<compile_context>
chip_gen: v5e
topology: v5e:2x2
jax: 0.10.0
libtpu: 0.0.40
codegen_flags: <defaults>
</compile_context>

<pallas_src>
import functools

import numpy as np
import jax
import jax.numpy as jnp
from jax import lax
from jax.experimental import pallas as pl
from jax.experimental.pallas import tpu as pltpu

BATCH_PAD = 8       # pad batch to one full sublane tile -> unmasked stores everywhere
HEAD_LANES = 128    # fused actor|critic head output width (lane-dense)
CONV_CH = 32        # every conv layer in the module has 32 output channels


# ---------------------------------------------------------------------------
# Fused forward kernel
# ---------------------------------------------------------------------------

def _fused_kernel(x_ref, m1_ref, b1_ref, m2_ref, b2_ref, m3_ref, b3_ref,
                  m4_ref, b4_ref, hx_ref, cx_ref, wx_ref, bl_ref, wo_ref, bo_ref,
                  whh_hbm, heads_ref, h_out_ref, c_out_ref,
                  a1_scr, a2_scr, whh_buf, whh_sem):
    Bp, H = hx_ref.shape

    # Start streaming W_hh^T (the single largest tensor) from HBM now; it is only needed
    # for the gate matmul after the whole conv chain, so its DMA is hidden under compute.
    whh_cp = pltpu.make_async_copy(whh_hbm, whh_buf, whh_sem)
    whh_cp.start()

    row1_in = m1_ref.shape[0] // 3        # lanes per padded-input row   (W1 * Cin)
    row1_out = m1_ref.shape[1]            # lanes per conv1 output row   (OW1 * 32)
    row2_out = m2_ref.shape[1]            # lanes per conv2 output row   (OW2 * 32)
    oh1 = a1_scr.shape[1] // row1_out - 1
    oh2 = a2_scr.shape[1] // row2_out

    def row_matmul(win, m_ref, b_ref):
        y = jnp.dot(win, m_ref[...], preferred_element_type=jnp.float32)
        return jnp.maximum(y + b_ref[...], 0.0)

    # conv1: 16x16xCin -> 8x8x32.  One (Bp, 3*W*Cin) @ (3*W*Cin, OW*32) matmul per output
    # row; rows land lane-contiguously (NHWC order) in a1_scr behind one zero y-pad row.
    a1_scr[:, :row1_out] = jnp.zeros((Bp, row1_out), jnp.bfloat16)
    for oy in range(oh1):
        win = x_ref[:, 2 * oy * row1_in:(2 * oy + 3) * row1_in]
        row = row_matmul(win, m1_ref, b1_ref)
        a1_scr[:, (oy + 1) * row1_out:(oy + 2) * row1_out] = row.astype(jnp.bfloat16)

    # conv2: 8x8x32 -> 4x4x32, same row-folded scheme over conv1's output rows.
    for oy in range(oh2):
        win = a1_scr[:, 2 * oy * row1_out:(2 * oy + 3) * row1_out]
        row = row_matmul(win, m2_ref, b2_ref)
        a2_scr[:, oy * row2_out:(oy + 1) * row2_out] = row.astype(jnp.bfloat16)

    # conv3 (4x4x32 -> 2x2x32) and conv4 (2x2x32 -> 1x1x32): tiny exact dense folds.
    a3 = row_matmul(a2_scr[...], m3_ref, b3_ref)                      # (Bp, 128)
    feat = row_matmul(a3.astype(jnp.bfloat16), m4_ref, b4_ref)        # (Bp, 32)

    # LSTM cell, PyTorch gate order (i, f, g, o); gate matmul split into x-side + h-side
    # (no concat scratch).  Only now wait for the W_hh^T DMA.  State math stays f32.
    whh_cp.wait()
    gates = (jnp.dot(hx_ref[...].astype(jnp.bfloat16), whh_buf[...],
                     preferred_element_type=jnp.float32)
             + jnp.dot(feat.astype(jnp.bfloat16), wx_ref[...],
                       preferred_element_type=jnp.float32)
             + bl_ref[...])
    i = jax.nn.sigmoid(gates[:, 0 * H:1 * H])
    f = jax.nn.sigmoid(gates[:, 1 * H:2 * H])
    g = jnp.tanh(gates[:, 2 * H:3 * H])
    o = jax.nn.sigmoid(gates[:, 3 * H:4 * H])
    c_new = f * cx_ref[...] + i * g
    h_new = o * jnp.tanh(c_new)
    h_out_ref[...] = h_new
    c_out_ref[...] = c_new

    # Fused actor|critic head: one lane-dense (Bp, 128) matmul + store.
    heads_ref[...] = jnp.dot(h_new.astype(jnp.bfloat16), wo_ref[...],
                             preferred_element_type=jnp.float32) + bo_ref[...]


def _fused_forward(packed, x_p, hx_p, cx_p):
    Bp, hidden = hx_p.shape
    row1_out = packed["m1"].shape[1]            # OW1 * 32
    row2_out = packed["m2"].shape[1]            # OW2 * 32
    oh1 = row1_out // CONV_CH                   # conv1 output rows (= OW1)
    oh2 = row2_out // CONV_CH
    a1_width = (oh1 + 1) * row1_out             # +1: zero y-pad row for conv2's windows
    a2_width = oh2 * row2_out

    vmem = lambda: pl.BlockSpec(memory_space=pltpu.MemorySpace.VMEM)
    return pl.pallas_call(
        _fused_kernel,
        out_shape=(
            jax.ShapeDtypeStruct((Bp, HEAD_LANES), jnp.float32),    # fused actor|critic
            jax.ShapeDtypeStruct((Bp, hidden), jnp.float32),        # new h
            jax.ShapeDtypeStruct((Bp, hidden), jnp.float32),        # new c
        ),
        in_specs=[vmem() for _ in range(15)] + [pl.BlockSpec(memory_space=pl.ANY)],
        out_specs=(vmem(), vmem(), vmem()),
        scratch_shapes=[
            pltpu.VMEM((Bp, a1_width), jnp.bfloat16),               # conv1 out (+ pad row)
            pltpu.VMEM((Bp, a2_width), jnp.bfloat16),               # conv2 out
            pltpu.VMEM(packed["w_hh_t"].shape, jnp.bfloat16),       # W_hh^T landing buffer
            pltpu.SemaphoreType.DMA(()),
        ],
        # In-place recurrent-state update: hx -> h_out, cx -> c_out.
        input_output_aliases={9: 1, 10: 2},
    )(x_p,
      packed["m1"], packed["b1"], packed["m2"], packed["b2"],
      packed["m3"], packed["b3"], packed["m4"], packed["b4"],
      hx_p, cx_p,
      packed["w_ih_t"], packed["b_lstm"], packed["w_heads"], packed["b_heads"],
      packed["w_hh_t"])


# ---------------------------------------------------------------------------
# Wrapper (matches ActorCritic.forward semantics)
# ---------------------------------------------------------------------------

def prepare_conv_input(x_nchw):
    """NCHW -> flattened NHWC rows with one zero row on top (conv1's y-pad), batch padded
    to BATCH_PAD, pre-cast to bf16 (matmul operand dtype)."""
    B = x_nchw.shape[0]
    assert B <= BATCH_PAD
    x = jnp.transpose(x_nchw, (0, 2, 3, 1))                           # NHWC
    x = jnp.pad(x, ((0, BATCH_PAD - B), (1, 0), (0, 0), (0, 0)))
    return x.reshape(BATCH_PAD, -1).astype(jnp.bfloat16)


def pad_state(s):
    """Pad recurrent state to (BATCH_PAD, hidden) once; keep it in this form across steps."""
    s = jnp.asarray(s, jnp.float32)
    return jnp.pad(s, ((0, BATCH_PAD - s.shape[0]), (0, 0)))


def actor_critic_forward(packed, x_nchw, hx_p, cx_p, *, num_actions, batch):
    """One ActorCritic.forward step.

    hx_p / cx_p are the recurrent state in padded (BATCH_PAD, hidden) form (see pad_state);
    the returned state is in the same form, so rollout loops never pad/slice it and the
    in-kernel aliasing updates it in place.
    Returns (actor_logits[batch, A], critic_value[batch, 1], hx_p_new, cx_p_new)."""
    x_p = prepare_conv_input(x_nchw)
    heads, h_new, c_new = _fused_forward(packed, x_p, hx_p, cx_p)
    actor = heads[:batch, :num_actions]
    critic = heads[:batch, num_actions:num_actions + 1]
    return actor, critic, h_new, c_new


# ---------------------------------------------------------------------------
# Host-side weight folding / packing
# ---------------------------------------------------------------------------

def _fold_conv_rows(w_hwio, W, stride=2, pad=1):
    """Fold a 3x3/stride-2/pad-1 conv into a per-output-row matrix mapping a 3-row input
    window (r, x, ci) -> one output row (ox, co).  x-direction padding is folded in
    (out-of-range taps dropped); y-direction padding is one zero row the kernel keeps at
    the top of the input/activation buffer.  Each matrix entry is a single original weight
    (exact regrouping)."""
    kh, kw, cin, cout = w_hwio.shape
    OW = (W + 2 * pad - kw) // stride + 1
    M = np.zeros((kh * W * cin, OW * cout), np.float32)
    for ox in range(OW):
        for kj in range(kw):
            x = ox * stride + kj - pad
            if 0 <= x < W:
                for r in range(kh):
                    M[(r * W + x) * cin:(r * W + x + 1) * cin,
                      ox * cout:(ox + 1) * cout] += w_hwio[r, kj]
    return M


def _fold_conv(w_hwio, H, W, stride=2, pad=1):
    """Full dense fold of a 3x3/stride-2/pad-1 conv over a fixed HxW NHWC input into a
    matrix mapping (y*W+x)*Cin+ci -> (oy*OW+ox)*Cout+co.  Used only for the tiny conv3/4."""
    kh, kw, cin, cout = w_hwio.shape
    OH = (H + 2 * pad - kh) // stride + 1
    OW = (W + 2 * pad - kw) // stride + 1
    M = np.zeros((H * W * cin, OH * OW * cout), np.float32)
    for oy in range(OH):
        for ox in range(OW):
            p = oy * OW + ox
            for ki in range(kh):
                for kj in range(kw):
                    y = oy * stride + ki - pad
                    x = ox * stride + kj - pad
                    if 0 <= y < H and 0 <= x < W:
                        h = y * W + x
                        M[h * cin:(h + 1) * cin, p * cout:(p + 1) * cout] += w_hwio[ki, kj]
    return M, OH, OW


def pack_params(raw, num_actions, hidden=512, in_hw=16):
    """Row-fold conv1/conv2, dense-fold conv3/conv4, split+transpose LSTM weights, fuse the
    heads; all matmul weights bf16, biases f32."""
    (w1, b1), (w2, b2), (w3, b3), (w4, b4) = raw["convs"]

    m1 = _fold_conv_rows(np.asarray(w1), in_hw)                  # (3*16*Cin, 8*32)
    m2 = _fold_conv_rows(np.asarray(w2), in_hw // 2)             # (3*8*32,  4*32)
    b1r = np.tile(np.asarray(b1), in_hw // 2)
    b2r = np.tile(np.asarray(b2), in_hw // 4)

    m3, oh3, ow3 = _fold_conv(np.asarray(w3), in_hw // 4, in_hw // 4)   # (512, 128)
    m4, oh4, ow4 = _fold_conv(np.asarray(w4), in_hw // 8, in_hw // 8)   # (128, 32)
    b3r = np.tile(np.asarray(b3), oh3 * ow3)
    b4r = np.tile(np.asarray(b4), oh4 * ow4)

    w_ih_t = np.asarray(raw["w_ih"]).T                           # (32, 4*hidden)
    w_hh_t = np.asarray(raw["w_hh"]).T                           # (hidden, 4*hidden)
    bl = np.asarray(raw["b_ih"]) + np.asarray(raw["b_hh"])

    # Fused lane-dense head: cols [0, A) = actor, col A = critic, rest zero.
    wh = np.zeros((hidden, HEAD_LANES), np.float32)
    wh[:, :num_actions] = np.asarray(raw["w_actor"])
    wh[:, num_actions] = np.asarray(raw["w_critic"])[:, 0]
    bh = np.zeros((HEAD_LANES,), np.float32)
    bh[:num_actions] = np.asarray(raw["b_actor"])
    bh[num_actions] = np.asarray(raw["b_critic"])[0]

    as_bf16 = lambda a: jnp.asarray(a, jnp.bfloat16)
    as_bias = lambda a: jnp.asarray(a, jnp.float32).reshape(1, -1)
    return {
        "m1": as_bf16(m1), "b1": as_bias(b1r),
        "m2": as_bf16(m2), "b2": as_bias(b2r),
        "m3": as_bf16(m3), "b3": as_bias(b3r),
        "m4": as_bf16(m4), "b4": as_bias(b4r),
        "w_ih_t": as_bf16(w_ih_t), "w_hh_t": as_bf16(w_hh_t), "b_lstm": as_bias(bl),
        "w_heads": as_bf16(wh), "b_heads": as_bias(bh),
    }


# ---------------------------------------------------------------------------
# Pure-JAX f32 reference (module semantics) for correctness checking
# ---------------------------------------------------------------------------

def reference_forward(raw, x_nchw, hx, cx):
    x = jnp.transpose(x_nchw, (0, 2, 3, 1)).astype(jnp.float32)
    for (w_hwio, b) in raw["convs"]:
        x = lax.conv_general_dilated(
            x, w_hwio, (2, 2), [(1, 1), (1, 1)],
            dimension_numbers=("NHWC", "HWIO", "NHWC"))
        x = jnp.maximum(x + b, 0.0)
    feat = x.reshape(x.shape[0], -1)
    gates = feat @ raw["w_ih"].T + hx @ raw["w_hh"].T + raw["b_ih"] + raw["b_hh"]
    H = hx.shape[1]
    i = jax.nn.sigmoid(gates[:, 0 * H:1 * H])
    f = jax.nn.sigmoid(gates[:, 1 * H:2 * H])
    g = jnp.tanh(gates[:, 2 * H:3 * H])
    o = jax.nn.sigmoid(gates[:, 3 * H:4 * H])
    c_new = f * cx + i * g
    h_new = o * jnp.tanh(c_new)
    actor = h_new @ raw["w_actor"] + raw["b_actor"]
    critic = h_new @ raw["w_critic"] + raw["b_critic"]
    return actor, critic, h_new, c_new


# ---------------------------------------------------------------------------
# Deterministic parameter initialization (shapes/init match the nn.Module)
# ---------------------------------------------------------------------------

def init_params(key, num_inputs, num_actions, hidden=512):
    ks = jax.random.split(key, 8)

    def xavier(k, shape, fan_in, fan_out):
        bound = (6.0 / (fan_in + fan_out)) ** 0.5
        return jax.random.uniform(k, shape, jnp.float32, -bound, bound)

    convs = []
    cin = num_inputs
    for li in range(4):
        cout = CONV_CH
        w = xavier(ks[li], (3, 3, cin, cout), cin * 9, cout * 9)   # HWIO
        b = jnp.zeros((cout,), jnp.float32)                         # bias = 0
        convs.append((w, b))
        cin = cout

    bound = 1.0 / (hidden ** 0.5)
    w_ih = jax.random.uniform(ks[4], (4 * hidden, CONV_CH), jnp.float32, -bound, bound)
    w_hh = jax.random.uniform(ks[5], (4 * hidden, hidden), jnp.float32, -bound, bound)
    b_ih = jnp.zeros((4 * hidden,), jnp.float32)
    b_hh = jnp.zeros((4 * hidden,), jnp.float32)

    w_actor = xavier(ks[6], (hidden, num_actions), hidden, num_actions)
    b_actor = jnp.zeros((num_actions,), jnp.float32)
    w_critic = xavier(ks[7], (hidden, 1), hidden, 1)
    b_critic = jnp.zeros((1,), jnp.float32)

    return {"convs": convs, "w_ih": w_ih, "w_hh": w_hh, "b_ih": b_ih, "b_hh": b_hh,
            "w_actor": w_actor, "b_actor": b_actor,
            "w_critic": w_critic, "b_critic": b_critic}


if __name__ == "__main__":
    num_inputs, num_actions = 4, 6
    B, S, hidden = 2, 16, 512

    key = jax.random.PRNGKey(0)
    kp, kx, kh, kc = jax.random.split(key, 4)

    raw = init_params(kp, num_inputs, num_actions, hidden)
    packed = pack_params(raw, num_actions, hidden, in_hw=S)

    x = jax.random.normal(kx, (B, num_inputs, S, S), jnp.float32)    # NCHW like PyTorch
    hx = 0.1 * jax.random.normal(kh, (B, hidden), jnp.float32)
    cx = 0.1 * jax.random.normal(kc, (B, hidden), jnp.float32)

    # Recurrent state lives permanently in padded (BATCH_PAD, hidden) form.
    hx_p, cx_p = pad_state(hx), pad_state(cx)

    fwd = jax.jit(functools.partial(actor_critic_forward,
                                    num_actions=num_actions, batch=B))
    actor, critic, hx_p_new, cx_p_new = jax.block_until_ready(
        fwd(packed, x, hx_p, cx_p))

    # Correctness check against the pure-JAX f32 reference (kernel uses bf16 matmul
    # operands with f32 accumulation -> loosened tolerance).
    a_ref, c_ref, h_ref, cc_ref = reference_forward(raw, x, hx, cx)
    hx_new, cx_new = hx_p_new[:B], cx_p_new[:B]
    assert actor.shape == (B, num_actions)
    assert critic.shape == (B, 1)
    assert hx_new.shape == (B, hidden) and cx_new.shape == (B, hidden)
    for got, ref in ((actor, a_ref), (critic, c_ref), (hx_new, h_ref), (cx_new, cc_ref)):
        assert bool(jnp.all(jnp.isfinite(got)))
        assert jnp.allclose(got, ref, atol=5e-2, rtol=5e-2), \
            float(jnp.max(jnp.abs(got - ref)))

    print("KERNEL_OK")
</pallas_src>

<mosaic_0001>
module attributes {stable_mosaic.version = 11 : i64} {
  func.func @_fused_kernel(%arg0: memref<8x1088xbf16, #tpu.memory_space<vmem>>, %arg1: memref<192x256xbf16, #tpu.memory_space<vmem>>, %arg2: memref<1x256xf32, #tpu.memory_space<vmem>>, %arg3: memref<768x128xbf16, #tpu.memory_space<vmem>>, %arg4: memref<1x128xf32, #tpu.memory_space<vmem>>, %arg5: memref<512x128xbf16, #tpu.memory_space<vmem>>, %arg6: memref<1x128xf32, #tpu.memory_space<vmem>>, %arg7: memref<128x32xbf16, #tpu.memory_space<vmem>>, %arg8: memref<1x32xf32, #tpu.memory_space<vmem>>, %arg9: memref<8x512xf32, #tpu.memory_space<vmem>>, %arg10: memref<8x512xf32, #tpu.memory_space<vmem>>, %arg11: memref<32x2048xbf16, #tpu.memory_space<vmem>>, %arg12: memref<1x2048xf32, #tpu.memory_space<vmem>>, %arg13: memref<512x128xbf16, #tpu.memory_space<vmem>>, %arg14: memref<1x128xf32, #tpu.memory_space<vmem>>, %arg15: memref<512x2048xbf16, #tpu.memory_space<any>>, %arg16: memref<8x128xf32, #tpu.memory_space<vmem>>, %arg17: memref<8x512xf32, #tpu.memory_space<vmem>>, %arg18: memref<8x512xf32, #tpu.memory_space<vmem>>, %arg19: memref<8x2304xbf16, #tpu.memory_space<vmem>>, %arg20: memref<8x512xbf16, #tpu.memory_space<vmem>>, %arg21: memref<512x2048xbf16, #tpu.memory_space<vmem>>, %arg22: memref<!tpu.dma_semaphore, #tpu.memory_space<semaphore_mem>>) attributes {dimension_semantics = [], scalar_prefetch = 0 : i64, scratch_operands = 4 : i64, tpu.core_type = #tpu.core_type<tc>} {
    tpu.enqueue_dma source(%arg15 : memref<512x2048xbf16, #tpu.memory_space<any>>) target(%arg21 : memref<512x2048xbf16, #tpu.memory_space<vmem>>) target_semaphore(%arg22 : memref<!tpu.dma_semaphore, #tpu.memory_space<semaphore_mem>>)
    %cst = arith.constant 0.000000e+00 : bf16
    %0 = vector.broadcast %cst : bf16 to vector<8x256xbf16>
    %c0 = arith.constant 0 : index
    %c0_0 = arith.constant 0 : index
    %1 = vector.load %arg19[%c0, %c0_0] : memref<8x2304xbf16, #tpu.memory_space<vmem>>, vector<8x256xbf16>
    tpu.vector_store %arg19[%c0, %c0_0], %0 {strides = array<i32>} : memref<8x2304xbf16, #tpu.memory_space<vmem>>, vector<8x256xbf16>,
    %c0_1 = arith.constant 0 : index
    %c0_2 = arith.constant 0 : index
    %2 = vector.load %arg0[%c0_1, %c0_2] : memref<8x1088xbf16, #tpu.memory_space<vmem>>, vector<8x192xbf16>
    %c0_3 = arith.constant 0 : index
    %c0_4 = arith.constant 0 : index
    %3 = vector.load %arg1[%c0_3, %c0_4] : memref<192x256xbf16, #tpu.memory_space<vmem>>, vector<192x256xbf16>
    %cst_5 = arith.constant dense<0.000000e+00> : vector<8x256xf32>
    %4 = tpu.matmul %2, %3, %cst_5 {dimension_numbers = #tpu.dot_dimension_numbers<[1], [0], [0], [1], [0, 0, 1, 1], [], []>} : vector<8x192xbf16>, vector<192x256xbf16>, vector<8x256xf32> -> vector<8x256xf32>
    %c0_6 = arith.constant 0 : index
    %c0_7 = arith.constant 0 : index
    %5 = vector.load %arg2[%c0_6, %c0_7] : memref<1x256xf32, #tpu.memory_space<vmem>>, vector<1x256xf32>
    %6 = vector.broadcast %5 : vector<1x256xf32> to vector<8x256xf32>
    %7 = arith.addf %4, %6 : vector<8x256xf32>
    %cst_8 = arith.constant 0.000000e+00 : f32
    %8 = vector.broadcast %cst_8 : f32 to vector<8x256xf32>
    %9 = arith.maximumf %7, %8 : vector<8x256xf32>
    %10 = arith.truncf %9 : vector<8x256xf32> to vector<8x256xbf16>
    %c0_9 = arith.constant 0 : index
    %c256 = arith.constant 256 : index
    %11 = vector.load %arg19[%c0_9, %c256] : memref<8x2304xbf16, #tpu.memory_space<vmem>>, vector<8x256xbf16>
    tpu.vector_store %arg19[%c0_9, %c256], %10 {strides = array<i32>} : memref<8x2304xbf16, #tpu.memory_space<vmem>>, vector<8x256xbf16>,
    %c0_10 = arith.constant 0 : index
    %c128 = arith.constant 128 : index
    %12 = vector.load %arg0[%c0_10, %c128] : memref<8x1088xbf16, #tpu.memory_space<vmem>>, vector<8x192xbf16>
    %c0_11 = arith.constant 0 : index
    %c0_12 = arith.constant 0 : index
    %13 = vector.load %arg1[%c0_11, %c0_12] : memref<192x256xbf16, #tpu.memory_space<vmem>>, vector<192x256xbf16>
    %cst_13 = arith.constant dense<0.000000e+00> : vector<8x256xf32>
    %14 = tpu.matmul %12, %13, %cst_13 {dimension_numbers = #tpu.dot_dimension_numbers<[1], [0], [0], [1], [0, 0, 1, 1], [], []>} : vector<8x192xbf16>, vector<192x256xbf16>, vector<8x256xf32> -> vector<8x256xf32>
    %c0_14 = arith.constant 0 : index
    %c0_15 = arith.constant 0 : index
    %15 = vector.load %arg2[%c0_14, %c0_15] : memref<1x256xf32, #tpu.memory_space<vmem>>, vector<1x256xf32>
    %16 = vector.broadcast %15 : vector<1x256xf32> to vector<8x256xf32>
    %17 = arith.addf %14, %16 : vector<8x256xf32>
    %cst_16 = arith.constant 0.000000e+00 : f32
    %18 = vector.broadcast %cst_16 : f32 to vector<8x256xf32>
    %19 = arith.maximumf %17, %18 : vector<8x256xf32>
    %20 = arith.truncf %19 : vector<8x256xf32> to vector<8x256xbf16>
    %c0_17 = arith.constant 0 : index
    %c512 = arith.constant 512 : index
    %21 = vector.load %arg19[%c0_17, %c512] : memref<8x2304xbf16, #tpu.memory_space<vmem>>, vector<8x256xbf16>
    tpu.vector_store %arg19[%c0_17, %c512], %20 {strides = array<i32>} : memref<8x2304xbf16, #tpu.memory_space<vmem>>, vector<8x256xbf16>,
    %c0_18 = arith.constant 0 : index
    %c256_19 = arith.constant 256 : index
    %22 = vector.load %arg0[%c0_18, %c256_19] : memref<8x1088xbf16, #tpu.memory_space<vmem>>, vector<8x192xbf16>
    %c0_20 = arith.constant 0 : index
    %c0_21 = arith.constant 0 : index
    %23 = vector.load %arg1[%c0_20, %c0_21] : memref<192x256xbf16, #tpu.memory_space<vmem>>, vector<192x256xbf16>
    %cst_22 = arith.constant dense<0.000000e+00> : vector<8x256xf32>
    %24 = tpu.matmul %22, %23, %cst_22 {dimension_numbers = #tpu.dot_dimension_numbers<[1], [0], [0], [1], [0, 0, 1, 1], [], []>} : vector<8x192xbf16>, vector<192x256xbf16>, vector<8x256xf32> -> vector<8x256xf32>
    %c0_23 = arith.constant 0 : index
    %c0_24 = arith.constant 0 : index
    %25 = vector.load %arg2[%c0_23, %c0_24] : memref<1x256xf32, #tpu.memory_space<vmem>>, vector<1x256xf32>
    %26 = vector.broadcast %25 : vector<1x256xf32> to vector<8x256xf32>
    %27 = arith.addf %24, %26 : vector<8x256xf32>
    %cst_25 = arith.constant 0.000000e+00 : f32
    %28 = vector.broadcast %cst_25 : f32 to vector<8x256xf32>
    %29 = arith.maximumf %27, %28 : vector<8x256xf32>
    %30 = arith.truncf %29 : vector<8x256xf32> to vector<8x256xbf16>
    %c0_26 = arith.constant 0 : index
    %c768 = arith.constant 768 : index
    %31 = vector.load %arg19[%c0_26, %c768] : memref<8x2304xbf16, #tpu.memory_space<vmem>>, vector<8x256xbf16>
    tpu.vector_store %arg19[%c0_26, %c768], %30 {strides = array<i32>} : memref<8x2304xbf16, #tpu.memory_space<vmem>>, vector<8x256xbf16>,
    %c0_27 = arith.constant 0 : index
    %c384 = arith.constant 384 : index
    %32 = vector.load %arg0[%c0_27, %c384] : memref<8x1088xbf16, #tpu.memory_space<vmem>>, vector<8x192xbf16>
    %c0_28 = arith.constant 0 : index
    %c0_29 = arith.constant 0 : index
    %33 = vector.load %arg1[%c0_28, %c0_29] : memref<192x256xbf16, #tpu.memory_space<vmem>>, vector<192x256xbf16>
    %cst_30 = arith.constant dense<0.000000e+00> : vector<8x256xf32>
    %34 = tpu.matmul %32, %33, %cst_30 {dimension_numbers = #tpu.dot_dimension_numbers<[1], [0], [0], [1], [0, 0, 1, 1], [], []>} : vector<8x192xbf16>, vector<192x256xbf16>, vector<8x256xf32> -> vector<8x256xf32>
    %c0_31 = arith.constant 0 : index
    %c0_32 = arith.constant 0 : index
    %35 = vector.load %arg2[%c0_31, %c0_32] : memref<1x256xf32, #tpu.memory_space<vmem>>, vector<1x256xf32>
    %36 = vector.broadcast %35 : vector<1x256xf32> to vector<8x256xf32>
    %37 = arith.addf %34, %36 : vector<8x256xf32>
    %cst_33 = arith.constant 0.000000e+00 : f32
    %38 = vector.broadcast %cst_33 : f32 to vector<8x256xf32>
    %39 = arith.maximumf %37, %38 : vector<8x256xf32>
    %40 = arith.truncf %39 : vector<8x256xf32> to vector<8x256xbf16>
    %c0_34 = arith.constant 0 : index
    %c1024 = arith.constant 1024 : index
    %41 = vector.load %arg19[%c0_34, %c1024] : memref<8x2304xbf16, #tpu.memory_space<vmem>>, vector<8x256xbf16>
    tpu.vector_store %arg19[%c0_34, %c1024], %40 {strides = array<i32>} : memref<8x2304xbf16, #tpu.memory_space<vmem>>, vector<8x256xbf16>,
    %c0_35 = arith.constant 0 : index
    %c512_36 = arith.constant 512 : index
    %42 = vector.load %arg0[%c0_35, %c512_36] : memref<8x1088xbf16, #tpu.memory_space<vmem>>, vector<8x192xbf16>
    %c0_37 = arith.constant 0 : index
    %c0_38 = arith.constant 0 : index
    %43 = vector.load %arg1[%c0_37, %c0_38] : memref<192x256xbf16, #tpu.memory_space<vmem>>, vector<192x256xbf16>
    %cst_39 = arith.constant dense<0.000000e+00> : vector<8x256xf32>
    %44 = tpu.matmul %42, %43, %cst_39 {dimension_numbers = #tpu.dot_dimension_numbers<[1], [0], [0], [1], [0, 0, 1, 1], [], []>} : vector<8x192xbf16>, vector<192x256xbf16>, vector<8x256xf32> -> vector<8x256xf32>
    %c0_40 = arith.constant 0 : index
    %c0_41 = arith.constant 0 : index
    %45 = vector.load %arg2[%c0_40, %c0_41] : memref<1x256xf32, #tpu.memory_space<vmem>>, vector<1x256xf32>
    %46 = vector.broadcast %45 : vector<1x256xf32> to vector<8x256xf32>
    %47 = arith.addf %44, %46 : vector<8x256xf32>
    %cst_42 = arith.constant 0.000000e+00 : f32
    %48 = vector.broadcast %cst_42 : f32 to vector<8x256xf32>
    %49 = arith.maximumf %47, %48 : vector<8x256xf32>
    %50 = arith.truncf %49 : vector<8x256xf32> to vector<8x256xbf16>
    %c0_43 = arith.constant 0 : index
    %c1280 = arith.constant 1280 : index
    %51 = vector.load %arg19[%c0_43, %c1280] : memref<8x2304xbf16, #tpu.memory_space<vmem>>, vector<8x256xbf16>
    tpu.vector_store %arg19[%c0_43, %c1280], %50 {strides = array<i32>} : memref<8x2304xbf16, #tpu.memory_space<vmem>>, vector<8x256xbf16>,
    %c0_44 = arith.constant 0 : index
    %c640 = arith.constant 640 : index
    %52 = vector.load %arg0[%c0_44, %c640] : memref<8x1088xbf16, #tpu.memory_space<vmem>>, vector<8x192xbf16>
    %c0_45 = arith.constant 0 : index
    %c0_46 = arith.constant 0 : index
    %53 = vector.load %arg1[%c0_45, %c0_46] : memref<192x256xbf16, #tpu.memory_space<vmem>>, vector<192x256xbf16>
    %cst_47 = arith.constant dense<0.000000e+00> : vector<8x256xf32>
    %54 = tpu.matmul %52, %53, %cst_47 {dimension_numbers = #tpu.dot_dimension_numbers<[1], [0], [0], [1], [0, 0, 1, 1], [], []>} : vector<8x192xbf16>, vector<192x256xbf16>, vector<8x256xf32> -> vector<8x256xf32>
    %c0_48 = arith.constant 0 : index
    %c0_49 = arith.constant 0 : index
    %55 = vector.load %arg2[%c0_48, %c0_49] : memref<1x256xf32, #tpu.memory_space<vmem>>, vector<1x256xf32>
    %56 = vector.broadcast %55 : vector<1x256xf32> to vector<8x256xf32>
    %57 = arith.addf %54, %56 : vector<8x256xf32>
    %cst_50 = arith.constant 0.000000e+00 : f32
    %58 = vector.broadcast %cst_50 : f32 to vector<8x256xf32>
    %59 = arith.maximumf %57, %58 : vector<8x256xf32>
    %60 = arith.truncf %59 : vector<8x256xf32> to vector<8x256xbf16>
    %c0_51 = arith.constant 0 : index
    %c1536 = arith.constant 1536 : index
    %61 = vector.load %arg19[%c0_51, %c1536] : memref<8x2304xbf16, #tpu.memory_space<vmem>>, vector<8x256xbf16>
    tpu.vector_store %arg19[%c0_51, %c1536], %60 {strides = array<i32>} : memref<8x2304xbf16, #tpu.memory_space<vmem>>, vector<8x256xbf16>,
    %c0_52 = arith.constant 0 : index
    %c768_53 = arith.constant 768 : index
    %62 = vector.load %arg0[%c0_52, %c768_53] : memref<8x1088xbf16, #tpu.memory_space<vmem>>, vector<8x192xbf16>
    %c0_54 = arith.constant 0 : index
    %c0_55 = arith.constant 0 : index
    %63 = vector.load %arg1[%c0_54, %c0_55] : memref<192x256xbf16, #tpu.memory_space<vmem>>, vector<192x256xbf16>
    %cst_56 = arith.constant dense<0.000000e+00> : vector<8x256xf32>
    %64 = tpu.matmul %62, %63, %cst_56 {dimension_numbers = #tpu.dot_dimension_numbers<[1], [0], [0], [1], [0, 0, 1, 1], [], []>} : vector<8x192xbf16>, vector<192x256xbf16>, vector<8x256xf32> -> vector<8x256xf32>
    %c0_57 = arith.constant 0 : index
    %c0_58 = arith.constant 0 : index
    %65 = vector.load %arg2[%c0_57, %c0_58] : memref<1x256xf32, #tpu.memory_space<vmem>>, vector<1x256xf32>
    %66 = vector.broadcast %65 : vector<1x256xf32> to vector<8x256xf32>
    %67 = arith.addf %64, %66 : vector<8x256xf32>
    %cst_59 = arith.constant 0.000000e+00 : f32
    %68 = vector.broadcast %cst_59 : f32 to vector<8x256xf32>
    %69 = arith.maximumf %67, %68 : vector<8x256xf32>
    %70 = arith.truncf %69 : vector<8x256xf32> to vector<8x256xbf16>
    %c0_60 = arith.constant 0 : index
    %c1792 = arith.constant 1792 : index
    %71 = vector.load %arg19[%c0_60, %c1792] : memref<8x2304xbf16, #tpu.memory_space<vmem>>, vector<8x256xbf16>
    tpu.vector_store %arg19[%c0_60, %c1792], %70 {strides = array<i32>} : memref<8x2304xbf16, #tpu.memory_space<vmem>>, vector<8x256xbf16>,
    %c0_61 = arith.constant 0 : index
    %c896 = arith.constant 896 : index
    %72 = vector.load %arg0[%c0_61, %c896] : memref<8x1088xbf16, #tpu.memory_space<vmem>>, vector<8x192xbf16>
    %c0_62 = arith.constant 0 : index
    %c0_63 = arith.constant 0 : index
    %73 = vector.load %arg1[%c0_62, %c0_63] : memref<192x256xbf16, #tpu.memory_space<vmem>>, vector<192x256xbf16>
    %cst_64 = arith.constant dense<0.000000e+00> : vector<8x256xf32>
    %74 = tpu.matmul %72, %73, %cst_64 {dimension_numbers = #tpu.dot_dimension_numbers<[1], [0], [0], [1], [0, 0, 1, 1], [], []>} : vector<8x192xbf16>, vector<192x256xbf16>, vector<8x256xf32> -> vector<8x256xf32>
    %c0_65 = arith.constant 0 : index
    %c0_66 = arith.constant 0 : index
    %75 = vector.load %arg2[%c0_65, %c0_66] : memref<1x256xf32, #tpu.memory_space<vmem>>, vector<1x256xf32>
    %76 = vector.broadcast %75 : vector<1x256xf32> to vector<8x256xf32>
    %77 = arith.addf %74, %76 : vector<8x256xf32>
    %cst_67 = arith.constant 0.000000e+00 : f32
    %78 = vector.broadcast %cst_67 : f32 to vector<8x256xf32>
    %79 = arith.maximumf %77, %78 : vector<8x256xf32>
    %80 = arith.truncf %79 : vector<8x256xf32> to vector<8x256xbf16>
    %c0_68 = arith.constant 0 : index
    %c2048 = arith.constant 2048 : index
    %81 = vector.load %arg19[%c0_68, %c2048] : memref<8x2304xbf16, #tpu.memory_space<vmem>>, vector<8x256xbf16>
    tpu.vector_store %arg19[%c0_68, %c2048], %80 {strides = array<i32>} : memref<8x2304xbf16, #tpu.memory_space<vmem>>, vector<8x256xbf16>,
    %c0_69 = arith.constant 0 : index
    %c0_70 = arith.constant 0 : index
    %82 = vector.load %arg19[%c0_69, %c0_70] : memref<8x2304xbf16, #tpu.memory_space<vmem>>, vector<8x768xbf16>
    %c0_71 = arith.constant 0 : index
    %c0_72 = arith.constant 0 : index
    %83 = vector.load %arg3[%c0_71, %c0_72] : memref<768x128xbf16, #tpu.memory_space<vmem>>, vector<768x128xbf16>
    %cst_73 = arith.constant dense<0.000000e+00> : vector<8x128xf32>
    %84 = tpu.matmul %82, %83, %cst_73 {dimension_numbers = #tpu.dot_dimension_numbers<[1], [0], [0], [1], [0, 0, 1, 1], [], []>} : vector<8x768xbf16>, vector<768x128xbf16>, vector<8x128xf32> -> vector<8x128xf32>
    %c0_74 = arith.constant 0 : index
    %c0_75 = arith.constant 0 : index
    %85 = vector.load %arg4[%c0_74, %c0_75] : memref<1x128xf32, #tpu.memory_space<vmem>>, vector<1x128xf32>
    %86 = vector.broadcast %85 : vector<1x128xf32> to vector<8x128xf32>
    %87 = arith.addf %84, %86 : vector<8x128xf32>
    %cst_76 = arith.constant 0.000000e+00 : f32
    %88 = vector.broadcast %cst_76 : f32 to vector<8x128xf32>
    %89 = arith.maximumf %87, %88 : vector<8x128xf32>
    %90 = arith.truncf %89 : vector<8x128xf32> to vector<8x128xbf16>
    %c0_77 = arith.constant 0 : index
    %c0_78 = arith.constant 0 : index
    %91 = vector.load %arg20[%c0_77, %c0_78] : memref<8x512xbf16, #tpu.memory_space<vmem>>, vector<8x128xbf16>
    tpu.vector_store %arg20[%c0_77, %c0_78], %90 {strides = array<i32>} : memref<8x512xbf16, #tpu.memory_space<vmem>>, vector<8x128xbf16>,
    %c0_79 = arith.constant 0 : index
    %c512_80 = arith.constant 512 : index
    %92 = vector.load %arg19[%c0_79, %c512_80] : memref<8x2304xbf16, #tpu.memory_space<vmem>>, vector<8x768xbf16>
    %c0_81 = arith.constant 0 : index
    %c0_82 = arith.constant 0 : index
    %93 = vector.load %arg3[%c0_81, %c0_82] : memref<768x128xbf16, #tpu.memory_space<vmem>>, vector<768x128xbf16>
    %cst_83 = arith.constant dense<0.000000e+00> : vector<8x128xf32>
    %94 = tpu.matmul %92, %93, %cst_83 {dimension_numbers = #tpu.dot_dimension_numbers<[1], [0], [0], [1], [0, 0, 1, 1], [], []>} : vector<8x768xbf16>, vector<768x128xbf16>, vector<8x128xf32> -> vector<8x128xf32>
    %c0_84 = arith.constant 0 : index
    %c0_85 = arith.constant 0 : index
    %95 = vector.load %arg4[%c0_84, %c0_85] : memref<1x128xf32, #tpu.memory_space<vmem>>, vector<1x128xf32>
    %96 = vector.broadcast %95 : vector<1x128xf32> to vector<8x128xf32>
    %97 = arith.addf %94, %96 : vector<8x128xf32>
    %cst_86 = arith.constant 0.000000e+00 : f32
    %98 = vector.broadcast %cst_86 : f32 to vector<8x128xf32>
    %99 = arith.maximumf %97, %98 : vector<8x128xf32>
    %100 = arith.truncf %99 : vector<8x128xf32> to vector<8x128xbf16>
    %c0_87 = arith.constant 0 : index
    %c128_88 = arith.constant 128 : index
    %101 = vector.load %arg20[%c0_87, %c128_88] : memref<8x512xbf16, #tpu.memory_space<vmem>>, vector<8x128xbf16>
    tpu.vector_store %arg20[%c0_87, %c128_88], %100 {strides = array<i32>} : memref<8x512xbf16, #tpu.memory_space<vmem>>, vector<8x128xbf16>,
    %c0_89 = arith.constant 0 : index
    %c1024_90 = arith.constant 1024 : index
    %102 = vector.load %arg19[%c0_89, %c1024_90] : memref<8x2304xbf16, #tpu.memory_space<vmem>>, vector<8x768xbf16>
    %c0_91 = arith.constant 0 : index
    %c0_92 = arith.constant 0 : index
    %103 = vector.load %arg3[%c0_91, %c0_92] : memref<768x128xbf16, #tpu.memory_space<vmem>>, vector<768x128xbf16>
    %cst_93 = arith.constant dense<0.000000e+00> : vector<8x128xf32>
    %104 = tpu.matmul %102, %103, %cst_93 {dimension_numbers = #tpu.dot_dimension_numbers<[1], [0], [0], [1], [0, 0, 1, 1], [], []>} : vector<8x768xbf16>, vector<768x128xbf16>, vector<8x128xf32> -> vector<8x128xf32>
    %c0_94 = arith.constant 0 : index
    %c0_95 = arith.constant 0 : index
    %105 = vector.load %arg4[%c0_94, %c0_95] : memref<1x128xf32, #tpu.memory_space<vmem>>, vector<1x128xf32>
    %106 = vector.broadcast %105 : vector<1x128xf32> to vector<8x128xf32>
    %107 = arith.addf %104, %106 : vector<8x128xf32>
    %cst_96 = arith.constant 0.000000e+00 : f32
    %108 = vector.broadcast %cst_96 : f32 to vector<8x128xf32>
    %109 = arith.maximumf %107, %108 : vector<8x128xf32>
    %110 = arith.truncf %109 : vector<8x128xf32> to vector<8x128xbf16>
    %c0_97 = arith.constant 0 : index
    %c256_98 = arith.constant 256 : index
    %111 = vector.load %arg20[%c0_97, %c256_98] : memref<8x512xbf16, #tpu.memory_space<vmem>>, vector<8x128xbf16>
    tpu.vector_store %arg20[%c0_97, %c256_98], %110 {strides = array<i32>} : memref<8x512xbf16, #tpu.memory_space<vmem>>, vector<8x128xbf16>,
    %c0_99 = arith.constant 0 : index
    %c1536_100 = arith.constant 1536 : index
    %112 = vector.load %arg19[%c0_99, %c1536_100] : memref<8x2304xbf16, #tpu.memory_space<vmem>>, vector<8x768xbf16>
    %c0_101 = arith.constant 0 : index
    %c0_102 = arith.constant 0 : index
    %113 = vector.load %arg3[%c0_101, %c0_102] : memref<768x128xbf16, #tpu.memory_space<vmem>>, vector<768x128xbf16>
    %cst_103 = arith.constant dense<0.000000e+00> : vector<8x128xf32>
    %114 = tpu.matmul %112, %113, %cst_103 {dimension_numbers = #tpu.dot_dimension_numbers<[1], [0], [0], [1], [0, 0, 1, 1], [], []>} : vector<8x768xbf16>, vector<768x128xbf16>, vector<8x128xf32> -> vector<8x128xf32>
    %c0_104 = arith.constant 0 : index
    %c0_105 = arith.constant 0 : index
    %115 = vector.load %arg4[%c0_104, %c0_105] : memref<1x128xf32, #tpu.memory_space<vmem>>, vector<1x128xf32>
    %116 = vector.broadcast %115 : vector<1x128xf32> to vector<8x128xf32>
    %117 = arith.addf %114, %116 : vector<8x128xf32>
    %cst_106 = arith.constant 0.000000e+00 : f32
    %118 = vector.broadcast %cst_106 : f32 to vector<8x128xf32>
    %119 = arith.maximumf %117, %118 : vector<8x128xf32>
    %120 = arith.truncf %119 : vector<8x128xf32> to vector<8x128xbf16>
    %c0_107 = arith.constant 0 : index
    %c384_108 = arith.constant 384 : index
    %121 = vector.load %arg20[%c0_107, %c384_108] : memref<8x512xbf16, #tpu.memory_space<vmem>>, vector<8x128xbf16>
    tpu.vector_store %arg20[%c0_107, %c384_108], %120 {strides = array<i32>} : memref<8x512xbf16, #tpu.memory_space<vmem>>, vector<8x128xbf16>,
    %c0_109 = arith.constant 0 : index
    %c0_110 = arith.constant 0 : index
    %122 = vector.load %arg20[%c0_109, %c0_110] : memref<8x512xbf16, #tpu.memory_space<vmem>>, vector<8x512xbf16>
    %c0_111 = arith.constant 0 : index
    %c0_112 = arith.constant 0 : index
    %123 = vector.load %arg5[%c0_111, %c0_112] : memref<512x128xbf16, #tpu.memory_space<vmem>>, vector<512x128xbf16>
    %cst_113 = arith.constant dense<0.000000e+00> : vector<8x128xf32>
    %124 = tpu.matmul %122, %123, %cst_113 {dimension_numbers = #tpu.dot_dimension_numbers<[1], [0], [0], [1], [0, 0, 1, 1], [], []>} : vector<8x512xbf16>, vector<512x128xbf16>, vector<8x128xf32> -> vector<8x128xf32>
    %c0_114 = arith.constant 0 : index
    %c0_115 = arith.constant 0 : index
    %125 = vector.load %arg6[%c0_114, %c0_115] : memref<1x128xf32, #tpu.memory_space<vmem>>, vector<1x128xf32>
    %126 = vector.broadcast %125 : vector<1x128xf32> to vector<8x128xf32>
    %127 = arith.addf %124, %126 : vector<8x128xf32>
    %cst_116 = arith.constant 0.000000e+00 : f32
    %128 = vector.broadcast %cst_116 : f32 to vector<8x128xf32>
    %129 = arith.maximumf %127, %128 : vector<8x128xf32>
    %130 = arith.truncf %129 : vector<8x128xf32> to vector<8x128xbf16>
    %c0_117 = arith.constant 0 : index
    %c0_118 = arith.constant 0 : index
    %131 = vector.load %arg7[%c0_117, %c0_118] : memref<128x32xbf16, #tpu.memory_space<vmem>>, vector<128x32xbf16>
    %cst_119 = arith.constant dense<0.000000e+00> : vector<8x32xf32>
    %132 = tpu.matmul %130, %131, %cst_119 {dimension_numbers = #tpu.dot_dimension_numbers<[1], [0], [0], [1], [0, 0, 1, 1], [], []>} : vector<8x128xbf16>, vector<128x32xbf16>, vector<8x32xf32> -> vector<8x32xf32>
    %c0_120 = arith.constant 0 : index
    %c0_121 = arith.constant 0 : index
    %133 = vector.load %arg8[%c0_120, %c0_121] : memref<1x32xf32, #tpu.memory_space<vmem>>, vector<1x32xf32>
    %134 = vector.broadcast %133 : vector<1x32xf32> to vector<8x32xf32>
    %135 = arith.addf %132, %134 : vector<8x32xf32>
    %cst_122 = arith.constant 0.000000e+00 : f32
    %136 = vector.broadcast %cst_122 : f32 to vector<8x32xf32>
    %137 = arith.maximumf %135, %136 : vector<8x32xf32>
    tpu.wait_dma2 semaphore(%arg22 : memref<!tpu.dma_semaphore, #tpu.memory_space<semaphore_mem>>) src(%arg15 : memref<512x2048xbf16, #tpu.memory_space<any>>) dst(%arg21 : memref<512x2048xbf16, #tpu.memory_space<vmem>>)
    %c0_123 = arith.constant 0 : index
    %c0_124 = arith.constant 0 : index
    %138 = vector.load %arg9[%c0_123, %c0_124] : memref<8x512xf32, #tpu.memory_space<vmem>>, vector<8x512xf32>
    %139 = arith.truncf %138 : vector<8x512xf32> to vector<8x512xbf16>
    %c0_125 = arith.constant 0 : index
    %c0_126 = arith.constant 0 : index
    %140 = vector.load %arg21[%c0_125, %c0_126] : memref<512x2048xbf16, #tpu.memory_space<vmem>>, vector<512x2048xbf16>
    %cst_127 = arith.constant dense<0.000000e+00> : vector<8x2048xf32>
    %141 = tpu.matmul %139, %140, %cst_127 {dimension_numbers = #tpu.dot_dimension_numbers<[1], [0], [0], [1], [0, 0, 1, 1], [], []>} : vector<8x512xbf16>, vector<512x2048xbf16>, vector<8x2048xf32> -> vector<8x2048xf32>
    %142 = arith.truncf %137 : vector<8x32xf32> to vector<8x32xbf16>
    %c0_128 = arith.constant 0 : index
    %c0_129 = arith.constant 0 : index
    %143 = vector.load %arg11[%c0_128, %c0_129] : memref<32x2048xbf16, #tpu.memory_space<vmem>>, vector<32x2048xbf16>
    %cst_130 = arith.constant dense<0.000000e+00> : vector<8x2048xf32>
    %144 = tpu.matmul %142, %143, %cst_130 {dimension_numbers = #tpu.dot_dimension_numbers<[1], [0], [0], [1], [0, 0, 1, 1], [], []>} : vector<8x32xbf16>, vector<32x2048xbf16>, vector<8x2048xf32> -> vector<8x2048xf32>
    %145 = arith.addf %141, %144 : vector<8x2048xf32>
    %c0_131 = arith.constant 0 : index
    %c0_132 = arith.constant 0 : index
    %146 = vector.load %arg12[%c0_131, %c0_132] : memref<1x2048xf32, #tpu.memory_space<vmem>>, vector<1x2048xf32>
    %147 = vector.broadcast %146 : vector<1x2048xf32> to vector<8x2048xf32>
    %148 = arith.addf %145, %147 : vector<8x2048xf32>
    %149 = vector.extract_strided_slice %148 {offsets = [0, 0], sizes = [8, 512], strides = [1, 1]} : vector<8x2048xf32> to vector<8x512xf32>
    %150 = arith.negf %149 : vector<8x512xf32>
    %151 = math.exp %150 : vector<8x512xf32>
    %cst_133 = arith.constant 1.000000e+00 : f32
    %152 = vector.broadcast %cst_133 : f32 to vector<8x512xf32>
    %153 = arith.addf %152, %151 : vector<8x512xf32>
    %154 = arith.divf %152, %153 : vector<8x512xf32>
    %155 = vector.extract_strided_slice %148 {offsets = [0, 512], sizes = [8, 512], strides = [1, 1]} : vector<8x2048xf32> to vector<8x512xf32>
    %156 = arith.negf %155 : vector<8x512xf32>
    %157 = math.exp %156 : vector<8x512xf32>
    %cst_134 = arith.constant 1.000000e+00 : f32
    %158 = vector.broadcast %cst_134 : f32 to vector<8x512xf32>
    %159 = arith.addf %158, %157 : vector<8x512xf32>
    %160 = arith.divf %158, %159 : vector<8x512xf32>
    %161 = vector.extract_strided_slice %148 {offsets = [0, 1024], sizes = [8, 512], strides = [1, 1]} : vector<8x2048xf32> to vector<8x512xf32>
    %162 = math.tanh %161 : vector<8x512xf32>
    %163 = vector.extract_strided_slice %148 {offsets = [0, 1536], sizes = [8, 512], strides = [1, 1]} : vector<8x2048xf32> to vector<8x512xf32>
    %164 = arith.negf %163 : vector<8x512xf32>
    %165 = math.exp %164 : vector<8x512xf32>
    %cst_135 = arith.constant 1.000000e+00 : f32
    %166 = vector.broadcast %cst_135 : f32 to vector<8x512xf32>
    %167 = arith.addf %166, %165 : vector<8x512xf32>
    %168 = arith.divf %166, %167 : vector<8x512xf32>
    %c0_136 = arith.constant 0 : index
    %c0_137 = arith.constant 0 : index
    %169 = vector.load %arg10[%c0_136, %c0_137] : memref<8x512xf32, #tpu.memory_space<vmem>>, vector<8x512xf32>
    %170 = arith.mulf %160, %169 : vector<8x512xf32>
    %171 = arith.mulf %154, %162 : vector<8x512xf32>
    %172 = arith.addf %170, %171 : vector<8x512xf32>
    %173 = math.tanh %172 : vector<8x512xf32>
    %174 = arith.mulf %168, %173 : vector<8x512xf32>
    %c0_138 = arith.constant 0 : index
    %c0_139 = arith.constant 0 : index
    %175 = vector.load %arg17[%c0_138, %c0_139] : memref<8x512xf32, #tpu.memory_space<vmem>>, vector<8x512xf32>
    tpu.vector_store %arg17[%c0_138, %c0_139], %174 {strides = array<i32>} : memref<8x512xf32, #tpu.memory_space<vmem>>, vector<8x512xf32>,
    %c0_140 = arith.constant 0 : index
    %c0_141 = arith.constant 0 : index
    %176 = vector.load %arg18[%c0_140, %c0_141] : memref<8x512xf32, #tpu.memory_space<vmem>>, vector<8x512xf32>
    tpu.vector_store %arg18[%c0_140, %c0_141], %172 {strides = array<i32>} : memref<8x512xf32, #tpu.memory_space<vmem>>, vector<8x512xf32>,
    %177 = arith.truncf %174 : vector<8x512xf32> to vector<8x512xbf16>
    %c0_142 = arith.constant 0 : index
    %c0_143 = arith.constant 0 : index
    %178 = vector.load %arg13[%c0_142, %c0_143] : memref<512x128xbf16, #tpu.memory_space<vmem>>, vector<512x128xbf16>
    %cst_144 = arith.constant dense<0.000000e+00> : vector<8x128xf32>
    %179 = tpu.matmul %177, %178, %cst_144 {dimension_numbers = #tpu.dot_dimension_numbers<[1], [0], [0], [1], [0, 0, 1, 1], [], []>} : vector<8x512xbf16>, vector<512x128xbf16>, vector<8x128xf32> -> vector<8x128xf32>
    %c0_145 = arith.constant 0 : index
    %c0_146 = arith.constant 0 : index
    %180 = vector.load %arg14[%c0_145, %c0_146] : memref<1x128xf32, #tpu.memory_space<vmem>>, vector<1x128xf32>
    %181 = vector.broadcast %180 : vector<1x128xf32> to vector<8x128xf32>
    %182 = arith.addf %179, %181 : vector<8x128xf32>
    %c0_147 = arith.constant 0 : index
    %c0_148 = arith.constant 0 : index
    %183 = vector.load %arg16[%c0_147, %c0_148] : memref<8x128xf32, #tpu.memory_space<vmem>>, vector<8x128xf32>
    tpu.vector_store %arg16[%c0_147, %c0_148], %182 {strides = array<i32>} : memref<8x128xf32, #tpu.memory_space<vmem>>, vector<8x128xf32>,
    return
  }
}

</mosaic_0001>

<llo_original>
// kernel: actor_critic_forward.1
$region0: #{actor_critic_forward.1}
  #allocation0 [shape = 'u32[]', space=smem, size = 0x4, offset = 0x4, fixed_abs, tag = 'smem constant byte address 0x4 - core index']
  #allocation1 [shape = 'u32[72,128]{1,0:T(1,128)}', space=vmem, size = 0x9000, scoped, tag = 'internal scratch']
  #allocation2 [shape = 'bf16[8,2304]{1,0:T(8,128)(2,1)}', space=vmem, size = 0x9000, scoped, tag = 'scratch operand']
  #allocation3 [shape = 'bf16[8,512]{1,0:T(8,128)(2,1)}', space=vmem, size = 0x2000, scoped, tag = 'scratch operand']
  #allocation4 [shape = 'bf16[512,2048]{1,0:T(8,128)(2,1)}', space=vmem, size = 0x200000, scoped, tag = 'scratch operand']
  #allocation5 [shape = 's32[1]{0}', space=sflag, size = 0x4, scoped, tag = 'scratch operand']
  #allocation23 [shape = 's32[]', space=sflag, size = 0x4, offset = 0, fixed_abs, tag = 'sflag constant byte address 0x0 - dummy sync flag']
  #allocation24 [shape = 's32[]', space=sflag, size = 0x4, offset = 0, fixed_abs, tag = 'sflag constant byte address 0x0 - dummy sync flag']
  #allocation25 [shape = 'u32[]', space=smem, size = 0x4, offset = 0x44, fixed_abs, tag = 'smem constant byte address 0x44 - assertion arg 0']
  #allocation26 [shape = 'u32[]', space=smem, size = 0x4, offset = 0x48, fixed_abs, tag = 'smem constant byte address 0x48 - assertion arg 1']
  %s0 = inlined_call_operand.vmem [shape: bf16[8,1088], index: 0, kind: input, shape index: {}]
  %s1 = inlined_call_operand.hbm [shape: bf16[192,256], index: 1, kind: input, shape index: {}]
  %s2 = inlined_call_operand.hbm [shape: f32[1,256], index: 2, kind: input, shape index: {}]
  %s3 = inlined_call_operand.hbm [shape: bf16[768,128], index: 3, kind: input, shape index: {}]
  %s4 = inlined_call_operand.hbm [shape: f32[1,128], index: 4, kind: input, shape index: {}]
  %s5 = inlined_call_operand.hbm [shape: bf16[512,128], index: 5, kind: input, shape index: {}]
  %s6 = inlined_call_operand.hbm [shape: f32[1,128], index: 6, kind: input, shape index: {}]
  %s7 = inlined_call_operand.vmem [shape: bf16[128,32], index: 7, kind: input, shape index: {}]
  %s8 = inlined_call_operand.hbm [shape: f32[1,32], index: 8, kind: input, shape index: {}]
  %s9 = inlined_call_operand.vmem [shape: f32[8,512], index: 9, kind: input, shape index: {}, may-alias: {9,17}]
  %s10 = inlined_call_operand.vmem [shape: f32[8,512], index: 10, kind: input, shape index: {}, may-alias: {10,18}]
  %s11 = inlined_call_operand.hbm [shape: bf16[32,2048], index: 11, kind: input, shape index: {}]
  %s12 = inlined_call_operand.hbm [shape: f32[1,2048], index: 12, kind: input, shape index: {}]
  %s13 = inlined_call_operand.hbm [shape: bf16[512,128], index: 13, kind: input, shape index: {}]
  %s14 = inlined_call_operand.hbm [shape: f32[1,128], index: 14, kind: input, shape index: {}]
  %s15 = inlined_call_operand.hbm [shape: bf16[512,2048], index: 15, kind: input, shape index: {}]
  %s16 = inlined_call_operand.vmem [shape: f32[8,128], index: 16, kind: output, shape index: {0}]
  %s17 = inlined_call_operand.vmem [shape: f32[8,512], index: 17, kind: output, shape index: {1}, may-alias: {9,17}]
  %s18 = inlined_call_operand.vmem [shape: f32[8,512], index: 18, kind: output, shape index: {2}, may-alias: {10,18}]
  %19 = xla_tuple %s16, %s17, %s18
  %s20 = sld [smem:[#allocation0]]
  $region134: #{actor_critic_forward.1} parent=0
    _
  %s22 = ssub.s32 1, %s20
  %s23 = scalar_select 0, %s22, %s20
  $region1: #{actor_critic_forward.1} parent=0
    #allocation6 [shape = 'u8[98304]{0}', space=vmem, size = 0x18000, scoped, tag = 'input window, operand 1, single buffered']
    #allocation7 [shape = 's32[1]{0}', space=sflag, size = 0x4, scoped, tag = 'scoped memory for actor_critic_forward.1']
    #allocation8 [shape = 'u8[1024]{0}', space=vmem, size = 0x400, scoped, tag = 'input window, operand 2, single buffered']
    #allocation9 [shape = 's32[1]{0}', space=sflag, size = 0x4, scoped, tag = 'scoped memory for actor_critic_forward.1']
    #allocation10 [shape = 'u8[196608]{0}', space=vmem, size = 0x30000, scoped, tag = 'input window, operand 3, single buffered']
    #allocation11 [shape = 'u8[512]{0}', space=vmem, size = 0x400, scoped, tag = 'input window, operand 4, single buffered']
    #allocation12 [shape = 's32[1]{0}', space=sflag, size = 0x4, scoped, tag = 'scoped memory for actor_critic_forward.1']
    #allocation13 [shape = 'u8[131072]{0}', space=vmem, size = 0x20000, scoped, tag = 'input window, operand 5, single buffered']
    #allocation14 [shape = 'u8[512]{0}', space=vmem, size = 0x400, scoped, tag = 'input window, operand 6, single buffered']
    #allocation15 [shape = 's32[1]{0}', space=sflag, size = 0x4, scoped, tag = 'scoped memory for actor_critic_forward.1']
    #allocation16 [shape = 'u8[512]{0}', space=vmem, size = 0x400, scoped, tag = 'input window, operand 8, single buffered']
    #allocation17 [shape = 'u8[131072]{0}', space=vmem, size = 0x20000, scoped, tag = 'input window, operand 11, single buffered']
    #allocation18 [shape = 's32[1]{0}', space=sflag, size = 0x4, scoped, tag = 'scoped memory for actor_critic_forward.1']
    #allocation19 [shape = 'u8[8192]{0}', space=vmem, size = 0x2000, scoped, tag = 'input window, operand 12, single buffered']
    #allocation20 [shape = 'u8[131072]{0}', space=vmem, size = 0x20000, scoped, tag = 'input window, operand 13, single buffered']
    #allocation21 [shape = 's32[1]{0}', space=sflag, size = 0x4, scoped, tag = 'scoped memory for actor_critic_forward.1']
    #allocation22 [shape = 'u8[512]{0}', space=vmem, size = 0x400, scoped, tag = 'input window, operand 14, single buffered']
    %24 = vsyncpa [#allocation7], 0
    %25 = vsyncpa [#allocation9], 0
    %26 = vsyncpa [#allocation12], 0
    %27 = vsyncpa [#allocation15], 0
    %28 = vsyncpa [#allocation18], 0
    %29 = vsyncpa [#allocation21], 0
    // Predicated region
    $region2: #{actor_critic_forward.1} parent=1 // pred_check
      _
    $region3: #{actor_critic_forward.1} parent=1 // pred_check_branch
      %31 = sbr.rel (0) target = $region5
    $region4: #{actor_critic_forward.1} parent=1 // pred_region
      _
    $region5: #{actor_critic_forward.1} parent=1 // pred_fallthru
      _
    // Predicated region
    $region6: #{actor_critic_forward.1} parent=1 // pred_check
      _
    $region7: #{actor_critic_forward.1} parent=1 // pred_check_branch
      %33 = sbr.rel (0) target = $region9
    $region8: #{actor_critic_forward.1} parent=1 // pred_region
      %35 = vsyncadd [#allocation7], 0
      %s36 = sshll.u32 %s1, 4
      %s37 = int_to_ptr.hbm [resolvable:$true] %s36
      %s38 = sshll.u32 [#allocation6], 4
      %s39 = int_to_ptr.vmem [resolvable:$true] %s38
      %44 = dma.hbm_to_vmem [thread:$0]  %s37, 3072, %s39, [#allocation7], 128, 128, 8
    $region9: #{actor_critic_forward.1} parent=1 // pred_fallthru
      _
    // Predicated region
    $region10: #{actor_critic_forward.1} parent=1 // pred_check
      _
    $region11: #{actor_critic_forward.1} parent=1 // pred_check_branch
      %46 = sbr.rel (0) target = $region13
    $region12: #{actor_critic_forward.1} parent=1 // pred_region
      %48 = vsyncadd [#allocation9], 0
      %s50 = sshll.u32 %s2, 4
      %s51 = int_to_ptr.hbm [resolvable:$true] %s50
      %s52 = sshll.u32 [#allocation8], 4
      %s53 = int_to_ptr.vmem [resolvable:$true] %s52
      %55 = dma.hbm_to_vmem [thread:$0]  %s51, 32, %s53, [#allocation9]
    $region13: #{actor_critic_forward.1} parent=1 // pred_fallthru
      _
    // Predicated region
    $region14: #{actor_critic_forward.1} parent=1 // pred_check
      _
    $region15: #{actor_critic_forward.1} parent=1 // pred_check_branch
      %57 = sbr.rel (0) target = $region17
    $region16: #{actor_critic_forward.1} parent=1 // pred_region
      %59 = vsyncadd [#allocation9], 0
      %s60 = sshll.u32 %s3, 4
      %s61 = int_to_ptr.hbm [resolvable:$true] %s60
      %s62 = sshll.u32 [#allocation10], 4
      %s63 = int_to_ptr.vmem [resolvable:$true] %s62
      %68 = dma.hbm_to_vmem [thread:$0]  %s61, 6144, %s63, [#allocation9], 64, 64, 4
    $region17: #{actor_critic_forward.1} parent=1 // pred_fallthru
      _
    // Predicated region
    $region18: #{actor_critic_forward.1} parent=1 // pred_check
      _
    $region19: #{actor_critic_forward.1} parent=1 // pred_check_branch
      %70 = sbr.rel (0) target = $region21
    $region20: #{actor_critic_forward.1} parent=1 // pred_region
      %72 = vsyncadd [#allocation12], 0
      %s74 = sshll.u32 %s4, 4
      %s75 = int_to_ptr.hbm [resolvable:$true] %s74
      %s76 = sshll.u32 [#allocation11], 4
      %s77 = int_to_ptr.vmem [resolvable:$true] %s76
      %79 = dma.hbm_to_vmem [thread:$0]  %s75, 16, %s77, [#allocation12]
    $region21: #{actor_critic_forward.1} parent=1 // pred_fallthru
      _
    // Predicated region
    $region22: #{actor_critic_forward.1} parent=1 // pred_check
      _
    $region23: #{actor_critic_forward.1} parent=1 // pred_check_branch
      %81 = sbr.rel (0) target = $region25
    $region24: #{actor_critic_forward.1} parent=1 // pred_region
      %83 = vsyncadd [#allocation12], 0
      %s84 = sshll.u32 %s5, 4
      %s85 = int_to_ptr.hbm [resolvable:$true] %s84
      %s86 = sshll.u32 [#allocation13], 4
      %s87 = int_to_ptr.vmem [resolvable:$true] %s86
      %92 = dma.hbm_to_vmem [thread:$0]  %s85, 4096, %s87, [#allocation12], 64, 64, 4
    $region25: #{actor_critic_forward.1} parent=1 // pred_fallthru
      _
    // Predicated region
    $region26: #{actor_critic_forward.1} parent=1 // pred_check
      _
    $region27: #{actor_critic_forward.1} parent=1 // pred_check_branch
      %94 = sbr.rel (0) target = $region29
    $region28: #{actor_critic_forward.1} parent=1 // pred_region
      %96 = vsyncadd [#allocation15], 0
      %s98 = sshll.u32 %s6, 4
      %s99 = int_to_ptr.hbm [resolvable:$true] %s98
      %s100 = sshll.u32 [#allocation14], 4
      %s101 = int_to_ptr.vmem [resolvable:$true] %s100
      %103 = dma.hbm_to_vmem [thread:$0]  %s99, 16, %s101, [#allocation15]
    $region29: #{actor_critic_forward.1} parent=1 // pred_fallthru
      _
    // Predicated region
    $region30: #{actor_critic_forward.1} parent=1 // pred_check
      _
    $region31: #{actor_critic_forward.1} parent=1 // pred_check_branch
      %105 = sbr.rel (0) target = $region33
    $region32: #{actor_critic_forward.1} parent=1 // pred_region
      _
    $region33: #{actor_critic_forward.1} parent=1 // pred_fallthru
      _
    // Predicated region
    $region34: #{actor_critic_forward.1} parent=1 // pred_check
      _
    $region35: #{actor_critic_forward.1} parent=1 // pred_check_branch
      %107 = sbr.rel (0) target = $region37
    $region36: #{actor_critic_forward.1} parent=1 // pred_region
      %109 = vsyncadd [#allocation15], 0
      %s111 = sshll.u32 %s8, 4
      %s112 = int_to_ptr.hbm [resolvable:$true] %s111
      %s113 = sshll.u32 [#allocation16], 4
      %s114 = int_to_ptr.vmem [resolvable:$true] %s113
      %116 = dma.hbm_to_vmem [thread:$0]  %s112, 16, %s114, [#allocation15]
    $region37: #{actor_critic_forward.1} parent=1 // pred_fallthru
      _
    // Predicated region
    $region38: #{actor_critic_forward.1} parent=1 // pred_check
      _
    $region39: #{actor_critic_forward.1} parent=1 // pred_check_branch
      %118 = sbr.rel (0) target = $region41
    $region40: #{actor_critic_forward.1} parent=1 // pred_region
      _
    $region41: #{actor_critic_forward.1} parent=1 // pred_fallthru
      _
    // Predicated region
    $region42: #{actor_critic_forward.1} parent=1 // pred_check
      _
    $region43: #{actor_critic_forward.1} parent=1 // pred_check_branch
      %120 = sbr.rel (0) target = $region45
    $region44: #{actor_critic_forward.1} parent=1 // pred_region
      _
    $region45: #{actor_critic_forward.1} parent=1 // pred_fallthru
      _
    // Predicated region
    $region46: #{actor_critic_forward.1} parent=1 // pred_check
      _
    $region47: #{actor_critic_forward.1} parent=1 // pred_check_branch
      %122 = sbr.rel (0) target = $region49
    $region48: #{actor_critic_forward.1} parent=1 // pred_region
      %124 = vsyncadd [#allocation18], 0
      %s125 = sshll.u32 %s11, 4
      %s126 = int_to_ptr.hbm [resolvable:$true] %s125
      %s127 = sshll.u32 [#allocation17], 4
      %s128 = int_to_ptr.vmem [resolvable:$true] %s127
      %133 = dma.hbm_to_vmem [thread:$0]  %s126, 4096, %s128, [#allocation18], 1024, 1024, 64
    $region49: #{actor_critic_forward.1} parent=1 // pred_fallthru
      _
    // Predicated region
    $region50: #{actor_critic_forward.1} parent=1 // pred_check
      _
    $region51: #{actor_critic_forward.1} parent=1 // pred_check_branch
      %135 = sbr.rel (0) target = $region53
    $region52: #{actor_critic_forward.1} parent=1 // pred_region
      %137 = vsyncadd [#allocation18], 0
      %s139 = sshll.u32 %s12, 4
      %s140 = int_to_ptr.hbm [resolvable:$true] %s139
      %s141 = sshll.u32 [#allocation19], 4
      %s142 = int_to_ptr.vmem [resolvable:$true] %s141
      %144 = dma.hbm_to_vmem [thread:$0]  %s140, 256, %s142, [#allocation18]
    $region53: #{actor_critic_forward.1} parent=1 // pred_fallthru
      _
    // Predicated region
    $region54: #{actor_critic_forward.1} parent=1 // pred_check
      _
    $region55: #{actor_critic_forward.1} parent=1 // pred_check_branch
      %146 = sbr.rel (0) target = $region57
    $region56: #{actor_critic_forward.1} parent=1 // pred_region
      %148 = vsyncadd [#allocation21], 0
      %s149 = sshll.u32 %s13, 4
      %s150 = int_to_ptr.hbm [resolvable:$true] %s149
      %s151 = sshll.u32 [#allocation20], 4
      %s152 = int_to_ptr.vmem [resolvable:$true] %s151
      %157 = dma.hbm_to_vmem [thread:$0]  %s150, 4096, %s152, [#allocation21], 64, 64, 4
    $region57: #{actor_critic_forward.1} parent=1 // pred_fallthru
      _
    // Predicated region
    $region58: #{actor_critic_forward.1} parent=1 // pred_check
      _
    $region59: #{actor_critic_forward.1} parent=1 // pred_check_branch
      %159 = sbr.rel (0) target = $region61
    $region60: #{actor_critic_forward.1} parent=1 // pred_region
      %161 = vsyncadd [#allocation21], 0
      %s163 = sshll.u32 %s14, 4
      %s164 = int_to_ptr.hbm [resolvable:$true] %s163
      %s165 = sshll.u32 [#allocation22], 4
      %s166 = int_to_ptr.vmem [resolvable:$true] %s165
      %168 = dma.hbm_to_vmem [thread:$0]  %s164, 16, %s166, [#allocation21]
    $region61: #{actor_critic_forward.1} parent=1 // pred_fallthru
      _
    // Predicated region
    $region62: #{actor_critic_forward.1} parent=1 // pred_check
      _
    $region63: #{actor_critic_forward.1} parent=1 // pred_check_branch
      %170 = sbr.rel (0) target = $region65
    $region64: #{actor_critic_forward.1} parent=1 // pred_region
      %172 = dma.done [#allocation7], 3072
    $region65: #{actor_critic_forward.1} parent=1 // pred_fallthru
      _
    // Predicated region
    $region66: #{actor_critic_forward.1} parent=1 // pred_check
      _
    $region67: #{actor_critic_forward.1} parent=1 // pred_check_branch
      %174 = sbr.rel (0) target = $region69
    $region68: #{actor_critic_forward.1} parent=1 // pred_region
      %176 = dma.done [#allocation9], 32
    $region69: #{actor_critic_forward.1} parent=1 // pred_fallthru
      _
    // Predicated region
    $region70: #{actor_critic_forward.1} parent=1 // pred_check
      _
    $region71: #{actor_critic_forward.1} parent=1 // pred_check_branch
      %178 = sbr.rel (0) target = $region73
    $region72: #{actor_critic_forward.1} parent=1 // pred_region
      %180 = dma.done [#allocation9], 6144
    $region73: #{actor_critic_forward.1} parent=1 // pred_fallthru
      _
    // Predicated region
    $region74: #{actor_critic_forward.1} parent=1 // pred_check
      _
    $region75: #{actor_critic_forward.1} parent=1 // pred_check_branch
      %182 = sbr.rel (0) target = $region77
    $region76: #{actor_critic_forward.1} parent=1 // pred_region
      %184 = dma.done [#allocation12], 16
    $region77: #{actor_critic_forward.1} parent=1 // pred_fallthru
      _
    // Predicated region
    $region78: #{actor_critic_forward.1} parent=1 // pred_check
      _
    $region79: #{actor_critic_forward.1} parent=1 // pred_check_branch
      %186 = sbr.rel (0) target = $region81
    $region80: #{actor_critic_forward.1} parent=1 // pred_region
      %188 = dma.done [#allocation12], 4096
    $region81: #{actor_critic_forward.1} parent=1 // pred_fallthru
      _
    // Predicated region
    $region82: #{actor_critic_forward.1} parent=1 // pred_check
      _
    $region83: #{actor_critic_forward.1} parent=1 // pred_check_branch
      %190 = sbr.rel (0) target = $region85
    $region84: #{actor_critic_forward.1} parent=1 // pred_region
      %192 = dma.done [#allocation15], 16
    $region85: #{actor_critic_forward.1} parent=1 // pred_fallthru
      _
    // Predicated region
    $region86: #{actor_critic_forward.1} parent=1 // pred_check
      _
    $region87: #{actor_critic_forward.1} parent=1 // pred_check_branch
      %194 = sbr.rel (0) target = $region89
    $region88: #{actor_critic_forward.1} parent=1 // pred_region
      %196 = dma.done [#allocation15], 16
    $region89: #{actor_critic_forward.1} parent=1 // pred_fallthru
      _
    // Predicated region
    $region90: #{actor_critic_forward.1} parent=1 // pred_check
      _
    $region91: #{actor_critic_forward.1} parent=1 // pred_check_branch
      %198 = sbr.rel (0) target = $region93
    $region92: #{actor_critic_forward.1} parent=1 // pred_region
      %200 = dma.done [#allocation18], 4096
    $region93: #{actor_critic_forward.1} parent=1 // pred_fallthru
      _
    // Predicated region
    $region94: #{actor_critic_forward.1} parent=1 // pred_check
      _
    $region95: #{actor_critic_forward.1} parent=1 // pred_check_branch
      %202 = sbr.rel (0) target = $region97
    $region96: #{actor_critic_forward.1} parent=1 // pred_region
      %204 = dma.done [#allocation18], 256
    $region97: #{actor_critic_forward.1} parent=1 // pred_fallthru
      _
    // Predicated region
    $region98: #{actor_critic_forward.1} parent=1 // pred_check
      _
    $region99: #{actor_critic_forward.1} parent=1 // pred_check_branch
      %206 = sbr.rel (0) target = $region101
    $region100: #{actor_critic_forward.1} parent=1 // pred_region
      %208 = dma.done [#allocation21], 4096
    $region101: #{actor_critic_forward.1} parent=1 // pred_fallthru
      _
    // Predicated region
    $region102: #{actor_critic_forward.1} parent=1 // pred_check
      _
    $region103: #{actor_critic_forward.1} parent=1 // pred_check_branch
      %210 = sbr.rel (0) target = $region105
    $region104: #{actor_critic_forward.1} parent=1 // pred_region
      %212 = dma.done [#allocation21], 16
    $region105: #{actor_critic_forward.1} parent=1 // pred_fallthru
      _
    // Predicated region
    $region106: #{actor_critic_forward.1} parent=1 // pred_check
      _
    $region107: #{actor_critic_forward.1} parent=1 // pred_check_branch
      %215 = sbr.rel target = $region109
    $region108: #{actor_critic_forward.1} parent=1 // pred_region
      %216 = sst [smem:[#allocation25]] [#allocation24]
      %217 = sst [smem:[#allocation26]] [#allocation23]
    $region109: #{actor_critic_forward.1} parent=1 // pred_fallthru
      _
    %219 = shalt.err (0)
    %s221 = sshll.u32 %s15, 4
    %s222 = int_to_ptr.hbm [resolvable:$true] %s221
    %s223 = sshll.u32 [#allocation4], 4
    %s224 = int_to_ptr.vmem [resolvable:$true] %s223
    %226 = dma.hbm_to_vmem [thread:$0]  %s222, 65536, %s224, [#allocation5]
    %227 = vst [vmem:[#allocation2] sm:$0xff] 0
    %v228 = vld [vmem:[%s0] sm:$0xff]
    %v229 = vld [vmem:[#allocation6] sm:$0xff]
    %v230 = vld [vmem:[#allocation6 + $0x8] sm:$0xff]
    %v231 = vld [vmem:[#allocation6 + $0x10] sm:$0xff]
    %v232 = vld [vmem:[#allocation6 + $0x18] sm:$0xff]
    %v233 = vld [vmem:[#allocation6 + $0x20] sm:$0xff]
    %v234 = vld [vmem:[#allocation6 + $0x28] sm:$0xff]
    %v235 = vld [vmem:[#allocation6 + $0x30] sm:$0xff]
    %v236 = vld [vmem:[#allocation6 + $0x38] sm:$0xff]
    %v237 = vld [vmem:[#allocation6 + $0x40] sm:$0xff]
    %v238 = vld [vmem:[#allocation6 + $0x48] sm:$0xff]
    %v239 = vld [vmem:[#allocation6 + $0x50] sm:$0xff]
    %v240 = vld [vmem:[#allocation6 + $0x58] sm:$0xff]
    %v241 = vld [vmem:[#allocation6 + $0x60] sm:$0xff]
    %v242 = vld [vmem:[#allocation6 + $0x68] sm:$0xff]
    %v243 = vld [vmem:[#allocation6 + $0x70] sm:$0xff]
    %v244 = vld [vmem:[#allocation6 + $0x78] sm:$0xff]
    %v245 = vld [vmem:[#allocation6 + $0x80] sm:$0xff]
    %v246 = vld [vmem:[#allocation6 + $0x88] sm:$0xff]
    %v247 = vld [vmem:[#allocation6 + $0x90] sm:$0xff]
    %v248 = vld [vmem:[#allocation6 + $0x98] sm:$0xff]
    %v249 = vld [vmem:[#allocation6 + $0xa0] sm:$0xff]
    %v250 = vld [vmem:[#allocation6 + $0xa8] sm:$0xff]
    %v251 = vld [vmem:[#allocation6 + $0xb0] sm:$0xff]
    %v252 = vld [vmem:[#allocation6 + $0xb8] sm:$0xff]
    %v253 = vld [vmem:[#allocation8] sm:$0x3]
    %v255 = vperm.slane %v253, 0
    %v256 = vperm.slane %v253, 1
    %v260 = vunpack.c.l.b16 %v228
    %v261 = vunpack.c.h.b16 %v228
    %v262 = vpack.c.b16 %v260, %v260
    %v263 = vpack.c.b16 %v261, %v261
    %v289 = vunpack.c.l.b16 %v229
    %v290 = vunpack.c.h.b16 %v229
    %v291 = vunpack.c.l.b16 %v230
    %v292 = vunpack.c.h.b16 %v230
    %v293 = vunpack.c.l.b16 %v231
    %v294 = vunpack.c.h.b16 %v231
    %v295 = vunpack.c.l.b16 %v232
    %v296 = vunpack.c.h.b16 %v232
    %v297 = vunpack.c.l.b16 %v233
    %v298 = vunpack.c.h.b16 %v233
    %v299 = vunpack.c.l.b16 %v234
    %v300 = vunpack.c.h.b16 %v234
    %v301 = vunpack.c.l.b16 %v235
    %v302 = vunpack.c.h.b16 %v235
    %v303 = vunpack.c.l.b16 %v236
    %v304 = vunpack.c.h.b16 %v236
    %v305 = vunpack.c.l.b16 %v237
    %v306 = vunpack.c.h.b16 %v237
    %v307 = vunpack.c.l.b16 %v238
    %v308 = vunpack.c.h.b16 %v238
    %v309 = vunpack.c.l.b16 %v239
    %v310 = vunpack.c.h.b16 %v239
    %v311 = vunpack.c.l.b16 %v240
    %v312 = vunpack.c.h.b16 %v240
    %v313 = vunpack.c.l.b16 %v241
    %v314 = vunpack.c.h.b16 %v241
    %v315 = vunpack.c.l.b16 %v242
    %v316 = vunpack.c.h.b16 %v242
    %v317 = vunpack.c.l.b16 %v243
    %v318 = vunpack.c.h.b16 %v243
    %v319 = vunpack.c.l.b16 %v244
    %v320 = vunpack.c.h.b16 %v244
    %v321 = vunpack.c.l.b16 %v245
    %v322 = vunpack.c.h.b16 %v245
    %v323 = vunpack.c.l.b16 %v246
    %v324 = vunpack.c.h.b16 %v246
    %v325 = vunpack.c.l.b16 %v247
    %v326 = vunpack.c.h.b16 %v247
    %v327 = vunpack.c.l.b16 %v248
    %v328 = vunpack.c.h.b16 %v248
    %v329 = vunpack.c.l.b16 %v249
    %v330 = vunpack.c.h.b16 %v249
    %v331 = vunpack.c.l.b16 %v250
    %v332 = vunpack.c.h.b16 %v250
    %v333 = vunpack.c.l.b16 %v251
    %v334 = vunpack.c.h.b16 %v251
    %v335 = vunpack.c.l.b16 %v252
    %v336 = vunpack.c.h.b16 %v252
    %v337 = vpack.c.b16 %v291, %v289
    %v338 = vpack.c.b16 %v292, %v290
    %v339 = vpack.c.b16 %v295, %v293
    %v340 = vpack.c.b16 %v296, %v294
    %v341 = vpack.c.b16 %v299, %v297
    %v342 = vpack.c.b16 %v300, %v298
    %v343 = vpack.c.b16 %v303, %v301
    %v344 = vpack.c.b16 %v304, %v302
    %v345 = vpack.c.b16 %v307, %v305
    %v346 = vpack.c.b16 %v308, %v306
    %v347 = vpack.c.b16 %v311, %v309
    %v348 = vpack.c.b16 %v312, %v310
    %v349 = vpack.c.b16 %v315, %v313
    %v350 = vpack.c.b16 %v316, %v314
    %v351 = vpack.c.b16 %v319, %v317
    %v352 = vpack.c.b16 %v320, %v318
    %v353 = vpack.c.b16 %v323, %v321
    %v354 = vpack.c.b16 %v324, %v322
    %v355 = vpack.c.b16 %v327, %v325
    %v356 = vpack.c.b16 %v328, %v326
    %v357 = vpack.c.b16 %v331, %v329
    %v358 = vpack.c.b16 %v332, %v330
    %v359 = vpack.c.b16 %v335, %v333
    %v360 = vpack.c.b16 %v336, %v334
    %vm385 = vcmask 523264
    %v387 = vsel %vm385, %v263, 0
    %389 = vmatpush.bf16.msra.mxu0 %v351
    %390 = vmatpush.bf16.msra.mxu0 %v349
    %391 = vmatpush.bf16.msra.mxu0 %v347
    %392 = vmatpush.bf16.msra.mxu0 %v345
    %393 = vmatpush.bf16.msra.mxu0 %v343
    %394 = vmatpush.bf16.msra.mxu0 %v341
    %395 = vmatpush.bf16.msra.mxu0 %v339
    %396 = vmatpush.bf16.msra.mxu0 %v337
    %397 = vmatmul.bf16.gmra.mxu0 %v262
    %v398 = vpop.f32.mrf.mxu0
    %v399 = vadd.f32 %v255, %v398
    %v400 = vpop.f32.mrf.mxu0
    %401 = vdwg.mxu0
    %402 = vmatpush.bf16.msra.mxu0 0
    %403 = vmatpush.bf16.msra.mxu0 0
    %404 = vmatpush.bf16.msra.mxu0 0
    %405 = vmatpush.bf16.msra.mxu0 0
    %406 = vmatpush.bf16.msra.mxu0 %v359
    %407 = vmatpush.bf16.msra.mxu0 %v357
    %408 = vmatpush.bf16.msra.mxu0 %v355
    %409 = vmatpush.bf16.msra.mxu0 %v353
    %410 = vmatmul.bf16.gmra.mxu0 %v387
    %v411 = vpop.f32.mrf.mxu0
    %v412 = vadd.f32 %v399, %v411
    %v413 = vpop.f32.mrf.mxu0
    %414 = vdwg.mxu0
    %415 = vmatpush.bf16.msra.mxu0 %v352
    %416 = vmatpush.bf16.msra.mxu0 %v350
    %417 = vmatpush.bf16.msra.mxu0 %v348
    %418 = vmatpush.bf16.msra.mxu0 %v346
    %419 = vmatpush.bf16.msra.mxu0 %v344
    %420 = vmatpush.bf16.msra.mxu0 %v342
    %421 = vmatpush.bf16.msra.mxu0 %v340
    %422 = vmatpush.bf16.msra.mxu0 %v338
    %423 = vmatmul.bf16.gmra.mxu0 %v262
    %v424 = vpop.f32.mrf.mxu0
    %v425 = vadd.f32 %v256, %v424
    %v426 = vpop.f32.mrf.mxu0
    %427 = vdwg.mxu0
    %428 = vmatpush.bf16.msra.mxu0 0
    %429 = vmatpush.bf16.msra.mxu0 0
    %430 = vmatpush.bf16.msra.mxu0 0
    %431 = vmatpush.bf16.msra.mxu0 0
    %432 = vmatpush.bf16.msra.mxu0 %v360
    %433 = vmatpush.bf16.msra.mxu0 %v358
    %434 = vmatpush.bf16.msra.mxu0 %v356
    %435 = vmatpush.bf16.msra.mxu0 %v354
    %436 = vmatmul.bf16.gmra.mxu0 %v387
    %v437 = vpop.f32.mrf.mxu0
    %v438 = vadd.f32 %v425, %v437
    %v439 = vpop.f32.mrf.mxu0
    %440 = vdwg.mxu0
    %v441 = vmax.f32 %v412, 0.0
    %v442 = vmax.f32 %v438, 0.0
    %v443 = vpack.c.bf16 %v442, %v441
    %444 = vst [vmem:[#allocation2 + $0x8] sm:$0xff] %v443
    %v445 = vld [vmem:[%s0 + $0x4] sm:$0xff]
    %v446 = vld [vmem:[#allocation6] sm:$0xff]
    %v447 = vld [vmem:[#allocation6 + $0x8] sm:$0xff]
    %v448 = vld [vmem:[#allocation6 + $0x10] sm:$0xff]
    %v449 = vld [vmem:[#allocation6 + $0x18] sm:$0xff]
    %v450 = vld [vmem:[#allocation6 + $0x20] sm:$0xff]
    %v451 = vld [vmem:[#allocation6 + $0x28] sm:$0xff]
    %v452 = vld [vmem:[#allocation6 + $0x30] sm:$0xff]
    %v453 = vld [vmem:[#allocation6 + $0x38] sm:$0xff]
    %v454 = vld [vmem:[#allocation6 + $0x40] sm:$0xff]
    %v455 = vld [vmem:[#allocation6 + $0x48] sm:$0xff]
    %v456 = vld [vmem:[#allocation6 + $0x50] sm:$0xff]
    %v457 = vld [vmem:[#allocation6 + $0x58] sm:$0xff]
    %v458 = vld [vmem:[#allocation6 + $0x60] sm:$0xff]
    %v459 = vld [vmem:[#allocation6 + $0x68] sm:$0xff]
    %v460 = vld [vmem:[#allocation6 + $0x70] sm:$0xff]
    %v461 = vld [vmem:[#allocation6 + $0x78] sm:$0xff]
    %v462 = vld [vmem:[#allocation6 + $0x80] sm:$0xff]
    %v463 = vld [vmem:[#allocation6 + $0x88] sm:$0xff]
    %v464 = vld [vmem:[#allocation6 + $0x90] sm:$0xff]
    %v465 = vld [vmem:[#allocation6 + $0x98] sm:$0xff]
    %v466 = vld [vmem:[#allocation6 + $0xa0] sm:$0xff]
    %v467 = vld [vmem:[#allocation6 + $0xa8] sm:$0xff]
    %v468 = vld [vmem:[#allocation6 + $0xb0] sm:$0xff]
    %v469 = vld [vmem:[#allocation6 + $0xb8] sm:$0xff]
    %v470 = vld [vmem:[#allocation8] sm:$0x3]
    %v472 = vperm.slane %v470, 0
    %v473 = vperm.slane %v470, 1
    %v477 = vunpack.c.l.b16 %v445
    %v478 = vunpack.c.h.b16 %v445
    %v479 = vpack.c.b16 %v477, %v477
    %v480 = vpack.c.b16 %v478, %v478
    %v506 = vunpack.c.l.b16 %v446
    %v507 = vunpack.c.h.b16 %v446
    %v508 = vunpack.c.l.b16 %v447
    %v509 = vunpack.c.h.b16 %v447
    %v510 = vunpack.c.l.b16 %v448
    %v511 = vunpack.c.h.b16 %v448
    %v512 = vunpack.c.l.b16 %v449
    %v513 = vunpack.c.h.b16 %v449
    %v514 = vunpack.c.l.b16 %v450
    %v515 = vunpack.c.h.b16 %v450
    %v516 = vunpack.c.l.b16 %v451
    %v517 = vunpack.c.h.b16 %v451
    %v518 = vunpack.c.l.b16 %v452
    %v519 = vunpack.c.h.b16 %v452
    %v520 = vunpack.c.l.b16 %v453
    %v521 = vunpack.c.h.b16 %v453
    %v522 = vunpack.c.l.b16 %v454
    %v523 = vunpack.c.h.b16 %v454
    %v524 = vunpack.c.l.b16 %v455
    %v525 = vunpack.c.h.b16 %v455
    %v526 = vunpack.c.l.b16 %v456
    %v527 = vunpack.c.h.b16 %v456
    %v528 = vunpack.c.l.b16 %v457
    %v529 = vunpack.c.h.b16 %v457
    %v530 = vunpack.c.l.b16 %v458
    %v531 = vunpack.c.h.b16 %v458
    %v532 = vunpack.c.l.b16 %v459
    %v533 = vunpack.c.h.b16 %v459
    %v534 = vunpack.c.l.b16 %v460
    %v535 = vunpack.c.h.b16 %v460
    %v536 = vunpack.c.l.b16 %v461
    %v537 = vunpack.c.h.b16 %v461
    %v538 = vunpack.c.l.b16 %v462
    %v539 = vunpack.c.h.b16 %v462
    %v540 = vunpack.c.l.b16 %v463
    %v541 = vunpack.c.h.b16 %v463
    %v542 = vunpack.c.l.b16 %v464
    %v543 = vunpack.c.h.b16 %v464
    %v544 = vunpack.c.l.b16 %v465
    %v545 = vunpack.c.h.b16 %v465
    %v546 = vunpack.c.l.b16 %v466
    %v547 = vunpack.c.h.b16 %v466
    %v548 = vunpack.c.l.b16 %v467
    %v549 = vunpack.c.h.b16 %v467
    %v550 = vunpack.c.l.b16 %v468
    %v551 = vunpack.c.h.b16 %v468
    %v552 = vunpack.c.l.b16 %v469
    %v553 = vunpack.c.h.b16 %v469
    %v554 = vpack.c.b16 %v508, %v506
    %v555 = vpack.c.b16 %v509, %v507
    %v556 = vpack.c.b16 %v512, %v510
    %v557 = vpack.c.b16 %v513, %v511
    %v558 = vpack.c.b16 %v516, %v514
    %v559 = vpack.c.b16 %v517, %v515
    %v560 = vpack.c.b16 %v520, %v518
    %v561 = vpack.c.b16 %v521, %v519
    %v562 = vpack.c.b16 %v524, %v522
    %v563 = vpack.c.b16 %v525, %v523
    %v564 = vpack.c.b16 %v528, %v526
    %v565 = vpack.c.b16 %v529, %v527
    %v566 = vpack.c.b16 %v532, %v530
    %v567 = vpack.c.b16 %v533, %v531
    %v568 = vpack.c.b16 %v536, %v534
    %v569 = vpack.c.b16 %v537, %v535
    %v570 = vpack.c.b16 %v540, %v538
    %v571 = vpack.c.b16 %v541, %v539
    %v572 = vpack.c.b16 %v544, %v542
    %v573 = vpack.c.b16 %v545, %v543
    %v574 = vpack.c.b16 %v548, %v546
    %v575 = vpack.c.b16 %v549, %v547
    %v576 = vpack.c.b16 %v552, %v550
    %v577 = vpack.c.b16 %v553, %v551
    %v603 = vsel %vm385, %v480, 0
    %605 = vmatpush.bf16.msra.mxu0 %v568
    %606 = vmatpush.bf16.msra.mxu0 %v566
    %607 = vmatpush.bf16.msra.mxu0 %v564
    %608 = vmatpush.bf16.msra.mxu0 %v562
    %609 = vmatpush.bf16.msra.mxu0 %v560
    %610 = vmatpush.bf16.msra.mxu0 %v558
    %611 = vmatpush.bf16.msra.mxu0 %v556
    %612 = vmatpush.bf16.msra.mxu0 %v554
    %613 = vmatmul.bf16.gmra.mxu0 %v479
    %v614 = vpop.f32.mrf.mxu0
    %v615 = vadd.f32 %v472, %v614
    %v616 = vpop.f32.mrf.mxu0
    %617 = vdwg.mxu0
    %618 = vmatpush.bf16.msra.mxu0 0
    %619 = vmatpush.bf16.msra.mxu0 0
    %620 = vmatpush.bf16.msra.mxu0 0
    %621 = vmatpush.bf16.msra.mxu0 0
    %622 = vmatpush.bf16.msra.mxu0 %v576
    %623 = vmatpush.bf16.msra.mxu0 %v574
    %624 = vmatpush.bf16.msra.mxu0 %v572
    %625 = vmatpush.bf16.msra.mxu0 %v570
    %626 = vmatmul.bf16.gmra.mxu0 %v603
    %v627 = vpop.f32.mrf.mxu0
    %v628 = vadd.f32 %v615, %v627
    %v629 = vpop.f32.mrf.mxu0
    %630 = vdwg.mxu0
    %631 = vmatpush.bf16.msra.mxu0 %v569
    %632 = vmatpush.bf16.msra.mxu0 %v567
    %633 = vmatpush.bf16.msra.mxu0 %v565
    %634 = vmatpush.bf16.msra.mxu0 %v563
    %635 = vmatpush.bf16.msra.mxu0 %v561
    %636 = vmatpush.bf16.msra.mxu0 %v559
    %637 = vmatpush.bf16.msra.mxu0 %v557
    %638 = vmatpush.bf16.msra.mxu0 %v555
    %639 = vmatmul.bf16.gmra.mxu0 %v479
    %v640 = vpop.f32.mrf.mxu0
    %v641 = vadd.f32 %v473, %v640
    %v642 = vpop.f32.mrf.mxu0
    %643 = vdwg.mxu0
    %644 = vmatpush.bf16.msra.mxu0 0
    %645 = vmatpush.bf16.msra.mxu0 0
    %646 = vmatpush.bf16.msra.mxu0 0
    %647 = vmatpush.bf16.msra.mxu0 0
    %648 = vmatpush.bf16.msra.mxu0 %v577
    %649 = vmatpush.bf16.msra.mxu0 %v575
    %650 = vmatpush.bf16.msra.mxu0 %v573
    %651 = vmatpush.bf16.msra.mxu0 %v571
    %652 = vmatmul.bf16.gmra.mxu0 %v603
    %v653 = vpop.f32.mrf.mxu0
    %v654 = vadd.f32 %v641, %v653
    %v655 = vpop.f32.mrf.mxu0
    %656 = vdwg.mxu0
    %v657 = vmax.f32 %v628, 0.0
    %v658 = vmax.f32 %v654, 0.0
    %v659 = vpack.c.bf16 %v658, %v657
    %660 = vst [vmem:[#allocation2 + $0x10] sm:$0xff] %v659
    %v661 = vld [vmem:[%s0 + $0x8] sm:$0xff]
    %v662 = vld [vmem:[#allocation6] sm:$0xff]
    %v663 = vld [vmem:[#allocation6 + $0x8] sm:$0xff]
    %v664 = vld [vmem:[#allocation6 + $0x10] sm:$0xff]
    %v665 = vld [vmem:[#allocation6 + $0x18] sm:$0xff]
    %v666 = vld [vmem:[#allocation6 + $0x20] sm:$0xff]
    %v667 = vld [vmem:[#allocation6 + $0x28] sm:$0xff]
    %v668 = vld [vmem:[#allocation6 + $0x30] sm:$0xff]
    %v669 = vld [vmem:[#allocation6 + $0x38] sm:$0xff]
    %v670 = vld [vmem:[#allocation6 + $0x40] sm:$0xff]
    %v671 = vld [vmem:[#allocation6 + $0x48] sm:$0xff]
    %v672 = vld [vmem:[#allocation6 + $0x50] sm:$0xff]
    %v673 = vld [vmem:[#allocation6 + $0x58] sm:$0xff]
    %v674 = vld [vmem:[#allocation6 + $0x60] sm:$0xff]
    %v675 = vld [vmem:[#allocation6 + $0x68] sm:$0xff]
    %v676 = vld [vmem:[#allocation6 + $0x70] sm:$0xff]
    %v677 = vld [vmem:[#allocation6 + $0x78] sm:$0xff]
    %v678 = vld [vmem:[#allocation6 + $0x80] sm:$0xff]
    %v679 = vld [vmem:[#allocation6 + $0x88] sm:$0xff]
    %v680 = vld [vmem:[#allocation6 + $0x90] sm:$0xff]
    %v681 = vld [vmem:[#allocation6 + $0x98] sm:$0xff]
    %v682 = vld [vmem:[#allocation6 + $0xa0] sm:$0xff]
    %v683 = vld [vmem:[#allocation6 + $0xa8] sm:$0xff]
    %v684 = vld [vmem:[#allocation6 + $0xb0] sm:$0xff]
    %v685 = vld [vmem:[#allocation6 + $0xb8] sm:$0xff]
    %v686 = vld [vmem:[#allocation8] sm:$0x3]
    %v688 = vperm.slane %v686, 0
    %v689 = vperm.slane %v686, 1
    %v693 = vunpack.c.l.b16 %v661
    %v694 = vunpack.c.h.b16 %v661
    %v695 = vpack.c.b16 %v693, %v693
    %v696 = vpack.c.b16 %v694, %v694
    %v722 = vunpack.c.l.b16 %v662
    %v723 = vunpack.c.h.b16 %v662
    %v724 = vunpack.c.l.b16 %v663
    %v725 = vunpack.c.h.b16 %v663
    %v726 = vunpack.c.l.b16 %v664
    %v727 = vunpack.c.h.b16 %v664
    %v728 = vunpack.c.l.b16 %v665
    %v729 = vunpack.c.h.b16 %v665
    %v730 = vunpack.c.l.b16 %v666
    %v731 = vunpack.c.h.b16 %v666
    %v732 = vunpack.c.l.b16 %v667
    %v733 = vunpack.c.h.b16 %v667
    %v734 = vunpack.c.l.b16 %v668
    %v735 = vunpack.c.h.b16 %v668
    %v736 = vunpack.c.l.b16 %v669
    %v737 = vunpack.c.h.b16 %v669
    %v738 = vunpack.c.l.b16 %v670
    %v739 = vunpack.c.h.b16 %v670
    %v740 = vunpack.c.l.b16 %v671
    %v741 = vunpack.c.h.b16 %v671
    %v742 = vunpack.c.l.b16 %v672
    %v743 = vunpack.c.h.b16 %v672
    %v744 = vunpack.c.l.b16 %v673
    %v745 = vunpack.c.h.b16 %v673
    %v746 = vunpack.c.l.b16 %v674
    %v747 = vunpack.c.h.b16 %v674
    %v748 = vunpack.c.l.b16 %v675
    %v749 = vunpack.c.h.b16 %v675
    %v750 = vunpack.c.l.b16 %v676
    %v751 = vunpack.c.h.b16 %v676
    %v752 = vunpack.c.l.b16 %v677
    %v753 = vunpack.c.h.b16 %v677
    %v754 = vunpack.c.l.b16 %v678
    %v755 = vunpack.c.h.b16 %v678
    %v756 = vunpack.c.l.b16 %v679
    %v757 = vunpack.c.h.b16 %v679
    %v758 = vunpack.c.l.b16 %v680
    %v759 = vunpack.c.h.b16 %v680
    %v760 = vunpack.c.l.b16 %v681
    %v761 = vunpack.c.h.b16 %v681
    %v762 = vunpack.c.l.b16 %v682
    %v763 = vunpack.c.h.b16 %v682
    %v764 = vunpack.c.l.b16 %v683
    %v765 = vunpack.c.h.b16 %v683
    %v766 = vunpack.c.l.b16 %v684
    %v767 = vunpack.c.h.b16 %v684
    %v768 = vunpack.c.l.b16 %v685
    %v769 = vunpack.c.h.b16 %v685
    %v770 = vpack.c.b16 %v724, %v722
    %v771 = vpack.c.b16 %v725, %v723
    %v772 = vpack.c.b16 %v728, %v726
    %v773 = vpack.c.b16 %v729, %v727
    %v774 = vpack.c.b16 %v732, %v730
    %v775 = vpack.c.b16 %v733, %v731
    %v776 = vpack.c.b16 %v736, %v734
    %v777 = vpack.c.b16 %v737, %v735
    %v778 = vpack.c.b16 %v740, %v738
    %v779 = vpack.c.b16 %v741, %v739
    %v780 = vpack.c.b16 %v744, %v742
    %v781 = vpack.c.b16 %v745, %v743
    %v782 = vpack.c.b16 %v748, %v746
    %v783 = vpack.c.b16 %v749, %v747
    %v784 = vpack.c.b16 %v752, %v750
    %v785 = vpack.c.b16 %v753, %v751
    %v786 = vpack.c.b16 %v756, %v754
    %v787 = vpack.c.b16 %v757, %v755
    %v788 = vpack.c.b16 %v760, %v758
    %v789 = vpack.c.b16 %v761, %v759
    %v790 = vpack.c.b16 %v764, %v762
    %v791 = vpack.c.b16 %v765, %v763
    %v792 = vpack.c.b16 %v768, %v766
    %v793 = vpack.c.b16 %v769, %v767
    %v819 = vsel %vm385, %v696, 0
    %821 = vmatpush.bf16.msra.mxu0 %v784
    %822 = vmatpush.bf16.msra.mxu0 %v782
    %823 = vmatpush.bf16.msra.mxu0 %v780
    %824 = vmatpush.bf16.msra.mxu0 %v778
    %825 = vmatpush.bf16.msra.mxu0 %v776
    %826 = vmatpush.bf16.msra.mxu0 %v774
    %827 = vmatpush.bf16.msra.mxu0 %v772
    %828 = vmatpush.bf16.msra.mxu0 %v770
    %829 = vmatmul.bf16.gmra.mxu0 %v695
    %v830 = vpop.f32.mrf.mxu0
    %v831 = vadd.f32 %v688, %v830
    %v832 = vpop.f32.mrf.mxu0
    %833 = vdwg.mxu0
    %834 = vmatpush.bf16.msra.mxu0 0
    %835 = vmatpush.bf16.msra.mxu0 0
    %836 = vmatpush.bf16.msra.mxu0 0
    %837 = vmatpush.bf16.msra.mxu0 0
    %838 = vmatpush.bf16.msra.mxu0 %v792
    %839 = vmatpush.bf16.msra.mxu0 %v790
    %840 = vmatpush.bf16.msra.mxu0 %v788
    %841 = vmatpush.bf16.msra.mxu0 %v786
    %842 = vmatmul.bf16.gmra.mxu0 %v819
    %v843 = vpop.f32.mrf.mxu0
    %v844 = vadd.f32 %v831, %v843
    %v845 = vpop.f32.mrf.mxu0
    %846 = vdwg.mxu0
    %847 = vmatpush.bf16.msra.mxu0 %v785
    %848 = vmatpush.bf16.msra.mxu0 %v783
    %849 = vmatpush.bf16.msra.mxu0 %v781
    %850 = vmatpush.bf16.msra.mxu0 %v779
    %851 = vmatpush.bf16.msra.mxu0 %v777
    %852 = vmatpush.bf16.msra.mxu0 %v775
    %853 = vmatpush.bf16.msra.mxu0 %v773
    %854 = vmatpush.bf16.msra.mxu0 %v771
    %855 = vmatmul.bf16.gmra.mxu0 %v695
    %v856 = vpop.f32.mrf.mxu0
    %v857 = vadd.f32 %v689, %v856
    %v858 = vpop.f32.mrf.mxu0
    %859 = vdwg.mxu0
    %860 = vmatpush.bf16.msra.mxu0 0
    %861 = vmatpush.bf16.msra.mxu0 0
    %862 = vmatpush.bf16.msra.mxu0 0
    %863 = vmatpush.bf16.msra.mxu0 0
    %864 = vmatpush.bf16.msra.mxu0 %v793
    %865 = vmatpush.bf16.msra.mxu0 %v791
    %866 = vmatpush.bf16.msra.mxu0 %v789
    %867 = vmatpush.bf16.msra.mxu0 %v787
    %868 = vmatmul.bf16.gmra.mxu0 %v819
    %v869 = vpop.f32.mrf.mxu0
    %v870 = vadd.f32 %v857, %v869
    %v871 = vpop.f32.mrf.mxu0
    %872 = vdwg.mxu0
    %v873 = vmax.f32 %v844, 0.0
    %v874 = vmax.f32 %v870, 0.0
    %v875 = vpack.c.bf16 %v874, %v873
    %876 = vst [vmem:[#allocation2 + $0x18] sm:$0xff] %v875
    %v877 = vld [vmem:[%s0 + $0xc] sm:$0xff]
    %v878 = vld [vmem:[#allocation6] sm:$0xff]
    %v879 = vld [vmem:[#allocation6 + $0x8] sm:$0xff]
    %v880 = vld [vmem:[#allocation6 + $0x10] sm:$0xff]
    %v881 = vld [vmem:[#allocation6 + $0x18] sm:$0xff]
    %v882 = vld [vmem:[#allocation6 + $0x20] sm:$0xff]
    %v883 = vld [vmem:[#allocation6 + $0x28] sm:$0xff]
    %v884 = vld [vmem:[#allocation6 + $0x30] sm:$0xff]
    %v885 = vld [vmem:[#allocation6 + $0x38] sm:$0xff]
    %v886 = vld [vmem:[#allocation6 + $0x40] sm:$0xff]
    %v887 = vld [vmem:[#allocation6 + $0x48] sm:$0xff]
    %v888 = vld [vmem:[#allocation6 + $0x50] sm:$0xff]
    %v889 = vld [vmem:[#allocation6 + $0x58] sm:$0xff]
    %v890 = vld [vmem:[#allocation6 + $0x60] sm:$0xff]
    %v891 = vld [vmem:[#allocation6 + $0x68] sm:$0xff]
    %v892 = vld [vmem:[#allocation6 + $0x70] sm:$0xff]
    %v893 = vld [vmem:[#allocation6 + $0x78] sm:$0xff]
    %v894 = vld [vmem:[#allocation6 + $0x80] sm:$0xff]
    %v895 = vld [vmem:[#allocation6 + $0x88] sm:$0xff]
    %v896 = vld [vmem:[#allocation6 + $0x90] sm:$0xff]
    %v897 = vld [vmem:[#allocation6 + $0x98] sm:$0xff]
    %v898 = vld [vmem:[#allocation6 + $0xa0] sm:$0xff]
    %v899 = vld [vmem:[#allocation6 + $0xa8] sm:$0xff]
    %v900 = vld [vmem:[#allocation6 + $0xb0] sm:$0xff]
    %v901 = vld [vmem:[#allocation6 + $0xb8] sm:$0xff]
    %v902 = vld [vmem:[#allocation8] sm:$0x3]
    %v904 = vperm.slane %v902, 0
    %v905 = vperm.slane %v902, 1
    %v909 = vunpack.c.l.b16 %v877
    %v910 = vunpack.c.h.b16 %v877
    %v911 = vpack.c.b16 %v909, %v909
    %v912 = vpack.c.b16 %v910, %v910
    %v938 = vunpack.c.l.b16 %v878
    %v939 = vunpack.c.h.b16 %v878
    %v940 = vunpack.c.l.b16 %v879
    %v941 = vunpack.c.h.b16 %v879
    %v942 = vunpack.c.l.b16 %v880
    %v943 = vunpack.c.h.b16 %v880
    %v944 = vunpack.c.l.b16 %v881
    %v945 = vunpack.c.h.b16 %v881
    %v946 = vunpack.c.l.b16 %v882
    %v947 = vunpack.c.h.b16 %v882
    %v948 = vunpack.c.l.b16 %v883
    %v949 = vunpack.c.h.b16 %v883
    %v950 = vunpack.c.l.b16 %v884
    %v951 = vunpack.c.h.b16 %v884
    %v952 = vunpack.c.l.b16 %v885
    %v953 = vunpack.c.h.b16 %v885
    %v954 = vunpack.c.l.b16 %v886
    %v955 = vunpack.c.h.b16 %v886
    %v956 = vunpack.c.l.b16 %v887
    %v957 = vunpack.c.h.b16 %v887
    %v958 = vunpack.c.l.b16 %v888
    %v959 = vunpack.c.h.b16 %v888
    %v960 = vunpack.c.l.b16 %v889
    %v961 = vunpack.c.h.b16 %v889
    %v962 = vunpack.c.l.b16 %v890
    %v963 = vunpack.c.h.b16 %v890
    %v964 = vunpack.c.l.b16 %v891
    %v965 = vunpack.c.h.b16 %v891
    %v966 = vunpack.c.l.b16 %v892
    %v967 = vunpack.c.h.b16 %v892
    %v968 = vunpack.c.l.b16 %v893
    %v969 = vunpack.c.h.b16 %v893
    %v970 = vunpack.c.l.b16 %v894
    %v971 = vunpack.c.h.b16 %v894
    %v972 = vunpack.c.l.b16 %v895
    %v973 = vunpack.c.h.b16 %v895
    %v974 = vunpack.c.l.b16 %v896
    %v975 = vunpack.c.h.b16 %v896
    %v976 = vunpack.c.l.b16 %v897
    %v977 = vunpack.c.h.b16 %v897
    %v978 = vunpack.c.l.b16 %v898
    %v979 = vunpack.c.h.b16 %v898
    %v980 = vunpack.c.l.b16 %v899
    %v981 = vunpack.c.h.b16 %v899
    %v982 = vunpack.c.l.b16 %v900
    %v983 = vunpack.c.h.b16 %v900
    %v984 = vunpack.c.l.b16 %v901
    %v985 = vunpack.c.h.b16 %v901
    %v986 = vpack.c.b16 %v940, %v938
    %v987 = vpack.c.b16 %v941, %v939
    %v988 = vpack.c.b16 %v944, %v942
    %v989 = vpack.c.b16 %v945, %v943
    %v990 = vpack.c.b16 %v948, %v946
    %v991 = vpack.c.b16 %v949, %v947
    %v992 = vpack.c.b16 %v952, %v950
    %v993 = vpack.c.b16 %v953, %v951
    %v994 = vpack.c.b16 %v956, %v954
    %v995 = vpack.c.b16 %v957, %v955
    %v996 = vpack.c.b16 %v960, %v958
    %v997 = vpack.c.b16 %v961, %v959
    %v998 = vpack.c.b16 %v964, %v962
    %v999 = vpack.c.b16 %v965, %v963
    %v1000 = vpack.c.b16 %v968, %v966
    %v1001 = vpack.c.b16 %v969, %v967
    %v1002 = vpack.c.b16 %v972, %v970
    %v1003 = vpack.c.b16 %v973, %v971
    %v1004 = vpack.c.b16 %v976, %v974
    %v1005 = vpack.c.b16 %v977, %v975
    %v1006 = vpack.c.b16 %v980, %v978
    %v1007 = vpack.c.b16 %v981, %v979
    %v1008 = vpack.c.b16 %v984, %v982
    %v1009 = vpack.c.b16 %v985, %v983
    %v1035 = vsel %vm385, %v912, 0
    %1037 = vmatpush.bf16.msra.mxu0 %v1000
    %1038 = vmatpush.bf16.msra.mxu0 %v998
    %1039 = vmatpush.bf16.msra.mxu0 %v996
    %1040 = vmatpush.bf16.msra.mxu0 %v994
    %1041 = vmatpush.bf16.msra.mxu0 %v992
    %1042 = vmatpush.bf16.msra.mxu0 %v990
    %1043 = vmatpush.bf16.msra.mxu0 %v988
    %1044 = vmatpush.bf16.msra.mxu0 %v986
    %1045 = vmatmul.bf16.gmra.mxu0 %v911
    %v1046 = vpop.f32.mrf.mxu0
    %v1047 = vadd.f32 %v904, %v1046
    %v1048 = vpop.f32.mrf.mxu0
    %1049 = vdwg.mxu0
    %1050 = vmatpush.bf16.msra.mxu0 0
    %1051 = vmatpush.bf16.msra.mxu0 0
    %1052 = vmatpush.bf16.msra.mxu0 0
    %1053 = vmatpush.bf16.msra.mxu0 0
    %1054 = vmatpush.bf16.msra.mxu0 %v1008
    %1055 = vmatpush.bf16.msra.mxu0 %v1006
    %1056 = vmatpush.bf16.msra.mxu0 %v1004
    %1057 = vmatpush.bf16.msra.mxu0 %v1002
    %1058 = vmatmul.bf16.gmra.mxu0 %v1035
    %v1059 = vpop.f32.mrf.mxu0
    %v1060 = vadd.f32 %v1047, %v1059
    %v1061 = vpop.f32.mrf.mxu0
    %1062 = vdwg.mxu0
    %1063 = vmatpush.bf16.msra.mxu0 %v1001
    %1064 = vmatpush.bf16.msra.mxu0 %v999
    %1065 = vmatpush.bf16.msra.mxu0 %v997
    %1066 = vmatpush.bf16.msra.mxu0 %v995
    %1067 = vmatpush.bf16.msra.mxu0 %v993
    %1068 = vmatpush.bf16.msra.mxu0 %v991
    %1069 = vmatpush.bf16.msra.mxu0 %v989
    %1070 = vmatpush.bf16.msra.mxu0 %v987
    %1071 = vmatmul.bf16.gmra.mxu0 %v911
    %v1072 = vpop.f32.mrf.mxu0
    %v1073 = vadd.f32 %v905, %v1072
    %v1074 = vpop.f32.mrf.mxu0
    %1075 = vdwg.mxu0
    %1076 = vmatpush.bf16.msra.mxu0 0
    %1077 = vmatpush.bf16.msra.mxu0 0
    %1078 = vmatpush.bf16.msra.mxu0 0
    %1079 = vmatpush.bf16.msra.mxu0 0
    %1080 = vmatpush.bf16.msra.mxu0 %v1009
    %1081 = vmatpush.bf16.msra.mxu0 %v1007
    %1082 = vmatpush.bf16.msra.mxu0 %v1005
    %1083 = vmatpush.bf16.msra.mxu0 %v1003
    %1084 = vmatmul.bf16.gmra.mxu0 %v1035
    %v1085 = vpop.f32.mrf.mxu0
    %v1086 = vadd.f32 %v1073, %v1085
    %v1087 = vpop.f32.mrf.mxu0
    %1088 = vdwg.mxu0
    %v1089 = vmax.f32 %v1060, 0.0
    %v1090 = vmax.f32 %v1086, 0.0
    %v1091 = vpack.c.bf16 %v1090, %v1089
    %1092 = vst [vmem:[#allocation2 + $0x20] sm:$0xff] %v1091
    %v1093 = vld [vmem:[%s0 + $0x10] sm:$0xff]
    %v1094 = vld [vmem:[#allocation6] sm:$0xff]
    %v1095 = vld [vmem:[#allocation6 + $0x8] sm:$0xff]
    %v1096 = vld [vmem:[#allocation6 + $0x10] sm:$0xff]
    %v1097 = vld [vmem:[#allocation6 + $0x18] sm:$0xff]
    %v1098 = vld [vmem:[#allocation6 + $0x20] sm:$0xff]
    %v1099 = vld [vmem:[#allocation6 + $0x28] sm:$0xff]
    %v1100 = vld [vmem:[#allocation6 + $0x30] sm:$0xff]
    %v1101 = vld [vmem:[#allocation6 + $0x38] sm:$0xff]
    %v1102 = vld [vmem:[#allocation6 + $0x40] sm:$0xff]
    %v1103 = vld [vmem:[#allocation6 + $0x48] sm:$0xff]
    %v1104 = vld [vmem:[#allocation6 + $0x50] sm:$0xff]
    %v1105 = vld [vmem:[#allocation6 + $0x58] sm:$0xff]
    %v1106 = vld [vmem:[#allocation6 + $0x60] sm:$0xff]
    %v1107 = vld [vmem:[#allocation6 + $0x68] sm:$0xff]
    %v1108 = vld [vmem:[#allocation6 + $0x70] sm:$0xff]
    %v1109 = vld [vmem:[#allocation6 + $0x78] sm:$0xff]
    %v1110 = vld [vmem:[#allocation6 + $0x80] sm:$0xff]
    %v1111 = vld [vmem:[#allocation6 + $0x88] sm:$0xff]
    %v1112 = vld [vmem:[#allocation6 + $0x90] sm:$0xff]
    %v1113 = vld [vmem:[#allocation6 + $0x98] sm:$0xff]
    %v1114 = vld [vmem:[#allocation6 + $0xa0] sm:$0xff]
    %v1115 = vld [vmem:[#allocation6 + $0xa8] sm:$0xff]
    %v1116 = vld [vmem:[#allocation6 + $0xb0] sm:$0xff]
    %v1117 = vld [vmem:[#allocation6 + $0xb8] sm:$0xff]
    %v1118 = vld [vmem:[#allocation8] sm:$0x3]
    %v1120 = vperm.slane %v1118, 0
    %v1121 = vperm.slane %v1118, 1
    %v1125 = vunpack.c.l.b16 %v1093
    %v1126 = vunpack.c.h.b16 %v1093
    %v1127 = vpack.c.b16 %v1125, %v1125
    %v1128 = vpack.c.b16 %v1126, %v1126
    %v1154 = vunpack.c.l.b16 %v1094
    %v1155 = vunpack.c.h.b16 %v1094
    %v1156 = vunpack.c.l.b16 %v1095
    %v1157 = vunpack.c.h.b16 %v1095
    %v1158 = vunpack.c.l.b16 %v1096
    %v1159 = vunpack.c.h.b16 %v1096
    %v1160 = vunpack.c.l.b16 %v1097
    %v1161 = vunpack.c.h.b16 %v1097
    %v1162 = vunpack.c.l.b16 %v1098
    %v1163 = vunpack.c.h.b16 %v1098
    %v1164 = vunpack.c.l.b16 %v1099
    %v1165 = vunpack.c.h.b16 %v1099
    %v1166 = vunpack.c.l.b16 %v1100
    %v1167 = vunpack.c.h.b16 %v1100
    %v1168 = vunpack.c.l.b16 %v1101
    %v1169 = vunpack.c.h.b16 %v1101
    %v1170 = vunpack.c.l.b16 %v1102
    %v1171 = vunpack.c.h.b16 %v1102
    %v1172 = vunpack.c.l.b16 %v1103
    %v1173 = vunpack.c.h.b16 %v1103
    %v1174 = vunpack.c.l.b16 %v1104
    %v1175 = vunpack.c.h.b16 %v1104
    %v1176 = vunpack.c.l.b16 %v1105
    %v1177 = vunpack.c.h.b16 %v1105
    %v1178 = vunpack.c.l.b16 %v1106
    %v1179 = vunpack.c.h.b16 %v1106
    %v1180 = vunpack.c.l.b16 %v1107
    %v1181 = vunpack.c.h.b16 %v1107
    %v1182 = vunpack.c.l.b16 %v1108
    %v1183 = vunpack.c.h.b16 %v1108
    %v1184 = vunpack.c.l.b16 %v1109
    %v1185 = vunpack.c.h.b16 %v1109
    %v1186 = vunpack.c.l.b16 %v1110
    %v1187 = vunpack.c.h.b16 %v1110
    %v1188 = vunpack.c.l.b16 %v1111
    %v1189 = vunpack.c.h.b16 %v1111
    %v1190 = vunpack.c.l.b16 %v1112
    %v1191 = vunpack.c.h.b16 %v1112
    %v1192 = vunpack.c.l.b16 %v1113
    %v1193 = vunpack.c.h.b16 %v1113
    %v1194 = vunpack.c.l.b16 %v1114
    %v1195 = vunpack.c.h.b16 %v1114
    %v1196 = vunpack.c.l.b16 %v1115
    %v1197 = vunpack.c.h.b16 %v1115
    %v1198 = vunpack.c.l.b16 %v1116
    %v1199 = vunpack.c.h.b16 %v1116
    %v1200 = vunpack.c.l.b16 %v1117
    %v1201 = vunpack.c.h.b16 %v1117
    %v1202 = vpack.c.b16 %v1156, %v1154
    %v1203 = vpack.c.b16 %v1157, %v1155
    %v1204 = vpack.c.b16 %v1160, %v1158
    %v1205 = vpack.c.b16 %v1161, %v1159
    %v1206 = vpack.c.b16 %v1164, %v1162
    %v1207 = vpack.c.b16 %v1165, %v1163
    %v1208 = vpack.c.b16 %v1168, %v1166
    %v1209 = vpack.c.b16 %v1169, %v1167
    %v1210 = vpack.c.b16 %v1172, %v1170
    %v1211 = vpack.c.b16 %v1173, %v1171
    %v1212 = vpack.c.b16 %v1176, %v1174
    %v1213 = vpack.c.b16 %v1177, %v1175
    %v1214 = vpack.c.b16 %v1180, %v1178
    %v1215 = vpack.c.b16 %v1181, %v1179
    %v1216 = vpack.c.b16 %v1184, %v1182
    %v1217 = vpack.c.b16 %v1185, %v1183
    %v1218 = vpack.c.b16 %v1188, %v1186
    %v1219 = vpack.c.b16 %v1189, %v1187
    %v1220 = vpack.c.b16 %v1192, %v1190
    %v1221 = vpack.c.b16 %v1193, %v1191
    %v1222 = vpack.c.b16 %v1196, %v1194
    %v1223 = vpack.c.b16 %v1197, %v1195
    %v1224 = vpack.c.b16 %v1200, %v1198
    %v1225 = vpack.c.b16 %v1201, %v1199
    %v1251 = vsel %vm385, %v1128, 0
    %1253 = vmatpush.bf16.msra.mxu0 %v1216
    %1254 = vmatpush.bf16.msra.mxu0 %v1214
    %1255 = vmatpush.bf16.msra.mxu0 %v1212
    %1256 = vmatpush.bf16.msra.mxu0 %v1210
    %1257 = vmatpush.bf16.msra.mxu0 %v1208
    %1258 = vmatpush.bf16.msra.mxu0 %v1206
    %1259 = vmatpush.bf16.msra.mxu0 %v1204
    %1260 = vmatpush.bf16.msra.mxu0 %v1202
    %1261 = vmatmul.bf16.gmra.mxu0 %v1127
    %v1262 = vpop.f32.mrf.mxu0
    %v1263 = vadd.f32 %v1120, %v1262
    %v1264 = vpop.f32.mrf.mxu0
    %1265 = vdwg.mxu0
    %1266 = vmatpush.bf16.msra.mxu0 0
    %1267 = vmatpush.bf16.msra.mxu0 0
    %1268 = vmatpush.bf16.msra.mxu0 0
    %1269 = vmatpush.bf16.msra.mxu0 0
    %1270 = vmatpush.bf16.msra.mxu0 %v1224
    %1271 = vmatpush.bf16.msra.mxu0 %v1222
    %1272 = vmatpush.bf16.msra.mxu0 %v1220
    %1273 = vmatpush.bf16.msra.mxu0 %v1218
    %1274 = vmatmul.bf16.gmra.mxu0 %v1251
    %v1275 = vpop.f32.mrf.mxu0
    %v1276 = vadd.f32 %v1263, %v1275
    %v1277 = vpop.f32.mrf.mxu0
    %1278 = vdwg.mxu0
    %1279 = vmatpush.bf16.msra.mxu0 %v1217
    %1280 = vmatpush.bf16.msra.mxu0 %v1215
    %1281 = vmatpush.bf16.msra.mxu0 %v1213
    %1282 = vmatpush.bf16.msra.mxu0 %v1211
    %1283 = vmatpush.bf16.msra.mxu0 %v1209
    %1284 = vmatpush.bf16.msra.mxu0 %v1207
    %1285 = vmatpush.bf16.msra.mxu0 %v1205
    %1286 = vmatpush.bf16.msra.mxu0 %v1203
    %1287 = vmatmul.bf16.gmra.mxu0 %v1127
    %v1288 = vpop.f32.mrf.mxu0
    %v1289 = vadd.f32 %v1121, %v1288
    %v1290 = vpop.f32.mrf.mxu0
    %1291 = vdwg.mxu0
    %1292 = vmatpush.bf16.msra.mxu0 0
    %1293 = vmatpush.bf16.msra.mxu0 0
    %1294 = vmatpush.bf16.msra.mxu0 0
    %1295 = vmatpush.bf16.msra.mxu0 0
    %1296 = vmatpush.bf16.msra.mxu0 %v1225
    %1297 = vmatpush.bf16.msra.mxu0 %v1223
    %1298 = vmatpush.bf16.msra.mxu0 %v1221
    %1299 = vmatpush.bf16.msra.mxu0 %v1219
    %1300 = vmatmul.bf16.gmra.mxu0 %v1251
    %v1301 = vpop.f32.mrf.mxu0
    %v1302 = vadd.f32 %v1289, %v1301
    %v1303 = vpop.f32.mrf.mxu0
    %1304 = vdwg.mxu0
    %v1305 = vmax.f32 %v1276, 0.0
    %v1306 = vmax.f32 %v1302, 0.0
    %v1307 = vpack.c.bf16 %v1306, %v1305
    %1308 = vst [vmem:[#allocation2 + $0x28] sm:$0xff] %v1307
    %v1309 = vld [vmem:[%s0 + $0x14] sm:$0xff]
    %v1310 = vld [vmem:[#allocation6] sm:$0xff]
    %v1311 = vld [vmem:[#allocation6 + $0x8] sm:$0xff]
    %v1312 = vld [vmem:[#allocation6 + $0x10] sm:$0xff]
    %v1313 = vld [vmem:[#allocation6 + $0x18] sm:$0xff]
    %v1314 = vld [vmem:[#allocation6 + $0x20] sm:$0xff]
    %v1315 = vld [vmem:[#allocation6 + $0x28] sm:$0xff]
    %v1316 = vld [vmem:[#allocation6 + $0x30] sm:$0xff]
    %v1317 = vld [vmem:[#allocation6 + $0x38] sm:$0xff]
    %v1318 = vld [vmem:[#allocation6 + $0x40] sm:$0xff]
    %v1319 = vld [vmem:[#allocation6 + $0x48] sm:$0xff]
    %v1320 = vld [vmem:[#allocation6 + $0x50] sm:$0xff]
    %v1321 = vld [vmem:[#allocation6 + $0x58] sm:$0xff]
    %v1322 = vld [vmem:[#allocation6 + $0x60] sm:$0xff]
    %v1323 = vld [vmem:[#allocation6 + $0x68] sm:$0xff]
    %v1324 = vld [vmem:[#allocation6 + $0x70] sm:$0xff]
    %v1325 = vld [vmem:[#allocation6 + $0x78] sm:$0xff]
    %v1326 = vld [vmem:[#allocation6 + $0x80] sm:$0xff]
    %v1327 = vld [vmem:[#allocation6 + $0x88] sm:$0xff]
    %v1328 = vld [vmem:[#allocation6 + $0x90] sm:$0xff]
    %v1329 = vld [vmem:[#allocation6 + $0x98] sm:$0xff]
    %v1330 = vld [vmem:[#allocation6 + $0xa0] sm:$0xff]
    %v1331 = vld [vmem:[#allocation6 + $0xa8] sm:$0xff]
    %v1332 = vld [vmem:[#allocation6 + $0xb0] sm:$0xff]
    %v1333 = vld [vmem:[#allocation6 + $0xb8] sm:$0xff]
    %v1334 = vld [vmem:[#allocation8] sm:$0x3]
    %v1336 = vperm.slane %v1334, 0
    %v1337 = vperm.slane %v1334, 1
    %v1341 = vunpack.c.l.b16 %v1309
    %v1342 = vunpack.c.h.b16 %v1309
    %v1343 = vpack.c.b16 %v1341, %v1341
    %v1344 = vpack.c.b16 %v1342, %v1342
    %v1370 = vunpack.c.l.b16 %v1310
    %v1371 = vunpack.c.h.b16 %v1310
    %v1372 = vunpack.c.l.b16 %v1311
    %v1373 = vunpack.c.h.b16 %v1311
    %v1374 = vunpack.c.l.b16 %v1312
    %v1375 = vunpack.c.h.b16 %v1312
    %v1376 = vunpack.c.l.b16 %v1313
    %v1377 = vunpack.c.h.b16 %v1313
    %v1378 = vunpack.c.l.b16 %v1314
    %v1379 = vunpack.c.h.b16 %v1314
    %v1380 = vunpack.c.l.b16 %v1315
    %v1381 = vunpack.c.h.b16 %v1315
    %v1382 = vunpack.c.l.b16 %v1316
    %v1383 = vunpack.c.h.b16 %v1316
    %v1384 = vunpack.c.l.b16 %v1317
    %v1385 = vunpack.c.h.b16 %v1317
    %v1386 = vunpack.c.l.b16 %v1318
    %v1387 = vunpack.c.h.b16 %v1318
    %v1388 = vunpack.c.l.b16 %v1319
    %v1389 = vunpack.c.h.b16 %v1319
    %v1390 = vunpack.c.l.b16 %v1320
    %v1391 = vunpack.c.h.b16 %v1320
    %v1392 = vunpack.c.l.b16 %v1321
    %v1393 = vunpack.c.h.b16 %v1321
    %v1394 = vunpack.c.l.b16 %v1322
    %v1395 = vunpack.c.h.b16 %v1322
    %v1396 = vunpack.c.l.b16 %v1323
    %v1397 = vunpack.c.h.b16 %v1323
    %v1398 = vunpack.c.l.b16 %v1324
    %v1399 = vunpack.c.h.b16 %v1324
    %v1400 = vunpack.c.l.b16 %v1325
    %v1401 = vunpack.c.h.b16 %v1325
    %v1402 = vunpack.c.l.b16 %v1326
    %v1403 = vunpack.c.h.b16 %v1326
    %v1404 = vunpack.c.l.b16 %v1327
    %v1405 = vunpack.c.h.b16 %v1327
    %v1406 = vunpack.c.l.b16 %v1328
    %v1407 = vunpack.c.h.b16 %v1328
    %v1408 = vunpack.c.l.b16 %v1329
    %v1409 = vunpack.c.h.b16 %v1329
    %v1410 = vunpack.c.l.b16 %v1330
    %v1411 = vunpack.c.h.b16 %v1330
    %v1412 = vunpack.c.l.b16 %v1331
    %v1413 = vunpack.c.h.b16 %v1331
    %v1414 = vunpack.c.l.b16 %v1332
    %v1415 = vunpack.c.h.b16 %v1332
    %v1416 = vunpack.c.l.b16 %v1333
    %v1417 = vunpack.c.h.b16 %v1333
    %v1418 = vpack.c.b16 %v1372, %v1370
    %v1419 = vpack.c.b16 %v1373, %v1371
    %v1420 = vpack.c.b16 %v1376, %v1374
    %v1421 = vpack.c.b16 %v1377, %v1375
    %v1422 = vpack.c.b16 %v1380, %v1378
    %v1423 = vpack.c.b16 %v1381, %v1379
    %v1424 = vpack.c.b16 %v1384, %v1382
    %v1425 = vpack.c.b16 %v1385, %v1383
    %v1426 = vpack.c.b16 %v1388, %v1386
    %v1427 = vpack.c.b16 %v1389, %v1387
    %v1428 = vpack.c.b16 %v1392, %v1390
    %v1429 = vpack.c.b16 %v1393, %v1391
    %v1430 = vpack.c.b16 %v1396, %v1394
    %v1431 = vpack.c.b16 %v1397, %v1395
    %v1432 = vpack.c.b16 %v1400, %v1398
    %v1433 = vpack.c.b16 %v1401, %v1399
    %v1434 = vpack.c.b16 %v1404, %v1402
    %v1435 = vpack.c.b16 %v1405, %v1403
    %v1436 = vpack.c.b16 %v1408, %v1406
    %v1437 = vpack.c.b16 %v1409, %v1407
    %v1438 = vpack.c.b16 %v1412, %v1410
    %v1439 = vpack.c.b16 %v1413, %v1411
    %v1440 = vpack.c.b16 %v1416, %v1414
    %v1441 = vpack.c.b16 %v1417, %v1415
    %v1467 = vsel %vm385, %v1344, 0
    %1469 = vmatpush.bf16.msra.mxu0 %v1432
    %1470 = vmatpush.bf16.msra.mxu0 %v1430
    %1471 = vmatpush.bf16.msra.mxu0 %v1428
    %1472 = vmatpush.bf16.msra.mxu0 %v1426
    %1473 = vmatpush.bf16.msra.mxu0 %v1424
    %1474 = vmatpush.bf16.msra.mxu0 %v1422
    %1475 = vmatpush.bf16.msra.mxu0 %v1420
    %1476 = vmatpush.bf16.msra.mxu0 %v1418
    %1477 = vmatmul.bf16.gmra.mxu0 %v1343
    %v1478 = vpop.f32.mrf.mxu0
    %v1479 = vadd.f32 %v1336, %v1478
    %v1480 = vpop.f32.mrf.mxu0
    %1481 = vdwg.mxu0
    %1482 = vmatpush.bf16.msra.mxu0 0
    %1483 = vmatpush.bf16.msra.mxu0 0
    %1484 = vmatpush.bf16.msra.mxu0 0
    %1485 = vmatpush.bf16.msra.mxu0 0
    %1486 = vmatpush.bf16.msra.mxu0 %v1440
    %1487 = vmatpush.bf16.msra.mxu0 %v1438
    %1488 = vmatpush.bf16.msra.mxu0 %v1436
    %1489 = vmatpush.bf16.msra.mxu0 %v1434
    %1490 = vmatmul.bf16.gmra.mxu0 %v1467
    %v1491 = vpop.f32.mrf.mxu0
    %v1492 = vadd.f32 %v1479, %v1491
    %v1493 = vpop.f32.mrf.mxu0
    %1494 = vdwg.mxu0
    %1495 = vmatpush.bf16.msra.mxu0 %v1433
    %1496 = vmatpush.bf16.msra.mxu0 %v1431
    %1497 = vmatpush.bf16.msra.mxu0 %v1429
    %1498 = vmatpush.bf16.msra.mxu0 %v1427
    %1499 = vmatpush.bf16.msra.mxu0 %v1425
    %1500 = vmatpush.bf16.msra.mxu0 %v1423
    %1501 = vmatpush.bf16.msra.mxu0 %v1421
    %1502 = vmatpush.bf16.msra.mxu0 %v1419
    %1503 = vmatmul.bf16.gmra.mxu0 %v1343
    %v1504 = vpop.f32.mrf.mxu0
    %v1505 = vadd.f32 %v1337, %v1504
    %v1506 = vpop.f32.mrf.mxu0
    %1507 = vdwg.mxu0
    %1508 = vmatpush.bf16.msra.mxu0 0
    %1509 = vmatpush.bf16.msra.mxu0 0
    %1510 = vmatpush.bf16.msra.mxu0 0
    %1511 = vmatpush.bf16.msra.mxu0 0
    %1512 = vmatpush.bf16.msra.mxu0 %v1441
    %1513 = vmatpush.bf16.msra.mxu0 %v1439
    %1514 = vmatpush.bf16.msra.mxu0 %v1437
    %1515 = vmatpush.bf16.msra.mxu0 %v1435
    %1516 = vmatmul.bf16.gmra.mxu0 %v1467
    %v1517 = vpop.f32.mrf.mxu0
    %v1518 = vadd.f32 %v1505, %v1517
    %v1519 = vpop.f32.mrf.mxu0
    %1520 = vdwg.mxu0
    %v1521 = vmax.f32 %v1492, 0.0
    %v1522 = vmax.f32 %v1518, 0.0
    %v1523 = vpack.c.bf16 %v1522, %v1521
    %1524 = vst [vmem:[#allocation2 + $0x30] sm:$0xff] %v1523
    %v1525 = vld [vmem:[%s0 + $0x18] sm:$0xff]
    %v1526 = vld [vmem:[#allocation6] sm:$0xff]
    %v1527 = vld [vmem:[#allocation6 + $0x8] sm:$0xff]
    %v1528 = vld [vmem:[#allocation6 + $0x10] sm:$0xff]
    %v1529 = vld [vmem:[#allocation6 + $0x18] sm:$0xff]
    %v1530 = vld [vmem:[#allocation6 + $0x20] sm:$0xff]
    %v1531 = vld [vmem:[#allocation6 + $0x28] sm:$0xff]
    %v1532 = vld [vmem:[#allocation6 + $0x30] sm:$0xff]
    %v1533 = vld [vmem:[#allocation6 + $0x38] sm:$0xff]
    %v1534 = vld [vmem:[#allocation6 + $0x40] sm:$0xff]
    %v1535 = vld [vmem:[#allocation6 + $0x48] sm:$0xff]
    %v1536 = vld [vmem:[#allocation6 + $0x50] sm:$0xff]
    %v1537 = vld [vmem:[#allocation6 + $0x58] sm:$0xff]
    %v1538 = vld [vmem:[#allocation6 + $0x60] sm:$0xff]
    %v1539 = vld [vmem:[#allocation6 + $0x68] sm:$0xff]
    %v1540 = vld [vmem:[#allocation6 + $0x70] sm:$0xff]
    %v1541 = vld [vmem:[#allocation6 + $0x78] sm:$0xff]
    %v1542 = vld [vmem:[#allocation6 + $0x80] sm:$0xff]
    %v1543 = vld [vmem:[#allocation6 + $0x88] sm:$0xff]
    %v1544 = vld [vmem:[#allocation6 + $0x90] sm:$0xff]
    %v1545 = vld [vmem:[#allocation6 + $0x98] sm:$0xff]
    %v1546 = vld [vmem:[#allocation6 + $0xa0] sm:$0xff]
    %v1547 = vld [vmem:[#allocation6 + $0xa8] sm:$0xff]
    %v1548 = vld [vmem:[#allocation6 + $0xb0] sm:$0xff]
    %v1549 = vld [vmem:[#allocation6 + $0xb8] sm:$0xff]
    %v1550 = vld [vmem:[#allocation8] sm:$0x3]
    %v1552 = vperm.slane %v1550, 0
    %v1553 = vperm.slane %v1550, 1
    %v1557 = vunpack.c.l.b16 %v1525
    %v1558 = vunpack.c.h.b16 %v1525
    %v1559 = vpack.c.b16 %v1557, %v1557
    %v1560 = vpack.c.b16 %v1558, %v1558
    %v1586 = vunpack.c.l.b16 %v1526
    %v1587 = vunpack.c.h.b16 %v1526
    %v1588 = vunpack.c.l.b16 %v1527
    %v1589 = vunpack.c.h.b16 %v1527
    %v1590 = vunpack.c.l.b16 %v1528
    %v1591 = vunpack.c.h.b16 %v1528
    %v1592 = vunpack.c.l.b16 %v1529
    %v1593 = vunpack.c.h.b16 %v1529
    %v1594 = vunpack.c.l.b16 %v1530
    %v1595 = vunpack.c.h.b16 %v1530
    %v1596 = vunpack.c.l.b16 %v1531
    %v1597 = vunpack.c.h.b16 %v1531
    %v1598 = vunpack.c.l.b16 %v1532
    %v1599 = vunpack.c.h.b16 %v1532
    %v1600 = vunpack.c.l.b16 %v1533
    %v1601 = vunpack.c.h.b16 %v1533
    %v1602 = vunpack.c.l.b16 %v1534
    %v1603 = vunpack.c.h.b16 %v1534
    %v1604 = vunpack.c.l.b16 %v1535
    %v1605 = vunpack.c.h.b16 %v1535
    %v1606 = vunpack.c.l.b16 %v1536
    %v1607 = vunpack.c.h.b16 %v1536
    %v1608 = vunpack.c.l.b16 %v1537
    %v1609 = vunpack.c.h.b16 %v1537
    %v1610 = vunpack.c.l.b16 %v1538
    %v1611 = vunpack.c.h.b16 %v1538
    %v1612 = vunpack.c.l.b16 %v1539
    %v1613 = vunpack.c.h.b16 %v1539
    %v1614 = vunpack.c.l.b16 %v1540
    %v1615 = vunpack.c.h.b16 %v1540
    %v1616 = vunpack.c.l.b16 %v1541
    %v1617 = vunpack.c.h.b16 %v1541
    %v1618 = vunpack.c.l.b16 %v1542
    %v1619 = vunpack.c.h.b16 %v1542
    %v1620 = vunpack.c.l.b16 %v1543
    %v1621 = vunpack.c.h.b16 %v1543
    %v1622 = vunpack.c.l.b16 %v1544
    %v1623 = vunpack.c.h.b16 %v1544
    %v1624 = vunpack.c.l.b16 %v1545
    %v1625 = vunpack.c.h.b16 %v1545
    %v1626 = vunpack.c.l.b16 %v1546
    %v1627 = vunpack.c.h.b16 %v1546
    %v1628 = vunpack.c.l.b16 %v1547
    %v1629 = vunpack.c.h.b16 %v1547
    %v1630 = vunpack.c.l.b16 %v1548
    %v1631 = vunpack.c.h.b16 %v1548
    %v1632 = vunpack.c.l.b16 %v1549
    %v1633 = vunpack.c.h.b16 %v1549
    %v1634 = vpack.c.b16 %v1588, %v1586
    %v1635 = vpack.c.b16 %v1589, %v1587
    %v1636 = vpack.c.b16 %v1592, %v1590
    %v1637 = vpack.c.b16 %v1593, %v1591
    %v1638 = vpack.c.b16 %v1596, %v1594
    %v1639 = vpack.c.b16 %v1597, %v1595
    %v1640 = vpack.c.b16 %v1600, %v1598
    %v1641 = vpack.c.b16 %v1601, %v1599
    %v1642 = vpack.c.b16 %v1604, %v1602
    %v1643 = vpack.c.b16 %v1605, %v1603
    %v1644 = vpack.c.b16 %v1608, %v1606
    %v1645 = vpack.c.b16 %v1609, %v1607
    %v1646 = vpack.c.b16 %v1612, %v1610
    %v1647 = vpack.c.b16 %v1613, %v1611
    %v1648 = vpack.c.b16 %v1616, %v1614
    %v1649 = vpack.c.b16 %v1617, %v1615
    %v1650 = vpack.c.b16 %v1620, %v1618
    %v1651 = vpack.c.b16 %v1621, %v1619
    %v1652 = vpack.c.b16 %v1624, %v1622
    %v1653 = vpack.c.b16 %v1625, %v1623
    %v1654 = vpack.c.b16 %v1628, %v1626
    %v1655 = vpack.c.b16 %v1629, %v1627
    %v1656 = vpack.c.b16 %v1632, %v1630
    %v1657 = vpack.c.b16 %v1633, %v1631
    %v1683 = vsel %vm385, %v1560, 0
    %1685 = vmatpush.bf16.msra.mxu0 %v1648
    %1686 = vmatpush.bf16.msra.mxu0 %v1646
    %1687 = vmatpush.bf16.msra.mxu0 %v1644
    %1688 = vmatpush.bf16.msra.mxu0 %v1642
    %1689 = vmatpush.bf16.msra.mxu0 %v1640
    %1690 = vmatpush.bf16.msra.mxu0 %v1638
    %1691 = vmatpush.bf16.msra.mxu0 %v1636
    %1692 = vmatpush.bf16.msra.mxu0 %v1634
    %1693 = vmatmul.bf16.gmra.mxu0 %v1559
    %v1694 = vpop.f32.mrf.mxu0
    %v1695 = vadd.f32 %v1552, %v1694
    %v1696 = vpop.f32.mrf.mxu0
    %1697 = vdwg.mxu0
    %1698 = vmatpush.bf16.msra.mxu0 0
    %1699 = vmatpush.bf16.msra.mxu0 0
    %1700 = vmatpush.bf16.msra.mxu0 0
    %1701 = vmatpush.bf16.msra.mxu0 0
    %1702 = vmatpush.bf16.msra.mxu0 %v1656
    %1703 = vmatpush.bf16.msra.mxu0 %v1654
    %1704 = vmatpush.bf16.msra.mxu0 %v1652
    %1705 = vmatpush.bf16.msra.mxu0 %v1650
    %1706 = vmatmul.bf16.gmra.mxu0 %v1683
    %v1707 = vpop.f32.mrf.mxu0
    %v1708 = vadd.f32 %v1695, %v1707
    %v1709 = vpop.f32.mrf.mxu0
    %1710 = vdwg.mxu0
    %1711 = vmatpush.bf16.msra.mxu0 %v1649
    %1712 = vmatpush.bf16.msra.mxu0 %v1647
    %1713 = vmatpush.bf16.msra.mxu0 %v1645
    %1714 = vmatpush.bf16.msra.mxu0 %v1643
    %1715 = vmatpush.bf16.msra.mxu0 %v1641
    %1716 = vmatpush.bf16.msra.mxu0 %v1639
    %1717 = vmatpush.bf16.msra.mxu0 %v1637
    %1718 = vmatpush.bf16.msra.mxu0 %v1635
    %1719 = vmatmul.bf16.gmra.mxu0 %v1559
    %v1720 = vpop.f32.mrf.mxu0
    %v1721 = vadd.f32 %v1553, %v1720
    %v1722 = vpop.f32.mrf.mxu0
    %1723 = vdwg.mxu0
    %1724 = vmatpush.bf16.msra.mxu0 0
    %1725 = vmatpush.bf16.msra.mxu0 0
    %1726 = vmatpush.bf16.msra.mxu0 0
    %1727 = vmatpush.bf16.msra.mxu0 0
    %1728 = vmatpush.bf16.msra.mxu0 %v1657
    %1729 = vmatpush.bf16.msra.mxu0 %v1655
    %1730 = vmatpush.bf16.msra.mxu0 %v1653
    %1731 = vmatpush.bf16.msra.mxu0 %v1651
    %1732 = vmatmul.bf16.gmra.mxu0 %v1683
    %v1733 = vpop.f32.mrf.mxu0
    %v1734 = vadd.f32 %v1721, %v1733
    %v1735 = vpop.f32.mrf.mxu0
    %1736 = vdwg.mxu0
    %v1737 = vmax.f32 %v1708, 0.0
    %v1738 = vmax.f32 %v1734, 0.0
    %v1739 = vpack.c.bf16 %v1738, %v1737
    %1740 = vst [vmem:[#allocation2 + $0x38] sm:$0xff] %v1739
    %v1741 = vld [vmem:[%s0 + $0x1c] sm:$0xff]
    %v1742 = vld [vmem:[#allocation6] sm:$0xff]
    %v1743 = vld [vmem:[#allocation6 + $0x8] sm:$0xff]
    %v1744 = vld [vmem:[#allocation6 + $0x10] sm:$0xff]
    %v1745 = vld [vmem:[#allocation6 + $0x18] sm:$0xff]
    %v1746 = vld [vmem:[#allocation6 + $0x20] sm:$0xff]
    %v1747 = vld [vmem:[#allocation6 + $0x28] sm:$0xff]
    %v1748 = vld [vmem:[#allocation6 + $0x30] sm:$0xff]
    %v1749 = vld [vmem:[#allocation6 + $0x38] sm:$0xff]
    %v1750 = vld [vmem:[#allocation6 + $0x40] sm:$0xff]
    %v1751 = vld [vmem:[#allocation6 + $0x48] sm:$0xff]
    %v1752 = vld [vmem:[#allocation6 + $0x50] sm:$0xff]
    %v1753 = vld [vmem:[#allocation6 + $0x58] sm:$0xff]
    %v1754 = vld [vmem:[#allocation6 + $0x60] sm:$0xff]
    %v1755 = vld [vmem:[#allocation6 + $0x68] sm:$0xff]
    %v1756 = vld [vmem:[#allocation6 + $0x70] sm:$0xff]
    %v1757 = vld [vmem:[#allocation6 + $0x78] sm:$0xff]
    %v1758 = vld [vmem:[#allocation6 + $0x80] sm:$0xff]
    %v1759 = vld [vmem:[#allocation6 + $0x88] sm:$0xff]
    %v1760 = vld [vmem:[#allocation6 + $0x90] sm:$0xff]
    %v1761 = vld [vmem:[#allocation6 + $0x98] sm:$0xff]
    %v1762 = vld [vmem:[#allocation6 + $0xa0] sm:$0xff]
    %v1763 = vld [vmem:[#allocation6 + $0xa8] sm:$0xff]
    %v1764 = vld [vmem:[#allocation6 + $0xb0] sm:$0xff]
    %v1765 = vld [vmem:[#allocation6 + $0xb8] sm:$0xff]
    %v1766 = vld [vmem:[#allocation8] sm:$0x3]
    %v1768 = vperm.slane %v1766, 0
    %v1769 = vperm.slane %v1766, 1
    %v1773 = vunpack.c.l.b16 %v1741
    %v1774 = vunpack.c.h.b16 %v1741
    %v1775 = vpack.c.b16 %v1773, %v1773
    %v1776 = vpack.c.b16 %v1774, %v1774
    %v1802 = vunpack.c.l.b16 %v1742
    %v1803 = vunpack.c.h.b16 %v1742
    %v1804 = vunpack.c.l.b16 %v1743
    %v1805 = vunpack.c.h.b16 %v1743
    %v1806 = vunpack.c.l.b16 %v1744
    %v1807 = vunpack.c.h.b16 %v1744
    %v1808 = vunpack.c.l.b16 %v1745
    %v1809 = vunpack.c.h.b16 %v1745
    %v1810 = vunpack.c.l.b16 %v1746
    %v1811 = vunpack.c.h.b16 %v1746
    %v1812 = vunpack.c.l.b16 %v1747
    %v1813 = vunpack.c.h.b16 %v1747
    %v1814 = vunpack.c.l.b16 %v1748
    %v1815 = vunpack.c.h.b16 %v1748
    %v1816 = vunpack.c.l.b16 %v1749
    %v1817 = vunpack.c.h.b16 %v1749
    %v1818 = vunpack.c.l.b16 %v1750
    %v1819 = vunpack.c.h.b16 %v1750
    %v1820 = vunpack.c.l.b16 %v1751
    %v1821 = vunpack.c.h.b16 %v1751
    %v1822 = vunpack.c.l.b16 %v1752
    %v1823 = vunpack.c.h.b16 %v1752
    %v1824 = vunpack.c.l.b16 %v1753
    %v1825 = vunpack.c.h.b16 %v1753
    %v1826 = vunpack.c.l.b16 %v1754
    %v1827 = vunpack.c.h.b16 %v1754
    %v1828 = vunpack.c.l.b16 %v1755
    %v1829 = vunpack.c.h.b16 %v1755
    %v1830 = vunpack.c.l.b16 %v1756
    %v1831 = vunpack.c.h.b16 %v1756
    %v1832 = vunpack.c.l.b16 %v1757
    %v1833 = vunpack.c.h.b16 %v1757
    %v1834 = vunpack.c.l.b16 %v1758
    %v1835 = vunpack.c.h.b16 %v1758
    %v1836 = vunpack.c.l.b16 %v1759
    %v1837 = vunpack.c.h.b16 %v1759
    %v1838 = vunpack.c.l.b16 %v1760
    %v1839 = vunpack.c.h.b16 %v1760
    %v1840 = vunpack.c.l.b16 %v1761
    %v1841 = vunpack.c.h.b16 %v1761
    %v1842 = vunpack.c.l.b16 %v1762
    %v1843 = vunpack.c.h.b16 %v1762
    %v1844 = vunpack.c.l.b16 %v1763
    %v1845 = vunpack.c.h.b16 %v1763
    %v1846 = vunpack.c.l.b16 %v1764
    %v1847 = vunpack.c.h.b16 %v1764
    %v1848 = vunpack.c.l.b16 %v1765
    %v1849 = vunpack.c.h.b16 %v1765
    %v1850 = vpack.c.b16 %v1804, %v1802
    %v1851 = vpack.c.b16 %v1805, %v1803
    %v1852 = vpack.c.b16 %v1808, %v1806
    %v1853 = vpack.c.b16 %v1809, %v1807
    %v1854 = vpack.c.b16 %v1812, %v1810
    %v1855 = vpack.c.b16 %v1813, %v1811
    %v1856 = vpack.c.b16 %v1816, %v1814
    %v1857 = vpack.c.b16 %v1817, %v1815
    %v1858 = vpack.c.b16 %v1820, %v1818
    %v1859 = vpack.c.b16 %v1821, %v1819
    %v1860 = vpack.c.b16 %v1824, %v1822
    %v1861 = vpack.c.b16 %v1825, %v1823
    %v1862 = vpack.c.b16 %v1828, %v1826
    %v1863 = vpack.c.b16 %v1829, %v1827
    %v1864 = vpack.c.b16 %v1832, %v1830
    %v1865 = vpack.c.b16 %v1833, %v1831
    %v1866 = vpack.c.b16 %v1836, %v1834
    %v1867 = vpack.c.b16 %v1837, %v1835
    %v1868 = vpack.c.b16 %v1840, %v1838
    %v1869 = vpack.c.b16 %v1841, %v1839
    %v1870 = vpack.c.b16 %v1844, %v1842
    %v1871 = vpack.c.b16 %v1845, %v1843
    %v1872 = vpack.c.b16 %v1848, %v1846
    %v1873 = vpack.c.b16 %v1849, %v1847
    %v1899 = vsel %vm385, %v1776, 0
    %1901 = vmatpush.bf16.msra.mxu0 %v1864
    %1902 = vmatpush.bf16.msra.mxu0 %v1862
    %1903 = vmatpush.bf16.msra.mxu0 %v1860
    %1904 = vmatpush.bf16.msra.mxu0 %v1858
    %1905 = vmatpush.bf16.msra.mxu0 %v1856
    %1906 = vmatpush.bf16.msra.mxu0 %v1854
    %1907 = vmatpush.bf16.msra.mxu0 %v1852
    %1908 = vmatpush.bf16.msra.mxu0 %v1850
    %1909 = vmatmul.bf16.gmra.mxu0 %v1775
    %v1910 = vpop.f32.mrf.mxu0
    %v1911 = vadd.f32 %v1768, %v1910
    %v1912 = vpop.f32.mrf.mxu0
    %1913 = vdwg.mxu0
    %1914 = vmatpush.bf16.msra.mxu0 0
    %1915 = vmatpush.bf16.msra.mxu0 0
    %1916 = vmatpush.bf16.msra.mxu0 0
    %1917 = vmatpush.bf16.msra.mxu0 0
    %1918 = vmatpush.bf16.msra.mxu0 %v1872
    %1919 = vmatpush.bf16.msra.mxu0 %v1870
    %1920 = vmatpush.bf16.msra.mxu0 %v1868
    %1921 = vmatpush.bf16.msra.mxu0 %v1866
    %1922 = vmatmul.bf16.gmra.mxu0 %v1899
    %v1923 = vpop.f32.mrf.mxu0
    %v1924 = vadd.f32 %v1911, %v1923
    %v1925 = vpop.f32.mrf.mxu0
    %1926 = vdwg.mxu0
    %1927 = vmatpush.bf16.msra.mxu0 %v1865
    %1928 = vmatpush.bf16.msra.mxu0 %v1863
    %1929 = vmatpush.bf16.msra.mxu0 %v1861
    %1930 = vmatpush.bf16.msra.mxu0 %v1859
    %1931 = vmatpush.bf16.msra.mxu0 %v1857
    %1932 = vmatpush.bf16.msra.mxu0 %v1855
    %1933 = vmatpush.bf16.msra.mxu0 %v1853
    %1934 = vmatpush.bf16.msra.mxu0 %v1851
    %1935 = vmatmul.bf16.gmra.mxu0 %v1775
    %v1936 = vpop.f32.mrf.mxu0
    %v1937 = vadd.f32 %v1769, %v1936
    %v1938 = vpop.f32.mrf.mxu0
    %1939 = vdwg.mxu0
    %1940 = vmatpush.bf16.msra.mxu0 0
    %1941 = vmatpush.bf16.msra.mxu0 0
    %1942 = vmatpush.bf16.msra.mxu0 0
    %1943 = vmatpush.bf16.msra.mxu0 0
    %1944 = vmatpush.bf16.msra.mxu0 %v1873
    %1945 = vmatpush.bf16.msra.mxu0 %v1871
    %1946 = vmatpush.bf16.msra.mxu0 %v1869
    %1947 = vmatpush.bf16.msra.mxu0 %v1867
    %1948 = vmatmul.bf16.gmra.mxu0 %v1899
    %v1949 = vpop.f32.mrf.mxu0
    %v1950 = vadd.f32 %v1937, %v1949
    %v1951 = vpop.f32.mrf.mxu0
    %1952 = vdwg.mxu0
    %v1953 = vmax.f32 %v1924, 0.0
    %v1954 = vmax.f32 %v1950, 0.0
    %v1955 = vpack.c.bf16 %v1954, %v1953
    %1956 = vst [vmem:[#allocation2 + $0x40] sm:$0xff] %v1955
    %v1957 = vld [vmem:[#allocation2] sm:$0xff]
    %v1958 = vld [vmem:[#allocation2 + $0x8] sm:$0xff]
    %v1959 = vld [vmem:[#allocation2 + $0x10] sm:$0xff]
    %v1960 = vld [vmem:[#allocation10] sm:$0xf]
    %v1961 = vld [vmem:[#allocation10 + $0x4] sm:$0xf]
    %v1962 = vld [vmem:[#allocation10 + $0x8] sm:$0xf]
    %v1963 = vld [vmem:[#allocation10 + $0xc] sm:$0xf]
    %v1964 = vld [vmem:[#allocation10 + $0x10] sm:$0xf]
    %v1965 = vld [vmem:[#allocation10 + $0x14] sm:$0xf]
    %v1966 = vld [vmem:[#allocation10 + $0x18] sm:$0xf]
    %v1967 = vld [vmem:[#allocation10 + $0x1c] sm:$0xf]
    %v1968 = vld [vmem:[#allocation10 + $0x20] sm:$0xf]
    %v1969 = vld [vmem:[#allocation10 + $0x24] sm:$0xf]
    %v1970 = vld [vmem:[#allocation10 + $0x28] sm:$0xf]
    %v1971 = vld [vmem:[#allocation10 + $0x2c] sm:$0xf]
    %v1972 = vld [vmem:[#allocation10 + $0x30] sm:$0xf]
    %v1973 = vld [vmem:[#allocation10 + $0x34] sm:$0xf]
    %v1974 = vld [vmem:[#allocation10 + $0x38] sm:$0xf]
    %v1975 = vld [vmem:[#allocation10 + $0x3c] sm:$0xf]
    %v1976 = vld [vmem:[#allocation10 + $0x40] sm:$0xf]
    %v1977 = vld [vmem:[#allocation10 + $0x44] sm:$0xf]
    %v1978 = vld [vmem:[#allocation10 + $0x48] sm:$0xf]
    %v1979 = vld [vmem:[#allocation10 + $0x4c] sm:$0xf]
    %v1980 = vld [vmem:[#allocation10 + $0x50] sm:$0xf]
    %v1981 = vld [vmem:[#allocation10 + $0x54] sm:$0xf]
    %v1982 = vld [vmem:[#allocation10 + $0x58] sm:$0xf]
    %v1983 = vld [vmem:[#allocation10 + $0x5c] sm:$0xf]
    %v1984 = vld [vmem:[#allocation10 + $0x60] sm:$0xf]
    %v1985 = vld [vmem:[#allocation10 + $0x64] sm:$0xf]
    %v1986 = vld [vmem:[#allocation10 + $0x68] sm:$0xf]
    %v1987 = vld [vmem:[#allocation10 + $0x6c] sm:$0xf]
    %v1988 = vld [vmem:[#allocation10 + $0x70] sm:$0xf]
    %v1989 = vld [vmem:[#allocation10 + $0x74] sm:$0xf]
    %v1990 = vld [vmem:[#allocation10 + $0x78] sm:$0xf]
    %v1991 = vld [vmem:[#allocation10 + $0x7c] sm:$0xf]
    %v1992 = vld [vmem:[#allocation10 + $0x80] sm:$0xf]
    %v1993 = vld [vmem:[#allocation10 + $0x84] sm:$0xf]
    %v1994 = vld [vmem:[#allocation10 + $0x88] sm:$0xf]
    %v1995 = vld [vmem:[#allocation10 + $0x8c] sm:$0xf]
    %v1996 = vld [vmem:[#allocation10 + $0x90] sm:$0xf]
    %v1997 = vld [vmem:[#allocation10 + $0x94] sm:$0xf]
    %v1998 = vld [vmem:[#allocation10 + $0x98] sm:$0xf]
    %v1999 = vld [vmem:[#allocation10 + $0x9c] sm:$0xf]
    %v2000 = vld [vmem:[#allocation10 + $0xa0] sm:$0xf]
    %v2001 = vld [vmem:[#allocation10 + $0xa4] sm:$0xf]
    %v2002 = vld [vmem:[#allocation10 + $0xa8] sm:$0xf]
    %v2003 = vld [vmem:[#allocation10 + $0xac] sm:$0xf]
    %v2004 = vld [vmem:[#allocation10 + $0xb0] sm:$0xf]
    %v2005 = vld [vmem:[#allocation10 + $0xb4] sm:$0xf]
    %v2006 = vld [vmem:[#allocation10 + $0xb8] sm:$0xf]
    %v2007 = vld [vmem:[#allocation10 + $0xbc] sm:$0xf]
    %v2008 = vld [vmem:[#allocation10 + $0xc0] sm:$0xf]
    %v2009 = vld [vmem:[#allocation10 + $0xc4] sm:$0xf]
    %v2010 = vld [vmem:[#allocation10 + $0xc8] sm:$0xf]
    %v2011 = vld [vmem:[#allocation10 + $0xcc] sm:$0xf]
    %v2012 = vld [vmem:[#allocation10 + $0xd0] sm:$0xf]
    %v2013 = vld [vmem:[#allocation10 + $0xd4] sm:$0xf]
    %v2014 = vld [vmem:[#allocation10 + $0xd8] sm:$0xf]
    %v2015 = vld [vmem:[#allocation10 + $0xdc] sm:$0xf]
    %v2016 = vld [vmem:[#allocation10 + $0xe0] sm:$0xf]
    %v2017 = vld [vmem:[#allocation10 + $0xe4] sm:$0xf]
    %v2018 = vld [vmem:[#allocation10 + $0xe8] sm:$0xf]
    %v2019 = vld [vmem:[#allocation10 + $0xec] sm:$0xf]
    %v2020 = vld [vmem:[#allocation10 + $0xf0] sm:$0xf]
    %v2021 = vld [vmem:[#allocation10 + $0xf4] sm:$0xf]
    %v2022 = vld [vmem:[#allocation10 + $0xf8] sm:$0xf]
    %v2023 = vld [vmem:[#allocation10 + $0xfc] sm:$0xf]
    %v2024 = vld [vmem:[#allocation10 + $0x100] sm:$0xf]
    %v2025 = vld [vmem:[#allocation10 + $0x104] sm:$0xf]
    %v2026 = vld [vmem:[#allocation10 + $0x108] sm:$0xf]
    %v2027 = vld [vmem:[#allocation10 + $0x10c] sm:$0xf]
    %v2028 = vld [vmem:[#allocation10 + $0x110] sm:$0xf]
    %v2029 = vld [vmem:[#allocation10 + $0x114] sm:$0xf]
    %v2030 = vld [vmem:[#allocation10 + $0x118] sm:$0xf]
    %v2031 = vld [vmem:[#allocation10 + $0x11c] sm:$0xf]
    %v2032 = vld [vmem:[#allocation10 + $0x120] sm:$0xf]
    %v2033 = vld [vmem:[#allocation10 + $0x124] sm:$0xf]
    %v2034 = vld [vmem:[#allocation10 + $0x128] sm:$0xf]
    %v2035 = vld [vmem:[#allocation10 + $0x12c] sm:$0xf]
    %v2036 = vld [vmem:[#allocation10 + $0x130] sm:$0xf]
    %v2037 = vld [vmem:[#allocation10 + $0x134] sm:$0xf]
    %v2038 = vld [vmem:[#allocation10 + $0x138] sm:$0xf]
    %v2039 = vld [vmem:[#allocation10 + $0x13c] sm:$0xf]
    %v2040 = vld [vmem:[#allocation10 + $0x140] sm:$0xf]
    %v2041 = vld [vmem:[#allocation10 + $0x144] sm:$0xf]
    %v2042 = vld [vmem:[#allocation10 + $0x148] sm:$0xf]
    %v2043 = vld [vmem:[#allocation10 + $0x14c] sm:$0xf]
    %v2044 = vld [vmem:[#allocation10 + $0x150] sm:$0xf]
    %v2045 = vld [vmem:[#allocation10 + $0x154] sm:$0xf]
    %v2046 = vld [vmem:[#allocation10 + $0x158] sm:$0xf]
    %v2047 = vld [vmem:[#allocation10 + $0x15c] sm:$0xf]
    %v2048 = vld [vmem:[#allocation10 + $0x160] sm:$0xf]
    %v2049 = vld [vmem:[#allocation10 + $0x164] sm:$0xf]
    %v2050 = vld [vmem:[#allocation10 + $0x168] sm:$0xf]
    %v2051 = vld [vmem:[#allocation10 + $0x16c] sm:$0xf]
    %v2052 = vld [vmem:[#allocation10 + $0x170] sm:$0xf]
    %v2053 = vld [vmem:[#allocation10 + $0x174] sm:$0xf]
    %v2054 = vld [vmem:[#allocation10 + $0x178] sm:$0xf]
    %v2055 = vld [vmem:[#allocation10 + $0x17c] sm:$0xf]
    %v2056 = vld [vmem:[#allocation11] sm:$0x1]
    %v2058 = vperm.slane %v2056, 0
    %v2063 = vunpack.c.l.b16 %v1957
    %v2064 = vunpack.c.h.b16 %v1957
    %v2065 = vunpack.c.l.b16 %v1958
    %v2066 = vunpack.c.h.b16 %v1958
    %v2067 = vunpack.c.l.b16 %v1959
    %v2068 = vunpack.c.h.b16 %v1959
    %v2069 = vpack.c.b16 %v2063, %v2063
    %v2070 = vpack.c.b16 %v2064, %v2064
    %v2071 = vpack.c.b16 %v2065, %v2065
    %v2072 = vpack.c.b16 %v2066, %v2066
    %v2073 = vpack.c.b16 %v2067, %v2067
    %v2074 = vpack.c.b16 %v2068, %v2068
    %v2177 = vunpack.c.l.b16 %v1960
    %v2178 = vunpack.c.l.b16 %v1961
    %v2179 = vunpack.c.l.b16 %v1962
    %v2180 = vunpack.c.l.b16 %v1963
    %v2181 = vunpack.c.l.b16 %v1964
    %v2182 = vunpack.c.l.b16 %v1965
    %v2183 = vunpack.c.l.b16 %v1966
    %v2184 = vunpack.c.l.b16 %v1967
    %v2185 = vunpack.c.l.b16 %v1968
    %v2186 = vunpack.c.l.b16 %v1969
    %v2187 = vunpack.c.l.b16 %v1970
    %v2188 = vunpack.c.l.b16 %v1971
    %v2189 = vunpack.c.l.b16 %v1972
    %v2190 = vunpack.c.l.b16 %v1973
    %v2191 = vunpack.c.l.b16 %v1974
    %v2192 = vunpack.c.l.b16 %v1975
    %v2193 = vunpack.c.l.b16 %v1976
    %v2194 = vunpack.c.l.b16 %v1977
    %v2195 = vunpack.c.l.b16 %v1978
    %v2196 = vunpack.c.l.b16 %v1979
    %v2197 = vunpack.c.l.b16 %v1980
    %v2198 = vunpack.c.l.b16 %v1981
    %v2199 = vunpack.c.l.b16 %v1982
    %v2200 = vunpack.c.l.b16 %v1983
    %v2201 = vunpack.c.l.b16 %v1984
    %v2202 = vunpack.c.l.b16 %v1985
    %v2203 = vunpack.c.l.b16 %v1986
    %v2204 = vunpack.c.l.b16 %v1987
    %v2205 = vunpack.c.l.b16 %v1988
    %v2206 = vunpack.c.l.b16 %v1989
    %v2207 = vunpack.c.l.b16 %v1990
    %v2208 = vunpack.c.l.b16 %v1991
    %v2209 = vunpack.c.l.b16 %v1992
    %v2210 = vunpack.c.l.b16 %v1993
    %v2211 = vunpack.c.l.b16 %v1994
    %v2212 = vunpack.c.l.b16 %v1995
    %v2213 = vunpack.c.l.b16 %v1996
    %v2214 = vunpack.c.l.b16 %v1997
    %v2215 = vunpack.c.l.b16 %v1998
    %v2216 = vunpack.c.l.b16 %v1999
    %v2217 = vunpack.c.l.b16 %v2000
    %v2218 = vunpack.c.l.b16 %v2001
    %v2219 = vunpack.c.l.b16 %v2002
    %v2220 = vunpack.c.l.b16 %v2003
    %v2221 = vunpack.c.l.b16 %v2004
    %v2222 = vunpack.c.l.b16 %v2005
    %v2223 = vunpack.c.l.b16 %v2006
    %v2224 = vunpack.c.l.b16 %v2007
    %v2225 = vunpack.c.l.b16 %v2008
    %v2226 = vunpack.c.l.b16 %v2009
    %v2227 = vunpack.c.l.b16 %v2010
    %v2228 = vunpack.c.l.b16 %v2011
    %v2229 = vunpack.c.l.b16 %v2012
    %v2230 = vunpack.c.l.b16 %v2013
    %v2231 = vunpack.c.l.b16 %v2014
    %v2232 = vunpack.c.l.b16 %v2015
    %v2233 = vunpack.c.l.b16 %v2016
    %v2234 = vunpack.c.l.b16 %v2017
    %v2235 = vunpack.c.l.b16 %v2018
    %v2236 = vunpack.c.l.b16 %v2019
    %v2237 = vunpack.c.l.b16 %v2020
    %v2238 = vunpack.c.l.b16 %v2021
    %v2239 = vunpack.c.l.b16 %v2022
    %v2240 = vunpack.c.l.b16 %v2023
    %v2241 = vunpack.c.l.b16 %v2024
    %v2242 = vunpack.c.l.b16 %v2025
    %v2243 = vunpack.c.l.b16 %v2026
    %v2244 = vunpack.c.l.b16 %v2027
    %v2245 = vunpack.c.l.b16 %v2028
    %v2246 = vunpack.c.l.b16 %v2029
    %v2247 = vunpack.c.l.b16 %v2030
    %v2248 = vunpack.c.l.b16 %v2031
    %v2249 = vunpack.c.l.b16 %v2032
    %v2250 = vunpack.c.l.b16 %v2033
    %v2251 = vunpack.c.l.b16 %v2034
    %v2252 = vunpack.c.l.b16 %v2035
    %v2253 = vunpack.c.l.b16 %v2036
    %v2254 = vunpack.c.l.b16 %v2037
    %v2255 = vunpack.c.l.b16 %v2038
    %v2256 = vunpack.c.l.b16 %v2039
    %v2257 = vunpack.c.l.b16 %v2040
    %v2258 = vunpack.c.l.b16 %v2041
    %v2259 = vunpack.c.l.b16 %v2042
    %v2260 = vunpack.c.l.b16 %v2043
    %v2261 = vunpack.c.l.b16 %v2044
    %v2262 = vunpack.c.l.b16 %v2045
    %v2263 = vunpack.c.l.b16 %v2046
    %v2264 = vunpack.c.l.b16 %v2047
    %v2265 = vunpack.c.l.b16 %v2048
    %v2266 = vunpack.c.l.b16 %v2049
    %v2267 = vunpack.c.l.b16 %v2050
    %v2268 = vunpack.c.l.b16 %v2051
    %v2269 = vunpack.c.l.b16 %v2052
    %v2270 = vunpack.c.l.b16 %v2053
    %v2271 = vunpack.c.l.b16 %v2054
    %v2272 = vunpack.c.l.b16 %v2055
    %v2273 = vpack.c.b16 %v2178, %v2177
    %v2274 = vpack.c.b16 %v2180, %v2179
    %v2275 = vpack.c.b16 %v2182, %v2181
    %v2276 = vpack.c.b16 %v2184, %v2183
    %v2277 = vpack.c.b16 %v2186, %v2185
    %v2278 = vpack.c.b16 %v2188, %v2187
    %v2279 = vpack.c.b16 %v2190, %v2189
    %v2280 = vpack.c.b16 %v2192, %v2191
    %v2281 = vpack.c.b16 %v2194, %v2193
    %v2282 = vpack.c.b16 %v2196, %v2195
    %v2283 = vpack.c.b16 %v2198, %v2197
    %v2284 = vpack.c.b16 %v2200, %v2199
    %v2285 = vpack.c.b16 %v2202, %v2201
    %v2286 = vpack.c.b16 %v2204, %v2203
    %v2287 = vpack.c.b16 %v2206, %v2205
    %v2288 = vpack.c.b16 %v2208, %v2207
    %v2289 = vpack.c.b16 %v2210, %v2209
    %v2290 = vpack.c.b16 %v2212, %v2211
    %v2291 = vpack.c.b16 %v2214, %v2213
    %v2292 = vpack.c.b16 %v2216, %v2215
    %v2293 = vpack.c.b16 %v2218, %v2217
    %v2294 = vpack.c.b16 %v2220, %v2219
    %v2295 = vpack.c.b16 %v2222, %v2221
    %v2296 = vpack.c.b16 %v2224, %v2223
    %v2297 = vpack.c.b16 %v2226, %v2225
    %v2298 = vpack.c.b16 %v2228, %v2227
    %v2299 = vpack.c.b16 %v2230, %v2229
    %v2300 = vpack.c.b16 %v2232, %v2231
    %v2301 = vpack.c.b16 %v2234, %v2233
    %v2302 = vpack.c.b16 %v2236, %v2235
    %v2303 = vpack.c.b16 %v2238, %v2237
    %v2304 = vpack.c.b16 %v2240, %v2239
    %v2305 = vpack.c.b16 %v2242, %v2241
    %v2306 = vpack.c.b16 %v2244, %v2243
    %v2307 = vpack.c.b16 %v2246, %v2245
    %v2308 = vpack.c.b16 %v2248, %v2247
    %v2309 = vpack.c.b16 %v2250, %v2249
    %v2310 = vpack.c.b16 %v2252, %v2251
    %v2311 = vpack.c.b16 %v2254, %v2253
    %v2312 = vpack.c.b16 %v2256, %v2255
    %v2313 = vpack.c.b16 %v2258, %v2257
    %v2314 = vpack.c.b16 %v2260, %v2259
    %v2315 = vpack.c.b16 %v2262, %v2261
    %v2316 = vpack.c.b16 %v2264, %v2263
    %v2317 = vpack.c.b16 %v2266, %v2265
    %v2318 = vpack.c.b16 %v2268, %v2267
    %v2319 = vpack.c.b16 %v2270, %v2269
    %v2320 = vpack.c.b16 %v2272, %v2271
    %2369 = vmatpush.bf16.msra.mxu0 %v2280
    %2370 = vmatpush.bf16.msra.mxu0 %v2279
    %2371 = vmatpush.bf16.msra.mxu0 %v2278
    %2372 = vmatpush.bf16.msra.mxu0 %v2277
    %2373 = vmatpush.bf16.msra.mxu0 %v2276
    %2374 = vmatpush.bf16.msra.mxu0 %v2275
    %2375 = vmatpush.bf16.msra.mxu0 %v2274
    %2376 = vmatpush.bf16.msra.mxu0 %v2273
    %2377 = vmatmul.bf16.gmra.mxu0 %v2069
    %v2378 = vpop.f32.mrf.mxu0
    %v2379 = vadd.f32 %v2058, %v2378
    %v2380 = vpop.f32.mrf.mxu0
    %2381 = vdwg.mxu0
    %2382 = vmatpush.bf16.msra.mxu0 %v2288
    %2383 = vmatpush.bf16.msra.mxu0 %v2287
    %2384 = vmatpush.bf16.msra.mxu0 %v2286
    %2385 = vmatpush.bf16.msra.mxu0 %v2285
    %2386 = vmatpush.bf16.msra.mxu0 %v2284
    %2387 = vmatpush.bf16.msra.mxu0 %v2283
    %2388 = vmatpush.bf16.msra.mxu0 %v2282
    %2389 = vmatpush.bf16.msra.mxu0 %v2281
    %2390 = vmatmul.bf16.gmra.mxu0 %v2070
    %v2391 = vpop.f32.mrf.mxu0
    %v2392 = vadd.f32 %v2379, %v2391
    %v2393 = vpop.f32.mrf.mxu0
    %2394 = vdwg.mxu0
    %2395 = vmatpush.bf16.msra.mxu0 %v2296
    %2396 = vmatpush.bf16.msra.mxu0 %v2295
    %2397 = vmatpush.bf16.msra.mxu0 %v2294
    %2398 = vmatpush.bf16.msra.mxu0 %v2293
    %2399 = vmatpush.bf16.msra.mxu0 %v2292
    %2400 = vmatpush.bf16.msra.mxu0 %v2291
    %2401 = vmatpush.bf16.msra.mxu0 %v2290
    %2402 = vmatpush.bf16.msra.mxu0 %v2289
    %2403 = vmatmul.bf16.gmra.mxu0 %v2071
    %v2404 = vpop.f32.mrf.mxu0
    %v2405 = vadd.f32 %v2392, %v2404
    %v2406 = vpop.f32.mrf.mxu0
    %2407 = vdwg.mxu0
    %2408 = vmatpush.bf16.msra.mxu0 %v2304
    %2409 = vmatpush.bf16.msra.mxu0 %v2303
    %2410 = vmatpush.bf16.msra.mxu0 %v2302
    %2411 = vmatpush.bf16.msra.mxu0 %v2301
    %2412 = vmatpush.bf16.msra.mxu0 %v2300
    %2413 = vmatpush.bf16.msra.mxu0 %v2299
    %2414 = vmatpush.bf16.msra.mxu0 %v2298
    %2415 = vmatpush.bf16.msra.mxu0 %v2297
    %2416 = vmatmul.bf16.gmra.mxu0 %v2072
    %v2417 = vpop.f32.mrf.mxu0
    %v2418 = vadd.f32 %v2405, %v2417
    %v2419 = vpop.f32.mrf.mxu0
    %2420 = vdwg.mxu0
    %2421 = vmatpush.bf16.msra.mxu0 %v2312
    %2422 = vmatpush.bf16.msra.mxu0 %v2311
    %2423 = vmatpush.bf16.msra.mxu0 %v2310
    %2424 = vmatpush.bf16.msra.mxu0 %v2309
    %2425 = vmatpush.bf16.msra.mxu0 %v2308
    %2426 = vmatpush.bf16.msra.mxu0 %v2307
    %2427 = vmatpush.bf16.msra.mxu0 %v2306
    %2428 = vmatpush.bf16.msra.mxu0 %v2305
    %2429 = vmatmul.bf16.gmra.mxu0 %v2073
    %v2430 = vpop.f32.mrf.mxu0
    %v2431 = vadd.f32 %v2418, %v2430
    %v2432 = vpop.f32.mrf.mxu0
    %2433 = vdwg.mxu0
    %2434 = vmatpush.bf16.msra.mxu0 %v2320
    %2435 = vmatpush.bf16.msra.mxu0 %v2319
    %2436 = vmatpush.bf16.msra.mxu0 %v2318
    %2437 = vmatpush.bf16.msra.mxu0 %v2317
    %2438 = vmatpush.bf16.msra.mxu0 %v2316
    %2439 = vmatpush.bf16.msra.mxu0 %v2315
    %2440 = vmatpush.bf16.msra.mxu0 %v2314
    %2441 = vmatpush.bf16.msra.mxu0 %v2313
    %2442 = vmatmul.bf16.gmra.mxu0 %v2074
    %v2443 = vpop.f32.mrf.mxu0
    %v2444 = vadd.f32 %v2431, %v2443
    %v2445 = vpop.f32.mrf.mxu0
    %2446 = vdwg.mxu0
    %v2447 = vmax.f32 %v2444, 0.0
    %v2448 = vpack.c.bf16 %v2447, %v2447
    %2449 = vst [vmem:[#allocation3] sm:$0xf] %v2448
    %v2450 = vld [vmem:[#allocation2 + $0x10] sm:$0xff]
    %v2451 = vld [vmem:[#allocation2 + $0x18] sm:$0xff]
    %v2452 = vld [vmem:[#allocation2 + $0x20] sm:$0xff]
    %v2453 = vld [vmem:[#allocation10] sm:$0xf]
    %v2454 = vld [vmem:[#allocation10 + $0x4] sm:$0xf]
    %v2455 = vld [vmem:[#allocation10 + $0x8] sm:$0xf]
    %v2456 = vld [vmem:[#allocation10 + $0xc] sm:$0xf]
    %v2457 = vld [vmem:[#allocation10 + $0x10] sm:$0xf]
    %v2458 = vld [vmem:[#allocation10 + $0x14] sm:$0xf]
    %v2459 = vld [vmem:[#allocation10 + $0x18] sm:$0xf]
    %v2460 = vld [vmem:[#allocation10 + $0x1c] sm:$0xf]
    %v2461 = vld [vmem:[#allocation10 + $0x20] sm:$0xf]
    %v2462 = vld [vmem:[#allocation10 + $0x24] sm:$0xf]
    %v2463 = vld [vmem:[#allocation10 + $0x28] sm:$0xf]
    %v2464 = vld [vmem:[#allocation10 + $0x2c] sm:$0xf]
    %v2465 = vld [vmem:[#allocation10 + $0x30] sm:$0xf]
    %v2466 = vld [vmem:[#allocation10 + $0x34] sm:$0xf]
    %v2467 = vld [vmem:[#allocation10 + $0x38] sm:$0xf]
    %v2468 = vld [vmem:[#allocation10 + $0x3c] sm:$0xf]
    %v2469 = vld [vmem:[#allocation10 + $0x40] sm:$0xf]
    %v2470 = vld [vmem:[#allocation10 + $0x44] sm:$0xf]
    %v2471 = vld [vmem:[#allocation10 + $0x48] sm:$0xf]
    %v2472 = vld [vmem:[#allocation10 + $0x4c] sm:$0xf]
    %v2473 = vld [vmem:[#allocation10 + $0x50] sm:$0xf]
    %v2474 = vld [vmem:[#allocation10 + $0x54] sm:$0xf]
    %v2475 = vld [vmem:[#allocation10 + $0x58] sm:$0xf]
    %v2476 = vld [vmem:[#allocation10 + $0x5c] sm:$0xf]
    %v2477 = vld [vmem:[#allocation10 + $0x60] sm:$0xf]
    %v2478 = vld [vmem:[#allocation10 + $0x64] sm:$0xf]
    %v2479 = vld [vmem:[#allocation10 + $0x68] sm:$0xf]
    %v2480 = vld [vmem:[#allocation10 + $0x6c] sm:$0xf]
    %v2481 = vld [vmem:[#allocation10 + $0x70] sm:$0xf]
    %v2482 = vld [vmem:[#allocation10 + $0x74] sm:$0xf]
    %v2483 = vld [vmem:[#allocation10 + $0x78] sm:$0xf]
    %v2484 = vld [vmem:[#allocation10 + $0x7c] sm:$0xf]
    %v2485 = vld [vmem:[#allocation10 + $0x80] sm:$0xf]
    %v2486 = vld [vmem:[#allocation10 + $0x84] sm:$0xf]
    %v2487 = vld [vmem:[#allocation10 + $0x88] sm:$0xf]
    %v2488 = vld [vmem:[#allocation10 + $0x8c] sm:$0xf]
    %v2489 = vld [vmem:[#allocation10 + $0x90] sm:$0xf]
    %v2490 = vld [vmem:[#allocation10 + $0x94] sm:$0xf]
    %v2491 = vld [vmem:[#allocation10 + $0x98] sm:$0xf]
    %v2492 = vld [vmem:[#allocation10 + $0x9c] sm:$0xf]
    %v2493 = vld [vmem:[#allocation10 + $0xa0] sm:$0xf]
    %v2494 = vld [vmem:[#allocation10 + $0xa4] sm:$0xf]
    %v2495 = vld [vmem:[#allocation10 + $0xa8] sm:$0xf]
    %v2496 = vld [vmem:[#allocation10 + $0xac] sm:$0xf]
    %v2497 = vld [vmem:[#allocation10 + $0xb0] sm:$0xf]
    %v2498 = vld [vmem:[#allocation10 + $0xb4] sm:$0xf]
    %v2499 = vld [vmem:[#allocation10 + $0xb8] sm:$0xf]
    %v2500 = vld [vmem:[#allocation10 + $0xbc] sm:$0xf]
    %v2501 = vld [vmem:[#allocation10 + $0xc0] sm:$0xf]
    %v2502 = vld [vmem:[#allocation10 + $0xc4] sm:$0xf]
    %v2503 = vld [vmem:[#allocation10 + $0xc8] sm:$0xf]
    %v2504 = vld [vmem:[#allocation10 + $0xcc] sm:$0xf]
    %v2505 = vld [vmem:[#allocation10 + $0xd0] sm:$0xf]
    %v2506 = vld [vmem:[#allocation10 + $0xd4] sm:$0xf]
    %v2507 = vld [vmem:[#allocation10 + $0xd8] sm:$0xf]
    %v2508 = vld [vmem:[#allocation10 + $0xdc] sm:$0xf]
    %v2509 = vld [vmem:[#allocation10 + $0xe0] sm:$0xf]
    %v2510 = vld [vmem:[#allocation10 + $0xe4] sm:$0xf]
    %v2511 = vld [vmem:[#allocation10 + $0xe8] sm:$0xf]
    %v2512 = vld [vmem:[#allocation10 + $0xec] sm:$0xf]
    %v2513 = vld [vmem:[#allocation10 + $0xf0] sm:$0xf]
    %v2514 = vld [vmem:[#allocation10 + $0xf4] sm:$0xf]
    %v2515 = vld [vmem:[#allocation10 + $0xf8] sm:$0xf]
    %v2516 = vld [vmem:[#allocation10 + $0xfc] sm:$0xf]
    %v2517 = vld [vmem:[#allocation10 + $0x100] sm:$0xf]
    %v2518 = vld [vmem:[#allocation10 + $0x104] sm:$0xf]
    %v2519 = vld [vmem:[#allocation10 + $0x108] sm:$0xf]
    %v2520 = vld [vmem:[#allocation10 + $0x10c] sm:$0xf]
    %v2521 = vld [vmem:[#allocation10 + $0x110] sm:$0xf]
    %v2522 = vld [vmem:[#allocation10 + $0x114] sm:$0xf]
    %v2523 = vld [vmem:[#allocation10 + $0x118] sm:$0xf]
    %v2524 = vld [vmem:[#allocation10 + $0x11c] sm:$0xf]
    %v2525 = vld [vmem:[#allocation10 + $0x120] sm:$0xf]
    %v2526 = vld [vmem:[#allocation10 + $0x124] sm:$0xf]
    %v2527 = vld [vmem:[#allocation10 + $0x128] sm:$0xf]
    %v2528 = vld [vmem:[#allocation10 + $0x12c] sm:$0xf]
    %v2529 = vld [vmem:[#allocation10 + $0x130] sm:$0xf]
    %v2530 = vld [vmem:[#allocation10 + $0x134] sm:$0xf]
    %v2531 = vld [vmem:[#allocation10 + $0x138] sm:$0xf]
    %v2532 = vld [vmem:[#allocation10 + $0x13c] sm:$0xf]
    %v2533 = vld [vmem:[#allocation10 + $0x140] sm:$0xf]
    %v2534 = vld [vmem:[#allocation10 + $0x144] sm:$0xf]
    %v2535 = vld [vmem:[#allocation10 + $0x148] sm:$0xf]
    %v2536 = vld [vmem:[#allocation10 + $0x14c] sm:$0xf]
    %v2537 = vld [vmem:[#allocation10 + $0x150] sm:$0xf]
    %v2538 = vld [vmem:[#allocation10 + $0x154] sm:$0xf]
    %v2539 = vld [vmem:[#allocation10 + $0x158] sm:$0xf]
    %v2540 = vld [vmem:[#allocation10 + $0x15c] sm:$0xf]
    %v2541 = vld [vmem:[#allocation10 + $0x160] sm:$0xf]
    %v2542 = vld [vmem:[#allocation10 + $0x164] sm:$0xf]
    %v2543 = vld [vmem:[#allocation10 + $0x168] sm:$0xf]
    %v2544 = vld [vmem:[#allocation10 + $0x16c] sm:$0xf]
    %v2545 = vld [vmem:[#allocation10 + $0x170] sm:$0xf]
    %v2546 = vld [vmem:[#allocation10 + $0x174] sm:$0xf]
    %v2547 = vld [vmem:[#allocation10 + $0x178] sm:$0xf]
    %v2548 = vld [vmem:[#allocation10 + $0x17c] sm:$0xf]
    %v2549 = vld [vmem:[#allocation11] sm:$0x1]
    %v2551 = vperm.slane %v2549, 0
    %v2556 = vunpack.c.l.b16 %v2450
    %v2557 = vunpack.c.h.b16 %v2450
    %v2558 = vunpack.c.l.b16 %v2451
    %v2559 = vunpack.c.h.b16 %v2451
    %v2560 = vunpack.c.l.b16 %v2452
    %v2561 = vunpack.c.h.b16 %v2452
    %v2562 = vpack.c.b16 %v2556, %v2556
    %v2563 = vpack.c.b16 %v2557, %v2557
    %v2564 = vpack.c.b16 %v2558, %v2558
    %v2565 = vpack.c.b16 %v2559, %v2559
    %v2566 = vpack.c.b16 %v2560, %v2560
    %v2567 = vpack.c.b16 %v2561, %v2561
    %v2670 = vunpack.c.l.b16 %v2453
    %v2671 = vunpack.c.l.b16 %v2454
    %v2672 = vunpack.c.l.b16 %v2455
    %v2673 = vunpack.c.l.b16 %v2456
    %v2674 = vunpack.c.l.b16 %v2457
    %v2675 = vunpack.c.l.b16 %v2458
    %v2676 = vunpack.c.l.b16 %v2459
    %v2677 = vunpack.c.l.b16 %v2460
    %v2678 = vunpack.c.l.b16 %v2461
    %v2679 = vunpack.c.l.b16 %v2462
    %v2680 = vunpack.c.l.b16 %v2463
    %v2681 = vunpack.c.l.b16 %v2464
    %v2682 = vunpack.c.l.b16 %v2465
    %v2683 = vunpack.c.l.b16 %v2466
    %v2684 = vunpack.c.l.b16 %v2467
    %v2685 = vunpack.c.l.b16 %v2468
    %v2686 = vunpack.c.l.b16 %v2469
    %v2687 = vunpack.c.l.b16 %v2470
    %v2688 = vunpack.c.l.b16 %v2471
    %v2689 = vunpack.c.l.b16 %v2472
    %v2690 = vunpack.c.l.b16 %v2473
    %v2691 = vunpack.c.l.b16 %v2474
    %v2692 = vunpack.c.l.b16 %v2475
    %v2693 = vunpack.c.l.b16 %v2476
    %v2694 = vunpack.c.l.b16 %v2477
    %v2695 = vunpack.c.l.b16 %v2478
    %v2696 = vunpack.c.l.b16 %v2479
    %v2697 = vunpack.c.l.b16 %v2480
    %v2698 = vunpack.c.l.b16 %v2481
    %v2699 = vunpack.c.l.b16 %v2482
    %v2700 = vunpack.c.l.b16 %v2483
    %v2701 = vunpack.c.l.b16 %v2484
    %v2702 = vunpack.c.l.b16 %v2485
    %v2703 = vunpack.c.l.b16 %v2486
    %v2704 = vunpack.c.l.b16 %v2487
    %v2705 = vunpack.c.l.b16 %v2488
    %v2706 = vunpack.c.l.b16 %v2489
    %v2707 = vunpack.c.l.b16 %v2490
    %v2708 = vunpack.c.l.b16 %v2491
    %v2709 = vunpack.c.l.b16 %v2492
    %v2710 = vunpack.c.l.b16 %v2493
    %v2711 = vunpack.c.l.b16 %v2494
    %v2712 = vunpack.c.l.b16 %v2495
    %v2713 = vunpack.c.l.b16 %v2496
    %v2714 = vunpack.c.l.b16 %v2497
    %v2715 = vunpack.c.l.b16 %v2498
    %v2716 = vunpack.c.l.b16 %v2499
    %v2717 = vunpack.c.l.b16 %v2500
    %v2718 = vunpack.c.l.b16 %v2501
    %v2719 = vunpack.c.l.b16 %v2502
    %v2720 = vunpack.c.l.b16 %v2503
    %v2721 = vunpack.c.l.b16 %v2504
    %v2722 = vunpack.c.l.b16 %v2505
    %v2723 = vunpack.c.l.b16 %v2506
    %v2724 = vunpack.c.l.b16 %v2507
    %v2725 = vunpack.c.l.b16 %v2508
    %v2726 = vunpack.c.l.b16 %v2509
    %v2727 = vunpack.c.l.b16 %v2510
    %v2728 = vunpack.c.l.b16 %v2511
    %v2729 = vunpack.c.l.b16 %v2512
    %v2730 = vunpack.c.l.b16 %v2513
    %v2731 = vunpack.c.l.b16 %v2514
    %v2732 = vunpack.c.l.b16 %v2515
    %v2733 = vunpack.c.l.b16 %v2516
    %v2734 = vunpack.c.l.b16 %v2517
    %v2735 = vunpack.c.l.b16 %v2518
    %v2736 = vunpack.c.l.b16 %v2519
    %v2737 = vunpack.c.l.b16 %v2520
    %v2738 = vunpack.c.l.b16 %v2521
    %v2739 = vunpack.c.l.b16 %v2522
    %v2740 = vunpack.c.l.b16 %v2523
    %v2741 = vunpack.c.l.b16 %v2524
    %v2742 = vunpack.c.l.b16 %v2525
    %v2743 = vunpack.c.l.b16 %v2526
    %v2744 = vunpack.c.l.b16 %v2527
    %v2745 = vunpack.c.l.b16 %v2528
    %v2746 = vunpack.c.l.b16 %v2529
    %v2747 = vunpack.c.l.b16 %v2530
    %v2748 = vunpack.c.l.b16 %v2531
    %v2749 = vunpack.c.l.b16 %v2532
    %v2750 = vunpack.c.l.b16 %v2533
    %v2751 = vunpack.c.l.b16 %v2534
    %v2752 = vunpack.c.l.b16 %v2535
    %v2753 = vunpack.c.l.b16 %v2536
    %v2754 = vunpack.c.l.b16 %v2537
    %v2755 = vunpack.c.l.b16 %v2538
    %v2756 = vunpack.c.l.b16 %v2539
    %v2757 = vunpack.c.l.b16 %v2540
    %v2758 = vunpack.c.l.b16 %v2541
    %v2759 = vunpack.c.l.b16 %v2542
    %v2760 = vunpack.c.l.b16 %v2543
    %v2761 = vunpack.c.l.b16 %v2544
    %v2762 = vunpack.c.l.b16 %v2545
    %v2763 = vunpack.c.l.b16 %v2546
    %v2764 = vunpack.c.l.b16 %v2547
    %v2765 = vunpack.c.l.b16 %v2548
    %v2766 = vpack.c.b16 %v2671, %v2670
    %v2767 = vpack.c.b16 %v2673, %v2672
    %v2768 = vpack.c.b16 %v2675, %v2674
    %v2769 = vpack.c.b16 %v2677, %v2676
    %v2770 = vpack.c.b16 %v2679, %v2678
    %v2771 = vpack.c.b16 %v2681, %v2680
    %v2772 = vpack.c.b16 %v2683, %v2682
    %v2773 = vpack.c.b16 %v2685, %v2684
    %v2774 = vpack.c.b16 %v2687, %v2686
    %v2775 = vpack.c.b16 %v2689, %v2688
    %v2776 = vpack.c.b16 %v2691, %v2690
    %v2777 = vpack.c.b16 %v2693, %v2692
    %v2778 = vpack.c.b16 %v2695, %v2694
    %v2779 = vpack.c.b16 %v2697, %v2696
    %v2780 = vpack.c.b16 %v2699, %v2698
    %v2781 = vpack.c.b16 %v2701, %v2700
    %v2782 = vpack.c.b16 %v2703, %v2702
    %v2783 = vpack.c.b16 %v2705, %v2704
    %v2784 = vpack.c.b16 %v2707, %v2706
    %v2785 = vpack.c.b16 %v2709, %v2708
    %v2786 = vpack.c.b16 %v2711, %v2710
    %v2787 = vpack.c.b16 %v2713, %v2712
    %v2788 = vpack.c.b16 %v2715, %v2714
    %v2789 = vpack.c.b16 %v2717, %v2716
    %v2790 = vpack.c.b16 %v2719, %v2718
    %v2791 = vpack.c.b16 %v2721, %v2720
    %v2792 = vpack.c.b16 %v2723, %v2722
    %v2793 = vpack.c.b16 %v2725, %v2724
    %v2794 = vpack.c.b16 %v2727, %v2726
    %v2795 = vpack.c.b16 %v2729, %v2728
    %v2796 = vpack.c.b16 %v2731, %v2730
    %v2797 = vpack.c.b16 %v2733, %v2732
    %v2798 = vpack.c.b16 %v2735, %v2734
    %v2799 = vpack.c.b16 %v2737, %v2736
    %v2800 = vpack.c.b16 %v2739, %v2738
    %v2801 = vpack.c.b16 %v2741, %v2740
    %v2802 = vpack.c.b16 %v2743, %v2742
    %v2803 = vpack.c.b16 %v2745, %v2744
    %v2804 = vpack.c.b16 %v2747, %v2746
    %v2805 = vpack.c.b16 %v2749, %v2748
    %v2806 = vpack.c.b16 %v2751, %v2750
    %v2807 = vpack.c.b16 %v2753, %v2752
    %v2808 = vpack.c.b16 %v2755, %v2754
    %v2809 = vpack.c.b16 %v2757, %v2756
    %v2810 = vpack.c.b16 %v2759, %v2758
    %v2811 = vpack.c.b16 %v2761, %v2760
    %v2812 = vpack.c.b16 %v2763, %v2762
    %v2813 = vpack.c.b16 %v2765, %v2764
    %2862 = vmatpush.bf16.msra.mxu0 %v2773
    %2863 = vmatpush.bf16.msra.mxu0 %v2772
    %2864 = vmatpush.bf16.msra.mxu0 %v2771
    %2865 = vmatpush.bf16.msra.mxu0 %v2770
    %2866 = vmatpush.bf16.msra.mxu0 %v2769
    %2867 = vmatpush.bf16.msra.mxu0 %v2768
    %2868 = vmatpush.bf16.msra.mxu0 %v2767
    %2869 = vmatpush.bf16.msra.mxu0 %v2766
    %2870 = vmatmul.bf16.gmra.mxu0 %v2562
    %v2871 = vpop.f32.mrf.mxu0
    %v2872 = vadd.f32 %v2551, %v2871
    %v2873 = vpop.f32.mrf.mxu0
    %2874 = vdwg.mxu0
    %2875 = vmatpush.bf16.msra.mxu0 %v2781
    %2876 = vmatpush.bf16.msra.mxu0 %v2780
    %2877 = vmatpush.bf16.msra.mxu0 %v2779
    %2878 = vmatpush.bf16.msra.mxu0 %v2778
    %2879 = vmatpush.bf16.msra.mxu0 %v2777
    %2880 = vmatpush.bf16.msra.mxu0 %v2776
    %2881 = vmatpush.bf16.msra.mxu0 %v2775
    %2882 = vmatpush.bf16.msra.mxu0 %v2774
    %2883 = vmatmul.bf16.gmra.mxu0 %v2563
    %v2884 = vpop.f32.mrf.mxu0
    %v2885 = vadd.f32 %v2872, %v2884
    %v2886 = vpop.f32.mrf.mxu0
    %2887 = vdwg.mxu0
    %2888 = vmatpush.bf16.msra.mxu0 %v2789
    %2889 = vmatpush.bf16.msra.mxu0 %v2788
    %2890 = vmatpush.bf16.msra.mxu0 %v2787
    %2891 = vmatpush.bf16.msra.mxu0 %v2786
    %2892 = vmatpush.bf16.msra.mxu0 %v2785
    %2893 = vmatpush.bf16.msra.mxu0 %v2784
    %2894 = vmatpush.bf16.msra.mxu0 %v2783
    %2895 = vmatpush.bf16.msra.mxu0 %v2782
    %2896 = vmatmul.bf16.gmra.mxu0 %v2564
    %v2897 = vpop.f32.mrf.mxu0
    %v2898 = vadd.f32 %v2885, %v2897
    %v2899 = vpop.f32.mrf.mxu0
    %2900 = vdwg.mxu0
    %2901 = vmatpush.bf16.msra.mxu0 %v2797
    %2902 = vmatpush.bf16.msra.mxu0 %v2796
    %2903 = vmatpush.bf16.msra.mxu0 %v2795
    %2904 = vmatpush.bf16.msra.mxu0 %v2794
    %2905 = vmatpush.bf16.msra.mxu0 %v2793
    %2906 = vmatpush.bf16.msra.mxu0 %v2792
    %2907 = vmatpush.bf16.msra.mxu0 %v2791
    %2908 = vmatpush.bf16.msra.mxu0 %v2790
    %2909 = vmatmul.bf16.gmra.mxu0 %v2565
    %v2910 = vpop.f32.mrf.mxu0
    %v2911 = vadd.f32 %v2898, %v2910
    %v2912 = vpop.f32.mrf.mxu0
    %2913 = vdwg.mxu0
    %2914 = vmatpush.bf16.msra.mxu0 %v2805
    %2915 = vmatpush.bf16.msra.mxu0 %v2804
    %2916 = vmatpush.bf16.msra.mxu0 %v2803
    %2917 = vmatpush.bf16.msra.mxu0 %v2802
    %2918 = vmatpush.bf16.msra.mxu0 %v2801
    %2919 = vmatpush.bf16.msra.mxu0 %v2800
    %2920 = vmatpush.bf16.msra.mxu0 %v2799
    %2921 = vmatpush.bf16.msra.mxu0 %v2798
    %2922 = vmatmul.bf16.gmra.mxu0 %v2566
    %v2923 = vpop.f32.mrf.mxu0
    %v2924 = vadd.f32 %v2911, %v2923
    %v2925 = vpop.f32.mrf.mxu0
    %2926 = vdwg.mxu0
    %2927 = vmatpush.bf16.msra.mxu0 %v2813
    %2928 = vmatpush.bf16.msra.mxu0 %v2812
    %2929 = vmatpush.bf16.msra.mxu0 %v2811
    %2930 = vmatpush.bf16.msra.mxu0 %v2810
    %2931 = vmatpush.bf16.msra.mxu0 %v2809
    %2932 = vmatpush.bf16.msra.mxu0 %v2808
    %2933 = vmatpush.bf16.msra.mxu0 %v2807
    %2934 = vmatpush.bf16.msra.mxu0 %v2806
    %2935 = vmatmul.bf16.gmra.mxu0 %v2567
    %v2936 = vpop.f32.mrf.mxu0
    %v2937 = vadd.f32 %v2924, %v2936
    %v2938 = vpop.f32.mrf.mxu0
    %2939 = vdwg.mxu0
    %v2940 = vmax.f32 %v2937, 0.0
    %v2941 = vpack.c.bf16 %v2940, %v2940
    %2942 = vst [vmem:[#allocation3 + $0x4] sm:$0xf] %v2941
    %v2943 = vld [vmem:[#allocation2 + $0x20] sm:$0xff]
    %v2944 = vld [vmem:[#allocation2 + $0x28] sm:$0xff]
    %v2945 = vld [vmem:[#allocation2 + $0x30] sm:$0xff]
    %v2946 = vld [vmem:[#allocation10] sm:$0xf]
    %v2947 = vld [vmem:[#allocation10 + $0x4] sm:$0xf]
    %v2948 = vld [vmem:[#allocation10 + $0x8] sm:$0xf]
    %v2949 = vld [vmem:[#allocation10 + $0xc] sm:$0xf]
    %v2950 = vld [vmem:[#allocation10 + $0x10] sm:$0xf]
    %v2951 = vld [vmem:[#allocation10 + $0x14] sm:$0xf]
    %v2952 = vld [vmem:[#allocation10 + $0x18] sm:$0xf]
    %v2953 = vld [vmem:[#allocation10 + $0x1c] sm:$0xf]
    %v2954 = vld [vmem:[#allocation10 + $0x20] sm:$0xf]
    %v2955 = vld [vmem:[#allocation10 + $0x24] sm:$0xf]
    %v2956 = vld [vmem:[#allocation10 + $0x28] sm:$0xf]
    %v2957 = vld [vmem:[#allocation10 + $0x2c] sm:$0xf]
    %v2958 = vld [vmem:[#allocation10 + $0x30] sm:$0xf]
    %v2959 = vld [vmem:[#allocation10 + $0x34] sm:$0xf]
    %v2960 = vld [vmem:[#allocation10 + $0x38] sm:$0xf]
    %v2961 = vld [vmem:[#allocation10 + $0x3c] sm:$0xf]
    %v2962 = vld [vmem:[#allocation10 + $0x40] sm:$0xf]
    %v2963 = vld [vmem:[#allocation10 + $0x44] sm:$0xf]
    %v2964 = vld [vmem:[#allocation10 + $0x48] sm:$0xf]
    %v2965 = vld [vmem:[#allocation10 + $0x4c] sm:$0xf]
    %v2966 = vld [vmem:[#allocation10 + $0x50] sm:$0xf]
    %v2967 = vld [vmem:[#allocation10 + $0x54] sm:$0xf]
    %v2968 = vld [vmem:[#allocation10 + $0x58] sm:$0xf]
    %v2969 = vld [vmem:[#allocation10 + $0x5c] sm:$0xf]
    %v2970 = vld [vmem:[#allocation10 + $0x60] sm:$0xf]
    %v2971 = vld [vmem:[#allocation10 + $0x64] sm:$0xf]
    %v2972 = vld [vmem:[#allocation10 + $0x68] sm:$0xf]
    %v2973 = vld [vmem:[#allocation10 + $0x6c] sm:$0xf]
    %v2974 = vld [vmem:[#allocation10 + $0x70] sm:$0xf]
    %v2975 = vld [vmem:[#allocation10 + $0x74] sm:$0xf]
    %v2976 = vld [vmem:[#allocation10 + $0x78] sm:$0xf]
    %v2977 = vld [vmem:[#allocation10 + $0x7c] sm:$0xf]
    %v2978 = vld [vmem:[#allocation10 + $0x80] sm:$0xf]
    %v2979 = vld [vmem:[#allocation10 + $0x84] sm:$0xf]
    %v2980 = vld [vmem:[#allocation10 + $0x88] sm:$0xf]
    %v2981 = vld [vmem:[#allocation10 + $0x8c] sm:$0xf]
    %v2982 = vld [vmem:[#allocation10 + $0x90] sm:$0xf]
    %v2983 = vld [vmem:[#allocation10 + $0x94] sm:$0xf]
    %v2984 = vld [vmem:[#allocation10 + $0x98] sm:$0xf]
    %v2985 = vld [vmem:[#allocation10 + $0x9c] sm:$0xf]
    %v2986 = vld [vmem:[#allocation10 + $0xa0] sm:$0xf]
    %v2987 = vld [vmem:[#allocation10 + $0xa4] sm:$0xf]
    %v2988 = vld [vmem:[#allocation10 + $0xa8] sm:$0xf]
    %v2989 = vld [vmem:[#allocation10 + $0xac] sm:$0xf]
    %v2990 = vld [vmem:[#allocation10 + $0xb0] sm:$0xf]
    %v2991 = vld [vmem:[#allocation10 + $0xb4] sm:$0xf]
    %v2992 = vld [vmem:[#allocation10 + $0xb8] sm:$0xf]
    %v2993 = vld [vmem:[#allocation10 + $0xbc] sm:$0xf]
    %v2994 = vld [vmem:[#allocation10 + $0xc0] sm:$0xf]
    %v2995 = vld [vmem:[#allocation10 + $0xc4] sm:$0xf]
    %v2996 = vld [vmem:[#allocation10 + $0xc8] sm:$0xf]
    %v2997 = vld [vmem:[#allocation10 + $0xcc] sm:$0xf]
    %v2998 = vld [vmem:[#allocation10 + $0xd0] sm:$0xf]
    %v2999 = vld [vmem:[#allocation10 + $0xd4] sm:$0xf]
    %v3000 = vld [vmem:[#allocation10 + $0xd8] sm:$0xf]
    %v3001 = vld [vmem:[#allocation10 + $0xdc] sm:$0xf]
    %v3002 = vld [vmem:[#allocation10 + $0xe0] sm:$0xf]
    %v3003 = vld [vmem:[#allocation10 + $0xe4] sm:$0xf]
    %v3004 = vld [vmem:[#allocation10 + $0xe8] sm:$0xf]
    %v3005 = vld [vmem:[#allocation10 + $0xec] sm:$0xf]
    %v3006 = vld [vmem:[#allocation10 + $0xf0] sm:$0xf]
    %v3007 = vld [vmem:[#allocation10 + $0xf4] sm:$0xf]
    %v3008 = vld [vmem:[#allocation10 + $0xf8] sm:$0xf]
    %v3009 = vld [vmem:[#allocation10 + $0xfc] sm:$0xf]
    %v3010 = vld [vmem:[#allocation10 + $0x100] sm:$0xf]
    %v3011 = vld [vmem:[#allocation10 + $0x104] sm:$0xf]
    %v3012 = vld [vmem:[#allocation10 + $0x108] sm:$0xf]
    %v3013 = vld [vmem:[#allocation10 + $0x10c] sm:$0xf]
    %v3014 = vld [vmem:[#allocation10 + $0x110] sm:$0xf]
    %v3015 = vld [vmem:[#allocation10 + $0x114] sm:$0xf]
    %v3016 = vld [vmem:[#allocation10 + $0x118] sm:$0xf]
    %v3017 = vld [vmem:[#allocation10 + $0x11c] sm:$0xf]
    %v3018 = vld [vmem:[#allocation10 + $0x120] sm:$0xf]
    %v3019 = vld [vmem:[#allocation10 + $0x124] sm:$0xf]
    %v3020 = vld [vmem:[#allocation10 + $0x128] sm:$0xf]
    %v3021 = vld [vmem:[#allocation10 + $0x12c] sm:$0xf]
    %v3022 = vld [vmem:[#allocation10 + $0x130] sm:$0xf]
    %v3023 = vld [vmem:[#allocation10 + $0x134] sm:$0xf]
    %v3024 = vld [vmem:[#allocation10 + $0x138] sm:$0xf]
    %v3025 = vld [vmem:[#allocation10 + $0x13c] sm:$0xf]
    %v3026 = vld [vmem:[#allocation10 + $0x140] sm:$0xf]
    %v3027 = vld [vmem:[#allocation10 + $0x144] sm:$0xf]
    %v3028 = vld [vmem:[#allocation10 + $0x148] sm:$0xf]
    %v3029 = vld [vmem:[#allocation10 + $0x14c] sm:$0xf]
    %v3030 = vld [vmem:[#allocation10 + $0x150] sm:$0xf]
    %v3031 = vld [vmem:[#allocation10 + $0x154] sm:$0xf]
    %v3032 = vld [vmem:[#allocation10 + $0x158] sm:$0xf]
    %v3033 = vld [vmem:[#allocation10 + $0x15c] sm:$0xf]
    %v3034 = vld [vmem:[#allocation10 + $0x160] sm:$0xf]
    %v3035 = vld [vmem:[#allocation10 + $0x164] sm:$0xf]
    %v3036 = vld [vmem:[#allocation10 + $0x168] sm:$0xf]
    %v3037 = vld [vmem:[#allocation10 + $0x16c] sm:$0xf]
    %v3038 = vld [vmem:[#allocation10 + $0x170] sm:$0xf]
    %v3039 = vld [vmem:[#allocation10 + $0x174] sm:$0xf]
    %v3040 = vld [vmem:[#allocation10 + $0x178] sm:$0xf]
    %v3041 = vld [vmem:[#allocation10 + $0x17c] sm:$0xf]
    %v3042 = vld [vmem:[#allocation11] sm:$0x1]
    %v3044 = vperm.slane %v3042, 0
    %v3049 = vunpack.c.l.b16 %v2943
    %v3050 = vunpack.c.h.b16 %v2943
    %v3051 = vunpack.c.l.b16 %v2944
    %v3052 = vunpack.c.h.b16 %v2944
    %v3053 = vunpack.c.l.b16 %v2945
    %v3054 = vunpack.c.h.b16 %v2945
    %v3055 = vpack.c.b16 %v3049, %v3049
    %v3056 = vpack.c.b16 %v3050, %v3050
    %v3057 = vpack.c.b16 %v3051, %v3051
    %v3058 = vpack.c.b16 %v3052, %v3052
    %v3059 = vpack.c.b16 %v3053, %v3053
    %v3060 = vpack.c.b16 %v3054, %v3054
    %v3163 = vunpack.c.l.b16 %v2946
    %v3164 = vunpack.c.l.b16 %v2947
    %v3165 = vunpack.c.l.b16 %v2948
    %v3166 = vunpack.c.l.b16 %v2949
    %v3167 = vunpack.c.l.b16 %v2950
    %v3168 = vunpack.c.l.b16 %v2951
    %v3169 = vunpack.c.l.b16 %v2952
    %v3170 = vunpack.c.l.b16 %v2953
    %v3171 = vunpack.c.l.b16 %v2954
    %v3172 = vunpack.c.l.b16 %v2955
    %v3173 = vunpack.c.l.b16 %v2956
    %v3174 = vunpack.c.l.b16 %v2957
    %v3175 = vunpack.c.l.b16 %v2958
    %v3176 = vunpack.c.l.b16 %v2959
    %v3177 = vunpack.c.l.b16 %v2960
    %v3178 = vunpack.c.l.b16 %v2961
    %v3179 = vunpack.c.l.b16 %v2962
    %v3180 = vunpack.c.l.b16 %v2963
    %v3181 = vunpack.c.l.b16 %v2964
    %v3182 = vunpack.c.l.b16 %v2965
    %v3183 = vunpack.c.l.b16 %v2966
    %v3184 = vunpack.c.l.b16 %v2967
    %v3185 = vunpack.c.l.b16 %v2968
    %v3186 = vunpack.c.l.b16 %v2969
    %v3187 = vunpack.c.l.b16 %v2970
    %v3188 = vunpack.c.l.b16 %v2971
    %v3189 = vunpack.c.l.b16 %v2972
    %v3190 = vunpack.c.l.b16 %v2973
    %v3191 = vunpack.c.l.b16 %v2974
    %v3192 = vunpack.c.l.b16 %v2975
    %v3193 = vunpack.c.l.b16 %v2976
    %v3194 = vunpack.c.l.b16 %v2977
    %v3195 = vunpack.c.l.b16 %v2978
    %v3196 = vunpack.c.l.b16 %v2979
    %v3197 = vunpack.c.l.b16 %v2980
    %v3198 = vunpack.c.l.b16 %v2981
    %v3199 = vunpack.c.l.b16 %v2982
    %v3200 = vunpack.c.l.b16 %v2983
    %v3201 = vunpack.c.l.b16 %v2984
    %v3202 = vunpack.c.l.b16 %v2985
    %v3203 = vunpack.c.l.b16 %v2986
    %v3204 = vunpack.c.l.b16 %v2987
    %v3205 = vunpack.c.l.b16 %v2988
    %v3206 = vunpack.c.l.b16 %v2989
    %v3207 = vunpack.c.l.b16 %v2990
    %v3208 = vunpack.c.l.b16 %v2991
    %v3209 = vunpack.c.l.b16 %v2992
    %v3210 = vunpack.c.l.b16 %v2993
    %v3211 = vunpack.c.l.b16 %v2994
    %v3212 = vunpack.c.l.b16 %v2995
    %v3213 = vunpack.c.l.b16 %v2996
    %v3214 = vunpack.c.l.b16 %v2997
    %v3215 = vunpack.c.l.b16 %v2998
    %v3216 = vunpack.c.l.b16 %v2999
    %v3217 = vunpack.c.l.b16 %v3000
    %v3218 = vunpack.c.l.b16 %v3001
    %v3219 = vunpack.c.l.b16 %v3002
    %v3220 = vunpack.c.l.b16 %v3003
    %v3221 = vunpack.c.l.b16 %v3004
    %v3222 = vunpack.c.l.b16 %v3005
    %v3223 = vunpack.c.l.b16 %v3006
    %v3224 = vunpack.c.l.b16 %v3007
    %v3225 = vunpack.c.l.b16 %v3008
    %v3226 = vunpack.c.l.b16 %v3009
    %v3227 = vunpack.c.l.b16 %v3010
    %v3228 = vunpack.c.l.b16 %v3011
    %v3229 = vunpack.c.l.b16 %v3012
    %v3230 = vunpack.c.l.b16 %v3013
    %v3231 = vunpack.c.l.b16 %v3014
    %v3232 = vunpack.c.l.b16 %v3015
    %v3233 = vunpack.c.l.b16 %v3016
    %v3234 = vunpack.c.l.b16 %v3017
    %v3235 = vunpack.c.l.b16 %v3018
    %v3236 = vunpack.c.l.b16 %v3019
    %v3237 = vunpack.c.l.b16 %v3020
    %v3238 = vunpack.c.l.b16 %v3021
    %v3239 = vunpack.c.l.b16 %v3022
    %v3240 = vunpack.c.l.b16 %v3023
    %v3241 = vunpack.c.l.b16 %v3024
    %v3242 = vunpack.c.l.b16 %v3025
    %v3243 = vunpack.c.l.b16 %v3026
    %v3244 = vunpack.c.l.b16 %v3027
    %v3245 = vunpack.c.l.b16 %v3028
    %v3246 = vunpack.c.l.b16 %v3029
    %v3247 = vunpack.c.l.b16 %v3030
    %v3248 = vunpack.c.l.b16 %v3031
    %v3249 = vunpack.c.l.b16 %v3032
    %v3250 = vunpack.c.l.b16 %v3033
    %v3251 = vunpack.c.l.b16 %v3034
    %v3252 = vunpack.c.l.b16 %v3035
    %v3253 = vunpack.c.l.b16 %v3036
    %v3254 = vunpack.c.l.b16 %v3037
    %v3255 = vunpack.c.l.b16 %v3038
    %v3256 = vunpack.c.l.b16 %v3039
    %v3257 = vunpack.c.l.b16 %v3040
    %v3258 = vunpack.c.l.b16 %v3041
    %v3259 = vpack.c.b16 %v3164, %v3163
    %v3260 = vpack.c.b16 %v3166, %v3165
    %v3261 = vpack.c.b16 %v3168, %v3167
    %v3262 = vpack.c.b16 %v3170, %v3169
    %v3263 = vpack.c.b16 %v3172, %v3171
    %v3264 = vpack.c.b16 %v3174, %v3173
    %v3265 = vpack.c.b16 %v3176, %v3175
    %v3266 = vpack.c.b16 %v3178, %v3177
    %v3267 = vpack.c.b16 %v3180, %v3179
    %v3268 = vpack.c.b16 %v3182, %v3181
    %v3269 = vpack.c.b16 %v3184, %v3183
    %v3270 = vpack.c.b16 %v3186, %v3185
    %v3271 = vpack.c.b16 %v3188, %v3187
    %v3272 = vpack.c.b16 %v3190, %v3189
    %v3273 = vpack.c.b16 %v3192, %v3191
    %v3274 = vpack.c.b16 %v3194, %v3193
    %v3275 = vpack.c.b16 %v3196, %v3195
    %v3276 = vpack.c.b16 %v3198, %v3197
    %v3277 = vpack.c.b16 %v3200, %v3199
    %v3278 = vpack.c.b16 %v3202, %v3201
    %v3279 = vpack.c.b16 %v3204, %v3203
    %v3280 = vpack.c.b16 %v3206, %v3205
    %v3281 = vpack.c.b16 %v3208, %v3207
    %v3282 = vpack.c.b16 %v3210, %v3209
    %v3283 = vpack.c.b16 %v3212, %v3211
    %v3284 = vpack.c.b16 %v3214, %v3213
    %v3285 = vpack.c.b16 %v3216, %v3215
    %v3286 = vpack.c.b16 %v3218, %v3217
    %v3287 = vpack.c.b16 %v3220, %v3219
    %v3288 = vpack.c.b16 %v3222, %v3221
    %v3289 = vpack.c.b16 %v3224, %v3223
    %v3290 = vpack.c.b16 %v3226, %v3225
    %v3291 = vpack.c.b16 %v3228, %v3227
    %v3292 = vpack.c.b16 %v3230, %v3229
    %v3293 = vpack.c.b16 %v3232, %v3231
    %v3294 = vpack.c.b16 %v3234, %v3233
    %v3295 = vpack.c.b16 %v3236, %v3235
    %v3296 = vpack.c.b16 %v3238, %v3237
    %v3297 = vpack.c.b16 %v3240, %v3239
    %v3298 = vpack.c.b16 %v3242, %v3241
    %v3299 = vpack.c.b16 %v3244, %v3243
    %v3300 = vpack.c.b16 %v3246, %v3245
    %v3301 = vpack.c.b16 %v3248, %v3247
    %v3302 = vpack.c.b16 %v3250, %v3249
    %v3303 = vpack.c.b16 %v3252, %v3251
    %v3304 = vpack.c.b16 %v3254, %v3253
    %v3305 = vpack.c.b16 %v3256, %v3255
    %v3306 = vpack.c.b16 %v3258, %v3257
    %3355 = vmatpush.bf16.msra.mxu0 %v3266
    %3356 = vmatpush.bf16.msra.mxu0 %v3265
    %3357 = vmatpush.bf16.msra.mxu0 %v3264
    %3358 = vmatpush.bf16.msra.mxu0 %v3263
    %3359 = vmatpush.bf16.msra.mxu0 %v3262
    %3360 = vmatpush.bf16.msra.mxu0 %v3261
    %3361 = vmatpush.bf16.msra.mxu0 %v3260
    %3362 = vmatpush.bf16.msra.mxu0 %v3259
    %3363 = vmatmul.bf16.gmra.mxu0 %v3055
    %v3364 = vpop.f32.mrf.mxu0
    %v3365 = vadd.f32 %v3044, %v3364
    %v3366 = vpop.f32.mrf.mxu0
    %3367 = vdwg.mxu0
    %3368 = vmatpush.bf16.msra.mxu0 %v3274
    %3369 = vmatpush.bf16.msra.mxu0 %v3273
    %3370 = vmatpush.bf16.msra.mxu0 %v3272
    %3371 = vmatpush.bf16.msra.mxu0 %v3271
    %3372 = vmatpush.bf16.msra.mxu0 %v3270
    %3373 = vmatpush.bf16.msra.mxu0 %v3269
    %3374 = vmatpush.bf16.msra.mxu0 %v3268
    %3375 = vmatpush.bf16.msra.mxu0 %v3267
    %3376 = vmatmul.bf16.gmra.mxu0 %v3056
    %v3377 = vpop.f32.mrf.mxu0
    %v3378 = vadd.f32 %v3365, %v3377
    %v3379 = vpop.f32.mrf.mxu0
    %3380 = vdwg.mxu0
    %3381 = vmatpush.bf16.msra.mxu0 %v3282
    %3382 = vmatpush.bf16.msra.mxu0 %v3281
    %3383 = vmatpush.bf16.msra.mxu0 %v3280
    %3384 = vmatpush.bf16.msra.mxu0 %v3279
    %3385 = vmatpush.bf16.msra.mxu0 %v3278
    %3386 = vmatpush.bf16.msra.mxu0 %v3277
    %3387 = vmatpush.bf16.msra.mxu0 %v3276
    %3388 = vmatpush.bf16.msra.mxu0 %v3275
    %3389 = vmatmul.bf16.gmra.mxu0 %v3057
    %v3390 = vpop.f32.mrf.mxu0
    %v3391 = vadd.f32 %v3378, %v3390
    %v3392 = vpop.f32.mrf.mxu0
    %3393 = vdwg.mxu0
    %3394 = vmatpush.bf16.msra.mxu0 %v3290
    %3395 = vmatpush.bf16.msra.mxu0 %v3289
    %3396 = vmatpush.bf16.msra.mxu0 %v3288
    %3397 = vmatpush.bf16.msra.mxu0 %v3287
    %3398 = vmatpush.bf16.msra.mxu0 %v3286
    %3399 = vmatpush.bf16.msra.mxu0 %v3285
    %3400 = vmatpush.bf16.msra.mxu0 %v3284
    %3401 = vmatpush.bf16.msra.mxu0 %v3283
    %3402 = vmatmul.bf16.gmra.mxu0 %v3058
    %v3403 = vpop.f32.mrf.mxu0
    %v3404 = vadd.f32 %v3391, %v3403
    %v3405 = vpop.f32.mrf.mxu0
    %3406 = vdwg.mxu0
    %3407 = vmatpush.bf16.msra.mxu0 %v3298
    %3408 = vmatpush.bf16.msra.mxu0 %v3297
    %3409 = vmatpush.bf16.msra.mxu0 %v3296
    %3410 = vmatpush.bf16.msra.mxu0 %v3295
    %3411 = vmatpush.bf16.msra.mxu0 %v3294
    %3412 = vmatpush.bf16.msra.mxu0 %v3293
    %3413 = vmatpush.bf16.msra.mxu0 %v3292
    %3414 = vmatpush.bf16.msra.mxu0 %v3291
    %3415 = vmatmul.bf16.gmra.mxu0 %v3059
    %v3416 = vpop.f32.mrf.mxu0
    %v3417 = vadd.f32 %v3404, %v3416
    %v3418 = vpop.f32.mrf.mxu0
    %3419 = vdwg.mxu0
    %3420 = vmatpush.bf16.msra.mxu0 %v3306
    %3421 = vmatpush.bf16.msra.mxu0 %v3305
    %3422 = vmatpush.bf16.msra.mxu0 %v3304
    %3423 = vmatpush.bf16.msra.mxu0 %v3303
    %3424 = vmatpush.bf16.msra.mxu0 %v3302
    %3425 = vmatpush.bf16.msra.mxu0 %v3301
    %3426 = vmatpush.bf16.msra.mxu0 %v3300
    %3427 = vmatpush.bf16.msra.mxu0 %v3299
    %3428 = vmatmul.bf16.gmra.mxu0 %v3060
    %v3429 = vpop.f32.mrf.mxu0
    %v3430 = vadd.f32 %v3417, %v3429
    %v3431 = vpop.f32.mrf.mxu0
    %3432 = vdwg.mxu0
    %v3433 = vmax.f32 %v3430, 0.0
    %v3434 = vpack.c.bf16 %v3433, %v3433
    %3435 = vst [vmem:[#allocation3 + $0x8] sm:$0xf] %v3434
    %v3436 = vld [vmem:[#allocation2 + $0x30] sm:$0xff]
    %v3437 = vld [vmem:[#allocation2 + $0x38] sm:$0xff]
    %v3438 = vld [vmem:[#allocation2 + $0x40] sm:$0xff]
    %v3439 = vld [vmem:[#allocation10] sm:$0xf]
    %v3440 = vld [vmem:[#allocation10 + $0x4] sm:$0xf]
    %v3441 = vld [vmem:[#allocation10 + $0x8] sm:$0xf]
    %v3442 = vld [vmem:[#allocation10 + $0xc] sm:$0xf]
    %v3443 = vld [vmem:[#allocation10 + $0x10] sm:$0xf]
    %v3444 = vld [vmem:[#allocation10 + $0x14] sm:$0xf]
    %v3445 = vld [vmem:[#allocation10 + $0x18] sm:$0xf]
    %v3446 = vld [vmem:[#allocation10 + $0x1c] sm:$0xf]
    %v3447 = vld [vmem:[#allocation10 + $0x20] sm:$0xf]
    %v3448 = vld [vmem:[#allocation10 + $0x24] sm:$0xf]
    %v3449 = vld [vmem:[#allocation10 + $0x28] sm:$0xf]
    %v3450 = vld [vmem:[#allocation10 + $0x2c] sm:$0xf]
    %v3451 = vld [vmem:[#allocation10 + $0x30] sm:$0xf]
    %v3452 = vld [vmem:[#allocation10 + $0x34] sm:$0xf]
    %v3453 = vld [vmem:[#allocation10 + $0x38] sm:$0xf]
    %v3454 = vld [vmem:[#allocation10 + $0x3c] sm:$0xf]
    %v3455 = vld [vmem:[#allocation10 + $0x40] sm:$0xf]
    %v3456 = vld [vmem:[#allocation10 + $0x44] sm:$0xf]
    %v3457 = vld [vmem:[#allocation10 + $0x48] sm:$0xf]
    %v3458 = vld [vmem:[#allocation10 + $0x4c] sm:$0xf]
    %v3459 = vld [vmem:[#allocation10 + $0x50] sm:$0xf]
    %v3460 = vld [vmem:[#allocation10 + $0x54] sm:$0xf]
    %v3461 = vld [vmem:[#allocation10 + $0x58] sm:$0xf]
    %v3462 = vld [vmem:[#allocation10 + $0x5c] sm:$0xf]
    %v3463 = vld [vmem:[#allocation10 + $0x60] sm:$0xf]
    %v3464 = vld [vmem:[#allocation10 + $0x64] sm:$0xf]
    %v3465 = vld [vmem:[#allocation10 + $0x68] sm:$0xf]
    %v3466 = vld [vmem:[#allocation10 + $0x6c] sm:$0xf]
    %v3467 = vld [vmem:[#allocation10 + $0x70] sm:$0xf]
    %v3468 = vld [vmem:[#allocation10 + $0x74] sm:$0xf]
    %v3469 = vld [vmem:[#allocation10 + $0x78] sm:$0xf]
    %v3470 = vld [vmem:[#allocation10 + $0x7c] sm:$0xf]
    %v3471 = vld [vmem:[#allocation10 + $0x80] sm:$0xf]
    %v3472 = vld [vmem:[#allocation10 + $0x84] sm:$0xf]
    %v3473 = vld [vmem:[#allocation10 + $0x88] sm:$0xf]
    %v3474 = vld [vmem:[#allocation10 + $0x8c] sm:$0xf]
    %v3475 = vld [vmem:[#allocation10 + $0x90] sm:$0xf]
    %v3476 = vld [vmem:[#allocation10 + $0x94] sm:$0xf]
    %v3477 = vld [vmem:[#allocation10 + $0x98] sm:$0xf]
    %v3478 = vld [vmem:[#allocation10 + $0x9c] sm:$0xf]
    %v3479 = vld [vmem:[#allocation10 + $0xa0] sm:$0xf]
    %v3480 = vld [vmem:[#allocation10 + $0xa4] sm:$0xf]
    %v3481 = vld [vmem:[#allocation10 + $0xa8] sm:$0xf]
    %v3482 = vld [vmem:[#allocation10 + $0xac] sm:$0xf]
    %v3483 = vld [vmem:[#allocation10 + $0xb0] sm:$0xf]
    %v3484 = vld [vmem:[#allocation10 + $0xb4] sm:$0xf]
    %v3485 = vld [vmem:[#allocation10 + $0xb8] sm:$0xf]
    %v3486 = vld [vmem:[#allocation10 + $0xbc] sm:$0xf]
    %v3487 = vld [vmem:[#allocation10 + $0xc0] sm:$0xf]
    %v3488 = vld [vmem:[#allocation10 + $0xc4] sm:$0xf]
    %v3489 = vld [vmem:[#allocation10 + $0xc8] sm:$0xf]
    %v3490 = vld [vmem:[#allocation10 + $0xcc] sm:$0xf]
    %v3491 = vld [vmem:[#allocation10 + $0xd0] sm:$0xf]
    %v3492 = vld [vmem:[#allocation10 + $0xd4] sm:$0xf]
    %v3493 = vld [vmem:[#allocation10 + $0xd8] sm:$0xf]
    %v3494 = vld [vmem:[#allocation10 + $0xdc] sm:$0xf]
    %v3495 = vld [vmem:[#allocation10 + $0xe0] sm:$0xf]
    %v3496 = vld [vmem:[#allocation10 + $0xe4] sm:$0xf]
    %v3497 = vld [vmem:[#allocation10 + $0xe8] sm:$0xf]
    %v3498 = vld [vmem:[#allocation10 + $0xec] sm:$0xf]
    %v3499 = vld [vmem:[#allocation10 + $0xf0] sm:$0xf]
    %v3500 = vld [vmem:[#allocation10 + $0xf4] sm:$0xf]
    %v3501 = vld [vmem:[#allocation10 + $0xf8] sm:$0xf]
    %v3502 = vld [vmem:[#allocation10 + $0xfc] sm:$0xf]
    %v3503 = vld [vmem:[#allocation10 + $0x100] sm:$0xf]
    %v3504 = vld [vmem:[#allocation10 + $0x104] sm:$0xf]
    %v3505 = vld [vmem:[#allocation10 + $0x108] sm:$0xf]
    %v3506 = vld [vmem:[#allocation10 + $0x10c] sm:$0xf]
    %v3507 = vld [vmem:[#allocation10 + $0x110] sm:$0xf]
    %v3508 = vld [vmem:[#allocation10 + $0x114] sm:$0xf]
    %v3509 = vld [vmem:[#allocation10 + $0x118] sm:$0xf]
    %v3510 = vld [vmem:[#allocation10 + $0x11c] sm:$0xf]
    %v3511 = vld [vmem:[#allocation10 + $0x120] sm:$0xf]
    %v3512 = vld [vmem:[#allocation10 + $0x124] sm:$0xf]
    %v3513 = vld [vmem:[#allocation10 + $0x128] sm:$0xf]
    %v3514 = vld [vmem:[#allocation10 + $0x12c] sm:$0xf]
    %v3515 = vld [vmem:[#allocation10 + $0x130] sm:$0xf]
    %v3516 = vld [vmem:[#allocation10 + $0x134] sm:$0xf]
    %v3517 = vld [vmem:[#allocation10 + $0x138] sm:$0xf]
    %v3518 = vld [vmem:[#allocation10 + $0x13c] sm:$0xf]
    %v3519 = vld [vmem:[#allocation10 + $0x140] sm:$0xf]
    %v3520 = vld [vmem:[#allocation10 + $0x144] sm:$0xf]
    %v3521 = vld [vmem:[#allocation10 + $0x148] sm:$0xf]
    %v3522 = vld [vmem:[#allocation10 + $0x14c] sm:$0xf]
    %v3523 = vld [vmem:[#allocation10 + $0x150] sm:$0xf]
    %v3524 = vld [vmem:[#allocation10 + $0x154] sm:$0xf]
    %v3525 = vld [vmem:[#allocation10 + $0x158] sm:$0xf]
    %v3526 = vld [vmem:[#allocation10 + $0x15c] sm:$0xf]
    %v3527 = vld [vmem:[#allocation10 + $0x160] sm:$0xf]
    %v3528 = vld [vmem:[#allocation10 + $0x164] sm:$0xf]
    %v3529 = vld [vmem:[#allocation10 + $0x168] sm:$0xf]
    %v3530 = vld [vmem:[#allocation10 + $0x16c] sm:$0xf]
    %v3531 = vld [vmem:[#allocation10 + $0x170] sm:$0xf]
    %v3532 = vld [vmem:[#allocation10 + $0x174] sm:$0xf]
    %v3533 = vld [vmem:[#allocation10 + $0x178] sm:$0xf]
    %v3534 = vld [vmem:[#allocation10 + $0x17c] sm:$0xf]
    %v3535 = vld [vmem:[#allocation11] sm:$0x1]
    %v3537 = vperm.slane %v3535, 0
    %v3542 = vunpack.c.l.b16 %v3436
    %v3543 = vunpack.c.h.b16 %v3436
    %v3544 = vunpack.c.l.b16 %v3437
    %v3545 = vunpack.c.h.b16 %v3437
    %v3546 = vunpack.c.l.b16 %v3438
    %v3547 = vunpack.c.h.b16 %v3438
    %v3548 = vpack.c.b16 %v3542, %v3542
    %v3549 = vpack.c.b16 %v3543, %v3543
    %v3550 = vpack.c.b16 %v3544, %v3544
    %v3551 = vpack.c.b16 %v3545, %v3545
    %v3552 = vpack.c.b16 %v3546, %v3546
    %v3553 = vpack.c.b16 %v3547, %v3547
    %v3656 = vunpack.c.l.b16 %v3439
    %v3657 = vunpack.c.l.b16 %v3440
    %v3658 = vunpack.c.l.b16 %v3441
    %v3659 = vunpack.c.l.b16 %v3442
    %v3660 = vunpack.c.l.b16 %v3443
    %v3661 = vunpack.c.l.b16 %v3444
    %v3662 = vunpack.c.l.b16 %v3445
    %v3663 = vunpack.c.l.b16 %v3446
    %v3664 = vunpack.c.l.b16 %v3447
    %v3665 = vunpack.c.l.b16 %v3448
    %v3666 = vunpack.c.l.b16 %v3449
    %v3667 = vunpack.c.l.b16 %v3450
    %v3668 = vunpack.c.l.b16 %v3451
    %v3669 = vunpack.c.l.b16 %v3452
    %v3670 = vunpack.c.l.b16 %v3453
    %v3671 = vunpack.c.l.b16 %v3454
    %v3672 = vunpack.c.l.b16 %v3455
    %v3673 = vunpack.c.l.b16 %v3456
    %v3674 = vunpack.c.l.b16 %v3457
    %v3675 = vunpack.c.l.b16 %v3458
    %v3676 = vunpack.c.l.b16 %v3459
    %v3677 = vunpack.c.l.b16 %v3460
    %v3678 = vunpack.c.l.b16 %v3461
    %v3679 = vunpack.c.l.b16 %v3462
    %v3680 = vunpack.c.l.b16 %v3463
    %v3681 = vunpack.c.l.b16 %v3464
    %v3682 = vunpack.c.l.b16 %v3465
    %v3683 = vunpack.c.l.b16 %v3466
    %v3684 = vunpack.c.l.b16 %v3467
    %v3685 = vunpack.c.l.b16 %v3468
    %v3686 = vunpack.c.l.b16 %v3469
    %v3687 = vunpack.c.l.b16 %v3470
    %v3688 = vunpack.c.l.b16 %v3471
    %v3689 = vunpack.c.l.b16 %v3472
    %v3690 = vunpack.c.l.b16 %v3473
    %v3691 = vunpack.c.l.b16 %v3474
    %v3692 = vunpack.c.l.b16 %v3475
    %v3693 = vunpack.c.l.b16 %v3476
    %v3694 = vunpack.c.l.b16 %v3477
    %v3695 = vunpack.c.l.b16 %v3478
    %v3696 = vunpack.c.l.b16 %v3479
    %v3697 = vunpack.c.l.b16 %v3480
    %v3698 = vunpack.c.l.b16 %v3481
    %v3699 = vunpack.c.l.b16 %v3482
    %v3700 = vunpack.c.l.b16 %v3483
    %v3701 = vunpack.c.l.b16 %v3484
    %v3702 = vunpack.c.l.b16 %v3485
    %v3703 = vunpack.c.l.b16 %v3486
    %v3704 = vunpack.c.l.b16 %v3487
    %v3705 = vunpack.c.l.b16 %v3488
    %v3706 = vunpack.c.l.b16 %v3489
    %v3707 = vunpack.c.l.b16 %v3490
    %v3708 = vunpack.c.l.b16 %v3491
    %v3709 = vunpack.c.l.b16 %v3492
    %v3710 = vunpack.c.l.b16 %v3493
    %v3711 = vunpack.c.l.b16 %v3494
    %v3712 = vunpack.c.l.b16 %v3495
    %v3713 = vunpack.c.l.b16 %v3496
    %v3714 = vunpack.c.l.b16 %v3497
    %v3715 = vunpack.c.l.b16 %v3498
    %v3716 = vunpack.c.l.b16 %v3499
    %v3717 = vunpack.c.l.b16 %v3500
    %v3718 = vunpack.c.l.b16 %v3501
    %v3719 = vunpack.c.l.b16 %v3502
    %v3720 = vunpack.c.l.b16 %v3503
    %v3721 = vunpack.c.l.b16 %v3504
    %v3722 = vunpack.c.l.b16 %v3505
    %v3723 = vunpack.c.l.b16 %v3506
    %v3724 = vunpack.c.l.b16 %v3507
    %v3725 = vunpack.c.l.b16 %v3508
    %v3726 = vunpack.c.l.b16 %v3509
    %v3727 = vunpack.c.l.b16 %v3510
    %v3728 = vunpack.c.l.b16 %v3511
    %v3729 = vunpack.c.l.b16 %v3512
    %v3730 = vunpack.c.l.b16 %v3513
    %v3731 = vunpack.c.l.b16 %v3514
    %v3732 = vunpack.c.l.b16 %v3515
    %v3733 = vunpack.c.l.b16 %v3516
    %v3734 = vunpack.c.l.b16 %v3517
    %v3735 = vunpack.c.l.b16 %v3518
    %v3736 = vunpack.c.l.b16 %v3519
    %v3737 = vunpack.c.l.b16 %v3520
    %v3738 = vunpack.c.l.b16 %v3521
    %v3739 = vunpack.c.l.b16 %v3522
    %v3740 = vunpack.c.l.b16 %v3523
    %v3741 = vunpack.c.l.b16 %v3524
    %v3742 = vunpack.c.l.b16 %v3525
    %v3743 = vunpack.c.l.b16 %v3526
    %v3744 = vunpack.c.l.b16 %v3527
    %v3745 = vunpack.c.l.b16 %v3528
    %v3746 = vunpack.c.l.b16 %v3529
    %v3747 = vunpack.c.l.b16 %v3530
    %v3748 = vunpack.c.l.b16 %v3531
    %v3749 = vunpack.c.l.b16 %v3532
    %v3750 = vunpack.c.l.b16 %v3533
    %v3751 = vunpack.c.l.b16 %v3534
    %v3752 = vpack.c.b16 %v3657, %v3656
    %v3753 = vpack.c.b16 %v3659, %v3658
    %v3754 = vpack.c.b16 %v3661, %v3660
    %v3755 = vpack.c.b16 %v3663, %v3662
    %v3756 = vpack.c.b16 %v3665, %v3664
    %v3757 = vpack.c.b16 %v3667, %v3666
    %v3758 = vpack.c.b16 %v3669, %v3668
    %v3759 = vpack.c.b16 %v3671, %v3670
    %v3760 = vpack.c.b16 %v3673, %v3672
    %v3761 = vpack.c.b16 %v3675, %v3674
    %v3762 = vpack.c.b16 %v3677, %v3676
    %v3763 = vpack.c.b16 %v3679, %v3678
    %v3764 = vpack.c.b16 %v3681, %v3680
    %v3765 = vpack.c.b16 %v3683, %v3682
    %v3766 = vpack.c.b16 %v3685, %v3684
    %v3767 = vpack.c.b16 %v3687, %v3686
    %v3768 = vpack.c.b16 %v3689, %v3688
    %v3769 = vpack.c.b16 %v3691, %v3690
    %v3770 = vpack.c.b16 %v3693, %v3692
    %v3771 = vpack.c.b16 %v3695, %v3694
    %v3772 = vpack.c.b16 %v3697, %v3696
    %v3773 = vpack.c.b16 %v3699, %v3698
    %v3774 = vpack.c.b16 %v3701, %v3700
    %v3775 = vpack.c.b16 %v3703, %v3702
    %v3776 = vpack.c.b16 %v3705, %v3704
    %v3777 = vpack.c.b16 %v3707, %v3706
    %v3778 = vpack.c.b16 %v3709, %v3708
    %v3779 = vpack.c.b16 %v3711, %v3710
    %v3780 = vpack.c.b16 %v3713, %v3712
    %v3781 = vpack.c.b16 %v3715, %v3714
    %v3782 = vpack.c.b16 %v3717, %v3716
    %v3783 = vpack.c.b16 %v3719, %v3718
    %v3784 = vpack.c.b16 %v3721, %v3720
    %v3785 = vpack.c.b16 %v3723, %v3722
    %v3786 = vpack.c.b16 %v3725, %v3724
    %v3787 = vpack.c.b16 %v3727, %v3726
    %v3788 = vpack.c.b16 %v3729, %v3728
    %v3789 = vpack.c.b16 %v3731, %v3730
    %v3790 = vpack.c.b16 %v3733, %v3732
    %v3791 = vpack.c.b16 %v3735, %v3734
    %v3792 = vpack.c.b16 %v3737, %v3736
    %v3793 = vpack.c.b16 %v3739, %v3738
    %v3794 = vpack.c.b16 %v3741, %v3740
    %v3795 = vpack.c.b16 %v3743, %v3742
    %v3796 = vpack.c.b16 %v3745, %v3744
    %v3797 = vpack.c.b16 %v3747, %v3746
    %v3798 = vpack.c.b16 %v3749, %v3748
    %v3799 = vpack.c.b16 %v3751, %v3750
    %3848 = vmatpush.bf16.msra.mxu0 %v3759
    %3849 = vmatpush.bf16.msra.mxu0 %v3758
    %3850 = vmatpush.bf16.msra.mxu0 %v3757
    %3851 = vmatpush.bf16.msra.mxu0 %v3756
    %3852 = vmatpush.bf16.msra.mxu0 %v3755
    %3853 = vmatpush.bf16.msra.mxu0 %v3754
    %3854 = vmatpush.bf16.msra.mxu0 %v3753
    %3855 = vmatpush.bf16.msra.mxu0 %v3752
    %3856 = vmatmul.bf16.gmra.mxu0 %v3548
    %v3857 = vpop.f32.mrf.mxu0
    %v3858 = vadd.f32 %v3537, %v3857
    %v3859 = vpop.f32.mrf.mxu0
    %3860 = vdwg.mxu0
    %3861 = vmatpush.bf16.msra.mxu0 %v3767
    %3862 = vmatpush.bf16.msra.mxu0 %v3766
    %3863 = vmatpush.bf16.msra.mxu0 %v3765
    %3864 = vmatpush.bf16.msra.mxu0 %v3764
    %3865 = vmatpush.bf16.msra.mxu0 %v3763
    %3866 = vmatpush.bf16.msra.mxu0 %v3762
    %3867 = vmatpush.bf16.msra.mxu0 %v3761
    %3868 = vmatpush.bf16.msra.mxu0 %v3760
    %3869 = vmatmul.bf16.gmra.mxu0 %v3549
    %v3870 = vpop.f32.mrf.mxu0
    %v3871 = vadd.f32 %v3858, %v3870
    %v3872 = vpop.f32.mrf.mxu0
    %3873 = vdwg.mxu0
    %3874 = vmatpush.bf16.msra.mxu0 %v3775
    %3875 = vmatpush.bf16.msra.mxu0 %v3774
    %3876 = vmatpush.bf16.msra.mxu0 %v3773
    %3877 = vmatpush.bf16.msra.mxu0 %v3772
    %3878 = vmatpush.bf16.msra.mxu0 %v3771
    %3879 = vmatpush.bf16.msra.mxu0 %v3770
    %3880 = vmatpush.bf16.msra.mxu0 %v3769
    %3881 = vmatpush.bf16.msra.mxu0 %v3768
    %3882 = vmatmul.bf16.gmra.mxu0 %v3550
    %v3883 = vpop.f32.mrf.mxu0
    %v3884 = vadd.f32 %v3871, %v3883
    %v3885 = vpop.f32.mrf.mxu0
    %3886 = vdwg.mxu0
    %3887 = vmatpush.bf16.msra.mxu0 %v3783
    %3888 = vmatpush.bf16.msra.mxu0 %v3782
    %3889 = vmatpush.bf16.msra.mxu0 %v3781
    %3890 = vmatpush.bf16.msra.mxu0 %v3780
    %3891 = vmatpush.bf16.msra.mxu0 %v3779
    %3892 = vmatpush.bf16.msra.mxu0 %v3778
    %3893 = vmatpush.bf16.msra.mxu0 %v3777
    %3894 = vmatpush.bf16.msra.mxu0 %v3776
    %3895 = vmatmul.bf16.gmra.mxu0 %v3551
    %v3896 = vpop.f32.mrf.mxu0
    %v3897 = vadd.f32 %v3884, %v3896
    %v3898 = vpop.f32.mrf.mxu0
    %3899 = vdwg.mxu0
    %3900 = vmatpush.bf16.msra.mxu0 %v3791
    %3901 = vmatpush.bf16.msra.mxu0 %v3790
    %3902 = vmatpush.bf16.msra.mxu0 %v3789
    %3903 = vmatpush.bf16.msra.mxu0 %v3788
    %3904 = vmatpush.bf16.msra.mxu0 %v3787
    %3905 = vmatpush.bf16.msra.mxu0 %v3786
    %3906 = vmatpush.bf16.msra.mxu0 %v3785
    %3907 = vmatpush.bf16.msra.mxu0 %v3784
    %3908 = vmatmul.bf16.gmra.mxu0 %v3552
    %v3909 = vpop.f32.mrf.mxu0
    %v3910 = vadd.f32 %v3897, %v3909
    %v3911 = vpop.f32.mrf.mxu0
    %3912 = vdwg.mxu0
    %3913 = vmatpush.bf16.msra.mxu0 %v3799
    %3914 = vmatpush.bf16.msra.mxu0 %v3798
    %3915 = vmatpush.bf16.msra.mxu0 %v3797
    %3916 = vmatpush.bf16.msra.mxu0 %v3796
    %3917 = vmatpush.bf16.msra.mxu0 %v3795
    %3918 = vmatpush.bf16.msra.mxu0 %v3794
    %3919 = vmatpush.bf16.msra.mxu0 %v3793
    %3920 = vmatpush.bf16.msra.mxu0 %v3792
    %3921 = vmatmul.bf16.gmra.mxu0 %v3553
    %v3922 = vpop.f32.mrf.mxu0
    %v3923 = vadd.f32 %v3910, %v3922
    %v3924 = vpop.f32.mrf.mxu0
    %3925 = vdwg.mxu0
    %v3926 = vmax.f32 %v3923, 0.0
    %v3927 = vpack.c.bf16 %v3926, %v3926
    %3928 = vst [vmem:[#allocation3 + $0xc] sm:$0xf] %v3927
    %v3929 = vld [vmem:[#allocation3] sm:$0xff]
    %v3930 = vld [vmem:[#allocation3 + $0x8] sm:$0xff]
    %v3931 = vld [vmem:[#allocation13] sm:$0xf]
    %v3932 = vld [vmem:[#allocation13 + $0x4] sm:$0xf]
    %v3933 = vld [vmem:[#allocation13 + $0x8] sm:$0xf]
    %v3934 = vld [vmem:[#allocation13 + $0xc] sm:$0xf]
    %v3935 = vld [vmem:[#allocation13 + $0x10] sm:$0xf]
    %v3936 = vld [vmem:[#allocation13 + $0x14] sm:$0xf]
    %v3937 = vld [vmem:[#allocation13 + $0x18] sm:$0xf]
    %v3938 = vld [vmem:[#allocation13 + $0x1c] sm:$0xf]
    %v3939 = vld [vmem:[#allocation13 + $0x20] sm:$0xf]
    %v3940 = vld [vmem:[#allocation13 + $0x24] sm:$0xf]
    %v3941 = vld [vmem:[#allocation13 + $0x28] sm:$0xf]
    %v3942 = vld [vmem:[#allocation13 + $0x2c] sm:$0xf]
    %v3943 = vld [vmem:[#allocation13 + $0x30] sm:$0xf]
    %v3944 = vld [vmem:[#allocation13 + $0x34] sm:$0xf]
    %v3945 = vld [vmem:[#allocation13 + $0x38] sm:$0xf]
    %v3946 = vld [vmem:[#allocation13 + $0x3c] sm:$0xf]
    %v3947 = vld [vmem:[#allocation13 + $0x40] sm:$0xf]
    %v3948 = vld [vmem:[#allocation13 + $0x44] sm:$0xf]
    %v3949 = vld [vmem:[#allocation13 + $0x48] sm:$0xf]
    %v3950 = vld [vmem:[#allocation13 + $0x4c] sm:$0xf]
    %v3951 = vld [vmem:[#allocation13 + $0x50] sm:$0xf]
    %v3952 = vld [vmem:[#allocation13 + $0x54] sm:$0xf]
    %v3953 = vld [vmem:[#allocation13 + $0x58] sm:$0xf]
    %v3954 = vld [vmem:[#allocation13 + $0x5c] sm:$0xf]
    %v3955 = vld [vmem:[#allocation13 + $0x60] sm:$0xf]
    %v3956 = vld [vmem:[#allocation13 + $0x64] sm:$0xf]
    %v3957 = vld [vmem:[#allocation13 + $0x68] sm:$0xf]
    %v3958 = vld [vmem:[#allocation13 + $0x6c] sm:$0xf]
    %v3959 = vld [vmem:[#allocation13 + $0x70] sm:$0xf]
    %v3960 = vld [vmem:[#allocation13 + $0x74] sm:$0xf]
    %v3961 = vld [vmem:[#allocation13 + $0x78] sm:$0xf]
    %v3962 = vld [vmem:[#allocation13 + $0x7c] sm:$0xf]
    %v3963 = vld [vmem:[#allocation13 + $0x80] sm:$0xf]
    %v3964 = vld [vmem:[#allocation13 + $0x84] sm:$0xf]
    %v3965 = vld [vmem:[#allocation13 + $0x88] sm:$0xf]
    %v3966 = vld [vmem:[#allocation13 + $0x8c] sm:$0xf]
    %v3967 = vld [vmem:[#allocation13 + $0x90] sm:$0xf]
    %v3968 = vld [vmem:[#allocation13 + $0x94] sm:$0xf]
    %v3969 = vld [vmem:[#allocation13 + $0x98] sm:$0xf]
    %v3970 = vld [vmem:[#allocation13 + $0x9c] sm:$0xf]
    %v3971 = vld [vmem:[#allocation13 + $0xa0] sm:$0xf]
    %v3972 = vld [vmem:[#allocation13 + $0xa4] sm:$0xf]
    %v3973 = vld [vmem:[#allocation13 + $0xa8] sm:$0xf]
    %v3974 = vld [vmem:[#allocation13 + $0xac] sm:$0xf]
    %v3975 = vld [vmem:[#allocation13 + $0xb0] sm:$0xf]
    %v3976 = vld [vmem:[#allocation13 + $0xb4] sm:$0xf]
    %v3977 = vld [vmem:[#allocation13 + $0xb8] sm:$0xf]
    %v3978 = vld [vmem:[#allocation13 + $0xbc] sm:$0xf]
    %v3979 = vld [vmem:[#allocation13 + $0xc0] sm:$0xf]
    %v3980 = vld [vmem:[#allocation13 + $0xc4] sm:$0xf]
    %v3981 = vld [vmem:[#allocation13 + $0xc8] sm:$0xf]
    %v3982 = vld [vmem:[#allocation13 + $0xcc] sm:$0xf]
    %v3983 = vld [vmem:[#allocation13 + $0xd0] sm:$0xf]
    %v3984 = vld [vmem:[#allocation13 + $0xd4] sm:$0xf]
    %v3985 = vld [vmem:[#allocation13 + $0xd8] sm:$0xf]
    %v3986 = vld [vmem:[#allocation13 + $0xdc] sm:$0xf]
    %v3987 = vld [vmem:[#allocation13 + $0xe0] sm:$0xf]
    %v3988 = vld [vmem:[#allocation13 + $0xe4] sm:$0xf]
    %v3989 = vld [vmem:[#allocation13 + $0xe8] sm:$0xf]
    %v3990 = vld [vmem:[#allocation13 + $0xec] sm:$0xf]
    %v3991 = vld [vmem:[#allocation13 + $0xf0] sm:$0xf]
    %v3992 = vld [vmem:[#allocation13 + $0xf4] sm:$0xf]
    %v3993 = vld [vmem:[#allocation13 + $0xf8] sm:$0xf]
    %v3994 = vld [vmem:[#allocation13 + $0xfc] sm:$0xf]
    %v3995 = vld [vmem:[#allocation14] sm:$0x1]
    %v3997 = vperm.slane %v3995, 0
    %v4001 = vunpack.c.l.b16 %v3929
    %v4002 = vunpack.c.h.b16 %v3929
    %v4003 = vunpack.c.l.b16 %v3930
    %v4004 = vunpack.c.h.b16 %v3930
    %v4005 = vpack.c.b16 %v4001, %v4001
    %v4006 = vpack.c.b16 %v4002, %v4002
    %v4007 = vpack.c.b16 %v4003, %v4003
    %v4008 = vpack.c.b16 %v4004, %v4004
    %v4077 = vunpack.c.l.b16 %v3931
    %v4078 = vunpack.c.l.b16 %v3932
    %v4079 = vunpack.c.l.b16 %v3933
    %v4080 = vunpack.c.l.b16 %v3934
    %v4081 = vunpack.c.l.b16 %v3935
    %v4082 = vunpack.c.l.b16 %v3936
    %v4083 = vunpack.c.l.b16 %v3937
    %v4084 = vunpack.c.l.b16 %v3938
    %v4085 = vunpack.c.l.b16 %v3939
    %v4086 = vunpack.c.l.b16 %v3940
    %v4087 = vunpack.c.l.b16 %v3941
    %v4088 = vunpack.c.l.b16 %v3942
    %v4089 = vunpack.c.l.b16 %v3943
    %v4090 = vunpack.c.l.b16 %v3944
    %v4091 = vunpack.c.l.b16 %v3945
    %v4092 = vunpack.c.l.b16 %v3946
    %v4093 = vunpack.c.l.b16 %v3947
    %v4094 = vunpack.c.l.b16 %v3948
    %v4095 = vunpack.c.l.b16 %v3949
    %v4096 = vunpack.c.l.b16 %v3950
    %v4097 = vunpack.c.l.b16 %v3951
    %v4098 = vunpack.c.l.b16 %v3952
    %v4099 = vunpack.c.l.b16 %v3953
    %v4100 = vunpack.c.l.b16 %v3954
    %v4101 = vunpack.c.l.b16 %v3955
    %v4102 = vunpack.c.l.b16 %v3956
    %v4103 = vunpack.c.l.b16 %v3957
    %v4104 = vunpack.c.l.b16 %v3958
    %v4105 = vunpack.c.l.b16 %v3959
    %v4106 = vunpack.c.l.b16 %v3960
    %v4107 = vunpack.c.l.b16 %v3961
    %v4108 = vunpack.c.l.b16 %v3962
    %v4109 = vunpack.c.l.b16 %v3963
    %v4110 = vunpack.c.l.b16 %v3964
    %v4111 = vunpack.c.l.b16 %v3965
    %v4112 = vunpack.c.l.b16 %v3966
    %v4113 = vunpack.c.l.b16 %v3967
    %v4114 = vunpack.c.l.b16 %v3968
    %v4115 = vunpack.c.l.b16 %v3969
    %v4116 = vunpack.c.l.b16 %v3970
    %v4117 = vunpack.c.l.b16 %v3971
    %v4118 = vunpack.c.l.b16 %v3972
    %v4119 = vunpack.c.l.b16 %v3973
    %v4120 = vunpack.c.l.b16 %v3974
    %v4121 = vunpack.c.l.b16 %v3975
    %v4122 = vunpack.c.l.b16 %v3976
    %v4123 = vunpack.c.l.b16 %v3977
    %v4124 = vunpack.c.l.b16 %v3978
    %v4125 = vunpack.c.l.b16 %v3979
    %v4126 = vunpack.c.l.b16 %v3980
    %v4127 = vunpack.c.l.b16 %v3981
    %v4128 = vunpack.c.l.b16 %v3982
    %v4129 = vunpack.c.l.b16 %v3983
    %v4130 = vunpack.c.l.b16 %v3984
    %v4131 = vunpack.c.l.b16 %v3985
    %v4132 = vunpack.c.l.b16 %v3986
    %v4133 = vunpack.c.l.b16 %v3987
    %v4134 = vunpack.c.l.b16 %v3988
    %v4135 = vunpack.c.l.b16 %v3989
    %v4136 = vunpack.c.l.b16 %v3990
    %v4137 = vunpack.c.l.b16 %v3991
    %v4138 = vunpack.c.l.b16 %v3992
    %v4139 = vunpack.c.l.b16 %v3993
    %v4140 = vunpack.c.l.b16 %v3994
    %v4141 = vpack.c.b16 %v4078, %v4077
    %v4142 = vpack.c.b16 %v4080, %v4079
    %v4143 = vpack.c.b16 %v4082, %v4081
    %v4144 = vpack.c.b16 %v4084, %v4083
    %v4145 = vpack.c.b16 %v4086, %v4085
    %v4146 = vpack.c.b16 %v4088, %v4087
    %v4147 = vpack.c.b16 %v4090, %v4089
    %v4148 = vpack.c.b16 %v4092, %v4091
    %v4149 = vpack.c.b16 %v4094, %v4093
    %v4150 = vpack.c.b16 %v4096, %v4095
    %v4151 = vpack.c.b16 %v4098, %v4097
    %v4152 = vpack.c.b16 %v4100, %v4099
    %v4153 = vpack.c.b16 %v4102, %v4101
    %v4154 = vpack.c.b16 %v4104, %v4103
    %v4155 = vpack.c.b16 %v4106, %v4105
    %v4156 = vpack.c.b16 %v4108, %v4107
    %v4157 = vpack.c.b16 %v4110, %v4109
    %v4158 = vpack.c.b16 %v4112, %v4111
    %v4159 = vpack.c.b16 %v4114, %v4113
    %v4160 = vpack.c.b16 %v4116, %v4115
    %v4161 = vpack.c.b16 %v4118, %v4117
    %v4162 = vpack.c.b16 %v4120, %v4119
    %v4163 = vpack.c.b16 %v4122, %v4121
    %v4164 = vpack.c.b16 %v4124, %v4123
    %v4165 = vpack.c.b16 %v4126, %v4125
    %v4166 = vpack.c.b16 %v4128, %v4127
    %v4167 = vpack.c.b16 %v4130, %v4129
    %v4168 = vpack.c.b16 %v4132, %v4131
    %v4169 = vpack.c.b16 %v4134, %v4133
    %v4170 = vpack.c.b16 %v4136, %v4135
    %v4171 = vpack.c.b16 %v4138, %v4137
    %v4172 = vpack.c.b16 %v4140, %v4139
    %4205 = vmatpush.bf16.msra.mxu0 %v4148
    %4206 = vmatpush.bf16.msra.mxu0 %v4147
    %4207 = vmatpush.bf16.msra.mxu0 %v4146
    %4208 = vmatpush.bf16.msra.mxu0 %v4145
    %4209 = vmatpush.bf16.msra.mxu0 %v4144
    %4210 = vmatpush.bf16.msra.mxu0 %v4143
    %4211 = vmatpush.bf16.msra.mxu0 %v4142
    %4212 = vmatpush.bf16.msra.mxu0 %v4141
    %4213 = vmatmul.bf16.gmra.mxu0 %v4005
    %v4214 = vpop.f32.mrf.mxu0
    %v4215 = vadd.f32 %v3997, %v4214
    %v4216 = vpop.f32.mrf.mxu0
    %4217 = vdwg.mxu0
    %4218 = vmatpush.bf16.msra.mxu0 %v4156
    %4219 = vmatpush.bf16.msra.mxu0 %v4155
    %4220 = vmatpush.bf16.msra.mxu0 %v4154
    %4221 = vmatpush.bf16.msra.mxu0 %v4153
    %4222 = vmatpush.bf16.msra.mxu0 %v4152
    %4223 = vmatpush.bf16.msra.mxu0 %v4151
    %4224 = vmatpush.bf16.msra.mxu0 %v4150
    %4225 = vmatpush.bf16.msra.mxu0 %v4149
    %4226 = vmatmul.bf16.gmra.mxu0 %v4006
    %v4227 = vpop.f32.mrf.mxu0
    %v4228 = vadd.f32 %v4215, %v4227
    %v4229 = vpop.f32.mrf.mxu0
    %4230 = vdwg.mxu0
    %4231 = vmatpush.bf16.msra.mxu0 %v4164
    %4232 = vmatpush.bf16.msra.mxu0 %v4163
    %4233 = vmatpush.bf16.msra.mxu0 %v4162
    %4234 = vmatpush.bf16.msra.mxu0 %v4161
    %4235 = vmatpush.bf16.msra.mxu0 %v4160
    %4236 = vmatpush.bf16.msra.mxu0 %v4159
    %4237 = vmatpush.bf16.msra.mxu0 %v4158
    %4238 = vmatpush.bf16.msra.mxu0 %v4157
    %4239 = vmatmul.bf16.gmra.mxu0 %v4007
    %v4240 = vpop.f32.mrf.mxu0
    %v4241 = vadd.f32 %v4228, %v4240
    %v4242 = vpop.f32.mrf.mxu0
    %4243 = vdwg.mxu0
    %4244 = vmatpush.bf16.msra.mxu0 %v4172
    %4245 = vmatpush.bf16.msra.mxu0 %v4171
    %4246 = vmatpush.bf16.msra.mxu0 %v4170
    %4247 = vmatpush.bf16.msra.mxu0 %v4169
    %4248 = vmatpush.bf16.msra.mxu0 %v4168
    %4249 = vmatpush.bf16.msra.mxu0 %v4167
    %4250 = vmatpush.bf16.msra.mxu0 %v4166
    %4251 = vmatpush.bf16.msra.mxu0 %v4165
    %4252 = vmatmul.bf16.gmra.mxu0 %v4008
    %v4253 = vpop.f32.mrf.mxu0
    %v4254 = vadd.f32 %v4241, %v4253
    %v4255 = vpop.f32.mrf.mxu0
    %4256 = vdwg.mxu0
    %v4257 = vmax.f32 %v4254, 0.0
    %v4258 = vpack.c.bf16 %v4257, %v4257
    %v4259 = vld [vmem:[%s7] sm:$0xf]
    %v4260 = vld [vmem:[%s7 + $0x4] sm:$0xf]
    %v4261 = vld [vmem:[%s7 + $0x8] sm:$0xf]
    %v4262 = vld [vmem:[%s7 + $0xc] sm:$0xf]
    %v4263 = vld [vmem:[%s7 + $0x10] sm:$0xf]
    %v4264 = vld [vmem:[%s7 + $0x14] sm:$0xf]
    %v4265 = vld [vmem:[%s7 + $0x18] sm:$0xf]
    %v4266 = vld [vmem:[%s7 + $0x1c] sm:$0xf]
    %v4267 = vld [vmem:[%s7 + $0x20] sm:$0xf]
    %v4268 = vld [vmem:[%s7 + $0x24] sm:$0xf]
    %v4269 = vld [vmem:[%s7 + $0x28] sm:$0xf]
    %v4270 = vld [vmem:[%s7 + $0x2c] sm:$0xf]
    %v4271 = vld [vmem:[%s7 + $0x30] sm:$0xf]
    %v4272 = vld [vmem:[%s7 + $0x34] sm:$0xf]
    %v4273 = vld [vmem:[%s7 + $0x38] sm:$0xf]
    %v4274 = vld [vmem:[%s7 + $0x3c] sm:$0xf]
    %v4275 = vld [vmem:[#allocation16] sm:$0x1]
    %v4277 = vperm.slane %v4275, 0
    %v4295 = vunpack.c.l.b16 %v4259
    %v4296 = vunpack.c.l.b16 %v4260
    %v4297 = vunpack.c.l.b16 %v4261
    %v4298 = vunpack.c.l.b16 %v4262
    %v4299 = vunpack.c.l.b16 %v4263
    %v4300 = vunpack.c.l.b16 %v4264
    %v4301 = vunpack.c.l.b16 %v4265
    %v4302 = vunpack.c.l.b16 %v4266
    %v4303 = vunpack.c.l.b16 %v4267
    %v4304 = vunpack.c.l.b16 %v4268
    %v4305 = vunpack.c.l.b16 %v4269
    %v4306 = vunpack.c.l.b16 %v4270
    %v4307 = vunpack.c.l.b16 %v4271
    %v4308 = vunpack.c.l.b16 %v4272
    %v4309 = vunpack.c.l.b16 %v4273
    %v4310 = vunpack.c.l.b16 %v4274
    %v4311 = vpack.c.b16 %v4296, %v4295
    %v4312 = vpack.c.b16 %v4298, %v4297
    %v4313 = vpack.c.b16 %v4300, %v4299
    %v4314 = vpack.c.b16 %v4302, %v4301
    %v4315 = vpack.c.b16 %v4304, %v4303
    %v4316 = vpack.c.b16 %v4306, %v4305
    %v4317 = vpack.c.b16 %v4308, %v4307
    %v4318 = vpack.c.b16 %v4310, %v4309
    %4327 = vmatpush.bf16.msra.mxu0 %v4318
    %4328 = vmatpush.bf16.msra.mxu0 %v4317
    %4329 = vmatpush.bf16.msra.mxu0 %v4316
    %4330 = vmatpush.bf16.msra.mxu0 %v4315
    %4331 = vmatpush.bf16.msra.mxu0 %v4314
    %4332 = vmatpush.bf16.msra.mxu0 %v4313
    %4333 = vmatpush.bf16.msra.mxu0 %v4312
    %4334 = vmatpush.bf16.msra.mxu0 %v4311
    %4335 = vmatmul.bf16.gmra.mxu0 %v4258
    %v4336 = vpop.f32.mrf.mxu0
    %v4337 = vadd.f32 %v4277, %v4336
    %v4338 = vpop.f32.mrf.mxu0
    %4339 = vdwg.mxu0
    %v4340 = vmax.f32 %v4337, 0.0
    %s4341 = smul.u32 4, 64
    %s4342 = smul.u32 %s4341, 16
    %s4343 = sshll.u32 %s4342, 4
    %4344 = dma.done [#allocation5], %s4343
    %v4345 = vld [vmem:[%s9] sm:$0xff]
    %v4346 = vld [vmem:[%s9 + $0x8] sm:$0xff]
    %v4347 = vld [vmem:[%s9 + $0x10] sm:$0xff]
    %v4348 = vld [vmem:[%s9 + $0x18] sm:$0xff]
    %v4349 = vpack.c.bf16 %v4345, %v4345
    %v4350 = vpack.c.bf16 %v4346, %v4346
    %v4351 = vpack.c.bf16 %v4347, %v4347
    %v4352 = vpack.c.bf16 %v4348, %v4348
    %v4353 = vld [vmem:[#allocation4] sm:$0xff]
    %v4354 = vld [vmem:[#allocation4 + $0x8] sm:$0xff]
    %v4355 = vld [vmem:[#allocation4 + $0x10] sm:$0xff]
    %v4356 = vld [vmem:[#allocation4 + $0x18] sm:$0xff]
    %v4357 = vld [vmem:[#allocation4 + $0x20] sm:$0xff]
    %v4358 = vld [vmem:[#allocation4 + $0x28] sm:$0xff]
    %v4359 = vld [vmem:[#allocation4 + $0x30] sm:$0xff]
    %v4360 = vld [vmem:[#allocation4 + $0x38] sm:$0xff]
    %v4361 = vld [vmem:[#allocation4 + $0x40] sm:$0xff]
    %v4362 = vld [vmem:[#allocation4 + $0x48] sm:$0xff]
    %v4363 = vld [vmem:[#allocation4 + $0x50] sm:$0xff]
    %v4364 = vld [vmem:[#allocation4 + $0x58] sm:$0xff]
    %v4365 = vld [vmem:[#allocation4 + $0x60] sm:$0xff]
    %v4366 = vld [vmem:[#allocation4 + $0x68] sm:$0xff]
    %v4367 = vld [vmem:[#allocation4 + $0x70] sm:$0xff]
    %v4368 = vld [vmem:[#allocation4 + $0x78] sm:$0xff]
    %v4369 = vld [vmem:[#allocation4 + $0x80] sm:$0xff]
    %v4370 = vld [vmem:[#allocation4 + $0x88] sm:$0xff]
    %v4371 = vld [vmem:[#allocation4 + $0x90] sm:$0xff]
    %v4372 = vld [vmem:[#allocation4 + $0x98] sm:$0xff]
    %v4373 = vld [vmem:[#allocation4 + $0xa0] sm:$0xff]
    %v4374 = vld [vmem:[#allocation4 + $0xa8] sm:$0xff]
    %v4375 = vld [vmem:[#allocation4 + $0xb0] sm:$0xff]
    %v4376 = vld [vmem:[#allocation4 + $0xb8] sm:$0xff]
    %v4377 = vld [vmem:[#allocation4 + $0xc0] sm:$0xff]
    %v4378 = vld [vmem:[#allocation4 + $0xc8] sm:$0xff]
    %v4379 = vld [vmem:[#allocation4 + $0xd0] sm:$0xff]
    %v4380 = vld [vmem:[#allocation4 + $0xd8] sm:$0xff]
    %v4381 = vld [vmem:[#allocation4 + $0xe0] sm:$0xff]
    %v4382 = vld [vmem:[#allocation4 + $0xe8] sm:$0xff]
    %v4383 = vld [vmem:[#allocation4 + $0xf0] sm:$0xff]
    %v4384 = vld [vmem:[#allocation4 + $0xf8] sm:$0xff]
    %v4385 = vld [vmem:[#allocation4 + $0x100] sm:$0xff]
    %v4386 = vld [vmem:[#allocation4 + $0x108] sm:$0xff]
    %v4387 = vld [vmem:[#allocation4 + $0x110] sm:$0xff]
    %v4388 = vld [vmem:[#allocation4 + $0x118] sm:$0xff]
    %v4389 = vld [vmem:[#allocation4 + $0x120] sm:$0xff]
    %v4390 = vld [vmem:[#allocation4 + $0x128] sm:$0xff]
    %v4391 = vld [vmem:[#allocation4 + $0x130] sm:$0xff]
    %v4392 = vld [vmem:[#allocation4 + $0x138] sm:$0xff]
    %v4393 = vld [vmem:[#allocation4 + $0x140] sm:$0xff]
    %v4394 = vld [vmem:[#allocation4 + $0x148] sm:$0xff]
    %v4395 = vld [vmem:[#allocation4 + $0x150] sm:$0xff]
    %v4396 = vld [vmem:[#allocation4 + $0x158] sm:$0xff]
    %v4397 = vld [vmem:[#allocation4 + $0x160] sm:$0xff]
    %v4398 = vld [vmem:[#allocation4 + $0x168] sm:$0xff]
    %v4399 = vld [vmem:[#allocation4 + $0x170] sm:$0xff]
    %v4400 = vld [vmem:[#allocation4 + $0x178] sm:$0xff]
    %v4401 = vld [vmem:[#allocation4 + $0x180] sm:$0xff]
    %v4402 = vld [vmem:[#allocation4 + $0x188] sm:$0xff]
    %v4403 = vld [vmem:[#allocation4 + $0x190] sm:$0xff]
    %v4404 = vld [vmem:[#allocation4 + $0x198] sm:$0xff]
    %v4405 = vld [vmem:[#allocation4 + $0x1a0] sm:$0xff]
    %v4406 = vld [vmem:[#allocation4 + $0x1a8] sm:$0xff]
    %v4407 = vld [vmem:[#allocation4 + $0x1b0] sm:$0xff]
    %v4408 = vld [vmem:[#allocation4 + $0x1b8] sm:$0xff]
    %v4409 = vld [vmem:[#allocation4 + $0x1c0] sm:$0xff]
    %v4410 = vld [vmem:[#allocation4 + $0x1c8] sm:$0xff]
    %v4411 = vld [vmem:[#allocation4 + $0x1d0] sm:$0xff]
    %v4412 = vld [vmem:[#allocation4 + $0x1d8] sm:$0xff]
    %v4413 = vld [vmem:[#allocation4 + $0x1e0] sm:$0xff]
    %v4414 = vld [vmem:[#allocation4 + $0x1e8] sm:$0xff]
    %v4415 = vld [vmem:[#allocation4 + $0x1f0] sm:$0xff]
    %v4416 = vld [vmem:[#allocation4 + $0x1f8] sm:$0xff]
    %v4417 = vld [vmem:[#allocation4 + $0x200] sm:$0xff]
    %v4418 = vld [vmem:[#allocation4 + $0x208] sm:$0xff]
    %v4419 = vld [vmem:[#allocation4 + $0x210] sm:$0xff]
    %v4420 = vld [vmem:[#allocation4 + $0x218] sm:$0xff]
    %v4421 = vld [vmem:[#allocation4 + $0x220] sm:$0xff]
    %v4422 = vld [vmem:[#allocation4 + $0x228] sm:$0xff]
    %v4423 = vld [vmem:[#allocation4 + $0x230] sm:$0xff]
    %v4424 = vld [vmem:[#allocation4 + $0x238] sm:$0xff]
    %v4425 = vld [vmem:[#allocation4 + $0x240] sm:$0xff]
    %v4426 = vld [vmem:[#allocation4 + $0x248] sm:$0xff]
    %v4427 = vld [vmem:[#allocation4 + $0x250] sm:$0xff]
    %v4428 = vld [vmem:[#allocation4 + $0x258] sm:$0xff]
    %v4429 = vld [vmem:[#allocation4 + $0x260] sm:$0xff]
    %v4430 = vld [vmem:[#allocation4 + $0x268] sm:$0xff]
    %v4431 = vld [vmem:[#allocation4 + $0x270] sm:$0xff]
    %v4432 = vld [vmem:[#allocation4 + $0x278] sm:$0xff]
    %v4433 = vld [vmem:[#allocation4 + $0x280] sm:$0xff]
    %v4434 = vld [vmem:[#allocation4 + $0x288] sm:$0xff]
    %v4435 = vld [vmem:[#allocation4 + $0x290] sm:$0xff]
    %v4436 = vld [vmem:[#allocation4 + $0x298] sm:$0xff]
    %v4437 = vld [vmem:[#allocation4 + $0x2a0] sm:$0xff]
    %v4438 = vld [vmem:[#allocation4 + $0x2a8] sm:$0xff]
    %v4439 = vld [vmem:[#allocation4 + $0x2b0] sm:$0xff]
    %v4440 = vld [vmem:[#allocation4 + $0x2b8] sm:$0xff]
    %v4441 = vld [vmem:[#allocation4 + $0x2c0] sm:$0xff]
    %v4442 = vld [vmem:[#allocation4 + $0x2c8] sm:$0xff]
    %v4443 = vld [vmem:[#allocation4 + $0x2d0] sm:$0xff]
    %v4444 = vld [vmem:[#allocation4 + $0x2d8] sm:$0xff]
    %v4445 = vld [vmem:[#allocation4 + $0x2e0] sm:$0xff]
    %v4446 = vld [vmem:[#allocation4 + $0x2e8] sm:$0xff]
    %v4447 = vld [vmem:[#allocation4 + $0x2f0] sm:$0xff]
    %v4448 = vld [vmem:[#allocation4 + $0x2f8] sm:$0xff]
    %v4449 = vld [vmem:[#allocation4 + $0x300] sm:$0xff]
    %v4450 = vld [vmem:[#allocation4 + $0x308] sm:$0xff]
    %v4451 = vld [vmem:[#allocation4 + $0x310] sm:$0xff]
    %v4452 = vld [vmem:[#allocation4 + $0x318] sm:$0xff]
    %v4453 = vld [vmem:[#allocation4 + $0x320] sm:$0xff]
    %v4454 = vld [vmem:[#allocation4 + $0x328] sm:$0xff]
    %v4455 = vld [vmem:[#allocation4 + $0x330] sm:$0xff]
    %v4456 = vld [vmem:[#allocation4 + $0x338] sm:$0xff]
    %v4457 = vld [vmem:[#allocation4 + $0x340] sm:$0xff]
    %v4458 = vld [vmem:[#allocation4 + $0x348] sm:$0xff]
    %v4459 = vld [vmem:[#allocation4 + $0x350] sm:$0xff]
    %v4460 = vld [vmem:[#allocation4 + $0x358] sm:$0xff]
    %v4461 = vld [vmem:[#allocation4 + $0x360] sm:$0xff]
    %v4462 = vld [vmem:[#allocation4 + $0x368] sm:$0xff]
    %v4463 = vld [vmem:[#allocation4 + $0x370] sm:$0xff]
    %v4464 = vld [vmem:[#allocation4 + $0x378] sm:$0xff]
    %v4465 = vld [vmem:[#allocation4 + $0x380] sm:$0xff]
    %v4466 = vld [vmem:[#allocation4 + $0x388] sm:$0xff]
    %v4467 = vld [vmem:[#allocation4 + $0x390] sm:$0xff]
    %v4468 = vld [vmem:[#allocation4 + $0x398] sm:$0xff]
    %v4469 = vld [vmem:[#allocation4 + $0x3a0] sm:$0xff]
    %v4470 = vld [vmem:[#allocation4 + $0x3a8] sm:$0xff]
    %v4471 = vld [vmem:[#allocation4 + $0x3b0] sm:$0xff]
    %v4472 = vld [vmem:[#allocation4 + $0x3b8] sm:$0xff]
    %v4473 = vld [vmem:[#allocation4 + $0x3c0] sm:$0xff]
    %v4474 = vld [vmem:[#allocation4 + $0x3c8] sm:$0xff]
    %v4475 = vld [vmem:[#allocation4 + $0x3d0] sm:$0xff]
    %v4476 = vld [vmem:[#allocation4 + $0x3d8] sm:$0xff]
    %v4477 = vld [vmem:[#allocation4 + $0x3e0] sm:$0xff]
    %v4478 = vld [vmem:[#allocation4 + $0x3e8] sm:$0xff]
    %v4479 = vld [vmem:[#allocation4 + $0x3f0] sm:$0xff]
    %v4480 = vld [vmem:[#allocation4 + $0x3f8] sm:$0xff]
    %v4481 = vld [vmem:[#allocation4 + $0x400] sm:$0xff]
    %v4482 = vld [vmem:[#allocation4 + $0x408] sm:$0xff]
    %v4483 = vld [vmem:[#allocation4 + $0x410] sm:$0xff]
    %v4484 = vld [vmem:[#allocation4 + $0x418] sm:$0xff]
    %v4485 = vld [vmem:[#allocation4 + $0x420] sm:$0xff]
    %v4486 = vld [vmem:[#allocation4 + $0x428] sm:$0xff]
    %v4487 = vld [vmem:[#allocation4 + $0x430] sm:$0xff]
    %v4488 = vld [vmem:[#allocation4 + $0x438] sm:$0xff]
    %v4489 = vld [vmem:[#allocation4 + $0x440] sm:$0xff]
    %v4490 = vld [vmem:[#allocation4 + $0x448] sm:$0xff]
    %v4491 = vld [vmem:[#allocation4 + $0x450] sm:$0xff]
    %v4492 = vld [vmem:[#allocation4 + $0x458] sm:$0xff]
    %v4493 = vld [vmem:[#allocation4 + $0x460] sm:$0xff]
    %v4494 = vld [vmem:[#allocation4 + $0x468] sm:$0xff]
    %v4495 = vld [vmem:[#allocation4 + $0x470] sm:$0xff]
    %v4496 = vld [vmem:[#allocation4 + $0x478] sm:$0xff]
    %v4497 = vld [vmem:[#allocation4 + $0x480] sm:$0xff]
    %v4498 = vld [vmem:[#allocation4 + $0x488] sm:$0xff]
    %v4499 = vld [vmem:[#allocation4 + $0x490] sm:$0xff]
    %v4500 = vld [vmem:[#allocation4 + $0x498] sm:$0xff]
    %v4501 = vld [vmem:[#allocation4 + $0x4a0] sm:$0xff]
    %v4502 = vld [vmem:[#allocation4 + $0x4a8] sm:$0xff]
    %v4503 = vld [vmem:[#allocation4 + $0x4b0] sm:$0xff]
    %v4504 = vld [vmem:[#allocation4 + $0x4b8] sm:$0xff]
    %v4505 = vld [vmem:[#allocation4 + $0x4c0] sm:$0xff]
    %v4506 = vld [vmem:[#allocation4 + $0x4c8] sm:$0xff]
    %v4507 = vld [vmem:[#allocation4 + $0x4d0] sm:$0xff]
    %v4508 = vld [vmem:[#allocation4 + $0x4d8] sm:$0xff]
    %v4509 = vld [vmem:[#allocation4 + $0x4e0] sm:$0xff]
    %v4510 = vld [vmem:[#allocation4 + $0x4e8] sm:$0xff]
    %v4511 = vld [vmem:[#allocation4 + $0x4f0] sm:$0xff]
    %v4512 = vld [vmem:[#allocation4 + $0x4f8] sm:$0xff]
    %v4513 = vld [vmem:[#allocation4 + $0x500] sm:$0xff]
    %v4514 = vld [vmem:[#allocation4 + $0x508] sm:$0xff]
    %v4515 = vld [vmem:[#allocation4 + $0x510] sm:$0xff]
    %v4516 = vld [vmem:[#allocation4 + $0x518] sm:$0xff]
    %v4517 = vld [vmem:[#allocation4 + $0x520] sm:$0xff]
    %v4518 = vld [vmem:[#allocation4 + $0x528] sm:$0xff]
    %v4519 = vld [vmem:[#allocation4 + $0x530] sm:$0xff]
    %v4520 = vld [vmem:[#allocation4 + $0x538] sm:$0xff]
    %v4521 = vld [vmem:[#allocation4 + $0x540] sm:$0xff]
    %v4522 = vld [vmem:[#allocation4 + $0x548] sm:$0xff]
    %v4523 = vld [vmem:[#allocation4 + $0x550] sm:$0xff]
    %v4524 = vld [vmem:[#allocation4 + $0x558] sm:$0xff]
    %v4525 = vld [vmem:[#allocation4 + $0x560] sm:$0xff]
    %v4526 = vld [vmem:[#allocation4 + $0x568] sm:$0xff]
    %v4527 = vld [vmem:[#allocation4 + $0x570] sm:$0xff]
    %v4528 = vld [vmem:[#allocation4 + $0x578] sm:$0xff]
    %v4529 = vld [vmem:[#allocation4 + $0x580] sm:$0xff]
    %v4530 = vld [vmem:[#allocation4 + $0x588] sm:$0xff]
    %v4531 = vld [vmem:[#allocation4 + $0x590] sm:$0xff]
    %v4532 = vld [vmem:[#allocation4 + $0x598] sm:$0xff]
    %v4533 = vld [vmem:[#allocation4 + $0x5a0] sm:$0xff]
    %v4534 = vld [vmem:[#allocation4 + $0x5a8] sm:$0xff]
    %v4535 = vld [vmem:[#allocation4 + $0x5b0] sm:$0xff]
    %v4536 = vld [vmem:[#allocation4 + $0x5b8] sm:$0xff]
    %v4537 = vld [vmem:[#allocation4 + $0x5c0] sm:$0xff]
    %v4538 = vld [vmem:[#allocation4 + $0x5c8] sm:$0xff]
    %v4539 = vld [vmem:[#allocation4 + $0x5d0] sm:$0xff]
    %v4540 = vld [vmem:[#allocation4 + $0x5d8] sm:$0xff]
    %v4541 = vld [vmem:[#allocation4 + $0x5e0] sm:$0xff]
    %v4542 = vld [vmem:[#allocation4 + $0x5e8] sm:$0xff]
    %v4543 = vld [vmem:[#allocation4 + $0x5f0] sm:$0xff]
    %v4544 = vld [vmem:[#allocation4 + $0x5f8] sm:$0xff]
    %v4545 = vld [vmem:[#allocation4 + $0x600] sm:$0xff]
    %v4546 = vld [vmem:[#allocation4 + $0x608] sm:$0xff]
    %v4547 = vld [vmem:[#allocation4 + $0x610] sm:$0xff]
    %v4548 = vld [vmem:[#allocation4 + $0x618] sm:$0xff]
    %v4549 = vld [vmem:[#allocation4 + $0x620] sm:$0xff]
    %v4550 = vld [vmem:[#allocation4 + $0x628] sm:$0xff]
    %v4551 = vld [vmem:[#allocation4 + $0x630] sm:$0xff]
    %v4552 = vld [vmem:[#allocation4 + $0x638] sm:$0xff]
    %v4553 = vld [vmem:[#allocation4 + $0x640] sm:$0xff]
    %v4554 = vld [vmem:[#allocation4 + $0x648] sm:$0xff]
    %v4555 = vld [vmem:[#allocation4 + $0x650] sm:$0xff]
    %v4556 = vld [vmem:[#allocation4 + $0x658] sm:$0xff]
    %v4557 = vld [vmem:[#allocation4 + $0x660] sm:$0xff]
    %v4558 = vld [vmem:[#allocation4 + $0x668] sm:$0xff]
    %v4559 = vld [vmem:[#allocation4 + $0x670] sm:$0xff]
    %v4560 = vld [vmem:[#allocation4 + $0x678] sm:$0xff]
    %v4561 = vld [vmem:[#allocation4 + $0x680] sm:$0xff]
    %v4562 = vld [vmem:[#allocation4 + $0x688] sm:$0xff]
    %v4563 = vld [vmem:[#allocation4 + $0x690] sm:$0xff]
    %v4564 = vld [vmem:[#allocation4 + $0x698] sm:$0xff]
    %v4565 = vld [vmem:[#allocation4 + $0x6a0] sm:$0xff]
    %v4566 = vld [vmem:[#allocation4 + $0x6a8] sm:$0xff]
    %v4567 = vld [vmem:[#allocation4 + $0x6b0] sm:$0xff]
    %v4568 = vld [vmem:[#allocation4 + $0x6b8] sm:$0xff]
    %v4569 = vld [vmem:[#allocation4 + $0x6c0] sm:$0xff]
    %v4570 = vld [vmem:[#allocation4 + $0x6c8] sm:$0xff]
    %v4571 = vld [vmem:[#allocation4 + $0x6d0] sm:$0xff]
    %v4572 = vld [vmem:[#allocation4 + $0x6d8] sm:$0xff]
    %v4573 = vld [vmem:[#allocation4 + $0x6e0] sm:$0xff]
    %v4574 = vld [vmem:[#allocation4 + $0x6e8] sm:$0xff]
    %v4575 = vld [vmem:[#allocation4 + $0x6f0] sm:$0xff]
    %v4576 = vld [vmem:[#allocation4 + $0x6f8] sm:$0xff]
    %v4577 = vld [vmem:[#allocation4 + $0x700] sm:$0xff]
    %v4578 = vld [vmem:[#allocation4 + $0x708] sm:$0xff]
    %v4579 = vld [vmem:[#allocation4 + $0x710] sm:$0xff]
    %v4580 = vld [vmem:[#allocation4 + $0x718] sm:$0xff]
    %v4581 = vld [vmem:[#allocation4 + $0x720] sm:$0xff]
    %v4582 = vld [vmem:[#allocation4 + $0x728] sm:$0xff]
    %v4583 = vld [vmem:[#allocation4 + $0x730] sm:$0xff]
    %v4584 = vld [vmem:[#allocation4 + $0x738] sm:$0xff]
    %v4585 = vld [vmem:[#allocation4 + $0x740] sm:$0xff]
    %v4586 = vld [vmem:[#allocation4 + $0x748] sm:$0xff]
    %v4587 = vld [vmem:[#allocation4 + $0x750] sm:$0xff]
    %v4588 = vld [vmem:[#allocation4 + $0x758] sm:$0xff]
    %v4589 = vld [vmem:[#allocation4 + $0x760] sm:$0xff]
    %v4590 = vld [vmem:[#allocation4 + $0x768] sm:$0xff]
    %v4591 = vld [vmem:[#allocation4 + $0x770] sm:$0xff]
    %v4592 = vld [vmem:[#allocation4 + $0x778] sm:$0xff]
    %v4593 = vld [vmem:[#allocation4 + $0x780] sm:$0xff]
    %v4594 = vld [vmem:[#allocation4 + $0x788] sm:$0xff]
    %v4595 = vld [vmem:[#allocation4 + $0x790] sm:$0xff]
    %v4596 = vld [vmem:[#allocation4 + $0x798] sm:$0xff]
    %v4597 = vld [vmem:[#allocation4 + $0x7a0] sm:$0xff]
    %v4598 = vld [vmem:[#allocation4 + $0x7a8] sm:$0xff]
    %v4599 = vld [vmem:[#allocation4 + $0x7b0] sm:$0xff]
    %v4600 = vld [vmem:[#allocation4 + $0x7b8] sm:$0xff]
    %v4601 = vld [vmem:[#allocation4 + $0x7c0] sm:$0xff]
    %v4602 = vld [vmem:[#allocation4 + $0x7c8] sm:$0xff]
    %v4603 = vld [vmem:[#allocation4 + $0x7d0] sm:$0xff]
    %v4604 = vld [vmem:[#allocation4 + $0x7d8] sm:$0xff]
    %v4605 = vld [vmem:[#allocation4 + $0x7e0] sm:$0xff]
    %v4606 = vld [vmem:[#allocation4 + $0x7e8] sm:$0xff]
    %v4607 = vld [vmem:[#allocation4 + $0x7f0] sm:$0xff]
    %v4608 = vld [vmem:[#allocation4 + $0x7f8] sm:$0xff]
    %v4609 = vld [vmem:[#allocation4 + $0x800] sm:$0xff]
    %v4610 = vld [vmem:[#allocation4 + $0x808] sm:$0xff]
    %v4611 = vld [vmem:[#allocation4 + $0x810] sm:$0xff]
    %v4612 = vld [vmem:[#allocation4 + $0x818] sm:$0xff]
    %v4613 = vld [vmem:[#allocation4 + $0x820] sm:$0xff]
    %v4614 = vld [vmem:[#allocation4 + $0x828] sm:$0xff]
    %v4615 = vld [vmem:[#allocation4 + $0x830] sm:$0xff]
    %v4616 = vld [vmem:[#allocation4 + $0x838] sm:$0xff]
    %v4617 = vld [vmem:[#allocation4 + $0x840] sm:$0xff]
    %v4618 = vld [vmem:[#allocation4 + $0x848] sm:$0xff]
    %v4619 = vld [vmem:[#allocation4 + $0x850] sm:$0xff]
    %v4620 = vld [vmem:[#allocation4 + $0x858] sm:$0xff]
    %v4621 = vld [vmem:[#allocation4 + $0x860] sm:$0xff]
    %v4622 = vld [vmem:[#allocation4 + $0x868] sm:$0xff]
    %v4623 = vld [vmem:[#allocation4 + $0x870] sm:$0xff]
    %v4624 = vld [vmem:[#allocation4 + $0x878] sm:$0xff]
    %v4625 = vld [vmem:[#allocation4 + $0x880] sm:$0xff]
    %v4626 = vld [vmem:[#allocation4 + $0x888] sm:$0xff]
    %v4627 = vld [vmem:[#allocation4 + $0x890] sm:$0xff]
    %v4628 = vld [vmem:[#allocation4 + $0x898] sm:$0xff]
    %v4629 = vld [vmem:[#allocation4 + $0x8a0] sm:$0xff]
    %v4630 = vld [vmem:[#allocation4 + $0x8a8] sm:$0xff]
    %v4631 = vld [vmem:[#allocation4 + $0x8b0] sm:$0xff]
    %v4632 = vld [vmem:[#allocation4 + $0x8b8] sm:$0xff]
    %v4633 = vld [vmem:[#allocation4 + $0x8c0] sm:$0xff]
    %v4634 = vld [vmem:[#allocation4 + $0x8c8] sm:$0xff]
    %v4635 = vld [vmem:[#allocation4 + $0x8d0] sm:$0xff]
    %v4636 = vld [vmem:[#allocation4 + $0x8d8] sm:$0xff]
    %v4637 = vld [vmem:[#allocation4 + $0x8e0] sm:$0xff]
    %v4638 = vld [vmem:[#allocation4 + $0x8e8] sm:$0xff]
    %v4639 = vld [vmem:[#allocation4 + $0x8f0] sm:$0xff]
    %v4640 = vld [vmem:[#allocation4 + $0x8f8] sm:$0xff]
    %v4641 = vld [vmem:[#allocation4 + $0x900] sm:$0xff]
    %v4642 = vld [vmem:[#allocation4 + $0x908] sm:$0xff]
    %v4643 = vld [vmem:[#allocation4 + $0x910] sm:$0xff]
    %v4644 = vld [vmem:[#allocation4 + $0x918] sm:$0xff]
    %v4645 = vld [vmem:[#allocation4 + $0x920] sm:$0xff]
    %v4646 = vld [vmem:[#allocation4 + $0x928] sm:$0xff]
    %v4647 = vld [vmem:[#allocation4 + $0x930] sm:$0xff]
    %v4648 = vld [vmem:[#allocation4 + $0x938] sm:$0xff]
    %v4649 = vld [vmem:[#allocation4 + $0x940] sm:$0xff]
    %v4650 = vld [vmem:[#allocation4 + $0x948] sm:$0xff]
    %v4651 = vld [vmem:[#allocation4 + $0x950] sm:$0xff]
    %v4652 = vld [vmem:[#allocation4 + $0x958] sm:$0xff]
    %v4653 = vld [vmem:[#allocation4 + $0x960] sm:$0xff]
    %v4654 = vld [vmem:[#allocation4 + $0x968] sm:$0xff]
    %v4655 = vld [vmem:[#allocation4 + $0x970] sm:$0xff]
    %v4656 = vld [vmem:[#allocation4 + $0x978] sm:$0xff]
    %v4657 = vld [vmem:[#allocation4 + $0x980] sm:$0xff]
    %v4658 = vld [vmem:[#allocation4 + $0x988] sm:$0xff]
    %v4659 = vld [vmem:[#allocation4 + $0x990] sm:$0xff]
    %v4660 = vld [vmem:[#allocation4 + $0x998] sm:$0xff]
    %v4661 = vld [vmem:[#allocation4 + $0x9a0] sm:$0xff]
    %v4662 = vld [vmem:[#allocation4 + $0x9a8] sm:$0xff]
    %v4663 = vld [vmem:[#allocation4 + $0x9b0] sm:$0xff]
    %v4664 = vld [vmem:[#allocation4 + $0x9b8] sm:$0xff]
    %v4665 = vld [vmem:[#allocation4 + $0x9c0] sm:$0xff]
    %v4666 = vld [vmem:[#allocation4 + $0x9c8] sm:$0xff]
    %v4667 = vld [vmem:[#allocation4 + $0x9d0] sm:$0xff]
    %v4668 = vld [vmem:[#allocation4 + $0x9d8] sm:$0xff]
    %v4669 = vld [vmem:[#allocation4 + $0x9e0] sm:$0xff]
    %v4670 = vld [vmem:[#allocation4 + $0x9e8] sm:$0xff]
    %v4671 = vld [vmem:[#allocation4 + $0x9f0] sm:$0xff]
    %v4672 = vld [vmem:[#allocation4 + $0x9f8] sm:$0xff]
    %v4673 = vld [vmem:[#allocation4 + $0xa00] sm:$0xff]
    %v4674 = vld [vmem:[#allocation4 + $0xa08] sm:$0xff]
    %v4675 = vld [vmem:[#allocation4 + $0xa10] sm:$0xff]
    %v4676 = vld [vmem:[#allocation4 + $0xa18] sm:$0xff]
    %v4677 = vld [vmem:[#allocation4 + $0xa20] sm:$0xff]
    %v4678 = vld [vmem:[#allocation4 + $0xa28] sm:$0xff]
    %v4679 = vld [vmem:[#allocation4 + $0xa30] sm:$0xff]
    %v4680 = vld [vmem:[#allocation4 + $0xa38] sm:$0xff]
    %v4681 = vld [vmem:[#allocation4 + $0xa40] sm:$0xff]
    %v4682 = vld [vmem:[#allocation4 + $0xa48] sm:$0xff]
    %v4683 = vld [vmem:[#allocation4 + $0xa50] sm:$0xff]
    %v4684 = vld [vmem:[#allocation4 + $0xa58] sm:$0xff]
    %v4685 = vld [vmem:[#allocation4 + $0xa60] sm:$0xff]
    %v4686 = vld [vmem:[#allocation4 + $0xa68] sm:$0xff]
    %v4687 = vld [vmem:[#allocation4 + $0xa70] sm:$0xff]
    %v4688 = vld [vmem:[#allocation4 + $0xa78] sm:$0xff]
    %v4689 = vld [vmem:[#allocation4 + $0xa80] sm:$0xff]
    %v4690 = vld [vmem:[#allocation4 + $0xa88] sm:$0xff]
    %v4691 = vld [vmem:[#allocation4 + $0xa90] sm:$0xff]
    %v4692 = vld [vmem:[#allocation4 + $0xa98] sm:$0xff]
    %v4693 = vld [vmem:[#allocation4 + $0xaa0] sm:$0xff]
    %v4694 = vld [vmem:[#allocation4 + $0xaa8] sm:$0xff]
    %v4695 = vld [vmem:[#allocation4 + $0xab0] sm:$0xff]
    %v4696 = vld [vmem:[#allocation4 + $0xab8] sm:$0xff]
    %v4697 = vld [vmem:[#allocation4 + $0xac0] sm:$0xff]
    %v4698 = vld [vmem:[#allocation4 + $0xac8] sm:$0xff]
    %v4699 = vld [vmem:[#allocation4 + $0xad0] sm:$0xff]
    %v4700 = vld [vmem:[#allocation4 + $0xad8] sm:$0xff]
    %v4701 = vld [vmem:[#allocation4 + $0xae0] sm:$0xff]
    %v4702 = vld [vmem:[#allocation4 + $0xae8] sm:$0xff]
    %v4703 = vld [vmem:[#allocation4 + $0xaf0] sm:$0xff]
    %v4704 = vld [vmem:[#allocation4 + $0xaf8] sm:$0xff]
    %v4705 = vld [vmem:[#allocation4 + $0xb00] sm:$0xff]
    %v4706 = vld [vmem:[#allocation4 + $0xb08] sm:$0xff]
    %v4707 = vld [vmem:[#allocation4 + $0xb10] sm:$0xff]
    %v4708 = vld [vmem:[#allocation4 + $0xb18] sm:$0xff]
    %v4709 = vld [vmem:[#allocation4 + $0xb20] sm:$0xff]
    %v4710 = vld [vmem:[#allocation4 + $0xb28] sm:$0xff]
    %v4711 = vld [vmem:[#allocation4 + $0xb30] sm:$0xff]
    %v4712 = vld [vmem:[#allocation4 + $0xb38] sm:$0xff]
    %v4713 = vld [vmem:[#allocation4 + $0xb40] sm:$0xff]
    %v4714 = vld [vmem:[#allocation4 + $0xb48] sm:$0xff]
    %v4715 = vld [vmem:[#allocation4 + $0xb50] sm:$0xff]
    %v4716 = vld [vmem:[#allocation4 + $0xb58] sm:$0xff]
    %v4717 = vld [vmem:[#allocation4 + $0xb60] sm:$0xff]
    %v4718 = vld [vmem:[#allocation4 + $0xb68] sm:$0xff]
    %v4719 = vld [vmem:[#allocation4 + $0xb70] sm:$0xff]
    %v4720 = vld [vmem:[#allocation4 + $0xb78] sm:$0xff]
    %v4721 = vld [vmem:[#allocation4 + $0xb80] sm:$0xff]
    %v4722 = vld [vmem:[#allocation4 + $0xb88] sm:$0xff]
    %v4723 = vld [vmem:[#allocation4 + $0xb90] sm:$0xff]
    %v4724 = vld [vmem:[#allocation4 + $0xb98] sm:$0xff]
    %v4725 = vld [vmem:[#allocation4 + $0xba0] sm:$0xff]
    %v4726 = vld [vmem:[#allocation4 + $0xba8] sm:$0xff]
    %v4727 = vld [vmem:[#allocation4 + $0xbb0] sm:$0xff]
    %v4728 = vld [vmem:[#allocation4 + $0xbb8] sm:$0xff]
    %v4729 = vld [vmem:[#allocation4 + $0xbc0] sm:$0xff]
    %v4730 = vld [vmem:[#allocation4 + $0xbc8] sm:$0xff]
    %v4731 = vld [vmem:[#allocation4 + $0xbd0] sm:$0xff]
    %v4732 = vld [vmem:[#allocation4 + $0xbd8] sm:$0xff]
    %v4733 = vld [vmem:[#allocation4 + $0xbe0] sm:$0xff]
    %v4734 = vld [vmem:[#allocation4 + $0xbe8] sm:$0xff]
    %v4735 = vld [vmem:[#allocation4 + $0xbf0] sm:$0xff]
    %v4736 = vld [vmem:[#allocation4 + $0xbf8] sm:$0xff]
    %v4737 = vld [vmem:[#allocation4 + $0xc00] sm:$0xff]
    %v4738 = vld [vmem:[#allocation4 + $0xc08] sm:$0xff]
    %v4739 = vld [vmem:[#allocation4 + $0xc10] sm:$0xff]
    %v4740 = vld [vmem:[#allocation4 + $0xc18] sm:$0xff]
    %v4741 = vld [vmem:[#allocation4 + $0xc20] sm:$0xff]
    %v4742 = vld [vmem:[#allocation4 + $0xc28] sm:$0xff]
    %v4743 = vld [vmem:[#allocation4 + $0xc30] sm:$0xff]
    %v4744 = vld [vmem:[#allocation4 + $0xc38] sm:$0xff]
    %v4745 = vld [vmem:[#allocation4 + $0xc40] sm:$0xff]
    %v4746 = vld [vmem:[#allocation4 + $0xc48] sm:$0xff]
    %v4747 = vld [vmem:[#allocation4 + $0xc50] sm:$0xff]
    %v4748 = vld [vmem:[#allocation4 + $0xc58] sm:$0xff]
    %v4749 = vld [vmem:[#allocation4 + $0xc60] sm:$0xff]
    %v4750 = vld [vmem:[#allocation4 + $0xc68] sm:$0xff]
    %v4751 = vld [vmem:[#allocation4 + $0xc70] sm:$0xff]
    %v4752 = vld [vmem:[#allocation4 + $0xc78] sm:$0xff]
    %v4753 = vld [vmem:[#allocation4 + $0xc80] sm:$0xff]
    %v4754 = vld [vmem:[#allocation4 + $0xc88] sm:$0xff]
    %v4755 = vld [vmem:[#allocation4 + $0xc90] sm:$0xff]
    %v4756 = vld [vmem:[#allocation4 + $0xc98] sm:$0xff]
    %v4757 = vld [vmem:[#allocation4 + $0xca0] sm:$0xff]
    %v4758 = vld [vmem:[#allocation4 + $0xca8] sm:$0xff]
    %v4759 = vld [vmem:[#allocation4 + $0xcb0] sm:$0xff]
    %v4760 = vld [vmem:[#allocation4 + $0xcb8] sm:$0xff]
    %v4761 = vld [vmem:[#allocation4 + $0xcc0] sm:$0xff]
    %v4762 = vld [vmem:[#allocation4 + $0xcc8] sm:$0xff]
    %v4763 = vld [vmem:[#allocation4 + $0xcd0] sm:$0xff]
    %v4764 = vld [vmem:[#allocation4 + $0xcd8] sm:$0xff]
    %v4765 = vld [vmem:[#allocation4 + $0xce0] sm:$0xff]
    %v4766 = vld [vmem:[#allocation4 + $0xce8] sm:$0xff]
    %v4767 = vld [vmem:[#allocation4 + $0xcf0] sm:$0xff]
    %v4768 = vld [vmem:[#allocation4 + $0xcf8] sm:$0xff]
    %v4769 = vld [vmem:[#allocation4 + $0xd00] sm:$0xff]
    %v4770 = vld [vmem:[#allocation4 + $0xd08] sm:$0xff]
    %v4771 = vld [vmem:[#allocation4 + $0xd10] sm:$0xff]
    %v4772 = vld [vmem:[#allocation4 + $0xd18] sm:$0xff]
    %v4773 = vld [vmem:[#allocation4 + $0xd20] sm:$0xff]
    %v4774 = vld [vmem:[#allocation4 + $0xd28] sm:$0xff]
    %v4775 = vld [vmem:[#allocation4 + $0xd30] sm:$0xff]
    %v4776 = vld [vmem:[#allocation4 + $0xd38] sm:$0xff]
    %v4777 = vld [vmem:[#allocation4 + $0xd40] sm:$0xff]
    %v4778 = vld [vmem:[#allocation4 + $0xd48] sm:$0xff]
    %v4779 = vld [vmem:[#allocation4 + $0xd50] sm:$0xff]
    %v4780 = vld [vmem:[#allocation4 + $0xd58] sm:$0xff]
    %v4781 = vld [vmem:[#allocation4 + $0xd60] sm:$0xff]
    %v4782 = vld [vmem:[#allocation4 + $0xd68] sm:$0xff]
    %v4783 = vld [vmem:[#allocation4 + $0xd70] sm:$0xff]
    %v4784 = vld [vmem:[#allocation4 + $0xd78] sm:$0xff]
    %v4785 = vld [vmem:[#allocation4 + $0xd80] sm:$0xff]
    %v4786 = vld [vmem:[#allocation4 + $0xd88] sm:$0xff]
    %v4787 = vld [vmem:[#allocation4 + $0xd90] sm:$0xff]
    %v4788 = vld [vmem:[#allocation4 + $0xd98] sm:$0xff]
    %v4789 = vld [vmem:[#allocation4 + $0xda0] sm:$0xff]
    %v4790 = vld [vmem:[#allocation4 + $0xda8] sm:$0xff]
    %v4791 = vld [vmem:[#allocation4 + $0xdb0] sm:$0xff]
    %v4792 = vld [vmem:[#allocation4 + $0xdb8] sm:$0xff]
    %v4793 = vld [vmem:[#allocation4 + $0xdc0] sm:$0xff]
    %v4794 = vld [vmem:[#allocation4 + $0xdc8] sm:$0xff]
    %v4795 = vld [vmem:[#allocation4 + $0xdd0] sm:$0xff]
    %v4796 = vld [vmem:[#allocation4 + $0xdd8] sm:$0xff]
    %v4797 = vld [vmem:[#allocation4 + $0xde0] sm:$0xff]
    %v4798 = vld [vmem:[#allocation4 + $0xde8] sm:$0xff]
    %v4799 = vld [vmem:[#allocation4 + $0xdf0] sm:$0xff]
    %v4800 = vld [vmem:[#allocation4 + $0xdf8] sm:$0xff]
    %v4801 = vld [vmem:[#allocation4 + $0xe00] sm:$0xff]
    %v4802 = vld [vmem:[#allocation4 + $0xe08] sm:$0xff]
    %v4803 = vld [vmem:[#allocation4 + $0xe10] sm:$0xff]
    %v4804 = vld [vmem:[#allocation4 + $0xe18] sm:$0xff]
    %v4805 = vld [vmem:[#allocation4 + $0xe20] sm:$0xff]
    %v4806 = vld [vmem:[#allocation4 + $0xe28] sm:$0xff]
    %v4807 = vld [vmem:[#allocation4 + $0xe30] sm:$0xff]
    %v4808 = vld [vmem:[#allocation4 + $0xe38] sm:$0xff]
    %v4809 = vld [vmem:[#allocation4 + $0xe40] sm:$0xff]
    %v4810 = vld [vmem:[#allocation4 + $0xe48] sm:$0xff]
    %v4811 = vld [vmem:[#allocation4 + $0xe50] sm:$0xff]
    %v4812 = vld [vmem:[#allocation4 + $0xe58] sm:$0xff]
    %v4813 = vld [vmem:[#allocation4 + $0xe60] sm:$0xff]
    %v4814 = vld [vmem:[#allocation4 + $0xe68] sm:$0xff]
    %v4815 = vld [vmem:[#allocation4 + $0xe70] sm:$0xff]
    %v4816 = vld [vmem:[#allocation4 + $0xe78] sm:$0xff]
    %v4817 = vld [vmem:[#allocation4 + $0xe80] sm:$0xff]
    %v4818 = vld [vmem:[#allocation4 + $0xe88] sm:$0xff]
    %v4819 = vld [vmem:[#allocation4 + $0xe90] sm:$0xff]
    %v4820 = vld [vmem:[#allocation4 + $0xe98] sm:$0xff]
    %v4821 = vld [vmem:[#allocation4 + $0xea0] sm:$0xff]
    %v4822 = vld [vmem:[#allocation4 + $0xea8] sm:$0xff]
    %v4823 = vld [vmem:[#allocation4 + $0xeb0] sm:$0xff]
    %v4824 = vld [vmem:[#allocation4 + $0xeb8] sm:$0xff]
    %v4825 = vld [vmem:[#allocation4 + $0xec0] sm:$0xff]
    %v4826 = vld [vmem:[#allocation4 + $0xec8] sm:$0xff]
    %v4827 = vld [vmem:[#allocation4 + $0xed0] sm:$0xff]
    %v4828 = vld [vmem:[#allocation4 + $0xed8] sm:$0xff]
    %v4829 = vld [vmem:[#allocation4 + $0xee0] sm:$0xff]
    %v4830 = vld [vmem:[#allocation4 + $0xee8] sm:$0xff]
    %v4831 = vld [vmem:[#allocation4 + $0xef0] sm:$0xff]
    %v4832 = vld [vmem:[#allocation4 + $0xef8] sm:$0xff]
    %v4833 = vld [vmem:[#allocation4 + $0xf00] sm:$0xff]
    %v4834 = vld [vmem:[#allocation4 + $0xf08] sm:$0xff]
    %v4835 = vld [vmem:[#allocation4 + $0xf10] sm:$0xff]
    %v4836 = vld [vmem:[#allocation4 + $0xf18] sm:$0xff]
    %v4837 = vld [vmem:[#allocation4 + $0xf20] sm:$0xff]
    %v4838 = vld [vmem:[#allocation4 + $0xf28] sm:$0xff]
    %v4839 = vld [vmem:[#allocation4 + $0xf30] sm:$0xff]
    %v4840 = vld [vmem:[#allocation4 + $0xf38] sm:$0xff]
    %v4841 = vld [vmem:[#allocation4 + $0xf40] sm:$0xff]
    %v4842 = vld [vmem:[#allocation4 + $0xf48] sm:$0xff]
    %v4843 = vld [vmem:[#allocation4 + $0xf50] sm:$0xff]
    %v4844 = vld [vmem:[#allocation4 + $0xf58] sm:$0xff]
    %v4845 = vld [vmem:[#allocation4 + $0xf60] sm:$0xff]
    %v4846 = vld [vmem:[#allocation4 + $0xf68] sm:$0xff]
    %v4847 = vld [vmem:[#allocation4 + $0xf70] sm:$0xff]
    %v4848 = vld [vmem:[#allocation4 + $0xf78] sm:$0xff]
    %v4849 = vld [vmem:[#allocation4 + $0xf80] sm:$0xff]
    %v4850 = vld [vmem:[#allocation4 + $0xf88] sm:$0xff]
    %v4851 = vld [vmem:[#allocation4 + $0xf90] sm:$0xff]
    %v4852 = vld [vmem:[#allocation4 + $0xf98] sm:$0xff]
    %v4853 = vld [vmem:[#allocation4 + $0xfa0] sm:$0xff]
    %v4854 = vld [vmem:[#allocation4 + $0xfa8] sm:$0xff]
    %v4855 = vld [vmem:[#allocation4 + $0xfb0] sm:$0xff]
    %v4856 = vld [vmem:[#allocation4 + $0xfb8] sm:$0xff]
    %v4857 = vld [vmem:[#allocation4 + $0xfc0] sm:$0xff]
    %v4858 = vld [vmem:[#allocation4 + $0xfc8] sm:$0xff]
    %v4859 = vld [vmem:[#allocation4 + $0xfd0] sm:$0xff]
    %v4860 = vld [vmem:[#allocation4 + $0xfd8] sm:$0xff]
    %v4861 = vld [vmem:[#allocation4 + $0xfe0] sm:$0xff]
    %v4862 = vld [vmem:[#allocation4 + $0xfe8] sm:$0xff]
    %v4863 = vld [vmem:[#allocation4 + $0xff0] sm:$0xff]
    %v4864 = vld [vmem:[#allocation4 + $0xff8] sm:$0xff]
    %v4865 = vpack.c.bf16 %v4340, %v4340
    %v4866 = vld [vmem:[#allocation17] sm:$0xff]
    %v4867 = vld [vmem:[#allocation17 + $0x8] sm:$0xff]
    %v4868 = vld [vmem:[#allocation17 + $0x10] sm:$0xff]
    %v4869 = vld [vmem:[#allocation17 + $0x18] sm:$0xff]
    %v4870 = vld [vmem:[#allocation17 + $0x20] sm:$0xff]
    %v4871 = vld [vmem:[#allocation17 + $0x28] sm:$0xff]
    %v4872 = vld [vmem:[#allocation17 + $0x30] sm:$0xff]
    %v4873 = vld [vmem:[#allocation17 + $0x38] sm:$0xff]
    %v4874 = vld [vmem:[#allocation17 + $0x40] sm:$0xff]
    %v4875 = vld [vmem:[#allocation17 + $0x48] sm:$0xff]
    %v4876 = vld [vmem:[#allocation17 + $0x50] sm:$0xff]
    %v4877 = vld [vmem:[#allocation17 + $0x58] sm:$0xff]
    %v4878 = vld [vmem:[#allocation17 + $0x60] sm:$0xff]
    %v4879 = vld [vmem:[#allocation17 + $0x68] sm:$0xff]
    %v4880 = vld [vmem:[#allocation17 + $0x70] sm:$0xff]
    %v4881 = vld [vmem:[#allocation17 + $0x78] sm:$0xff]
    %v4882 = vld [vmem:[#allocation17 + $0x80] sm:$0xff]
    %v4883 = vld [vmem:[#allocation17 + $0x88] sm:$0xff]
    %v4884 = vld [vmem:[#allocation17 + $0x90] sm:$0xff]
    %v4885 = vld [vmem:[#allocation17 + $0x98] sm:$0xff]
    %v4886 = vld [vmem:[#allocation17 + $0xa0] sm:$0xff]
    %v4887 = vld [vmem:[#allocation17 + $0xa8] sm:$0xff]
    %v4888 = vld [vmem:[#allocation17 + $0xb0] sm:$0xff]
    %v4889 = vld [vmem:[#allocation17 + $0xb8] sm:$0xff]
    %v4890 = vld [vmem:[#allocation17 + $0xc0] sm:$0xff]
    %v4891 = vld [vmem:[#allocation17 + $0xc8] sm:$0xff]
    %v4892 = vld [vmem:[#allocation17 + $0xd0] sm:$0xff]
    %v4893 = vld [vmem:[#allocation17 + $0xd8] sm:$0xff]
    %v4894 = vld [vmem:[#allocation17 + $0xe0] sm:$0xff]
    %v4895 = vld [vmem:[#allocation17 + $0xe8] sm:$0xff]
    %v4896 = vld [vmem:[#allocation17 + $0xf0] sm:$0xff]
    %v4897 = vld [vmem:[#allocation17 + $0xf8] sm:$0xff]
    %v4930 = vunpack.c.l.b16 %v4866
    %v4931 = vunpack.c.h.b16 %v4866
    %v4932 = vunpack.c.l.b16 %v4867
    %v4933 = vunpack.c.h.b16 %v4867
    %v4934 = vunpack.c.l.b16 %v4868
    %v4935 = vunpack.c.h.b16 %v4868
    %v4936 = vunpack.c.l.b16 %v4869
    %v4937 = vunpack.c.h.b16 %v4869
    %v4938 = vunpack.c.l.b16 %v4870
    %v4939 = vunpack.c.h.b16 %v4870
    %v4940 = vunpack.c.l.b16 %v4871
    %v4941 = vunpack.c.h.b16 %v4871
    %v4942 = vunpack.c.l.b16 %v4872
    %v4943 = vunpack.c.h.b16 %v4872
    %v4944 = vunpack.c.l.b16 %v4873
    %v4945 = vunpack.c.h.b16 %v4873
    %v4946 = vunpack.c.l.b16 %v4874
    %v4947 = vunpack.c.h.b16 %v4874
    %v4948 = vunpack.c.l.b16 %v4875
    %v4949 = vunpack.c.h.b16 %v4875
    %v4950 = vunpack.c.l.b16 %v4876
    %v4951 = vunpack.c.h.b16 %v4876
    %v4952 = vunpack.c.l.b16 %v4877
    %v4953 = vunpack.c.h.b16 %v4877
    %v4954 = vunpack.c.l.b16 %v4878
    %v4955 = vunpack.c.h.b16 %v4878
    %v4956 = vunpack.c.l.b16 %v4879
    %v4957 = vunpack.c.h.b16 %v4879
    %v4958 = vunpack.c.l.b16 %v4880
    %v4959 = vunpack.c.h.b16 %v4880
    %v4960 = vunpack.c.l.b16 %v4881
    %v4961 = vunpack.c.h.b16 %v4881
    %v4962 = vunpack.c.l.b16 %v4882
    %v4963 = vunpack.c.h.b16 %v4882
    %v4964 = vunpack.c.l.b16 %v4883
    %v4965 = vunpack.c.h.b16 %v4883
    %v4966 = vunpack.c.l.b16 %v4884
    %v4967 = vunpack.c.h.b16 %v4884
    %v4968 = vunpack.c.l.b16 %v4885
    %v4969 = vunpack.c.h.b16 %v4885
    %v4970 = vunpack.c.l.b16 %v4886
    %v4971 = vunpack.c.h.b16 %v4886
    %v4972 = vunpack.c.l.b16 %v4887
    %v4973 = vunpack.c.h.b16 %v4887
    %v4974 = vunpack.c.l.b16 %v4888
    %v4975 = vunpack.c.h.b16 %v4888
    %v4976 = vunpack.c.l.b16 %v4889
    %v4977 = vunpack.c.h.b16 %v4889
    %v4978 = vunpack.c.l.b16 %v4890
    %v4979 = vunpack.c.h.b16 %v4890
    %v4980 = vunpack.c.l.b16 %v4891
    %v4981 = vunpack.c.h.b16 %v4891
    %v4982 = vunpack.c.l.b16 %v4892
    %v4983 = vunpack.c.h.b16 %v4892
    %v4984 = vunpack.c.l.b16 %v4893
    %v4985 = vunpack.c.h.b16 %v4893
    %v4986 = vunpack.c.l.b16 %v4894
    %v4987 = vunpack.c.h.b16 %v4894
    %v4988 = vunpack.c.l.b16 %v4895
    %v4989 = vunpack.c.h.b16 %v4895
    %v4990 = vunpack.c.l.b16 %v4896
    %v4991 = vunpack.c.h.b16 %v4896
    %v4992 = vunpack.c.l.b16 %v4897
    %v4993 = vunpack.c.h.b16 %v4897
    %v4994 = vpack.c.b16 %v4946, %v4930
    %v4995 = vpack.c.b16 %v4947, %v4931
    %v4996 = vpack.c.b16 %v4948, %v4932
    %v4997 = vpack.c.b16 %v4949, %v4933
    %v4998 = vpack.c.b16 %v4950, %v4934
    %v4999 = vpack.c.b16 %v4951, %v4935
    %v5000 = vpack.c.b16 %v4952, %v4936
    %v5001 = vpack.c.b16 %v4953, %v4937
    %v5002 = vpack.c.b16 %v4954, %v4938
    %v5003 = vpack.c.b16 %v4955, %v4939
    %v5004 = vpack.c.b16 %v4956, %v4940
    %v5005 = vpack.c.b16 %v4957, %v4941
    %v5006 = vpack.c.b16 %v4958, %v4942
    %v5007 = vpack.c.b16 %v4959, %v4943
    %v5008 = vpack.c.b16 %v4960, %v4944
    %v5009 = vpack.c.b16 %v4961, %v4945
    %v5010 = vpack.c.b16 %v4978, %v4962
    %v5011 = vpack.c.b16 %v4979, %v4963
    %v5012 = vpack.c.b16 %v4980, %v4964
    %v5013 = vpack.c.b16 %v4981, %v4965
    %v5014 = vpack.c.b16 %v4982, %v4966
    %v5015 = vpack.c.b16 %v4983, %v4967
    %v5016 = vpack.c.b16 %v4984, %v4968
    %v5017 = vpack.c.b16 %v4985, %v4969
    %v5018 = vpack.c.b16 %v4986, %v4970
    %v5019 = vpack.c.b16 %v4987, %v4971
    %v5020 = vpack.c.b16 %v4988, %v4972
    %v5021 = vpack.c.b16 %v4989, %v4973
    %v5022 = vpack.c.b16 %v4990, %v4974
    %v5023 = vpack.c.b16 %v4991, %v4975
    %v5024 = vpack.c.b16 %v4992, %v4976
    %v5025 = vpack.c.b16 %v4993, %v4977
    %vm5058 = vcmask 261120
    %v5060 = vsel %vm5058, %v4865, 0
    %5062 = vmatpush.bf16.msra.mxu0 0
    %5063 = vmatpush.bf16.msra.mxu0 0
    %5064 = vmatpush.bf16.msra.mxu0 0
    %5065 = vmatpush.bf16.msra.mxu0 0
    %5066 = vmatpush.bf16.msra.mxu0 0
    %5067 = vmatpush.bf16.msra.mxu0 0
    %5068 = vmatpush.bf16.msra.mxu0 %v5010
    %5069 = vmatpush.bf16.msra.mxu0 %v4994
    %5070 = vmatmul.bf16.gmra.mxu0 %v5060
    %v5071 = vpop.f32.mrf.mxu0
    %v5072 = vadd.f32 0.0, %v5071
    %v5073 = vpop.f32.mrf.mxu0
    %5074 = vdwg.mxu0
    %5075 = vmatpush.bf16.msra.mxu0 0
    %5076 = vmatpush.bf16.msra.mxu0 0
    %5077 = vmatpush.bf16.msra.mxu0 0
    %5078 = vmatpush.bf16.msra.mxu0 0
    %5079 = vmatpush.bf16.msra.mxu0 0
    %5080 = vmatpush.bf16.msra.mxu0 0
    %5081 = vmatpush.bf16.msra.mxu0 %v5011
    %5082 = vmatpush.bf16.msra.mxu0 %v4995
    %5083 = vmatmul.bf16.gmra.mxu0 %v5060
    %v5084 = vpop.f32.mrf.mxu0
    %v5085 = vadd.f32 0.0, %v5084
    %v5086 = vpop.f32.mrf.mxu0
    %5087 = vdwg.mxu0
    %5088 = vmatpush.bf16.msra.mxu0 0
    %5089 = vmatpush.bf16.msra.mxu0 0
    %5090 = vmatpush.bf16.msra.mxu0 0
    %5091 = vmatpush.bf16.msra.mxu0 0
    %5092 = vmatpush.bf16.msra.mxu0 0
    %5093 = vmatpush.bf16.msra.mxu0 0
    %5094 = vmatpush.bf16.msra.mxu0 %v5012
    %5095 = vmatpush.bf16.msra.mxu0 %v4996
    %5096 = vmatmul.bf16.gmra.mxu0 %v5060
    %v5097 = vpop.f32.mrf.mxu0
    %v5098 = vadd.f32 0.0, %v5097
    %v5099 = vpop.f32.mrf.mxu0
    %5100 = vdwg.mxu0
    %5101 = vmatpush.bf16.msra.mxu0 0
    %5102 = vmatpush.bf16.msra.mxu0 0
    %5103 = vmatpush.bf16.msra.mxu0 0
    %5104 = vmatpush.bf16.msra.mxu0 0
    %5105 = vmatpush.bf16.msra.mxu0 0
    %5106 = vmatpush.bf16.msra.mxu0 0
    %5107 = vmatpush.bf16.msra.mxu0 %v5013
    %5108 = vmatpush.bf16.msra.mxu0 %v4997
    %5109 = vmatmul.bf16.gmra.mxu0 %v5060
    %v5110 = vpop.f32.mrf.mxu0
    %v5111 = vadd.f32 0.0, %v5110
    %v5112 = vpop.f32.mrf.mxu0
    %5113 = vdwg.mxu0
    %5114 = vmatpush.bf16.msra.mxu0 0
    %5115 = vmatpush.bf16.msra.mxu0 0
    %5116 = vmatpush.bf16.msra.mxu0 0
    %5117 = vmatpush.bf16.msra.mxu0 0
    %5118 = vmatpush.bf16.msra.mxu0 0
    %5119 = vmatpush.bf16.msra.mxu0 0
    %5120 = vmatpush.bf16.msra.mxu0 %v5014
    %5121 = vmatpush.bf16.msra.mxu0 %v4998
    %5122 = vmatmul.bf16.gmra.mxu0 %v5060
    %v5123 = vpop.f32.mrf.mxu0
    %v5124 = vadd.f32 0.0, %v5123
    %v5125 = vpop.f32.mrf.mxu0
    %5126 = vdwg.mxu0
    %5127 = vmatpush.bf16.msra.mxu0 0
    %5128 = vmatpush.bf16.msra.mxu0 0
    %5129 = vmatpush.bf16.msra.mxu0 0
    %5130 = vmatpush.bf16.msra.mxu0 0
    %5131 = vmatpush.bf16.msra.mxu0 0
    %5132 = vmatpush.bf16.msra.mxu0 0
    %5133 = vmatpush.bf16.msra.mxu0 %v5015
    %5134 = vmatpush.bf16.msra.mxu0 %v4999
    %5135 = vmatmul.bf16.gmra.mxu0 %v5060
    %v5136 = vpop.f32.mrf.mxu0
    %v5137 = vadd.f32 0.0, %v5136
    %v5138 = vpop.f32.mrf.mxu0
    %5139 = vdwg.mxu0
    %5140 = vmatpush.bf16.msra.mxu0 0
    %5141 = vmatpush.bf16.msra.mxu0 0
    %5142 = vmatpush.bf16.msra.mxu0 0
    %5143 = vmatpush.bf16.msra.mxu0 0
    %5144 = vmatpush.bf16.msra.mxu0 0
    %5145 = vmatpush.bf16.msra.mxu0 0
    %5146 = vmatpush.bf16.msra.mxu0 %v5016
    %5147 = vmatpush.bf16.msra.mxu0 %v5000
    %5148 = vmatmul.bf16.gmra.mxu0 %v5060
    %v5149 = vpop.f32.mrf.mxu0
    %v5150 = vadd.f32 0.0, %v5149
    %v5151 = vpop.f32.mrf.mxu0
    %5152 = vdwg.mxu0
    %5153 = vmatpush.bf16.msra.mxu0 0
    %5154 = vmatpush.bf16.msra.mxu0 0
    %5155 = vmatpush.bf16.msra.mxu0 0
    %5156 = vmatpush.bf16.msra.mxu0 0
    %5157 = vmatpush.bf16.msra.mxu0 0
    %5158 = vmatpush.bf16.msra.mxu0 0
    %5159 = vmatpush.bf16.msra.mxu0 %v5017
    %5160 = vmatpush.bf16.msra.mxu0 %v5001
    %5161 = vmatmul.bf16.gmra.mxu0 %v5060
    %v5162 = vpop.f32.mrf.mxu0
    %v5163 = vadd.f32 0.0, %v5162
    %v5164 = vpop.f32.mrf.mxu0
    %5165 = vdwg.mxu0
    %5166 = vmatpush.bf16.msra.mxu0 0
    %5167 = vmatpush.bf16.msra.mxu0 0
    %5168 = vmatpush.bf16.msra.mxu0 0
    %5169 = vmatpush.bf16.msra.mxu0 0
    %5170 = vmatpush.bf16.msra.mxu0 0
    %5171 = vmatpush.bf16.msra.mxu0 0
    %5172 = vmatpush.bf16.msra.mxu0 %v5018
    %5173 = vmatpush.bf16.msra.mxu0 %v5002
    %5174 = vmatmul.bf16.gmra.mxu0 %v5060
    %v5175 = vpop.f32.mrf.mxu0
    %v5176 = vadd.f32 0.0, %v5175
    %v5177 = vpop.f32.mrf.mxu0
    %5178 = vdwg.mxu0
    %5179 = vmatpush.bf16.msra.mxu0 0
    %5180 = vmatpush.bf16.msra.mxu0 0
    %5181 = vmatpush.bf16.msra.mxu0 0
    %5182 = vmatpush.bf16.msra.mxu0 0
    %5183 = vmatpush.bf16.msra.mxu0 0
    %5184 = vmatpush.bf16.msra.mxu0 0
    %5185 = vmatpush.bf16.msra.mxu0 %v5019
    %5186 = vmatpush.bf16.msra.mxu0 %v5003
    %5187 = vmatmul.bf16.gmra.mxu0 %v5060
    %v5188 = vpop.f32.mrf.mxu0
    %v5189 = vadd.f32 0.0, %v5188
    %v5190 = vpop.f32.mrf.mxu0
    %5191 = vdwg.mxu0
    %5192 = vmatpush.bf16.msra.mxu0 0
    %5193 = vmatpush.bf16.msra.mxu0 0
    %5194 = vmatpush.bf16.msra.mxu0 0
    %5195 = vmatpush.bf16.msra.mxu0 0
    %5196 = vmatpush.bf16.msra.mxu0 0
    %5197 = vmatpush.bf16.msra.mxu0 0
    %5198 = vmatpush.bf16.msra.mxu0 %v5020
    %5199 = vmatpush.bf16.msra.mxu0 %v5004
    %5200 = vmatmul.bf16.gmra.mxu0 %v5060
    %v5201 = vpop.f32.mrf.mxu0
    %v5202 = vadd.f32 0.0, %v5201
    %v5203 = vpop.f32.mrf.mxu0
    %5204 = vdwg.mxu0
    %5205 = vmatpush.bf16.msra.mxu0 0
    %5206 = vmatpush.bf16.msra.mxu0 0
    %5207 = vmatpush.bf16.msra.mxu0 0
    %5208 = vmatpush.bf16.msra.mxu0 0
    %5209 = vmatpush.bf16.msra.mxu0 0
    %5210 = vmatpush.bf16.msra.mxu0 0
    %5211 = vmatpush.bf16.msra.mxu0 %v5021
    %5212 = vmatpush.bf16.msra.mxu0 %v5005
    %5213 = vmatmul.bf16.gmra.mxu0 %v5060
    %v5214 = vpop.f32.mrf.mxu0
    %v5215 = vadd.f32 0.0, %v5214
    %v5216 = vpop.f32.mrf.mxu0
    %5217 = vdwg.mxu0
    %5218 = vmatpush.bf16.msra.mxu0 0
    %5219 = vmatpush.bf16.msra.mxu0 0
    %5220 = vmatpush.bf16.msra.mxu0 0
    %5221 = vmatpush.bf16.msra.mxu0 0
    %5222 = vmatpush.bf16.msra.mxu0 0
    %5223 = vmatpush.bf16.msra.mxu0 0
    %5224 = vmatpush.bf16.msra.mxu0 %v5022
    %5225 = vmatpush.bf16.msra.mxu0 %v5006
    %5226 = vmatmul.bf16.gmra.mxu0 %v5060
    %v5227 = vpop.f32.mrf.mxu0
    %v5228 = vadd.f32 0.0, %v5227
    %v5229 = vpop.f32.mrf.mxu0
    %5230 = vdwg.mxu0
    %5231 = vmatpush.bf16.msra.mxu0 0
    %5232 = vmatpush.bf16.msra.mxu0 0
    %5233 = vmatpush.bf16.msra.mxu0 0
    %5234 = vmatpush.bf16.msra.mxu0 0
    %5235 = vmatpush.bf16.msra.mxu0 0
    %5236 = vmatpush.bf16.msra.mxu0 0
    %5237 = vmatpush.bf16.msra.mxu0 %v5023
    %5238 = vmatpush.bf16.msra.mxu0 %v5007
    %5239 = vmatmul.bf16.gmra.mxu0 %v5060
    %v5240 = vpop.f32.mrf.mxu0
    %v5241 = vadd.f32 0.0, %v5240
    %v5242 = vpop.f32.mrf.mxu0
    %5243 = vdwg.mxu0
    %5244 = vmatpush.bf16.msra.mxu0 0
    %5245 = vmatpush.bf16.msra.mxu0 0
    %5246 = vmatpush.bf16.msra.mxu0 0
    %5247 = vmatpush.bf16.msra.mxu0 0
    %5248 = vmatpush.bf16.msra.mxu0 0
    %5249 = vmatpush.bf16.msra.mxu0 0
    %5250 = vmatpush.bf16.msra.mxu0 %v5024
    %5251 = vmatpush.bf16.msra.mxu0 %v5008
    %5252 = vmatmul.bf16.gmra.mxu0 %v5060
    %v5253 = vpop.f32.mrf.mxu0
    %v5254 = vadd.f32 0.0, %v5253
    %v5255 = vpop.f32.mrf.mxu0
    %5256 = vdwg.mxu0
    %5257 = vmatpush.bf16.msra.mxu0 0
    %5258 = vmatpush.bf16.msra.mxu0 0
    %5259 = vmatpush.bf16.msra.mxu0 0
    %5260 = vmatpush.bf16.msra.mxu0 0
    %5261 = vmatpush.bf16.msra.mxu0 0
    %5262 = vmatpush.bf16.msra.mxu0 0
    %5263 = vmatpush.bf16.msra.mxu0 %v5025
    %5264 = vmatpush.bf16.msra.mxu0 %v5009
    %5265 = vmatmul.bf16.gmra.mxu0 %v5060
    %v5266 = vpop.f32.mrf.mxu0
    %v5267 = vadd.f32 0.0, %v5266
    %v5268 = vpop.f32.mrf.mxu0
    %5269 = vdwg.mxu0
    %v5782 = vunpack.c.l.b16 %v4353
    %v5783 = vunpack.c.h.b16 %v4353
    %v5784 = vunpack.c.l.b16 %v4354
    %v5785 = vunpack.c.h.b16 %v4354
    %v5786 = vunpack.c.l.b16 %v4355
    %v5787 = vunpack.c.h.b16 %v4355
    %v5788 = vunpack.c.l.b16 %v4356
    %v5789 = vunpack.c.h.b16 %v4356
    %v5790 = vunpack.c.l.b16 %v4357
    %v5791 = vunpack.c.h.b16 %v4357
    %v5792 = vunpack.c.l.b16 %v4358
    %v5793 = vunpack.c.h.b16 %v4358
    %v5794 = vunpack.c.l.b16 %v4359
    %v5795 = vunpack.c.h.b16 %v4359
    %v5796 = vunpack.c.l.b16 %v4360
    %v5797 = vunpack.c.h.b16 %v4360
    %v5798 = vunpack.c.l.b16 %v4361
    %v5799 = vunpack.c.h.b16 %v4361
    %v5800 = vunpack.c.l.b16 %v4362
    %v5801 = vunpack.c.h.b16 %v4362
    %v5802 = vunpack.c.l.b16 %v4363
    %v5803 = vunpack.c.h.b16 %v4363
    %v5804 = vunpack.c.l.b16 %v4364
    %v5805 = vunpack.c.h.b16 %v4364
    %v5806 = vunpack.c.l.b16 %v4365
    %v5807 = vunpack.c.h.b16 %v4365
    %v5808 = vunpack.c.l.b16 %v4366
    %v5809 = vunpack.c.h.b16 %v4366
    %v5810 = vunpack.c.l.b16 %v4367
    %v5811 = vunpack.c.h.b16 %v4367
    %v5812 = vunpack.c.l.b16 %v4368
    %v5813 = vunpack.c.h.b16 %v4368
    %v5814 = vunpack.c.l.b16 %v4369
    %v5815 = vunpack.c.h.b16 %v4369
    %v5816 = vunpack.c.l.b16 %v4370
    %v5817 = vunpack.c.h.b16 %v4370
    %v5818 = vunpack.c.l.b16 %v4371
    %v5819 = vunpack.c.h.b16 %v4371
    %v5820 = vunpack.c.l.b16 %v4372
    %v5821 = vunpack.c.h.b16 %v4372
    %v5822 = vunpack.c.l.b16 %v4373
    %v5823 = vunpack.c.h.b16 %v4373
    %v5824 = vunpack.c.l.b16 %v4374
    %v5825 = vunpack.c.h.b16 %v4374
    %v5826 = vunpack.c.l.b16 %v4375
    %v5827 = vunpack.c.h.b16 %v4375
    %v5828 = vunpack.c.l.b16 %v4376
    %v5829 = vunpack.c.h.b16 %v4376
    %v5830 = vunpack.c.l.b16 %v4377
    %v5831 = vunpack.c.h.b16 %v4377
    %v5832 = vunpack.c.l.b16 %v4378
    %v5833 = vunpack.c.h.b16 %v4378
    %v5834 = vunpack.c.l.b16 %v4379
    %v5835 = vunpack.c.h.b16 %v4379
    %v5836 = vunpack.c.l.b16 %v4380
    %v5837 = vunpack.c.h.b16 %v4380
    %v5838 = vunpack.c.l.b16 %v4381
    %v5839 = vunpack.c.h.b16 %v4381
    %v5840 = vunpack.c.l.b16 %v4382
    %v5841 = vunpack.c.h.b16 %v4382
    %v5842 = vunpack.c.l.b16 %v4383
    %v5843 = vunpack.c.h.b16 %v4383
    %v5844 = vunpack.c.l.b16 %v4384
    %v5845 = vunpack.c.h.b16 %v4384
    %v5846 = vunpack.c.l.b16 %v4385
    %v5847 = vunpack.c.h.b16 %v4385
    %v5848 = vunpack.c.l.b16 %v4386
    %v5849 = vunpack.c.h.b16 %v4386
    %v5850 = vunpack.c.l.b16 %v4387
    %v5851 = vunpack.c.h.b16 %v4387
    %v5852 = vunpack.c.l.b16 %v4388
    %v5853 = vunpack.c.h.b16 %v4388
    %v5854 = vunpack.c.l.b16 %v4389
    %v5855 = vunpack.c.h.b16 %v4389
    %v5856 = vunpack.c.l.b16 %v4390
    %v5857 = vunpack.c.h.b16 %v4390
    %v5858 = vunpack.c.l.b16 %v4391
    %v5859 = vunpack.c.h.b16 %v4391
    %v5860 = vunpack.c.l.b16 %v4392
    %v5861 = vunpack.c.h.b16 %v4392
    %v5862 = vunpack.c.l.b16 %v4393
    %v5863 = vunpack.c.h.b16 %v4393
    %v5864 = vunpack.c.l.b16 %v4394
    %v5865 = vunpack.c.h.b16 %v4394
    %v5866 = vunpack.c.l.b16 %v4395
    %v5867 = vunpack.c.h.b16 %v4395
    %v5868 = vunpack.c.l.b16 %v4396
    %v5869 = vunpack.c.h.b16 %v4396
    %v5870 = vunpack.c.l.b16 %v4397
    %v5871 = vunpack.c.h.b16 %v4397
    %v5872 = vunpack.c.l.b16 %v4398
    %v5873 = vunpack.c.h.b16 %v4398
    %v5874 = vunpack.c.l.b16 %v4399
    %v5875 = vunpack.c.h.b16 %v4399
    %v5876 = vunpack.c.l.b16 %v4400
    %v5877 = vunpack.c.h.b16 %v4400
    %v5878 = vunpack.c.l.b16 %v4401
    %v5879 = vunpack.c.h.b16 %v4401
    %v5880 = vunpack.c.l.b16 %v4402
    %v5881 = vunpack.c.h.b16 %v4402
    %v5882 = vunpack.c.l.b16 %v4403
    %v5883 = vunpack.c.h.b16 %v4403
    %v5884 = vunpack.c.l.b16 %v4404
    %v5885 = vunpack.c.h.b16 %v4404
    %v5886 = vunpack.c.l.b16 %v4405
    %v5887 = vunpack.c.h.b16 %v4405
    %v5888 = vunpack.c.l.b16 %v4406
    %v5889 = vunpack.c.h.b16 %v4406
    %v5890 = vunpack.c.l.b16 %v4407
    %v5891 = vunpack.c.h.b16 %v4407
    %v5892 = vunpack.c.l.b16 %v4408
    %v5893 = vunpack.c.h.b16 %v4408
    %v5894 = vunpack.c.l.b16 %v4409
    %v5895 = vunpack.c.h.b16 %v4409
    %v5896 = vunpack.c.l.b16 %v4410
    %v5897 = vunpack.c.h.b16 %v4410
    %v5898 = vunpack.c.l.b16 %v4411
    %v5899 = vunpack.c.h.b16 %v4411
    %v5900 = vunpack.c.l.b16 %v4412
    %v5901 = vunpack.c.h.b16 %v4412
    %v5902 = vunpack.c.l.b16 %v4413
    %v5903 = vunpack.c.h.b16 %v4413
    %v5904 = vunpack.c.l.b16 %v4414
    %v5905 = vunpack.c.h.b16 %v4414
    %v5906 = vunpack.c.l.b16 %v4415
    %v5907 = vunpack.c.h.b16 %v4415
    %v5908 = vunpack.c.l.b16 %v4416
    %v5909 = vunpack.c.h.b16 %v4416
    %v5910 = vunpack.c.l.b16 %v4417
    %v5911 = vunpack.c.h.b16 %v4417
    %v5912 = vunpack.c.l.b16 %v4418
    %v5913 = vunpack.c.h.b16 %v4418
    %v5914 = vunpack.c.l.b16 %v4419
    %v5915 = vunpack.c.h.b16 %v4419
    %v5916 = vunpack.c.l.b16 %v4420
    %v5917 = vunpack.c.h.b16 %v4420
    %v5918 = vunpack.c.l.b16 %v4421
    %v5919 = vunpack.c.h.b16 %v4421
    %v5920 = vunpack.c.l.b16 %v4422
    %v5921 = vunpack.c.h.b16 %v4422
    %v5922 = vunpack.c.l.b16 %v4423
    %v5923 = vunpack.c.h.b16 %v4423
    %v5924 = vunpack.c.l.b16 %v4424
    %v5925 = vunpack.c.h.b16 %v4424
    %v5926 = vunpack.c.l.b16 %v4425
    %v5927 = vunpack.c.h.b16 %v4425
    %v5928 = vunpack.c.l.b16 %v4426
    %v5929 = vunpack.c.h.b16 %v4426
    %v5930 = vunpack.c.l.b16 %v4427
    %v5931 = vunpack.c.h.b16 %v4427
    %v5932 = vunpack.c.l.b16 %v4428
    %v5933 = vunpack.c.h.b16 %v4428
    %v5934 = vunpack.c.l.b16 %v4429
    %v5935 = vunpack.c.h.b16 %v4429
    %v5936 = vunpack.c.l.b16 %v4430
    %v5937 = vunpack.c.h.b16 %v4430
    %v5938 = vunpack.c.l.b16 %v4431
    %v5939 = vunpack.c.h.b16 %v4431
    %v5940 = vunpack.c.l.b16 %v4432
    %v5941 = vunpack.c.h.b16 %v4432
    %v5942 = vunpack.c.l.b16 %v4433
    %v5943 = vunpack.c.h.b16 %v4433
    %v5944 = vunpack.c.l.b16 %v4434
    %v5945 = vunpack.c.h.b16 %v4434
    %v5946 = vunpack.c.l.b16 %v4435
    %v5947 = vunpack.c.h.b16 %v4435
    %v5948 = vunpack.c.l.b16 %v4436
    %v5949 = vunpack.c.h.b16 %v4436
    %v5950 = vunpack.c.l.b16 %v4437
    %v5951 = vunpack.c.h.b16 %v4437
    %v5952 = vunpack.c.l.b16 %v4438
    %v5953 = vunpack.c.h.b16 %v4438
    %v5954 = vunpack.c.l.b16 %v4439
    %v5955 = vunpack.c.h.b16 %v4439
    %v5956 = vunpack.c.l.b16 %v4440
    %v5957 = vunpack.c.h.b16 %v4440
    %v5958 = vunpack.c.l.b16 %v4441
    %v5959 = vunpack.c.h.b16 %v4441
    %v5960 = vunpack.c.l.b16 %v4442
    %v5961 = vunpack.c.h.b16 %v4442
    %v5962 = vunpack.c.l.b16 %v4443
    %v5963 = vunpack.c.h.b16 %v4443
    %v5964 = vunpack.c.l.b16 %v4444
    %v5965 = vunpack.c.h.b16 %v4444
    %v5966 = vunpack.c.l.b16 %v4445
    %v5967 = vunpack.c.h.b16 %v4445
    %v5968 = vunpack.c.l.b16 %v4446
    %v5969 = vunpack.c.h.b16 %v4446
    %v5970 = vunpack.c.l.b16 %v4447
    %v5971 = vunpack.c.h.b16 %v4447
    %v5972 = vunpack.c.l.b16 %v4448
    %v5973 = vunpack.c.h.b16 %v4448
    %v5974 = vunpack.c.l.b16 %v4449
    %v5975 = vunpack.c.h.b16 %v4449
    %v5976 = vunpack.c.l.b16 %v4450
    %v5977 = vunpack.c.h.b16 %v4450
    %v5978 = vunpack.c.l.b16 %v4451
    %v5979 = vunpack.c.h.b16 %v4451
    %v5980 = vunpack.c.l.b16 %v4452
    %v5981 = vunpack.c.h.b16 %v4452
    %v5982 = vunpack.c.l.b16 %v4453
    %v5983 = vunpack.c.h.b16 %v4453
    %v5984 = vunpack.c.l.b16 %v4454
    %v5985 = vunpack.c.h.b16 %v4454
    %v5986 = vunpack.c.l.b16 %v4455
    %v5987 = vunpack.c.h.b16 %v4455
    %v5988 = vunpack.c.l.b16 %v4456
    %v5989 = vunpack.c.h.b16 %v4456
    %v5990 = vunpack.c.l.b16 %v4457
    %v5991 = vunpack.c.h.b16 %v4457
    %v5992 = vunpack.c.l.b16 %v4458
    %v5993 = vunpack.c.h.b16 %v4458
    %v5994 = vunpack.c.l.b16 %v4459
    %v5995 = vunpack.c.h.b16 %v4459
    %v5996 = vunpack.c.l.b16 %v4460
    %v5997 = vunpack.c.h.b16 %v4460
    %v5998 = vunpack.c.l.b16 %v4461
    %v5999 = vunpack.c.h.b16 %v4461
    %v6000 = vunpack.c.l.b16 %v4462
    %v6001 = vunpack.c.h.b16 %v4462
    %v6002 = vunpack.c.l.b16 %v4463
    %v6003 = vunpack.c.h.b16 %v4463
    %v6004 = vunpack.c.l.b16 %v4464
    %v6005 = vunpack.c.h.b16 %v4464
    %v6006 = vunpack.c.l.b16 %v4465
    %v6007 = vunpack.c.h.b16 %v4465
    %v6008 = vunpack.c.l.b16 %v4466
    %v6009 = vunpack.c.h.b16 %v4466
    %v6010 = vunpack.c.l.b16 %v4467
    %v6011 = vunpack.c.h.b16 %v4467
    %v6012 = vunpack.c.l.b16 %v4468
    %v6013 = vunpack.c.h.b16 %v4468
    %v6014 = vunpack.c.l.b16 %v4469
    %v6015 = vunpack.c.h.b16 %v4469
    %v6016 = vunpack.c.l.b16 %v4470
    %v6017 = vunpack.c.h.b16 %v4470
    %v6018 = vunpack.c.l.b16 %v4471
    %v6019 = vunpack.c.h.b16 %v4471
    %v6020 = vunpack.c.l.b16 %v4472
    %v6021 = vunpack.c.h.b16 %v4472
    %v6022 = vunpack.c.l.b16 %v4473
    %v6023 = vunpack.c.h.b16 %v4473
    %v6024 = vunpack.c.l.b16 %v4474
    %v6025 = vunpack.c.h.b16 %v4474
    %v6026 = vunpack.c.l.b16 %v4475
    %v6027 = vunpack.c.h.b16 %v4475
    %v6028 = vunpack.c.l.b16 %v4476
    %v6029 = vunpack.c.h.b16 %v4476
    %v6030 = vunpack.c.l.b16 %v4477
    %v6031 = vunpack.c.h.b16 %v4477
    %v6032 = vunpack.c.l.b16 %v4478
    %v6033 = vunpack.c.h.b16 %v4478
    %v6034 = vunpack.c.l.b16 %v4479
    %v6035 = vunpack.c.h.b16 %v4479
    %v6036 = vunpack.c.l.b16 %v4480
    %v6037 = vunpack.c.h.b16 %v4480
    %v6038 = vunpack.c.l.b16 %v4481
    %v6039 = vunpack.c.h.b16 %v4481
    %v6040 = vunpack.c.l.b16 %v4482
    %v6041 = vunpack.c.h.b16 %v4482
    %v6042 = vunpack.c.l.b16 %v4483
    %v6043 = vunpack.c.h.b16 %v4483
    %v6044 = vunpack.c.l.b16 %v4484
    %v6045 = vunpack.c.h.b16 %v4484
    %v6046 = vunpack.c.l.b16 %v4485
    %v6047 = vunpack.c.h.b16 %v4485
    %v6048 = vunpack.c.l.b16 %v4486
    %v6049 = vunpack.c.h.b16 %v4486
    %v6050 = vunpack.c.l.b16 %v4487
    %v6051 = vunpack.c.h.b16 %v4487
    %v6052 = vunpack.c.l.b16 %v4488
    %v6053 = vunpack.c.h.b16 %v4488
    %v6054 = vunpack.c.l.b16 %v4489
    %v6055 = vunpack.c.h.b16 %v4489
    %v6056 = vunpack.c.l.b16 %v4490
    %v6057 = vunpack.c.h.b16 %v4490
    %v6058 = vunpack.c.l.b16 %v4491
    %v6059 = vunpack.c.h.b16 %v4491
    %v6060 = vunpack.c.l.b16 %v4492
    %v6061 = vunpack.c.h.b16 %v4492
    %v6062 = vunpack.c.l.b16 %v4493
    %v6063 = vunpack.c.h.b16 %v4493
    %v6064 = vunpack.c.l.b16 %v4494
    %v6065 = vunpack.c.h.b16 %v4494
    %v6066 = vunpack.c.l.b16 %v4495
    %v6067 = vunpack.c.h.b16 %v4495
    %v6068 = vunpack.c.l.b16 %v4496
    %v6069 = vunpack.c.h.b16 %v4496
    %v6070 = vunpack.c.l.b16 %v4497
    %v6071 = vunpack.c.h.b16 %v4497
    %v6072 = vunpack.c.l.b16 %v4498
    %v6073 = vunpack.c.h.b16 %v4498
    %v6074 = vunpack.c.l.b16 %v4499
    %v6075 = vunpack.c.h.b16 %v4499
    %v6076 = vunpack.c.l.b16 %v4500
    %v6077 = vunpack.c.h.b16 %v4500
    %v6078 = vunpack.c.l.b16 %v4501
    %v6079 = vunpack.c.h.b16 %v4501
    %v6080 = vunpack.c.l.b16 %v4502
    %v6081 = vunpack.c.h.b16 %v4502
    %v6082 = vunpack.c.l.b16 %v4503
    %v6083 = vunpack.c.h.b16 %v4503
    %v6084 = vunpack.c.l.b16 %v4504
    %v6085 = vunpack.c.h.b16 %v4504
    %v6086 = vunpack.c.l.b16 %v4505
    %v6087 = vunpack.c.h.b16 %v4505
    %v6088 = vunpack.c.l.b16 %v4506
    %v6089 = vunpack.c.h.b16 %v4506
    %v6090 = vunpack.c.l.b16 %v4507
    %v6091 = vunpack.c.h.b16 %v4507
    %v6092 = vunpack.c.l.b16 %v4508
    %v6093 = vunpack.c.h.b16 %v4508
    %v6094 = vunpack.c.l.b16 %v4509
    %v6095 = vunpack.c.h.b16 %v4509
    %v6096 = vunpack.c.l.b16 %v4510
    %v6097 = vunpack.c.h.b16 %v4510
    %v6098 = vunpack.c.l.b16 %v4511
    %v6099 = vunpack.c.h.b16 %v4511
    %v6100 = vunpack.c.l.b16 %v4512
    %v6101 = vunpack.c.h.b16 %v4512
    %v6102 = vunpack.c.l.b16 %v4513
    %v6103 = vunpack.c.h.b16 %v4513
    %v6104 = vunpack.c.l.b16 %v4514
    %v6105 = vunpack.c.h.b16 %v4514
    %v6106 = vunpack.c.l.b16 %v4515
    %v6107 = vunpack.c.h.b16 %v4515
    %v6108 = vunpack.c.l.b16 %v4516
    %v6109 = vunpack.c.h.b16 %v4516
    %v6110 = vunpack.c.l.b16 %v4517
    %v6111 = vunpack.c.h.b16 %v4517
    %v6112 = vunpack.c.l.b16 %v4518
    %v6113 = vunpack.c.h.b16 %v4518
    %v6114 = vunpack.c.l.b16 %v4519
    %v6115 = vunpack.c.h.b16 %v4519
    %v6116 = vunpack.c.l.b16 %v4520
    %v6117 = vunpack.c.h.b16 %v4520
    %v6118 = vunpack.c.l.b16 %v4521
    %v6119 = vunpack.c.h.b16 %v4521
    %v6120 = vunpack.c.l.b16 %v4522
    %v6121 = vunpack.c.h.b16 %v4522
    %v6122 = vunpack.c.l.b16 %v4523
    %v6123 = vunpack.c.h.b16 %v4523
    %v6124 = vunpack.c.l.b16 %v4524
    %v6125 = vunpack.c.h.b16 %v4524
    %v6126 = vunpack.c.l.b16 %v4525
    %v6127 = vunpack.c.h.b16 %v4525
    %v6128 = vunpack.c.l.b16 %v4526
    %v6129 = vunpack.c.h.b16 %v4526
    %v6130 = vunpack.c.l.b16 %v4527
    %v6131 = vunpack.c.h.b16 %v4527
    %v6132 = vunpack.c.l.b16 %v4528
    %v6133 = vunpack.c.h.b16 %v4528
    %v6134 = vunpack.c.l.b16 %v4529
    %v6135 = vunpack.c.h.b16 %v4529
    %v6136 = vunpack.c.l.b16 %v4530
    %v6137 = vunpack.c.h.b16 %v4530
    %v6138 = vunpack.c.l.b16 %v4531
    %v6139 = vunpack.c.h.b16 %v4531
    %v6140 = vunpack.c.l.b16 %v4532
    %v6141 = vunpack.c.h.b16 %v4532
    %v6142 = vunpack.c.l.b16 %v4533
    %v6143 = vunpack.c.h.b16 %v4533
    %v6144 = vunpack.c.l.b16 %v4534
    %v6145 = vunpack.c.h.b16 %v4534
    %v6146 = vunpack.c.l.b16 %v4535
    %v6147 = vunpack.c.h.b16 %v4535
    %v6148 = vunpack.c.l.b16 %v4536
    %v6149 = vunpack.c.h.b16 %v4536
    %v6150 = vunpack.c.l.b16 %v4537
    %v6151 = vunpack.c.h.b16 %v4537
    %v6152 = vunpack.c.l.b16 %v4538
    %v6153 = vunpack.c.h.b16 %v4538
    %v6154 = vunpack.c.l.b16 %v4539
    %v6155 = vunpack.c.h.b16 %v4539
    %v6156 = vunpack.c.l.b16 %v4540
    %v6157 = vunpack.c.h.b16 %v4540
    %v6158 = vunpack.c.l.b16 %v4541
    %v6159 = vunpack.c.h.b16 %v4541
    %v6160 = vunpack.c.l.b16 %v4542
    %v6161 = vunpack.c.h.b16 %v4542
    %v6162 = vunpack.c.l.b16 %v4543
    %v6163 = vunpack.c.h.b16 %v4543
    %v6164 = vunpack.c.l.b16 %v4544
    %v6165 = vunpack.c.h.b16 %v4544
    %v6166 = vunpack.c.l.b16 %v4545
    %v6167 = vunpack.c.h.b16 %v4545
    %v6168 = vunpack.c.l.b16 %v4546
    %v6169 = vunpack.c.h.b16 %v4546
    %v6170 = vunpack.c.l.b16 %v4547
    %v6171 = vunpack.c.h.b16 %v4547
    %v6172 = vunpack.c.l.b16 %v4548
    %v6173 = vunpack.c.h.b16 %v4548
    %v6174 = vunpack.c.l.b16 %v4549
    %v6175 = vunpack.c.h.b16 %v4549
    %v6176 = vunpack.c.l.b16 %v4550
    %v6177 = vunpack.c.h.b16 %v4550
    %v6178 = vunpack.c.l.b16 %v4551
    %v6179 = vunpack.c.h.b16 %v4551
    %v6180 = vunpack.c.l.b16 %v4552
    %v6181 = vunpack.c.h.b16 %v4552
    %v6182 = vunpack.c.l.b16 %v4553
    %v6183 = vunpack.c.h.b16 %v4553
    %v6184 = vunpack.c.l.b16 %v4554
    %v6185 = vunpack.c.h.b16 %v4554
    %v6186 = vunpack.c.l.b16 %v4555
    %v6187 = vunpack.c.h.b16 %v4555
    %v6188 = vunpack.c.l.b16 %v4556
    %v6189 = vunpack.c.h.b16 %v4556
    %v6190 = vunpack.c.l.b16 %v4557
    %v6191 = vunpack.c.h.b16 %v4557
    %v6192 = vunpack.c.l.b16 %v4558
    %v6193 = vunpack.c.h.b16 %v4558
    %v6194 = vunpack.c.l.b16 %v4559
    %v6195 = vunpack.c.h.b16 %v4559
    %v6196 = vunpack.c.l.b16 %v4560
    %v6197 = vunpack.c.h.b16 %v4560
    %v6198 = vunpack.c.l.b16 %v4561
    %v6199 = vunpack.c.h.b16 %v4561
    %v6200 = vunpack.c.l.b16 %v4562
    %v6201 = vunpack.c.h.b16 %v4562
    %v6202 = vunpack.c.l.b16 %v4563
    %v6203 = vunpack.c.h.b16 %v4563
    %v6204 = vunpack.c.l.b16 %v4564
    %v6205 = vunpack.c.h.b16 %v4564
    %v6206 = vunpack.c.l.b16 %v4565
    %v6207 = vunpack.c.h.b16 %v4565
    %v6208 = vunpack.c.l.b16 %v4566
    %v6209 = vunpack.c.h.b16 %v4566
    %v6210 = vunpack.c.l.b16 %v4567
    %v6211 = vunpack.c.h.b16 %v4567
    %v6212 = vunpack.c.l.b16 %v4568
    %v6213 = vunpack.c.h.b16 %v4568
    %v6214 = vunpack.c.l.b16 %v4569
    %v6215 = vunpack.c.h.b16 %v4569
    %v6216 = vunpack.c.l.b16 %v4570
    %v6217 = vunpack.c.h.b16 %v4570
    %v6218 = vunpack.c.l.b16 %v4571
    %v6219 = vunpack.c.h.b16 %v4571
    %v6220 = vunpack.c.l.b16 %v4572
    %v6221 = vunpack.c.h.b16 %v4572
    %v6222 = vunpack.c.l.b16 %v4573
    %v6223 = vunpack.c.h.b16 %v4573
    %v6224 = vunpack.c.l.b16 %v4574
    %v6225 = vunpack.c.h.b16 %v4574
    %v6226 = vunpack.c.l.b16 %v4575
    %v6227 = vunpack.c.h.b16 %v4575
    %v6228 = vunpack.c.l.b16 %v4576
    %v6229 = vunpack.c.h.b16 %v4576
    %v6230 = vunpack.c.l.b16 %v4577
    %v6231 = vunpack.c.h.b16 %v4577
    %v6232 = vunpack.c.l.b16 %v4578
    %v6233 = vunpack.c.h.b16 %v4578
    %v6234 = vunpack.c.l.b16 %v4579
    %v6235 = vunpack.c.h.b16 %v4579
    %v6236 = vunpack.c.l.b16 %v4580
    %v6237 = vunpack.c.h.b16 %v4580
    %v6238 = vunpack.c.l.b16 %v4581
    %v6239 = vunpack.c.h.b16 %v4581
    %v6240 = vunpack.c.l.b16 %v4582
    %v6241 = vunpack.c.h.b16 %v4582
    %v6242 = vunpack.c.l.b16 %v4583
    %v6243 = vunpack.c.h.b16 %v4583
    %v6244 = vunpack.c.l.b16 %v4584
    %v6245 = vunpack.c.h.b16 %v4584
    %v6246 = vunpack.c.l.b16 %v4585
    %v6247 = vunpack.c.h.b16 %v4585
    %v6248 = vunpack.c.l.b16 %v4586
    %v6249 = vunpack.c.h.b16 %v4586
    %v6250 = vunpack.c.l.b16 %v4587
    %v6251 = vunpack.c.h.b16 %v4587
    %v6252 = vunpack.c.l.b16 %v4588
    %v6253 = vunpack.c.h.b16 %v4588
    %v6254 = vunpack.c.l.b16 %v4589
    %v6255 = vunpack.c.h.b16 %v4589
    %v6256 = vunpack.c.l.b16 %v4590
    %v6257 = vunpack.c.h.b16 %v4590
    %v6258 = vunpack.c.l.b16 %v4591
    %v6259 = vunpack.c.h.b16 %v4591
    %v6260 = vunpack.c.l.b16 %v4592
    %v6261 = vunpack.c.h.b16 %v4592
    %v6262 = vunpack.c.l.b16 %v4593
    %v6263 = vunpack.c.h.b16 %v4593
    %v6264 = vunpack.c.l.b16 %v4594
    %v6265 = vunpack.c.h.b16 %v4594
    %v6266 = vunpack.c.l.b16 %v4595
    %v6267 = vunpack.c.h.b16 %v4595
    %v6268 = vunpack.c.l.b16 %v4596
    %v6269 = vunpack.c.h.b16 %v4596
    %v6270 = vunpack.c.l.b16 %v4597
    %v6271 = vunpack.c.h.b16 %v4597
    %v6272 = vunpack.c.l.b16 %v4598
    %v6273 = vunpack.c.h.b16 %v4598
    %v6274 = vunpack.c.l.b16 %v4599
    %v6275 = vunpack.c.h.b16 %v4599
    %v6276 = vunpack.c.l.b16 %v4600
    %v6277 = vunpack.c.h.b16 %v4600
    %v6278 = vunpack.c.l.b16 %v4601
    %v6279 = vunpack.c.h.b16 %v4601
    %v6280 = vunpack.c.l.b16 %v4602
    %v6281 = vunpack.c.h.b16 %v4602
    %v6282 = vunpack.c.l.b16 %v4603
    %v6283 = vunpack.c.h.b16 %v4603
    %v6284 = vunpack.c.l.b16 %v4604
    %v6285 = vunpack.c.h.b16 %v4604
    %v6286 = vunpack.c.l.b16 %v4605
    %v6287 = vunpack.c.h.b16 %v4605
    %v6288 = vunpack.c.l.b16 %v4606
    %v6289 = vunpack.c.h.b16 %v4606
    %v6290 = vunpack.c.l.b16 %v4607
    %v6291 = vunpack.c.h.b16 %v4607
    %v6292 = vunpack.c.l.b16 %v4608
    %v6293 = vunpack.c.h.b16 %v4608
    %v6294 = vunpack.c.l.b16 %v4609
    %v6295 = vunpack.c.h.b16 %v4609
    %v6296 = vunpack.c.l.b16 %v4610
    %v6297 = vunpack.c.h.b16 %v4610
    %v6298 = vunpack.c.l.b16 %v4611
    %v6299 = vunpack.c.h.b16 %v4611
    %v6300 = vunpack.c.l.b16 %v4612
    %v6301 = vunpack.c.h.b16 %v4612
    %v6302 = vunpack.c.l.b16 %v4613
    %v6303 = vunpack.c.h.b16 %v4613
    %v6304 = vunpack.c.l.b16 %v4614
    %v6305 = vunpack.c.h.b16 %v4614
    %v6306 = vunpack.c.l.b16 %v4615
    %v6307 = vunpack.c.h.b16 %v4615
    %v6308 = vunpack.c.l.b16 %v4616
    %v6309 = vunpack.c.h.b16 %v4616
    %v6310 = vunpack.c.l.b16 %v4617
    %v6311 = vunpack.c.h.b16 %v4617
    %v6312 = vunpack.c.l.b16 %v4618
    %v6313 = vunpack.c.h.b16 %v4618
    %v6314 = vunpack.c.l.b16 %v4619
    %v6315 = vunpack.c.h.b16 %v4619
    %v6316 = vunpack.c.l.b16 %v4620
    %v6317 = vunpack.c.h.b16 %v4620
    %v6318 = vunpack.c.l.b16 %v4621
    %v6319 = vunpack.c.h.b16 %v4621
    %v6320 = vunpack.c.l.b16 %v4622
    %v6321 = vunpack.c.h.b16 %v4622
    %v6322 = vunpack.c.l.b16 %v4623
    %v6323 = vunpack.c.h.b16 %v4623
    %v6324 = vunpack.c.l.b16 %v4624
    %v6325 = vunpack.c.h.b16 %v4624
    %v6326 = vunpack.c.l.b16 %v4625
    %v6327 = vunpack.c.h.b16 %v4625
    %v6328 = vunpack.c.l.b16 %v4626
    %v6329 = vunpack.c.h.b16 %v4626
    %v6330 = vunpack.c.l.b16 %v4627
    %v6331 = vunpack.c.h.b16 %v4627
    %v6332 = vunpack.c.l.b16 %v4628
    %v6333 = vunpack.c.h.b16 %v4628
    %v6334 = vunpack.c.l.b16 %v4629
    %v6335 = vunpack.c.h.b16 %v4629
    %v6336 = vunpack.c.l.b16 %v4630
    %v6337 = vunpack.c.h.b16 %v4630
    %v6338 = vunpack.c.l.b16 %v4631
    %v6339 = vunpack.c.h.b16 %v4631
    %v6340 = vunpack.c.l.b16 %v4632
    %v6341 = vunpack.c.h.b16 %v4632
    %v6342 = vunpack.c.l.b16 %v4633
    %v6343 = vunpack.c.h.b16 %v4633
    %v6344 = vunpack.c.l.b16 %v4634
    %v6345 = vunpack.c.h.b16 %v4634
    %v6346 = vunpack.c.l.b16 %v4635
    %v6347 = vunpack.c.h.b16 %v4635
    %v6348 = vunpack.c.l.b16 %v4636
    %v6349 = vunpack.c.h.b16 %v4636
    %v6350 = vunpack.c.l.b16 %v4637
    %v6351 = vunpack.c.h.b16 %v4637
    %v6352 = vunpack.c.l.b16 %v4638
    %v6353 = vunpack.c.h.b16 %v4638
    %v6354 = vunpack.c.l.b16 %v4639
    %v6355 = vunpack.c.h.b16 %v4639
    %v6356 = vunpack.c.l.b16 %v4640
    %v6357 = vunpack.c.h.b16 %v4640
    %v6358 = vunpack.c.l.b16 %v4641
    %v6359 = vunpack.c.h.b16 %v4641
    %v6360 = vunpack.c.l.b16 %v4642
    %v6361 = vunpack.c.h.b16 %v4642
    %v6362 = vunpack.c.l.b16 %v4643
    %v6363 = vunpack.c.h.b16 %v4643
    %v6364 = vunpack.c.l.b16 %v4644
    %v6365 = vunpack.c.h.b16 %v4644
    %v6366 = vunpack.c.l.b16 %v4645
    %v6367 = vunpack.c.h.b16 %v4645
    %v6368 = vunpack.c.l.b16 %v4646
    %v6369 = vunpack.c.h.b16 %v4646
    %v6370 = vunpack.c.l.b16 %v4647
    %v6371 = vunpack.c.h.b16 %v4647
    %v6372 = vunpack.c.l.b16 %v4648
    %v6373 = vunpack.c.h.b16 %v4648
    %v6374 = vunpack.c.l.b16 %v4649
    %v6375 = vunpack.c.h.b16 %v4649
    %v6376 = vunpack.c.l.b16 %v4650
    %v6377 = vunpack.c.h.b16 %v4650
    %v6378 = vunpack.c.l.b16 %v4651
    %v6379 = vunpack.c.h.b16 %v4651
    %v6380 = vunpack.c.l.b16 %v4652
    %v6381 = vunpack.c.h.b16 %v4652
    %v6382 = vunpack.c.l.b16 %v4653
    %v6383 = vunpack.c.h.b16 %v4653
    %v6384 = vunpack.c.l.b16 %v4654
    %v6385 = vunpack.c.h.b16 %v4654
    %v6386 = vunpack.c.l.b16 %v4655
    %v6387 = vunpack.c.h.b16 %v4655
    %v6388 = vunpack.c.l.b16 %v4656
    %v6389 = vunpack.c.h.b16 %v4656
    %v6390 = vunpack.c.l.b16 %v4657
    %v6391 = vunpack.c.h.b16 %v4657
    %v6392 = vunpack.c.l.b16 %v4658
    %v6393 = vunpack.c.h.b16 %v4658
    %v6394 = vunpack.c.l.b16 %v4659
    %v6395 = vunpack.c.h.b16 %v4659
    %v6396 = vunpack.c.l.b16 %v4660
    %v6397 = vunpack.c.h.b16 %v4660
    %v6398 = vunpack.c.l.b16 %v4661
    %v6399 = vunpack.c.h.b16 %v4661
    %v6400 = vunpack.c.l.b16 %v4662
    %v6401 = vunpack.c.h.b16 %v4662
    %v6402 = vunpack.c.l.b16 %v4663
    %v6403 = vunpack.c.h.b16 %v4663
    %v6404 = vunpack.c.l.b16 %v4664
    %v6405 = vunpack.c.h.b16 %v4664
    %v6406 = vunpack.c.l.b16 %v4665
    %v6407 = vunpack.c.h.b16 %v4665
    %v6408 = vunpack.c.l.b16 %v4666
    %v6409 = vunpack.c.h.b16 %v4666
    %v6410 = vunpack.c.l.b16 %v4667
    %v6411 = vunpack.c.h.b16 %v4667
    %v6412 = vunpack.c.l.b16 %v4668
    %v6413 = vunpack.c.h.b16 %v4668
    %v6414 = vunpack.c.l.b16 %v4669
    %v6415 = vunpack.c.h.b16 %v4669
    %v6416 = vunpack.c.l.b16 %v4670
    %v6417 = vunpack.c.h.b16 %v4670
    %v6418 = vunpack.c.l.b16 %v4671
    %v6419 = vunpack.c.h.b16 %v4671
    %v6420 = vunpack.c.l.b16 %v4672
    %v6421 = vunpack.c.h.b16 %v4672
    %v6422 = vunpack.c.l.b16 %v4673
    %v6423 = vunpack.c.h.b16 %v4673
    %v6424 = vunpack.c.l.b16 %v4674
    %v6425 = vunpack.c.h.b16 %v4674
    %v6426 = vunpack.c.l.b16 %v4675
    %v6427 = vunpack.c.h.b16 %v4675
    %v6428 = vunpack.c.l.b16 %v4676
    %v6429 = vunpack.c.h.b16 %v4676
    %v6430 = vunpack.c.l.b16 %v4677
    %v6431 = vunpack.c.h.b16 %v4677
    %v6432 = vunpack.c.l.b16 %v4678
    %v6433 = vunpack.c.h.b16 %v4678
    %v6434 = vunpack.c.l.b16 %v4679
    %v6435 = vunpack.c.h.b16 %v4679
    %v6436 = vunpack.c.l.b16 %v4680
    %v6437 = vunpack.c.h.b16 %v4680
    %v6438 = vunpack.c.l.b16 %v4681
    %v6439 = vunpack.c.h.b16 %v4681
    %v6440 = vunpack.c.l.b16 %v4682
    %v6441 = vunpack.c.h.b16 %v4682
    %v6442 = vunpack.c.l.b16 %v4683
    %v6443 = vunpack.c.h.b16 %v4683
    %v6444 = vunpack.c.l.b16 %v4684
    %v6445 = vunpack.c.h.b16 %v4684
    %v6446 = vunpack.c.l.b16 %v4685
    %v6447 = vunpack.c.h.b16 %v4685
    %v6448 = vunpack.c.l.b16 %v4686
    %v6449 = vunpack.c.h.b16 %v4686
    %v6450 = vunpack.c.l.b16 %v4687
    %v6451 = vunpack.c.h.b16 %v4687
    %v6452 = vunpack.c.l.b16 %v4688
    %v6453 = vunpack.c.h.b16 %v4688
    %v6454 = vunpack.c.l.b16 %v4689
    %v6455 = vunpack.c.h.b16 %v4689
    %v6456 = vunpack.c.l.b16 %v4690
    %v6457 = vunpack.c.h.b16 %v4690
    %v6458 = vunpack.c.l.b16 %v4691
    %v6459 = vunpack.c.h.b16 %v4691
    %v6460 = vunpack.c.l.b16 %v4692
    %v6461 = vunpack.c.h.b16 %v4692
    %v6462 = vunpack.c.l.b16 %v4693
    %v6463 = vunpack.c.h.b16 %v4693
    %v6464 = vunpack.c.l.b16 %v4694
    %v6465 = vunpack.c.h.b16 %v4694
    %v6466 = vunpack.c.l.b16 %v4695
    %v6467 = vunpack.c.h.b16 %v4695
    %v6468 = vunpack.c.l.b16 %v4696
    %v6469 = vunpack.c.h.b16 %v4696
    %v6470 = vunpack.c.l.b16 %v4697
    %v6471 = vunpack.c.h.b16 %v4697
    %v6472 = vunpack.c.l.b16 %v4698
    %v6473 = vunpack.c.h.b16 %v4698
    %v6474 = vunpack.c.l.b16 %v4699
    %v6475 = vunpack.c.h.b16 %v4699
    %v6476 = vunpack.c.l.b16 %v4700
    %v6477 = vunpack.c.h.b16 %v4700
    %v6478 = vunpack.c.l.b16 %v4701
    %v6479 = vunpack.c.h.b16 %v4701
    %v6480 = vunpack.c.l.b16 %v4702
    %v6481 = vunpack.c.h.b16 %v4702
    %v6482 = vunpack.c.l.b16 %v4703
    %v6483 = vunpack.c.h.b16 %v4703
    %v6484 = vunpack.c.l.b16 %v4704
    %v6485 = vunpack.c.h.b16 %v4704
    %v6486 = vunpack.c.l.b16 %v4705
    %v6487 = vunpack.c.h.b16 %v4705
    %v6488 = vunpack.c.l.b16 %v4706
    %v6489 = vunpack.c.h.b16 %v4706
    %v6490 = vunpack.c.l.b16 %v4707
    %v6491 = vunpack.c.h.b16 %v4707
    %v6492 = vunpack.c.l.b16 %v4708
    %v6493 = vunpack.c.h.b16 %v4708
    %v6494 = vunpack.c.l.b16 %v4709
    %v6495 = vunpack.c.h.b16 %v4709
    %v6496 = vunpack.c.l.b16 %v4710
    %v6497 = vunpack.c.h.b16 %v4710
    %v6498 = vunpack.c.l.b16 %v4711
    %v6499 = vunpack.c.h.b16 %v4711
    %v6500 = vunpack.c.l.b16 %v4712
    %v6501 = vunpack.c.h.b16 %v4712
    %v6502 = vunpack.c.l.b16 %v4713
    %v6503 = vunpack.c.h.b16 %v4713
    %v6504 = vunpack.c.l.b16 %v4714
    %v6505 = vunpack.c.h.b16 %v4714
    %v6506 = vunpack.c.l.b16 %v4715
    %v6507 = vunpack.c.h.b16 %v4715
    %v6508 = vunpack.c.l.b16 %v4716
    %v6509 = vunpack.c.h.b16 %v4716
    %v6510 = vunpack.c.l.b16 %v4717
    %v6511 = vunpack.c.h.b16 %v4717
    %v6512 = vunpack.c.l.b16 %v4718
    %v6513 = vunpack.c.h.b16 %v4718
    %v6514 = vunpack.c.l.b16 %v4719
    %v6515 = vunpack.c.h.b16 %v4719
    %v6516 = vunpack.c.l.b16 %v4720
    %v6517 = vunpack.c.h.b16 %v4720
    %v6518 = vunpack.c.l.b16 %v4721
    %v6519 = vunpack.c.h.b16 %v4721
    %v6520 = vunpack.c.l.b16 %v4722
    %v6521 = vunpack.c.h.b16 %v4722
    %v6522 = vunpack.c.l.b16 %v4723
    %v6523 = vunpack.c.h.b16 %v4723
    %v6524 = vunpack.c.l.b16 %v4724
    %v6525 = vunpack.c.h.b16 %v4724
    %v6526 = vunpack.c.l.b16 %v4725
    %v6527 = vunpack.c.h.b16 %v4725
    %v6528 = vunpack.c.l.b16 %v4726
    %v6529 = vunpack.c.h.b16 %v4726
    %v6530 = vunpack.c.l.b16 %v4727
    %v6531 = vunpack.c.h.b16 %v4727
    %v6532 = vunpack.c.l.b16 %v4728
    %v6533 = vunpack.c.h.b16 %v4728
    %v6534 = vunpack.c.l.b16 %v4729
    %v6535 = vunpack.c.h.b16 %v4729
    %v6536 = vunpack.c.l.b16 %v4730
    %v6537 = vunpack.c.h.b16 %v4730
    %v6538 = vunpack.c.l.b16 %v4731
    %v6539 = vunpack.c.h.b16 %v4731
    %v6540 = vunpack.c.l.b16 %v4732
    %v6541 = vunpack.c.h.b16 %v4732
    %v6542 = vunpack.c.l.b16 %v4733
    %v6543 = vunpack.c.h.b16 %v4733
    %v6544 = vunpack.c.l.b16 %v4734
    %v6545 = vunpack.c.h.b16 %v4734
    %v6546 = vunpack.c.l.b16 %v4735
    %v6547 = vunpack.c.h.b16 %v4735
    %v6548 = vunpack.c.l.b16 %v4736
    %v6549 = vunpack.c.h.b16 %v4736
    %v6550 = vunpack.c.l.b16 %v4737
    %v6551 = vunpack.c.h.b16 %v4737
    %v6552 = vunpack.c.l.b16 %v4738
    %v6553 = vunpack.c.h.b16 %v4738
    %v6554 = vunpack.c.l.b16 %v4739
    %v6555 = vunpack.c.h.b16 %v4739
    %v6556 = vunpack.c.l.b16 %v4740
    %v6557 = vunpack.c.h.b16 %v4740
    %v6558 = vunpack.c.l.b16 %v4741
    %v6559 = vunpack.c.h.b16 %v4741
    %v6560 = vunpack.c.l.b16 %v4742
    %v6561 = vunpack.c.h.b16 %v4742
    %v6562 = vunpack.c.l.b16 %v4743
    %v6563 = vunpack.c.h.b16 %v4743
    %v6564 = vunpack.c.l.b16 %v4744
    %v6565 = vunpack.c.h.b16 %v4744
    %v6566 = vunpack.c.l.b16 %v4745
    %v6567 = vunpack.c.h.b16 %v4745
    %v6568 = vunpack.c.l.b16 %v4746
    %v6569 = vunpack.c.h.b16 %v4746
    %v6570 = vunpack.c.l.b16 %v4747
    %v6571 = vunpack.c.h.b16 %v4747
    %v6572 = vunpack.c.l.b16 %v4748
    %v6573 = vunpack.c.h.b16 %v4748
    %v6574 = vunpack.c.l.b16 %v4749
    %v6575 = vunpack.c.h.b16 %v4749
    %v6576 = vunpack.c.l.b16 %v4750
    %v6577 = vunpack.c.h.b16 %v4750
    %v6578 = vunpack.c.l.b16 %v4751
    %v6579 = vunpack.c.h.b16 %v4751
    %v6580 = vunpack.c.l.b16 %v4752
    %v6581 = vunpack.c.h.b16 %v4752
    %v6582 = vunpack.c.l.b16 %v4753
    %v6583 = vunpack.c.h.b16 %v4753
    %v6584 = vunpack.c.l.b16 %v4754
    %v6585 = vunpack.c.h.b16 %v4754
    %v6586 = vunpack.c.l.b16 %v4755
    %v6587 = vunpack.c.h.b16 %v4755
    %v6588 = vunpack.c.l.b16 %v4756
    %v6589 = vunpack.c.h.b16 %v4756
    %v6590 = vunpack.c.l.b16 %v4757
    %v6591 = vunpack.c.h.b16 %v4757
    %v6592 = vunpack.c.l.b16 %v4758
    %v6593 = vunpack.c.h.b16 %v4758
    %v6594 = vunpack.c.l.b16 %v4759
    %v6595 = vunpack.c.h.b16 %v4759
    %v6596 = vunpack.c.l.b16 %v4760
    %v6597 = vunpack.c.h.b16 %v4760
    %v6598 = vunpack.c.l.b16 %v4761
    %v6599 = vunpack.c.h.b16 %v4761
    %v6600 = vunpack.c.l.b16 %v4762
    %v6601 = vunpack.c.h.b16 %v4762
    %v6602 = vunpack.c.l.b16 %v4763
    %v6603 = vunpack.c.h.b16 %v4763
    %v6604 = vunpack.c.l.b16 %v4764
    %v6605 = vunpack.c.h.b16 %v4764
    %v6606 = vunpack.c.l.b16 %v4765
    %v6607 = vunpack.c.h.b16 %v4765
    %v6608 = vunpack.c.l.b16 %v4766
    %v6609 = vunpack.c.h.b16 %v4766
    %v6610 = vunpack.c.l.b16 %v4767
    %v6611 = vunpack.c.h.b16 %v4767
    %v6612 = vunpack.c.l.b16 %v4768
    %v6613 = vunpack.c.h.b16 %v4768
    %v6614 = vunpack.c.l.b16 %v4769
    %v6615 = vunpack.c.h.b16 %v4769
    %v6616 = vunpack.c.l.b16 %v4770
    %v6617 = vunpack.c.h.b16 %v4770
    %v6618 = vunpack.c.l.b16 %v4771
    %v6619 = vunpack.c.h.b16 %v4771
    %v6620 = vunpack.c.l.b16 %v4772
    %v6621 = vunpack.c.h.b16 %v4772
    %v6622 = vunpack.c.l.b16 %v4773
    %v6623 = vunpack.c.h.b16 %v4773
    %v6624 = vunpack.c.l.b16 %v4774
    %v6625 = vunpack.c.h.b16 %v4774
    %v6626 = vunpack.c.l.b16 %v4775
    %v6627 = vunpack.c.h.b16 %v4775
    %v6628 = vunpack.c.l.b16 %v4776
    %v6629 = vunpack.c.h.b16 %v4776
    %v6630 = vunpack.c.l.b16 %v4777
    %v6631 = vunpack.c.h.b16 %v4777
    %v6632 = vunpack.c.l.b16 %v4778
    %v6633 = vunpack.c.h.b16 %v4778
    %v6634 = vunpack.c.l.b16 %v4779
    %v6635 = vunpack.c.h.b16 %v4779
    %v6636 = vunpack.c.l.b16 %v4780
    %v6637 = vunpack.c.h.b16 %v4780
    %v6638 = vunpack.c.l.b16 %v4781
    %v6639 = vunpack.c.h.b16 %v4781
    %v6640 = vunpack.c.l.b16 %v4782
    %v6641 = vunpack.c.h.b16 %v4782
    %v6642 = vunpack.c.l.b16 %v4783
    %v6643 = vunpack.c.h.b16 %v4783
    %v6644 = vunpack.c.l.b16 %v4784
    %v6645 = vunpack.c.h.b16 %v4784
    %v6646 = vunpack.c.l.b16 %v4785
    %v6647 = vunpack.c.h.b16 %v4785
    %v6648 = vunpack.c.l.b16 %v4786
    %v6649 = vunpack.c.h.b16 %v4786
    %v6650 = vunpack.c.l.b16 %v4787
    %v6651 = vunpack.c.h.b16 %v4787
    %v6652 = vunpack.c.l.b16 %v4788
    %v6653 = vunpack.c.h.b16 %v4788
    %v6654 = vunpack.c.l.b16 %v4789
    %v6655 = vunpack.c.h.b16 %v4789
    %v6656 = vunpack.c.l.b16 %v4790
    %v6657 = vunpack.c.h.b16 %v4790
    %v6658 = vunpack.c.l.b16 %v4791
    %v6659 = vunpack.c.h.b16 %v4791
    %v6660 = vunpack.c.l.b16 %v4792
    %v6661 = vunpack.c.h.b16 %v4792
    %v6662 = vunpack.c.l.b16 %v4793
    %v6663 = vunpack.c.h.b16 %v4793
    %v6664 = vunpack.c.l.b16 %v4794
    %v6665 = vunpack.c.h.b16 %v4794
    %v6666 = vunpack.c.l.b16 %v4795
    %v6667 = vunpack.c.h.b16 %v4795
    %v6668 = vunpack.c.l.b16 %v4796
    %v6669 = vunpack.c.h.b16 %v4796
    %v6670 = vunpack.c.l.b16 %v4797
    %v6671 = vunpack.c.h.b16 %v4797
    %v6672 = vunpack.c.l.b16 %v4798
    %v6673 = vunpack.c.h.b16 %v4798
    %v6674 = vunpack.c.l.b16 %v4799
    %v6675 = vunpack.c.h.b16 %v4799
    %v6676 = vunpack.c.l.b16 %v4800
    %v6677 = vunpack.c.h.b16 %v4800
    %v6678 = vunpack.c.l.b16 %v4801
    %v6679 = vunpack.c.h.b16 %v4801
    %v6680 = vunpack.c.l.b16 %v4802
    %v6681 = vunpack.c.h.b16 %v4802
    %v6682 = vunpack.c.l.b16 %v4803
    %v6683 = vunpack.c.h.b16 %v4803
    %v6684 = vunpack.c.l.b16 %v4804
    %v6685 = vunpack.c.h.b16 %v4804
    %v6686 = vunpack.c.l.b16 %v4805
    %v6687 = vunpack.c.h.b16 %v4805
    %v6688 = vunpack.c.l.b16 %v4806
    %v6689 = vunpack.c.h.b16 %v4806
    %v6690 = vunpack.c.l.b16 %v4807
    %v6691 = vunpack.c.h.b16 %v4807
    %v6692 = vunpack.c.l.b16 %v4808
    %v6693 = vunpack.c.h.b16 %v4808
    %v6694 = vunpack.c.l.b16 %v4809
    %v6695 = vunpack.c.h.b16 %v4809
    %v6696 = vunpack.c.l.b16 %v4810
    %v6697 = vunpack.c.h.b16 %v4810
    %v6698 = vunpack.c.l.b16 %v4811
    %v6699 = vunpack.c.h.b16 %v4811
    %v6700 = vunpack.c.l.b16 %v4812
    %v6701 = vunpack.c.h.b16 %v4812
    %v6702 = vunpack.c.l.b16 %v4813
    %v6703 = vunpack.c.h.b16 %v4813
    %v6704 = vunpack.c.l.b16 %v4814
    %v6705 = vunpack.c.h.b16 %v4814
    %v6706 = vunpack.c.l.b16 %v4815
    %v6707 = vunpack.c.h.b16 %v4815
    %v6708 = vunpack.c.l.b16 %v4816
    %v6709 = vunpack.c.h.b16 %v4816
    %v6710 = vunpack.c.l.b16 %v4817
    %v6711 = vunpack.c.h.b16 %v4817
    %v6712 = vunpack.c.l.b16 %v4818
    %v6713 = vunpack.c.h.b16 %v4818
    %v6714 = vunpack.c.l.b16 %v4819
    %v6715 = vunpack.c.h.b16 %v4819
    %v6716 = vunpack.c.l.b16 %v4820
    %v6717 = vunpack.c.h.b16 %v4820
    %v6718 = vunpack.c.l.b16 %v4821
    %v6719 = vunpack.c.h.b16 %v4821
    %v6720 = vunpack.c.l.b16 %v4822
    %v6721 = vunpack.c.h.b16 %v4822
    %v6722 = vunpack.c.l.b16 %v4823
    %v6723 = vunpack.c.h.b16 %v4823
    %v6724 = vunpack.c.l.b16 %v4824
    %v6725 = vunpack.c.h.b16 %v4824
    %v6726 = vunpack.c.l.b16 %v4825
    %v6727 = vunpack.c.h.b16 %v4825
    %v6728 = vunpack.c.l.b16 %v4826
    %v6729 = vunpack.c.h.b16 %v4826
    %v6730 = vunpack.c.l.b16 %v4827
    %v6731 = vunpack.c.h.b16 %v4827
    %v6732 = vunpack.c.l.b16 %v4828
    %v6733 = vunpack.c.h.b16 %v4828
    %v6734 = vunpack.c.l.b16 %v4829
    %v6735 = vunpack.c.h.b16 %v4829
    %v6736 = vunpack.c.l.b16 %v4830
    %v6737 = vunpack.c.h.b16 %v4830
    %v6738 = vunpack.c.l.b16 %v4831
    %v6739 = vunpack.c.h.b16 %v4831
    %v6740 = vunpack.c.l.b16 %v4832
    %v6741 = vunpack.c.h.b16 %v4832
    %v6742 = vunpack.c.l.b16 %v4833
    %v6743 = vunpack.c.h.b16 %v4833
    %v6744 = vunpack.c.l.b16 %v4834
    %v6745 = vunpack.c.h.b16 %v4834
    %v6746 = vunpack.c.l.b16 %v4835
    %v6747 = vunpack.c.h.b16 %v4835
    %v6748 = vunpack.c.l.b16 %v4836
    %v6749 = vunpack.c.h.b16 %v4836
    %v6750 = vunpack.c.l.b16 %v4837
    %v6751 = vunpack.c.h.b16 %v4837
    %v6752 = vunpack.c.l.b16 %v4838
    %v6753 = vunpack.c.h.b16 %v4838
    %v6754 = vunpack.c.l.b16 %v4839
    %v6755 = vunpack.c.h.b16 %v4839
    %v6756 = vunpack.c.l.b16 %v4840
    %v6757 = vunpack.c.h.b16 %v4840
    %v6758 = vunpack.c.l.b16 %v4841
    %v6759 = vunpack.c.h.b16 %v4841
    %v6760 = vunpack.c.l.b16 %v4842
    %v6761 = vunpack.c.h.b16 %v4842
    %v6762 = vunpack.c.l.b16 %v4843
    %v6763 = vunpack.c.h.b16 %v4843
    %v6764 = vunpack.c.l.b16 %v4844
    %v6765 = vunpack.c.h.b16 %v4844
    %v6766 = vunpack.c.l.b16 %v4845
    %v6767 = vunpack.c.h.b16 %v4845
    %v6768 = vunpack.c.l.b16 %v4846
    %v6769 = vunpack.c.h.b16 %v4846
    %v6770 = vunpack.c.l.b16 %v4847
    %v6771 = vunpack.c.h.b16 %v4847
    %v6772 = vunpack.c.l.b16 %v4848
    %v6773 = vunpack.c.h.b16 %v4848
    %v6774 = vunpack.c.l.b16 %v4849
    %v6775 = vunpack.c.h.b16 %v4849
    %v6776 = vunpack.c.l.b16 %v4850
    %v6777 = vunpack.c.h.b16 %v4850
    %v6778 = vunpack.c.l.b16 %v4851
    %v6779 = vunpack.c.h.b16 %v4851
    %v6780 = vunpack.c.l.b16 %v4852
    %v6781 = vunpack.c.h.b16 %v4852
    %v6782 = vunpack.c.l.b16 %v4853
    %v6783 = vunpack.c.h.b16 %v4853
    %v6784 = vunpack.c.l.b16 %v4854
    %v6785 = vunpack.c.h.b16 %v4854
    %v6786 = vunpack.c.l.b16 %v4855
    %v6787 = vunpack.c.h.b16 %v4855
    %v6788 = vunpack.c.l.b16 %v4856
    %v6789 = vunpack.c.h.b16 %v4856
    %v6790 = vunpack.c.l.b16 %v4857
    %v6791 = vunpack.c.h.b16 %v4857
    %v6792 = vunpack.c.l.b16 %v4858
    %v6793 = vunpack.c.h.b16 %v4858
    %v6794 = vunpack.c.l.b16 %v4859
    %v6795 = vunpack.c.h.b16 %v4859
    %v6796 = vunpack.c.l.b16 %v4860
    %v6797 = vunpack.c.h.b16 %v4860
    %v6798 = vunpack.c.l.b16 %v4861
    %v6799 = vunpack.c.h.b16 %v4861
    %v6800 = vunpack.c.l.b16 %v4862
    %v6801 = vunpack.c.h.b16 %v4862
    %v6802 = vunpack.c.l.b16 %v4863
    %v6803 = vunpack.c.h.b16 %v4863
    %v6804 = vunpack.c.l.b16 %v4864
    %v6805 = vunpack.c.h.b16 %v4864
    %v6806 = vpack.c.b16 %v5798, %v5782
    %v6807 = vpack.c.b16 %v5799, %v5783
    %v6808 = vpack.c.b16 %v5800, %v5784
    %v6809 = vpack.c.b16 %v5801, %v5785
    %v6810 = vpack.c.b16 %v5802, %v5786
    %v6811 = vpack.c.b16 %v5803, %v5787
    %v6812 = vpack.c.b16 %v5804, %v5788
    %v6813 = vpack.c.b16 %v5805, %v5789
    %v6814 = vpack.c.b16 %v5806, %v5790
    %v6815 = vpack.c.b16 %v5807, %v5791
    %v6816 = vpack.c.b16 %v5808, %v5792
    %v6817 = vpack.c.b16 %v5809, %v5793
    %v6818 = vpack.c.b16 %v5810, %v5794
    %v6819 = vpack.c.b16 %v5811, %v5795
    %v6820 = vpack.c.b16 %v5812, %v5796
    %v6821 = vpack.c.b16 %v5813, %v5797
    %v6822 = vpack.c.b16 %v5830, %v5814
    %v6823 = vpack.c.b16 %v5831, %v5815
    %v6824 = vpack.c.b16 %v5832, %v5816
    %v6825 = vpack.c.b16 %v5833, %v5817
    %v6826 = vpack.c.b16 %v5834, %v5818
    %v6827 = vpack.c.b16 %v5835, %v5819
    %v6828 = vpack.c.b16 %v5836, %v5820
    %v6829 = vpack.c.b16 %v5837, %v5821
    %v6830 = vpack.c.b16 %v5838, %v5822
    %v6831 = vpack.c.b16 %v5839, %v5823
    %v6832 = vpack.c.b16 %v5840, %v5824
    %v6833 = vpack.c.b16 %v5841, %v5825
    %v6834 = vpack.c.b16 %v5842, %v5826
    %v6835 = vpack.c.b16 %v5843, %v5827
    %v6836 = vpack.c.b16 %v5844, %v5828
    %v6837 = vpack.c.b16 %v5845, %v5829
    %v6838 = vpack.c.b16 %v5862, %v5846
    %v6839 = vpack.c.b16 %v5863, %v5847
    %v6840 = vpack.c.b16 %v5864, %v5848
    %v6841 = vpack.c.b16 %v5865, %v5849
    %v6842 = vpack.c.b16 %v5866, %v5850
    %v6843 = vpack.c.b16 %v5867, %v5851
    %v6844 = vpack.c.b16 %v5868, %v5852
    %v6845 = vpack.c.b16 %v5869, %v5853
    %v6846 = vpack.c.b16 %v5870, %v5854
    %v6847 = vpack.c.b16 %v5871, %v5855
    %v6848 = vpack.c.b16 %v5872, %v5856
    %v6849 = vpack.c.b16 %v5873, %v5857
    %v6850 = vpack.c.b16 %v5874, %v5858
    %v6851 = vpack.c.b16 %v5875, %v5859
    %v6852 = vpack.c.b16 %v5876, %v5860
    %v6853 = vpack.c.b16 %v5877, %v5861
    %v6854 = vpack.c.b16 %v5894, %v5878
    %v6855 = vpack.c.b16 %v5895, %v5879
    %v6856 = vpack.c.b16 %v5896, %v5880
    %v6857 = vpack.c.b16 %v5897, %v5881
    %v6858 = vpack.c.b16 %v5898, %v5882
    %v6859 = vpack.c.b16 %v5899, %v5883
    %v6860 = vpack.c.b16 %v5900, %v5884
    %v6861 = vpack.c.b16 %v5901, %v5885
    %v6862 = vpack.c.b16 %v5902, %v5886
    %v6863 = vpack.c.b16 %v5903, %v5887
    %v6864 = vpack.c.b16 %v5904, %v5888
    %v6865 = vpack.c.b16 %v5905, %v5889
    %v6866 = vpack.c.b16 %v5906, %v5890
    %v6867 = vpack.c.b16 %v5907, %v5891
    %v6868 = vpack.c.b16 %v5908, %v5892
    %v6869 = vpack.c.b16 %v5909, %v5893
    %v6870 = vpack.c.b16 %v5926, %v5910
    %v6871 = vpack.c.b16 %v5927, %v5911
    %v6872 = vpack.c.b16 %v5928, %v5912
    %v6873 = vpack.c.b16 %v5929, %v5913
    %v6874 = vpack.c.b16 %v5930, %v5914
    %v6875 = vpack.c.b16 %v5931, %v5915
    %v6876 = vpack.c.b16 %v5932, %v5916
    %v6877 = vpack.c.b16 %v5933, %v5917
    %v6878 = vpack.c.b16 %v5934, %v5918
    %v6879 = vpack.c.b16 %v5935, %v5919
    %v6880 = vpack.c.b16 %v5936, %v5920
    %v6881 = vpack.c.b16 %v5937, %v5921
    %v6882 = vpack.c.b16 %v5938, %v5922
    %v6883 = vpack.c.b16 %v5939, %v5923
    %v6884 = vpack.c.b16 %v5940, %v5924
    %v6885 = vpack.c.b16 %v5941, %v5925
    %v6886 = vpack.c.b16 %v5958, %v5942
    %v6887 = vpack.c.b16 %v5959, %v5943
    %v6888 = vpack.c.b16 %v5960, %v5944
    %v6889 = vpack.c.b16 %v5961, %v5945
    %v6890 = vpack.c.b16 %v5962, %v5946
    %v6891 = vpack.c.b16 %v5963, %v5947
    %v6892 = vpack.c.b16 %v5964, %v5948
    %v6893 = vpack.c.b16 %v5965, %v5949
    %v6894 = vpack.c.b16 %v5966, %v5950
    %v6895 = vpack.c.b16 %v5967, %v5951
    %v6896 = vpack.c.b16 %v5968, %v5952
    %v6897 = vpack.c.b16 %v5969, %v5953
    %v6898 = vpack.c.b16 %v5970, %v5954
    %v6899 = vpack.c.b16 %v5971, %v5955
    %v6900 = vpack.c.b16 %v5972, %v5956
    %v6901 = vpack.c.b16 %v5973, %v5957
    %v6902 = vpack.c.b16 %v5990, %v5974
    %v6903 = vpack.c.b16 %v5991, %v5975
    %v6904 = vpack.c.b16 %v5992, %v5976
    %v6905 = vpack.c.b16 %v5993, %v5977
    %v6906 = vpack.c.b16 %v5994, %v5978
    %v6907 = vpack.c.b16 %v5995, %v5979
    %v6908 = vpack.c.b16 %v5996, %v5980
    %v6909 = vpack.c.b16 %v5997, %v5981
    %v6910 = vpack.c.b16 %v5998, %v5982
    %v6911 = vpack.c.b16 %v5999, %v5983
    %v6912 = vpack.c.b16 %v6000, %v5984
    %v6913 = vpack.c.b16 %v6001, %v5985
    %v6914 = vpack.c.b16 %v6002, %v5986
    %v6915 = vpack.c.b16 %v6003, %v5987
    %v6916 = vpack.c.b16 %v6004, %v5988
    %v6917 = vpack.c.b16 %v6005, %v5989
    %v6918 = vpack.c.b16 %v6022, %v6006
    %v6919 = vpack.c.b16 %v6023, %v6007
    %v6920 = vpack.c.b16 %v6024, %v6008
    %v6921 = vpack.c.b16 %v6025, %v6009
    %v6922 = vpack.c.b16 %v6026, %v6010
    %v6923 = vpack.c.b16 %v6027, %v6011
    %v6924 = vpack.c.b16 %v6028, %v6012
    %v6925 = vpack.c.b16 %v6029, %v6013
    %v6926 = vpack.c.b16 %v6030, %v6014
    %v6927 = vpack.c.b16 %v6031, %v6015
    %v6928 = vpack.c.b16 %v6032, %v6016
    %v6929 = vpack.c.b16 %v6033, %v6017
    %v6930 = vpack.c.b16 %v6034, %v6018
    %v6931 = vpack.c.b16 %v6035, %v6019
    %v6932 = vpack.c.b16 %v6036, %v6020
    %v6933 = vpack.c.b16 %v6037, %v6021
    %v6934 = vpack.c.b16 %v6054, %v6038
    %v6935 = vpack.c.b16 %v6055, %v6039
    %v6936 = vpack.c.b16 %v6056, %v6040
    %v6937 = vpack.c.b16 %v6057, %v6041
    %v6938 = vpack.c.b16 %v6058, %v6042
    %v6939 = vpack.c.b16 %v6059, %v6043
    %v6940 = vpack.c.b16 %v6060, %v6044
    %v6941 = vpack.c.b16 %v6061, %v6045
    %v6942 = vpack.c.b16 %v6062, %v6046
    %v6943 = vpack.c.b16 %v6063, %v6047
    %v6944 = vpack.c.b16 %v6064, %v6048
    %v6945 = vpack.c.b16 %v6065, %v6049
    %v6946 = vpack.c.b16 %v6066, %v6050
    %v6947 = vpack.c.b16 %v6067, %v6051
    %v6948 = vpack.c.b16 %v6068, %v6052
    %v6949 = vpack.c.b16 %v6069, %v6053
    %v6950 = vpack.c.b16 %v6086, %v6070
    %v6951 = vpack.c.b16 %v6087, %v6071
    %v6952 = vpack.c.b16 %v6088, %v6072
    %v6953 = vpack.c.b16 %v6089, %v6073
    %v6954 = vpack.c.b16 %v6090, %v6074
    %v6955 = vpack.c.b16 %v6091, %v6075
    %v6956 = vpack.c.b16 %v6092, %v6076
    %v6957 = vpack.c.b16 %v6093, %v6077
    %v6958 = vpack.c.b16 %v6094, %v6078
    %v6959 = vpack.c.b16 %v6095, %v6079
    %v6960 = vpack.c.b16 %v6096, %v6080
    %v6961 = vpack.c.b16 %v6097, %v6081
    %v6962 = vpack.c.b16 %v6098, %v6082
    %v6963 = vpack.c.b16 %v6099, %v6083
    %v6964 = vpack.c.b16 %v6100, %v6084
    %v6965 = vpack.c.b16 %v6101, %v6085
    %v6966 = vpack.c.b16 %v6118, %v6102
    %v6967 = vpack.c.b16 %v6119, %v6103
    %v6968 = vpack.c.b16 %v6120, %v6104
    %v6969 = vpack.c.b16 %v6121, %v6105
    %v6970 = vpack.c.b16 %v6122, %v6106
    %v6971 = vpack.c.b16 %v6123, %v6107
    %v6972 = vpack.c.b16 %v6124, %v6108
    %v6973 = vpack.c.b16 %v6125, %v6109
    %v6974 = vpack.c.b16 %v6126, %v6110
    %v6975 = vpack.c.b16 %v6127, %v6111
    %v6976 = vpack.c.b16 %v6128, %v6112
    %v6977 = vpack.c.b16 %v6129, %v6113
    %v6978 = vpack.c.b16 %v6130, %v6114
    %v6979 = vpack.c.b16 %v6131, %v6115
    %v6980 = vpack.c.b16 %v6132, %v6116
    %v6981 = vpack.c.b16 %v6133, %v6117
    %v6982 = vpack.c.b16 %v6150, %v6134
    %v6983 = vpack.c.b16 %v6151, %v6135
    %v6984 = vpack.c.b16 %v6152, %v6136
    %v6985 = vpack.c.b16 %v6153, %v6137
    %v6986 = vpack.c.b16 %v6154, %v6138
    %v6987 = vpack.c.b16 %v6155, %v6139
    %v6988 = vpack.c.b16 %v6156, %v6140
    %v6989 = vpack.c.b16 %v6157, %v6141
    %v6990 = vpack.c.b16 %v6158, %v6142
    %v6991 = vpack.c.b16 %v6159, %v6143
    %v6992 = vpack.c.b16 %v6160, %v6144
    %v6993 = vpack.c.b16 %v6161, %v6145
    %v6994 = vpack.c.b16 %v6162, %v6146
    %v6995 = vpack.c.b16 %v6163, %v6147
    %v6996 = vpack.c.b16 %v6164, %v6148
    %v6997 = vpack.c.b16 %v6165, %v6149
    %v6998 = vpack.c.b16 %v6182, %v6166
    %v6999 = vpack.c.b16 %v6183, %v6167
    %v7000 = vpack.c.b16 %v6184, %v6168
    %v7001 = vpack.c.b16 %v6185, %v6169
    %v7002 = vpack.c.b16 %v6186, %v6170
    %v7003 = vpack.c.b16 %v6187, %v6171
    %v7004 = vpack.c.b16 %v6188, %v6172
    %v7005 = vpack.c.b16 %v6189, %v6173
    %v7006 = vpack.c.b16 %v6190, %v6174
    %v7007 = vpack.c.b16 %v6191, %v6175
    %v7008 = vpack.c.b16 %v6192, %v6176
    %v7009 = vpack.c.b16 %v6193, %v6177
    %v7010 = vpack.c.b16 %v6194, %v6178
    %v7011 = vpack.c.b16 %v6195, %v6179
    %v7012 = vpack.c.b16 %v6196, %v6180
    %v7013 = vpack.c.b16 %v6197, %v6181
    %v7014 = vpack.c.b16 %v6214, %v6198
    %v7015 = vpack.c.b16 %v6215, %v6199
    %v7016 = vpack.c.b16 %v6216, %v6200
    %v7017 = vpack.c.b16 %v6217, %v6201
    %v7018 = vpack.c.b16 %v6218, %v6202
    %v7019 = vpack.c.b16 %v6219, %v6203
    %v7020 = vpack.c.b16 %v6220, %v6204
    %v7021 = vpack.c.b16 %v6221, %v6205
    %v7022 = vpack.c.b16 %v6222, %v6206
    %v7023 = vpack.c.b16 %v6223, %v6207
    %v7024 = vpack.c.b16 %v6224, %v6208
    %v7025 = vpack.c.b16 %v6225, %v6209
    %v7026 = vpack.c.b16 %v6226, %v6210
    %v7027 = vpack.c.b16 %v6227, %v6211
    %v7028 = vpack.c.b16 %v6228, %v6212
    %v7029 = vpack.c.b16 %v6229, %v6213
    %v7030 = vpack.c.b16 %v6246, %v6230
    %v7031 = vpack.c.b16 %v6247, %v6231
    %v7032 = vpack.c.b16 %v6248, %v6232
    %v7033 = vpack.c.b16 %v6249, %v6233
    %v7034 = vpack.c.b16 %v6250, %v6234
    %v7035 = vpack.c.b16 %v6251, %v6235
    %v7036 = vpack.c.b16 %v6252, %v6236
    %v7037 = vpack.c.b16 %v6253, %v6237
    %v7038 = vpack.c.b16 %v6254, %v6238
    %v7039 = vpack.c.b16 %v6255, %v6239
    %v7040 = vpack.c.b16 %v6256, %v6240
    %v7041 = vpack.c.b16 %v6257, %v6241
    %v7042 = vpack.c.b16 %v6258, %v6242
    %v7043 = vpack.c.b16 %v6259, %v6243
    %v7044 = vpack.c.b16 %v6260, %v6244
    %v7045 = vpack.c.b16 %v6261, %v6245
    %v7046 = vpack.c.b16 %v6278, %v6262
    %v7047 = vpack.c.b16 %v6279, %v6263
    %v7048 = vpack.c.b16 %v6280, %v6264
    %v7049 = vpack.c.b16 %v6281, %v6265
    %v7050 = vpack.c.b16 %v6282, %v6266
    %v7051 = vpack.c.b16 %v6283, %v6267
    %v7052 = vpack.c.b16 %v6284, %v6268
    %v7053 = vpack.c.b16 %v6285, %v6269
    %v7054 = vpack.c.b16 %v6286, %v6270
    %v7055 = vpack.c.b16 %v6287, %v6271
    %v7056 = vpack.c.b16 %v6288, %v6272
    %v7057 = vpack.c.b16 %v6289, %v6273
    %v7058 = vpack.c.b16 %v6290, %v6274
    %v7059 = vpack.c.b16 %v6291, %v6275
    %v7060 = vpack.c.b16 %v6292, %v6276
    %v7061 = vpack.c.b16 %v6293, %v6277
    %v7062 = vpack.c.b16 %v6310, %v6294
    %v7063 = vpack.c.b16 %v6311, %v6295
    %v7064 = vpack.c.b16 %v6312, %v6296
    %v7065 = vpack.c.b16 %v6313, %v6297
    %v7066 = vpack.c.b16 %v6314, %v6298
    %v7067 = vpack.c.b16 %v6315, %v6299
    %v7068 = vpack.c.b16 %v6316, %v6300
    %v7069 = vpack.c.b16 %v6317, %v6301
    %v7070 = vpack.c.b16 %v6318, %v6302
    %v7071 = vpack.c.b16 %v6319, %v6303
    %v7072 = vpack.c.b16 %v6320, %v6304
    %v7073 = vpack.c.b16 %v6321, %v6305
    %v7074 = vpack.c.b16 %v6322, %v6306
    %v7075 = vpack.c.b16 %v6323, %v6307
    %v7076 = vpack.c.b16 %v6324, %v6308
    %v7077 = vpack.c.b16 %v6325, %v6309
    %v7078 = vpack.c.b16 %v6342, %v6326
    %v7079 = vpack.c.b16 %v6343, %v6327
    %v7080 = vpack.c.b16 %v6344, %v6328
    %v7081 = vpack.c.b16 %v6345, %v6329
    %v7082 = vpack.c.b16 %v6346, %v6330
    %v7083 = vpack.c.b16 %v6347, %v6331
    %v7084 = vpack.c.b16 %v6348, %v6332
    %v7085 = vpack.c.b16 %v6349, %v6333
    %v7086 = vpack.c.b16 %v6350, %v6334
    %v7087 = vpack.c.b16 %v6351, %v6335
    %v7088 = vpack.c.b16 %v6352, %v6336
    %v7089 = vpack.c.b16 %v6353, %v6337
    %v7090 = vpack.c.b16 %v6354, %v6338
    %v7091 = vpack.c.b16 %v6355, %v6339
    %v7092 = vpack.c.b16 %v6356, %v6340
    %v7093 = vpack.c.b16 %v6357, %v6341
    %v7094 = vpack.c.b16 %v6374, %v6358
    %v7095 = vpack.c.b16 %v6375, %v6359
    %v7096 = vpack.c.b16 %v6376, %v6360
    %v7097 = vpack.c.b16 %v6377, %v6361
    %v7098 = vpack.c.b16 %v6378, %v6362
    %v7099 = vpack.c.b16 %v6379, %v6363
    %v7100 = vpack.c.b16 %v6380, %v6364
    %v7101 = vpack.c.b16 %v6381, %v6365
    %v7102 = vpack.c.b16 %v6382, %v6366
    %v7103 = vpack.c.b16 %v6383, %v6367
    %v7104 = vpack.c.b16 %v6384, %v6368
    %v7105 = vpack.c.b16 %v6385, %v6369
    %v7106 = vpack.c.b16 %v6386, %v6370
    %v7107 = vpack.c.b16 %v6387, %v6371
    %v7108 = vpack.c.b16 %v6388, %v6372
    %v7109 = vpack.c.b16 %v6389, %v6373
    %v7110 = vpack.c.b16 %v6406, %v6390
    %v7111 = vpack.c.b16 %v6407, %v6391
    %v7112 = vpack.c.b16 %v6408, %v6392
    %v7113 = vpack.c.b16 %v6409, %v6393
    %v7114 = vpack.c.b16 %v6410, %v6394
    %v7115 = vpack.c.b16 %v6411, %v6395
    %v7116 = vpack.c.b16 %v6412, %v6396
    %v7117 = vpack.c.b16 %v6413, %v6397
    %v7118 = vpack.c.b16 %v6414, %v6398
    %v7119 = vpack.c.b16 %v6415, %v6399
    %v7120 = vpack.c.b16 %v6416, %v6400
    %v7121 = vpack.c.b16 %v6417, %v6401
    %v7122 = vpack.c.b16 %v6418, %v6402
    %v7123 = vpack.c.b16 %v6419, %v6403
    %v7124 = vpack.c.b16 %v6420, %v6404
    %v7125 = vpack.c.b16 %v6421, %v6405
    %v7126 = vpack.c.b16 %v6438, %v6422
    %v7127 = vpack.c.b16 %v6439, %v6423
    %v7128 = vpack.c.b16 %v6440, %v6424
    %v7129 = vpack.c.b16 %v6441, %v6425
    %v7130 = vpack.c.b16 %v6442, %v6426
    %v7131 = vpack.c.b16 %v6443, %v6427
    %v7132 = vpack.c.b16 %v6444, %v6428
    %v7133 = vpack.c.b16 %v6445, %v6429
    %v7134 = vpack.c.b16 %v6446, %v6430
    %v7135 = vpack.c.b16 %v6447, %v6431
    %v7136 = vpack.c.b16 %v6448, %v6432
    %v7137 = vpack.c.b16 %v6449, %v6433
    %v7138 = vpack.c.b16 %v6450, %v6434
    %v7139 = vpack.c.b16 %v6451, %v6435
    %v7140 = vpack.c.b16 %v6452, %v6436
    %v7141 = vpack.c.b16 %v6453, %v6437
    %v7142 = vpack.c.b16 %v6470, %v6454
    %v7143 = vpack.c.b16 %v6471, %v6455
    %v7144 = vpack.c.b16 %v6472, %v6456
    %v7145 = vpack.c.b16 %v6473, %v6457
    %v7146 = vpack.c.b16 %v6474, %v6458
    %v7147 = vpack.c.b16 %v6475, %v6459
    %v7148 = vpack.c.b16 %v6476, %v6460
    %v7149 = vpack.c.b16 %v6477, %v6461
    %v7150 = vpack.c.b16 %v6478, %v6462
    %v7151 = vpack.c.b16 %v6479, %v6463
    %v7152 = vpack.c.b16 %v6480, %v6464
    %v7153 = vpack.c.b16 %v6481, %v6465
    %v7154 = vpack.c.b16 %v6482, %v6466
    %v7155 = vpack.c.b16 %v6483, %v6467
    %v7156 = vpack.c.b16 %v6484, %v6468
    %v7157 = vpack.c.b16 %v6485, %v6469
    %v7158 = vpack.c.b16 %v6502, %v6486
    %v7159 = vpack.c.b16 %v6503, %v6487
    %v7160 = vpack.c.b16 %v6504, %v6488
    %v7161 = vpack.c.b16 %v6505, %v6489
    %v7162 = vpack.c.b16 %v6506, %v6490
    %v7163 = vpack.c.b16 %v6507, %v6491
    %v7164 = vpack.c.b16 %v6508, %v6492
    %v7165 = vpack.c.b16 %v6509, %v6493
    %v7166 = vpack.c.b16 %v6510, %v6494
    %v7167 = vpack.c.b16 %v6511, %v6495
    %v7168 = vpack.c.b16 %v6512, %v6496
    %v7169 = vpack.c.b16 %v6513, %v6497
    %v7170 = vpack.c.b16 %v6514, %v6498
    %v7171 = vpack.c.b16 %v6515, %v6499
    %v7172 = vpack.c.b16 %v6516, %v6500
    %v7173 = vpack.c.b16 %v6517, %v6501
    %v7174 = vpack.c.b16 %v6534, %v6518
    %v7175 = vpack.c.b16 %v6535, %v6519
    %v7176 = vpack.c.b16 %v6536, %v6520
    %v7177 = vpack.c.b16 %v6537, %v6521
    %v7178 = vpack.c.b16 %v6538, %v6522
    %v7179 = vpack.c.b16 %v6539, %v6523
    %v7180 = vpack.c.b16 %v6540, %v6524
    %v7181 = vpack.c.b16 %v6541, %v6525
    %v7182 = vpack.c.b16 %v6542, %v6526
    %v7183 = vpack.c.b16 %v6543, %v6527
    %v7184 = vpack.c.b16 %v6544, %v6528
    %v7185 = vpack.c.b16 %v6545, %v6529
    %v7186 = vpack.c.b16 %v6546, %v6530
    %v7187 = vpack.c.b16 %v6547, %v6531
    %v7188 = vpack.c.b16 %v6548, %v6532
    %v7189 = vpack.c.b16 %v6549, %v6533
    %v7190 = vpack.c.b16 %v6566, %v6550
    %v7191 = vpack.c.b16 %v6567, %v6551
    %v7192 = vpack.c.b16 %v6568, %v6552
    %v7193 = vpack.c.b16 %v6569, %v6553
    %v7194 = vpack.c.b16 %v6570, %v6554
    %v7195 = vpack.c.b16 %v6571, %v6555
    %v7196 = vpack.c.b16 %v6572, %v6556
    %v7197 = vpack.c.b16 %v6573, %v6557
    %v7198 = vpack.c.b16 %v6574, %v6558
    %v7199 = vpack.c.b16 %v6575, %v6559
    %v7200 = vpack.c.b16 %v6576, %v6560
    %v7201 = vpack.c.b16 %v6577, %v6561
    %v7202 = vpack.c.b16 %v6578, %v6562
    %v7203 = vpack.c.b16 %v6579, %v6563
    %v7204 = vpack.c.b16 %v6580, %v6564
    %v7205 = vpack.c.b16 %v6581, %v6565
    %v7206 = vpack.c.b16 %v6598, %v6582
    %v7207 = vpack.c.b16 %v6599, %v6583
    %v7208 = vpack.c.b16 %v6600, %v6584
    %v7209 = vpack.c.b16 %v6601, %v6585
    %v7210 = vpack.c.b16 %v6602, %v6586
    %v7211 = vpack.c.b16 %v6603, %v6587
    %v7212 = vpack.c.b16 %v6604, %v6588
    %v7213 = vpack.c.b16 %v6605, %v6589
    %v7214 = vpack.c.b16 %v6606, %v6590
    %v7215 = vpack.c.b16 %v6607, %v6591
    %v7216 = vpack.c.b16 %v6608, %v6592
    %v7217 = vpack.c.b16 %v6609, %v6593
    %v7218 = vpack.c.b16 %v6610, %v6594
    %v7219 = vpack.c.b16 %v6611, %v6595
    %v7220 = vpack.c.b16 %v6612, %v6596
    %v7221 = vpack.c.b16 %v6613, %v6597
    %v7222 = vpack.c.b16 %v6630, %v6614
    %v7223 = vpack.c.b16 %v6631, %v6615
    %v7224 = vpack.c.b16 %v6632, %v6616
    %v7225 = vpack.c.b16 %v6633, %v6617
    %v7226 = vpack.c.b16 %v6634, %v6618
    %v7227 = vpack.c.b16 %v6635, %v6619
    %v7228 = vpack.c.b16 %v6636, %v6620
    %v7229 = vpack.c.b16 %v6637, %v6621
    %v7230 = vpack.c.b16 %v6638, %v6622
    %v7231 = vpack.c.b16 %v6639, %v6623
    %v7232 = vpack.c.b16 %v6640, %v6624
    %v7233 = vpack.c.b16 %v6641, %v6625
    %v7234 = vpack.c.b16 %v6642, %v6626
    %v7235 = vpack.c.b16 %v6643, %v6627
    %v7236 = vpack.c.b16 %v6644, %v6628
    %v7237 = vpack.c.b16 %v6645, %v6629
    %v7238 = vpack.c.b16 %v6662, %v6646
    %v7239 = vpack.c.b16 %v6663, %v6647
    %v7240 = vpack.c.b16 %v6664, %v6648
    %v7241 = vpack.c.b16 %v6665, %v6649
    %v7242 = vpack.c.b16 %v6666, %v6650
    %v7243 = vpack.c.b16 %v6667, %v6651
    %v7244 = vpack.c.b16 %v6668, %v6652
    %v7245 = vpack.c.b16 %v6669, %v6653
    %v7246 = vpack.c.b16 %v6670, %v6654
    %v7247 = vpack.c.b16 %v6671, %v6655
    %v7248 = vpack.c.b16 %v6672, %v6656
    %v7249 = vpack.c.b16 %v6673, %v6657
    %v7250 = vpack.c.b16 %v6674, %v6658
    %v7251 = vpack.c.b16 %v6675, %v6659
    %v7252 = vpack.c.b16 %v6676, %v6660
    %v7253 = vpack.c.b16 %v6677, %v6661
    %v7254 = vpack.c.b16 %v6694, %v6678
    %v7255 = vpack.c.b16 %v6695, %v6679
    %v7256 = vpack.c.b16 %v6696, %v6680
    %v7257 = vpack.c.b16 %v6697, %v6681
    %v7258 = vpack.c.b16 %v6698, %v6682
    %v7259 = vpack.c.b16 %v6699, %v6683
    %v7260 = vpack.c.b16 %v6700, %v6684
    %v7261 = vpack.c.b16 %v6701, %v6685
    %v7262 = vpack.c.b16 %v6702, %v6686
    %v7263 = vpack.c.b16 %v6703, %v6687
    %v7264 = vpack.c.b16 %v6704, %v6688
    %v7265 = vpack.c.b16 %v6705, %v6689
    %v7266 = vpack.c.b16 %v6706, %v6690
    %v7267 = vpack.c.b16 %v6707, %v6691
    %v7268 = vpack.c.b16 %v6708, %v6692
    %v7269 = vpack.c.b16 %v6709, %v6693
    %v7270 = vpack.c.b16 %v6726, %v6710
    %v7271 = vpack.c.b16 %v6727, %v6711
    %v7272 = vpack.c.b16 %v6728, %v6712
    %v7273 = vpack.c.b16 %v6729, %v6713
    %v7274 = vpack.c.b16 %v6730, %v6714
    %v7275 = vpack.c.b16 %v6731, %v6715
    %v7276 = vpack.c.b16 %v6732, %v6716
    %v7277 = vpack.c.b16 %v6733, %v6717
    %v7278 = vpack.c.b16 %v6734, %v6718
    %v7279 = vpack.c.b16 %v6735, %v6719
    %v7280 = vpack.c.b16 %v6736, %v6720
    %v7281 = vpack.c.b16 %v6737, %v6721
    %v7282 = vpack.c.b16 %v6738, %v6722
    %v7283 = vpack.c.b16 %v6739, %v6723
    %v7284 = vpack.c.b16 %v6740, %v6724
    %v7285 = vpack.c.b16 %v6741, %v6725
    %v7286 = vpack.c.b16 %v6758, %v6742
    %v7287 = vpack.c.b16 %v6759, %v6743
    %v7288 = vpack.c.b16 %v6760, %v6744
    %v7289 = vpack.c.b16 %v6761, %v6745
    %v7290 = vpack.c.b16 %v6762, %v6746
    %v7291 = vpack.c.b16 %v6763, %v6747
    %v7292 = vpack.c.b16 %v6764, %v6748
    %v7293 = vpack.c.b16 %v6765, %v6749
    %v7294 = vpack.c.b16 %v6766, %v6750
    %v7295 = vpack.c.b16 %v6767, %v6751
    %v7296 = vpack.c.b16 %v6768, %v6752
    %v7297 = vpack.c.b16 %v6769, %v6753
    %v7298 = vpack.c.b16 %v6770, %v6754
    %v7299 = vpack.c.b16 %v6771, %v6755
    %v7300 = vpack.c.b16 %v6772, %v6756
    %v7301 = vpack.c.b16 %v6773, %v6757
    %v7302 = vpack.c.b16 %v6790, %v6774
    %v7303 = vpack.c.b16 %v6791, %v6775
    %v7304 = vpack.c.b16 %v6792, %v6776
    %v7305 = vpack.c.b16 %v6793, %v6777
    %v7306 = vpack.c.b16 %v6794, %v6778
    %v7307 = vpack.c.b16 %v6795, %v6779
    %v7308 = vpack.c.b16 %v6796, %v6780
    %v7309 = vpack.c.b16 %v6797, %v6781
    %v7310 = vpack.c.b16 %v6798, %v6782
    %v7311 = vpack.c.b16 %v6799, %v6783
    %v7312 = vpack.c.b16 %v6800, %v6784
    %v7313 = vpack.c.b16 %v6801, %v6785
    %v7314 = vpack.c.b16 %v6802, %v6786
    %v7315 = vpack.c.b16 %v6803, %v6787
    %v7316 = vpack.c.b16 %v6804, %v6788
    %v7317 = vpack.c.b16 %v6805, %v6789
    %7830 = vmatpush.bf16.msra.mxu0 %v6918
    %7831 = vmatpush.bf16.msra.mxu0 %v6902
    %7832 = vmatpush.bf16.msra.mxu0 %v6886
    %7833 = vmatpush.bf16.msra.mxu0 %v6870
    %7834 = vmatpush.bf16.msra.mxu0 %v6854
    %7835 = vmatpush.bf16.msra.mxu0 %v6838
    %7836 = vmatpush.bf16.msra.mxu0 %v6822
    %7837 = vmatpush.bf16.msra.mxu0 %v6806
    %7838 = vmatmul.bf16.gmra.mxu0 %v4349
    %v7839 = vpop.f32.mrf.mxu0
    %v7840 = vadd.f32 %v5072, %v7839
    %v7841 = vpop.f32.mrf.mxu0
    %7842 = vdwg.mxu0
    %7843 = vmatpush.bf16.msra.mxu0 %v7046
    %7844 = vmatpush.bf16.msra.mxu0 %v7030
    %7845 = vmatpush.bf16.msra.mxu0 %v7014
    %7846 = vmatpush.bf16.msra.mxu0 %v6998
    %7847 = vmatpush.bf16.msra.mxu0 %v6982
    %7848 = vmatpush.bf16.msra.mxu0 %v6966
    %7849 = vmatpush.bf16.msra.mxu0 %v6950
    %7850 = vmatpush.bf16.msra.mxu0 %v6934
    %7851 = vmatmul.bf16.gmra.mxu0 %v4350
    %v7852 = vpop.f32.mrf.mxu0
    %v7853 = vadd.f32 %v7840, %v7852
    %v7854 = vpop.f32.mrf.mxu0
    %7855 = vdwg.mxu0
    %7856 = vmatpush.bf16.msra.mxu0 %v7174
    %7857 = vmatpush.bf16.msra.mxu0 %v7158
    %7858 = vmatpush.bf16.msra.mxu0 %v7142
    %7859 = vmatpush.bf16.msra.mxu0 %v7126
    %7860 = vmatpush.bf16.msra.mxu0 %v7110
    %7861 = vmatpush.bf16.msra.mxu0 %v7094
    %7862 = vmatpush.bf16.msra.mxu0 %v7078
    %7863 = vmatpush.bf16.msra.mxu0 %v7062
    %7864 = vmatmul.bf16.gmra.mxu0 %v4351
    %v7865 = vpop.f32.mrf.mxu0
    %v7866 = vadd.f32 %v7853, %v7865
    %v7867 = vpop.f32.mrf.mxu0
    %7868 = vdwg.mxu0
    %7869 = vmatpush.bf16.msra.mxu0 %v7302
    %7870 = vmatpush.bf16.msra.mxu0 %v7286
    %7871 = vmatpush.bf16.msra.mxu0 %v7270
    %7872 = vmatpush.bf16.msra.mxu0 %v7254
    %7873 = vmatpush.bf16.msra.mxu0 %v7238
    %7874 = vmatpush.bf16.msra.mxu0 %v7222
    %7875 = vmatpush.bf16.msra.mxu0 %v7206
    %7876 = vmatpush.bf16.msra.mxu0 %v7190
    %7877 = vmatmul.bf16.gmra.mxu0 %v4352
    %v7878 = vpop.f32.mrf.mxu0
    %v7879 = vadd.f32 %v7866, %v7878
    %v7880 = vpop.f32.mrf.mxu0
    %7881 = vdwg.mxu0
    %7882 = vmatpush.bf16.msra.mxu0 %v6919
    %7883 = vmatpush.bf16.msra.mxu0 %v6903
    %7884 = vmatpush.bf16.msra.mxu0 %v6887
    %7885 = vmatpush.bf16.msra.mxu0 %v6871
    %7886 = vmatpush.bf16.msra.mxu0 %v6855
    %7887 = vmatpush.bf16.msra.mxu0 %v6839
    %7888 = vmatpush.bf16.msra.mxu0 %v6823
    %7889 = vmatpush.bf16.msra.mxu0 %v6807
    %7890 = vmatmul.bf16.gmra.mxu0 %v4349
    %v7891 = vpop.f32.mrf.mxu0
    %v7892 = vadd.f32 %v5085, %v7891
    %v7893 = vpop.f32.mrf.mxu0
    %7894 = vdwg.mxu0
    %7895 = vmatpush.bf16.msra.mxu0 %v7047
    %7896 = vmatpush.bf16.msra.mxu0 %v7031
    %7897 = vmatpush.bf16.msra.mxu0 %v7015
    %7898 = vmatpush.bf16.msra.mxu0 %v6999
    %7899 = vmatpush.bf16.msra.mxu0 %v6983
    %7900 = vmatpush.bf16.msra.mxu0 %v6967
    %7901 = vmatpush.bf16.msra.mxu0 %v6951
    %7902 = vmatpush.bf16.msra.mxu0 %v6935
    %7903 = vmatmul.bf16.gmra.mxu0 %v4350
    %v7904 = vpop.f32.mrf.mxu0
    %v7905 = vadd.f32 %v7892, %v7904
    %v7906 = vpop.f32.mrf.mxu0
    %7907 = vdwg.mxu0
    %7908 = vmatpush.bf16.msra.mxu0 %v7175
    %7909 = vmatpush.bf16.msra.mxu0 %v7159
    %7910 = vmatpush.bf16.msra.mxu0 %v7143
    %7911 = vmatpush.bf16.msra.mxu0 %v7127
    %7912 = vmatpush.bf16.msra.mxu0 %v7111
    %7913 = vmatpush.bf16.msra.mxu0 %v7095
    %7914 = vmatpush.bf16.msra.mxu0 %v7079
    %7915 = vmatpush.bf16.msra.mxu0 %v7063
    %7916 = vmatmul.bf16.gmra.mxu0 %v4351
    %v7917 = vpop.f32.mrf.mxu0
    %v7918 = vadd.f32 %v7905, %v7917
    %v7919 = vpop.f32.mrf.mxu0
    %7920 = vdwg.mxu0
    %7921 = vmatpush.bf16.msra.mxu0 %v7303
    %7922 = vmatpush.bf16.msra.mxu0 %v7287
    %7923 = vmatpush.bf16.msra.mxu0 %v7271
    %7924 = vmatpush.bf16.msra.mxu0 %v7255
    %7925 = vmatpush.bf16.msra.mxu0 %v7239
    %7926 = vmatpush.bf16.msra.mxu0 %v7223
    %7927 = vmatpush.bf16.msra.mxu0 %v7207
    %7928 = vmatpush.bf16.msra.mxu0 %v7191
    %7929 = vmatmul.bf16.gmra.mxu0 %v4352
    %v7930 = vpop.f32.mrf.mxu0
    %v7931 = vadd.f32 %v7918, %v7930
    %v7932 = vpop.f32.mrf.mxu0
    %7933 = vdwg.mxu0
    %7934 = vmatpush.bf16.msra.mxu0 %v6920
    %7935 = vmatpush.bf16.msra.mxu0 %v6904
    %7936 = vmatpush.bf16.msra.mxu0 %v6888
    %7937 = vmatpush.bf16.msra.mxu0 %v6872
    %7938 = vmatpush.bf16.msra.mxu0 %v6856
    %7939 = vmatpush.bf16.msra.mxu0 %v6840
    %7940 = vmatpush.bf16.msra.mxu0 %v6824
    %7941 = vmatpush.bf16.msra.mxu0 %v6808
    %7942 = vmatmul.bf16.gmra.mxu0 %v4349
    %v7943 = vpop.f32.mrf.mxu0
    %v7944 = vadd.f32 %v5098, %v7943
    %v7945 = vpop.f32.mrf.mxu0
    %7946 = vdwg.mxu0
    %7947 = vmatpush.bf16.msra.mxu0 %v7048
    %7948 = vmatpush.bf16.msra.mxu0 %v7032
    %7949 = vmatpush.bf16.msra.mxu0 %v7016
    %7950 = vmatpush.bf16.msra.mxu0 %v7000
    %7951 = vmatpush.bf16.msra.mxu0 %v6984
    %7952 = vmatpush.bf16.msra.mxu0 %v6968
    %7953 = vmatpush.bf16.msra.mxu0 %v6952
    %7954 = vmatpush.bf16.msra.mxu0 %v6936
    %7955 = vmatmul.bf16.gmra.mxu0 %v4350
    %v7956 = vpop.f32.mrf.mxu0
    %v7957 = vadd.f32 %v7944, %v7956
    %v7958 = vpop.f32.mrf.mxu0
    %7959 = vdwg.mxu0
    %7960 = vmatpush.bf16.msra.mxu0 %v7176
    %7961 = vmatpush.bf16.msra.mxu0 %v7160
    %7962 = vmatpush.bf16.msra.mxu0 %v7144
    %7963 = vmatpush.bf16.msra.mxu0 %v7128
    %7964 = vmatpush.bf16.msra.mxu0 %v7112
    %7965 = vmatpush.bf16.msra.mxu0 %v7096
    %7966 = vmatpush.bf16.msra.mxu0 %v7080
    %7967 = vmatpush.bf16.msra.mxu0 %v7064
    %7968 = vmatmul.bf16.gmra.mxu0 %v4351
    %v7969 = vpop.f32.mrf.mxu0
    %v7970 = vadd.f32 %v7957, %v7969
    %v7971 = vpop.f32.mrf.mxu0
    %7972 = vdwg.mxu0
    %7973 = vmatpush.bf16.msra.mxu0 %v7304
    %7974 = vmatpush.bf16.msra.mxu0 %v7288
    %7975 = vmatpush.bf16.msra.mxu0 %v7272
    %7976 = vmatpush.bf16.msra.mxu0 %v7256
    %7977 = vmatpush.bf16.msra.mxu0 %v7240
    %7978 = vmatpush.bf16.msra.mxu0 %v7224
    %7979 = vmatpush.bf16.msra.mxu0 %v7208
    %7980 = vmatpush.bf16.msra.mxu0 %v7192
    %7981 = vmatmul.bf16.gmra.mxu0 %v4352
    %v7982 = vpop.f32.mrf.mxu0
    %v7983 = vadd.f32 %v7970, %v7982
    %v7984 = vpop.f32.mrf.mxu0
    %7985 = vdwg.mxu0
    %7986 = vmatpush.bf16.msra.mxu0 %v6921
    %7987 = vmatpush.bf16.msra.mxu0 %v6905
    %7988 = vmatpush.bf16.msra.mxu0 %v6889
    %7989 = vmatpush.bf16.msra.mxu0 %v6873
    %7990 = vmatpush.bf16.msra.mxu0 %v6857
    %7991 = vmatpush.bf16.msra.mxu0 %v6841
    %7992 = vmatpush.bf16.msra.mxu0 %v6825
    %7993 = vmatpush.bf16.msra.mxu0 %v6809
    %7994 = vmatmul.bf16.gmra.mxu0 %v4349
    %v7995 = vpop.f32.mrf.mxu0
    %v7996 = vadd.f32 %v5111, %v7995
    %v7997 = vpop.f32.mrf.mxu0
    %7998 = vdwg.mxu0
    %7999 = vmatpush.bf16.msra.mxu0 %v7049
    %8000 = vmatpush.bf16.msra.mxu0 %v7033
    %8001 = vmatpush.bf16.msra.mxu0 %v7017
    %8002 = vmatpush.bf16.msra.mxu0 %v7001
    %8003 = vmatpush.bf16.msra.mxu0 %v6985
    %8004 = vmatpush.bf16.msra.mxu0 %v6969
    %8005 = vmatpush.bf16.msra.mxu0 %v6953
    %8006 = vmatpush.bf16.msra.mxu0 %v6937
    %8007 = vmatmul.bf16.gmra.mxu0 %v4350
    %v8008 = vpop.f32.mrf.mxu0
    %v8009 = vadd.f32 %v7996, %v8008
    %v8010 = vpop.f32.mrf.mxu0
    %8011 = vdwg.mxu0
    %8012 = vmatpush.bf16.msra.mxu0 %v7177
    %8013 = vmatpush.bf16.msra.mxu0 %v7161
    %8014 = vmatpush.bf16.msra.mxu0 %v7145
    %8015 = vmatpush.bf16.msra.mxu0 %v7129
    %8016 = vmatpush.bf16.msra.mxu0 %v7113
    %8017 = vmatpush.bf16.msra.mxu0 %v7097
    %8018 = vmatpush.bf16.msra.mxu0 %v7081
    %8019 = vmatpush.bf16.msra.mxu0 %v7065
    %8020 = vmatmul.bf16.gmra.mxu0 %v4351
    %v8021 = vpop.f32.mrf.mxu0
    %v8022 = vadd.f32 %v8009, %v8021
    %v8023 = vpop.f32.mrf.mxu0
    %8024 = vdwg.mxu0
    %8025 = vmatpush.bf16.msra.mxu0 %v7305
    %8026 = vmatpush.bf16.msra.mxu0 %v7289
    %8027 = vmatpush.bf16.msra.mxu0 %v7273
    %8028 = vmatpush.bf16.msra.mxu0 %v7257
    %8029 = vmatpush.bf16.msra.mxu0 %v7241
    %8030 = vmatpush.bf16.msra.mxu0 %v7225
    %8031 = vmatpush.bf16.msra.mxu0 %v7209
    %8032 = vmatpush.bf16.msra.mxu0 %v7193
    %8033 = vmatmul.bf16.gmra.mxu0 %v4352
    %v8034 = vpop.f32.mrf.mxu0
    %v8035 = vadd.f32 %v8022, %v8034
    %v8036 = vpop.f32.mrf.mxu0
    %8037 = vdwg.mxu0
    %8038 = vmatpush.bf16.msra.mxu0 %v6922
    %8039 = vmatpush.bf16.msra.mxu0 %v6906
    %8040 = vmatpush.bf16.msra.mxu0 %v6890
    %8041 = vmatpush.bf16.msra.mxu0 %v6874
    %8042 = vmatpush.bf16.msra.mxu0 %v6858
    %8043 = vmatpush.bf16.msra.mxu0 %v6842
    %8044 = vmatpush.bf16.msra.mxu0 %v6826
    %8045 = vmatpush.bf16.msra.mxu0 %v6810
    %8046 = vmatmul.bf16.gmra.mxu0 %v4349
    %v8047 = vpop.f32.mrf.mxu0
    %v8048 = vadd.f32 %v5124, %v8047
    %v8049 = vpop.f32.mrf.mxu0
    %8050 = vdwg.mxu0
    %8051 = vmatpush.bf16.msra.mxu0 %v7050
    %8052 = vmatpush.bf16.msra.mxu0 %v7034
    %8053 = vmatpush.bf16.msra.mxu0 %v7018
    %8054 = vmatpush.bf16.msra.mxu0 %v7002
    %8055 = vmatpush.bf16.msra.mxu0 %v6986
    %8056 = vmatpush.bf16.msra.mxu0 %v6970
    %8057 = vmatpush.bf16.msra.mxu0 %v6954
    %8058 = vmatpush.bf16.msra.mxu0 %v6938
    %8059 = vmatmul.bf16.gmra.mxu0 %v4350
    %v8060 = vpop.f32.mrf.mxu0
    %v8061 = vadd.f32 %v8048, %v8060
    %v8062 = vpop.f32.mrf.mxu0
    %8063 = vdwg.mxu0
    %8064 = vmatpush.bf16.msra.mxu0 %v7178
    %8065 = vmatpush.bf16.msra.mxu0 %v7162
    %8066 = vmatpush.bf16.msra.mxu0 %v7146
    %8067 = vmatpush.bf16.msra.mxu0 %v7130
    %8068 = vmatpush.bf16.msra.mxu0 %v7114
    %8069 = vmatpush.bf16.msra.mxu0 %v7098
    %8070 = vmatpush.bf16.msra.mxu0 %v7082
    %8071 = vmatpush.bf16.msra.mxu0 %v7066
    %8072 = vmatmul.bf16.gmra.mxu0 %v4351
    %v8073 = vpop.f32.mrf.mxu0
    %v8074 = vadd.f32 %v8061, %v8073
    %v8075 = vpop.f32.mrf.mxu0
    %8076 = vdwg.mxu0
    %8077 = vmatpush.bf16.msra.mxu0 %v7306
    %8078 = vmatpush.bf16.msra.mxu0 %v7290
    %8079 = vmatpush.bf16.msra.mxu0 %v7274
    %8080 = vmatpush.bf16.msra.mxu0 %v7258
    %8081 = vmatpush.bf16.msra.mxu0 %v7242
    %8082 = vmatpush.bf16.msra.mxu0 %v7226
    %8083 = vmatpush.bf16.msra.mxu0 %v7210
    %8084 = vmatpush.bf16.msra.mxu0 %v7194
    %8085 = vmatmul.bf16.gmra.mxu0 %v4352
    %v8086 = vpop.f32.mrf.mxu0
    %v8087 = vadd.f32 %v8074, %v8086
    %v8088 = vpop.f32.mrf.mxu0
    %8089 = vdwg.mxu0
    %8090 = vmatpush.bf16.msra.mxu0 %v6923
    %8091 = vmatpush.bf16.msra.mxu0 %v6907
    %8092 = vmatpush.bf16.msra.mxu0 %v6891
    %8093 = vmatpush.bf16.msra.mxu0 %v6875
    %8094 = vmatpush.bf16.msra.mxu0 %v6859
    %8095 = vmatpush.bf16.msra.mxu0 %v6843
    %8096 = vmatpush.bf16.msra.mxu0 %v6827
    %8097 = vmatpush.bf16.msra.mxu0 %v6811
    %8098 = vmatmul.bf16.gmra.mxu0 %v4349
    %v8099 = vpop.f32.mrf.mxu0
    %v8100 = vadd.f32 %v5137, %v8099
    %v8101 = vpop.f32.mrf.mxu0
    %8102 = vdwg.mxu0
    %8103 = vmatpush.bf16.msra.mxu0 %v7051
    %8104 = vmatpush.bf16.msra.mxu0 %v7035
    %8105 = vmatpush.bf16.msra.mxu0 %v7019
    %8106 = vmatpush.bf16.msra.mxu0 %v7003
    %8107 = vmatpush.bf16.msra.mxu0 %v6987
    %8108 = vmatpush.bf16.msra.mxu0 %v6971
    %8109 = vmatpush.bf16.msra.mxu0 %v6955
    %8110 = vmatpush.bf16.msra.mxu0 %v6939
    %8111 = vmatmul.bf16.gmra.mxu0 %v4350
    %v8112 = vpop.f32.mrf.mxu0
    %v8113 = vadd.f32 %v8100, %v8112
    %v8114 = vpop.f32.mrf.mxu0
    %8115 = vdwg.mxu0
    %8116 = vmatpush.bf16.msra.mxu0 %v7179
    %8117 = vmatpush.bf16.msra.mxu0 %v7163
    %8118 = vmatpush.bf16.msra.mxu0 %v7147
    %8119 = vmatpush.bf16.msra.mxu0 %v7131
    %8120 = vmatpush.bf16.msra.mxu0 %v7115
    %8121 = vmatpush.bf16.msra.mxu0 %v7099
    %8122 = vmatpush.bf16.msra.mxu0 %v7083
    %8123 = vmatpush.bf16.msra.mxu0 %v7067
    %8124 = vmatmul.bf16.gmra.mxu0 %v4351
    %v8125 = vpop.f32.mrf.mxu0
    %v8126 = vadd.f32 %v8113, %v8125
    %v8127 = vpop.f32.mrf.mxu0
    %8128 = vdwg.mxu0
    %8129 = vmatpush.bf16.msra.mxu0 %v7307
    %8130 = vmatpush.bf16.msra.mxu0 %v7291
    %8131 = vmatpush.bf16.msra.mxu0 %v7275
    %8132 = vmatpush.bf16.msra.mxu0 %v7259
    %8133 = vmatpush.bf16.msra.mxu0 %v7243
    %8134 = vmatpush.bf16.msra.mxu0 %v7227
    %8135 = vmatpush.bf16.msra.mxu0 %v7211
    %8136 = vmatpush.bf16.msra.mxu0 %v7195
    %8137 = vmatmul.bf16.gmra.mxu0 %v4352
    %v8138 = vpop.f32.mrf.mxu0
    %v8139 = vadd.f32 %v8126, %v8138
    %v8140 = vpop.f32.mrf.mxu0
    %8141 = vdwg.mxu0
    %8142 = vmatpush.bf16.msra.mxu0 %v6924
    %8143 = vmatpush.bf16.msra.mxu0 %v6908
    %8144 = vmatpush.bf16.msra.mxu0 %v6892
    %8145 = vmatpush.bf16.msra.mxu0 %v6876
    %8146 = vmatpush.bf16.msra.mxu0 %v6860
    %8147 = vmatpush.bf16.msra.mxu0 %v6844
    %8148 = vmatpush.bf16.msra.mxu0 %v6828
    %8149 = vmatpush.bf16.msra.mxu0 %v6812
    %8150 = vmatmul.bf16.gmra.mxu0 %v4349
    %v8151 = vpop.f32.mrf.mxu0
    %v8152 = vadd.f32 %v5150, %v8151
    %v8153 = vpop.f32.mrf.mxu0
    %8154 = vdwg.mxu0
    %8155 = vmatpush.bf16.msra.mxu0 %v7052
    %8156 = vmatpush.bf16.msra.mxu0 %v7036
    %8157 = vmatpush.bf16.msra.mxu0 %v7020
    %8158 = vmatpush.bf16.msra.mxu0 %v7004
    %8159 = vmatpush.bf16.msra.mxu0 %v6988
    %8160 = vmatpush.bf16.msra.mxu0 %v6972
    %8161 = vmatpush.bf16.msra.mxu0 %v6956
    %8162 = vmatpush.bf16.msra.mxu0 %v6940
    %8163 = vmatmul.bf16.gmra.mxu0 %v4350
    %v8164 = vpop.f32.mrf.mxu0
    %v8165 = vadd.f32 %v8152, %v8164
    %v8166 = vpop.f32.mrf.mxu0
    %8167 = vdwg.mxu0
    %8168 = vmatpush.bf16.msra.mxu0 %v7180
    %8169 = vmatpush.bf16.msra.mxu0 %v7164
    %8170 = vmatpush.bf16.msra.mxu0 %v7148
    %8171 = vmatpush.bf16.msra.mxu0 %v7132
    %8172 = vmatpush.bf16.msra.mxu0 %v7116
    %8173 = vmatpush.bf16.msra.mxu0 %v7100
    %8174 = vmatpush.bf16.msra.mxu0 %v7084
    %8175 = vmatpush.bf16.msra.mxu0 %v7068
    %8176 = vmatmul.bf16.gmra.mxu0 %v4351
    %v8177 = vpop.f32.mrf.mxu0
    %v8178 = vadd.f32 %v8165, %v8177
    %v8179 = vpop.f32.mrf.mxu0
    %8180 = vdwg.mxu0
    %8181 = vmatpush.bf16.msra.mxu0 %v7308
    %8182 = vmatpush.bf16.msra.mxu0 %v7292
    %8183 = vmatpush.bf16.msra.mxu0 %v7276
    %8184 = vmatpush.bf16.msra.mxu0 %v7260
    %8185 = vmatpush.bf16.msra.mxu0 %v7244
    %8186 = vmatpush.bf16.msra.mxu0 %v7228
    %8187 = vmatpush.bf16.msra.mxu0 %v7212
    %8188 = vmatpush.bf16.msra.mxu0 %v7196
    %8189 = vmatmul.bf16.gmra.mxu0 %v4352
    %v8190 = vpop.f32.mrf.mxu0
    %v8191 = vadd.f32 %v8178, %v8190
    %v8192 = vpop.f32.mrf.mxu0
    %8193 = vdwg.mxu0
    %8194 = vmatpush.bf16.msra.mxu0 %v6925
    %8195 = vmatpush.bf16.msra.mxu0 %v6909
    %8196 = vmatpush.bf16.msra.mxu0 %v6893
    %8197 = vmatpush.bf16.msra.mxu0 %v6877
    %8198 = vmatpush.bf16.msra.mxu0 %v6861
    %8199 = vmatpush.bf16.msra.mxu0 %v6845
    %8200 = vmatpush.bf16.msra.mxu0 %v6829
    %8201 = vmatpush.bf16.msra.mxu0 %v6813
    %8202 = vmatmul.bf16.gmra.mxu0 %v4349
    %v8203 = vpop.f32.mrf.mxu0
    %v8204 = vadd.f32 %v5163, %v8203
    %v8205 = vpop.f32.mrf.mxu0
    %8206 = vdwg.mxu0
    %8207 = vmatpush.bf16.msra.mxu0 %v7053
    %8208 = vmatpush.bf16.msra.mxu0 %v7037
    %8209 = vmatpush.bf16.msra.mxu0 %v7021
    %8210 = vmatpush.bf16.msra.mxu0 %v7005
    %8211 = vmatpush.bf16.msra.mxu0 %v6989
    %8212 = vmatpush.bf16.msra.mxu0 %v6973
    %8213 = vmatpush.bf16.msra.mxu0 %v6957
    %8214 = vmatpush.bf16.msra.mxu0 %v6941
    %8215 = vmatmul.bf16.gmra.mxu0 %v4350
    %v8216 = vpop.f32.mrf.mxu0
    %v8217 = vadd.f32 %v8204, %v8216
    %v8218 = vpop.f32.mrf.mxu0
    %8219 = vdwg.mxu0
    %8220 = vmatpush.bf16.msra.mxu0 %v7181
    %8221 = vmatpush.bf16.msra.mxu0 %v7165
    %8222 = vmatpush.bf16.msra.mxu0 %v7149
    %8223 = vmatpush.bf16.msra.mxu0 %v7133
    %8224 = vmatpush.bf16.msra.mxu0 %v7117
    %8225 = vmatpush.bf16.msra.mxu0 %v7101
    %8226 = vmatpush.bf16.msra.mxu0 %v7085
    %8227 = vmatpush.bf16.msra.mxu0 %v7069
    %8228 = vmatmul.bf16.gmra.mxu0 %v4351
    %v8229 = vpop.f32.mrf.mxu0
    %v8230 = vadd.f32 %v8217, %v8229
    %v8231 = vpop.f32.mrf.mxu0
    %8232 = vdwg.mxu0
    %8233 = vmatpush.bf16.msra.mxu0 %v7309
    %8234 = vmatpush.bf16.msra.mxu0 %v7293
    %8235 = vmatpush.bf16.msra.mxu0 %v7277
    %8236 = vmatpush.bf16.msra.mxu0 %v7261
    %8237 = vmatpush.bf16.msra.mxu0 %v7245
    %8238 = vmatpush.bf16.msra.mxu0 %v7229
    %8239 = vmatpush.bf16.msra.mxu0 %v7213
    %8240 = vmatpush.bf16.msra.mxu0 %v7197
    %8241 = vmatmul.bf16.gmra.mxu0 %v4352
    %v8242 = vpop.f32.mrf.mxu0
    %v8243 = vadd.f32 %v8230, %v8242
    %v8244 = vpop.f32.mrf.mxu0
    %8245 = vdwg.mxu0
    %8246 = vmatpush.bf16.msra.mxu0 %v6926
    %8247 = vmatpush.bf16.msra.mxu0 %v6910
    %8248 = vmatpush.bf16.msra.mxu0 %v6894
    %8249 = vmatpush.bf16.msra.mxu0 %v6878
    %8250 = vmatpush.bf16.msra.mxu0 %v6862
    %8251 = vmatpush.bf16.msra.mxu0 %v6846
    %8252 = vmatpush.bf16.msra.mxu0 %v6830
    %8253 = vmatpush.bf16.msra.mxu0 %v6814
    %8254 = vmatmul.bf16.gmra.mxu0 %v4349
    %v8255 = vpop.f32.mrf.mxu0
    %v8256 = vadd.f32 %v5176, %v8255
    %v8257 = vpop.f32.mrf.mxu0
    %8258 = vdwg.mxu0
    %8259 = vmatpush.bf16.msra.mxu0 %v7054
    %8260 = vmatpush.bf16.msra.mxu0 %v7038
    %8261 = vmatpush.bf16.msra.mxu0 %v7022
    %8262 = vmatpush.bf16.msra.mxu0 %v7006
    %8263 = vmatpush.bf16.msra.mxu0 %v6990
    %8264 = vmatpush.bf16.msra.mxu0 %v6974
    %8265 = vmatpush.bf16.msra.mxu0 %v6958
    %8266 = vmatpush.bf16.msra.mxu0 %v6942
    %8267 = vmatmul.bf16.gmra.mxu0 %v4350
    %v8268 = vpop.f32.mrf.mxu0
    %v8269 = vadd.f32 %v8256, %v8268
    %v8270 = vpop.f32.mrf.mxu0
    %8271 = vdwg.mxu0
    %8272 = vmatpush.bf16.msra.mxu0 %v7182
    %8273 = vmatpush.bf16.msra.mxu0 %v7166
    %8274 = vmatpush.bf16.msra.mxu0 %v7150
    %8275 = vmatpush.bf16.msra.mxu0 %v7134
    %8276 = vmatpush.bf16.msra.mxu0 %v7118
    %8277 = vmatpush.bf16.msra.mxu0 %v7102
    %8278 = vmatpush.bf16.msra.mxu0 %v7086
    %8279 = vmatpush.bf16.msra.mxu0 %v7070
    %8280 = vmatmul.bf16.gmra.mxu0 %v4351
    %v8281 = vpop.f32.mrf.mxu0
    %v8282 = vadd.f32 %v8269, %v8281
    %v8283 = vpop.f32.mrf.mxu0
    %8284 = vdwg.mxu0
    %8285 = vmatpush.bf16.msra.mxu0 %v7310
    %8286 = vmatpush.bf16.msra.mxu0 %v7294
    %8287 = vmatpush.bf16.msra.mxu0 %v7278
    %8288 = vmatpush.bf16.msra.mxu0 %v7262
    %8289 = vmatpush.bf16.msra.mxu0 %v7246
    %8290 = vmatpush.bf16.msra.mxu0 %v7230
    %8291 = vmatpush.bf16.msra.mxu0 %v7214
    %8292 = vmatpush.bf16.msra.mxu0 %v7198
    %8293 = vmatmul.bf16.gmra.mxu0 %v4352
    %v8294 = vpop.f32.mrf.mxu0
    %v8295 = vadd.f32 %v8282, %v8294
    %v8296 = vpop.f32.mrf.mxu0
    %8297 = vdwg.mxu0
    %8298 = vmatpush.bf16.msra.mxu0 %v6927
    %8299 = vmatpush.bf16.msra.mxu0 %v6911
    %8300 = vmatpush.bf16.msra.mxu0 %v6895
    %8301 = vmatpush.bf16.msra.mxu0 %v6879
    %8302 = vmatpush.bf16.msra.mxu0 %v6863
    %8303 = vmatpush.bf16.msra.mxu0 %v6847
    %8304 = vmatpush.bf16.msra.mxu0 %v6831
    %8305 = vmatpush.bf16.msra.mxu0 %v6815
    %8306 = vmatmul.bf16.gmra.mxu0 %v4349
    %v8307 = vpop.f32.mrf.mxu0
    %v8308 = vadd.f32 %v5189, %v8307
    %v8309 = vpop.f32.mrf.mxu0
    %8310 = vdwg.mxu0
    %8311 = vmatpush.bf16.msra.mxu0 %v7055
    %8312 = vmatpush.bf16.msra.mxu0 %v7039
    %8313 = vmatpush.bf16.msra.mxu0 %v7023
    %8314 = vmatpush.bf16.msra.mxu0 %v7007
    %8315 = vmatpush.bf16.msra.mxu0 %v6991
    %8316 = vmatpush.bf16.msra.mxu0 %v6975
    %8317 = vmatpush.bf16.msra.mxu0 %v6959
    %8318 = vmatpush.bf16.msra.mxu0 %v6943
    %8319 = vmatmul.bf16.gmra.mxu0 %v4350
    %v8320 = vpop.f32.mrf.mxu0
    %v8321 = vadd.f32 %v8308, %v8320
    %v8322 = vpop.f32.mrf.mxu0
    %8323 = vdwg.mxu0
    %8324 = vmatpush.bf16.msra.mxu0 %v7183
    %8325 = vmatpush.bf16.msra.mxu0 %v7167
    %8326 = vmatpush.bf16.msra.mxu0 %v7151
    %8327 = vmatpush.bf16.msra.mxu0 %v7135
    %8328 = vmatpush.bf16.msra.mxu0 %v7119
    %8329 = vmatpush.bf16.msra.mxu0 %v7103
    %8330 = vmatpush.bf16.msra.mxu0 %v7087
    %8331 = vmatpush.bf16.msra.mxu0 %v7071
    %8332 = vmatmul.bf16.gmra.mxu0 %v4351
    %v8333 = vpop.f32.mrf.mxu0
    %v8334 = vadd.f32 %v8321, %v8333
    %v8335 = vpop.f32.mrf.mxu0
    %8336 = vdwg.mxu0
    %8337 = vmatpush.bf16.msra.mxu0 %v7311
    %8338 = vmatpush.bf16.msra.mxu0 %v7295
    %8339 = vmatpush.bf16.msra.mxu0 %v7279
    %8340 = vmatpush.bf16.msra.mxu0 %v7263
    %8341 = vmatpush.bf16.msra.mxu0 %v7247
    %8342 = vmatpush.bf16.msra.mxu0 %v7231
    %8343 = vmatpush.bf16.msra.mxu0 %v7215
    %8344 = vmatpush.bf16.msra.mxu0 %v7199
    %8345 = vmatmul.bf16.gmra.mxu0 %v4352
    %v8346 = vpop.f32.mrf.mxu0
    %v8347 = vadd.f32 %v8334, %v8346
    %v8348 = vpop.f32.mrf.mxu0
    %8349 = vdwg.mxu0
    %8350 = vmatpush.bf16.msra.mxu0 %v6928
    %8351 = vmatpush.bf16.msra.mxu0 %v6912
    %8352 = vmatpush.bf16.msra.mxu0 %v6896
    %8353 = vmatpush.bf16.msra.mxu0 %v6880
    %8354 = vmatpush.bf16.msra.mxu0 %v6864
    %8355 = vmatpush.bf16.msra.mxu0 %v6848
    %8356 = vmatpush.bf16.msra.mxu0 %v6832
    %8357 = vmatpush.bf16.msra.mxu0 %v6816
    %8358 = vmatmul.bf16.gmra.mxu0 %v4349
    %v8359 = vpop.f32.mrf.mxu0
    %v8360 = vadd.f32 %v5202, %v8359
    %v8361 = vpop.f32.mrf.mxu0
    %8362 = vdwg.mxu0
    %8363 = vmatpush.bf16.msra.mxu0 %v7056
    %8364 = vmatpush.bf16.msra.mxu0 %v7040
    %8365 = vmatpush.bf16.msra.mxu0 %v7024
    %8366 = vmatpush.bf16.msra.mxu0 %v7008
    %8367 = vmatpush.bf16.msra.mxu0 %v6992
    %8368 = vmatpush.bf16.msra.mxu0 %v6976
    %8369 = vmatpush.bf16.msra.mxu0 %v6960
    %8370 = vmatpush.bf16.msra.mxu0 %v6944
    %8371 = vmatmul.bf16.gmra.mxu0 %v4350
    %v8372 = vpop.f32.mrf.mxu0
    %v8373 = vadd.f32 %v8360, %v8372
    %v8374 = vpop.f32.mrf.mxu0
    %8375 = vdwg.mxu0
    %8376 = vmatpush.bf16.msra.mxu0 %v7184
    %8377 = vmatpush.bf16.msra.mxu0 %v7168
    %8378 = vmatpush.bf16.msra.mxu0 %v7152
    %8379 = vmatpush.bf16.msra.mxu0 %v7136
    %8380 = vmatpush.bf16.msra.mxu0 %v7120
    %8381 = vmatpush.bf16.msra.mxu0 %v7104
    %8382 = vmatpush.bf16.msra.mxu0 %v7088
    %8383 = vmatpush.bf16.msra.mxu0 %v7072
    %8384 = vmatmul.bf16.gmra.mxu0 %v4351
    %v8385 = vpop.f32.mrf.mxu0
    %v8386 = vadd.f32 %v8373, %v8385
    %v8387 = vpop.f32.mrf.mxu0
    %8388 = vdwg.mxu0
    %8389 = vmatpush.bf16.msra.mxu0 %v7312
    %8390 = vmatpush.bf16.msra.mxu0 %v7296
    %8391 = vmatpush.bf16.msra.mxu0 %v7280
    %8392 = vmatpush.bf16.msra.mxu0 %v7264
    %8393 = vmatpush.bf16.msra.mxu0 %v7248
    %8394 = vmatpush.bf16.msra.mxu0 %v7232
    %8395 = vmatpush.bf16.msra.mxu0 %v7216
    %8396 = vmatpush.bf16.msra.mxu0 %v7200
    %8397 = vmatmul.bf16.gmra.mxu0 %v4352
    %v8398 = vpop.f32.mrf.mxu0
    %v8399 = vadd.f32 %v8386, %v8398
    %v8400 = vpop.f32.mrf.mxu0
    %8401 = vdwg.mxu0
    %8402 = vmatpush.bf16.msra.mxu0 %v6929
    %8403 = vmatpush.bf16.msra.mxu0 %v6913
    %8404 = vmatpush.bf16.msra.mxu0 %v6897
    %8405 = vmatpush.bf16.msra.mxu0 %v6881
    %8406 = vmatpush.bf16.msra.mxu0 %v6865
    %8407 = vmatpush.bf16.msra.mxu0 %v6849
    %8408 = vmatpush.bf16.msra.mxu0 %v6833
    %8409 = vmatpush.bf16.msra.mxu0 %v6817
    %8410 = vmatmul.bf16.gmra.mxu0 %v4349
    %v8411 = vpop.f32.mrf.mxu0
    %v8412 = vadd.f32 %v5215, %v8411
    %v8413 = vpop.f32.mrf.mxu0
    %8414 = vdwg.mxu0
    %8415 = vmatpush.bf16.msra.mxu0 %v7057
    %8416 = vmatpush.bf16.msra.mxu0 %v7041
    %8417 = vmatpush.bf16.msra.mxu0 %v7025
    %8418 = vmatpush.bf16.msra.mxu0 %v7009
    %8419 = vmatpush.bf16.msra.mxu0 %v6993
    %8420 = vmatpush.bf16.msra.mxu0 %v6977
    %8421 = vmatpush.bf16.msra.mxu0 %v6961
    %8422 = vmatpush.bf16.msra.mxu0 %v6945
    %8423 = vmatmul.bf16.gmra.mxu0 %v4350
    %v8424 = vpop.f32.mrf.mxu0
    %v8425 = vadd.f32 %v8412, %v8424
    %v8426 = vpop.f32.mrf.mxu0
    %8427 = vdwg.mxu0
    %8428 = vmatpush.bf16.msra.mxu0 %v7185
    %8429 = vmatpush.bf16.msra.mxu0 %v7169
    %8430 = vmatpush.bf16.msra.mxu0 %v7153
    %8431 = vmatpush.bf16.msra.mxu0 %v7137
    %8432 = vmatpush.bf16.msra.mxu0 %v7121
    %8433 = vmatpush.bf16.msra.mxu0 %v7105
    %8434 = vmatpush.bf16.msra.mxu0 %v7089
    %8435 = vmatpush.bf16.msra.mxu0 %v7073
    %8436 = vmatmul.bf16.gmra.mxu0 %v4351
    %v8437 = vpop.f32.mrf.mxu0
    %v8438 = vadd.f32 %v8425, %v8437
    %v8439 = vpop.f32.mrf.mxu0
    %8440 = vdwg.mxu0
    %8441 = vmatpush.bf16.msra.mxu0 %v7313
    %8442 = vmatpush.bf16.msra.mxu0 %v7297
    %8443 = vmatpush.bf16.msra.mxu0 %v7281
    %8444 = vmatpush.bf16.msra.mxu0 %v7265
    %8445 = vmatpush.bf16.msra.mxu0 %v7249
    %8446 = vmatpush.bf16.msra.mxu0 %v7233
    %8447 = vmatpush.bf16.msra.mxu0 %v7217
    %8448 = vmatpush.bf16.msra.mxu0 %v7201
    %8449 = vmatmul.bf16.gmra.mxu0 %v4352
    %v8450 = vpop.f32.mrf.mxu0
    %v8451 = vadd.f32 %v8438, %v8450
    %v8452 = vpop.f32.mrf.mxu0
    %8453 = vdwg.mxu0
    %8454 = vmatpush.bf16.msra.mxu0 %v6930
    %8455 = vmatpush.bf16.msra.mxu0 %v6914
    %8456 = vmatpush.bf16.msra.mxu0 %v6898
    %8457 = vmatpush.bf16.msra.mxu0 %v6882
    %8458 = vmatpush.bf16.msra.mxu0 %v6866
    %8459 = vmatpush.bf16.msra.mxu0 %v6850
    %8460 = vmatpush.bf16.msra.mxu0 %v6834
    %8461 = vmatpush.bf16.msra.mxu0 %v6818
    %8462 = vmatmul.bf16.gmra.mxu0 %v4349
    %v8463 = vpop.f32.mrf.mxu0
    %v8464 = vadd.f32 %v5228, %v8463
    %v8465 = vpop.f32.mrf.mxu0
    %8466 = vdwg.mxu0
    %8467 = vmatpush.bf16.msra.mxu0 %v7058
    %8468 = vmatpush.bf16.msra.mxu0 %v7042
    %8469 = vmatpush.bf16.msra.mxu0 %v7026
    %8470 = vmatpush.bf16.msra.mxu0 %v7010
    %8471 = vmatpush.bf16.msra.mxu0 %v6994
    %8472 = vmatpush.bf16.msra.mxu0 %v6978
    %8473 = vmatpush.bf16.msra.mxu0 %v6962
    %8474 = vmatpush.bf16.msra.mxu0 %v6946
    %8475 = vmatmul.bf16.gmra.mxu0 %v4350
    %v8476 = vpop.f32.mrf.mxu0
    %v8477 = vadd.f32 %v8464, %v8476
    %v8478 = vpop.f32.mrf.mxu0
    %8479 = vdwg.mxu0
    %8480 = vmatpush.bf16.msra.mxu0 %v7186
    %8481 = vmatpush.bf16.msra.mxu0 %v7170
    %8482 = vmatpush.bf16.msra.mxu0 %v7154
    %8483 = vmatpush.bf16.msra.mxu0 %v7138
    %8484 = vmatpush.bf16.msra.mxu0 %v7122
    %8485 = vmatpush.bf16.msra.mxu0 %v7106
    %8486 = vmatpush.bf16.msra.mxu0 %v7090
    %8487 = vmatpush.bf16.msra.mxu0 %v7074
    %8488 = vmatmul.bf16.gmra.mxu0 %v4351
    %v8489 = vpop.f32.mrf.mxu0
    %v8490 = vadd.f32 %v8477, %v8489
    %v8491 = vpop.f32.mrf.mxu0
    %8492 = vdwg.mxu0
    %8493 = vmatpush.bf16.msra.mxu0 %v7314
    %8494 = vmatpush.bf16.msra.mxu0 %v7298
    %8495 = vmatpush.bf16.msra.mxu0 %v7282
    %8496 = vmatpush.bf16.msra.mxu0 %v7266
    %8497 = vmatpush.bf16.msra.mxu0 %v7250
    %8498 = vmatpush.bf16.msra.mxu0 %v7234
    %8499 = vmatpush.bf16.msra.mxu0 %v7218
    %8500 = vmatpush.bf16.msra.mxu0 %v7202
    %8501 = vmatmul.bf16.gmra.mxu0 %v4352
    %v8502 = vpop.f32.mrf.mxu0
    %v8503 = vadd.f32 %v8490, %v8502
    %v8504 = vpop.f32.mrf.mxu0
    %8505 = vdwg.mxu0
    %8506 = vmatpush.bf16.msra.mxu0 %v6931
    %8507 = vmatpush.bf16.msra.mxu0 %v6915
    %8508 = vmatpush.bf16.msra.mxu0 %v6899
    %8509 = vmatpush.bf16.msra.mxu0 %v6883
    %8510 = vmatpush.bf16.msra.mxu0 %v6867
    %8511 = vmatpush.bf16.msra.mxu0 %v6851
    %8512 = vmatpush.bf16.msra.mxu0 %v6835
    %8513 = vmatpush.bf16.msra.mxu0 %v6819
    %8514 = vmatmul.bf16.gmra.mxu0 %v4349
    %v8515 = vpop.f32.mrf.mxu0
    %v8516 = vadd.f32 %v5241, %v8515
    %v8517 = vpop.f32.mrf.mxu0
    %8518 = vdwg.mxu0
    %8519 = vmatpush.bf16.msra.mxu0 %v7059
    %8520 = vmatpush.bf16.msra.mxu0 %v7043
    %8521 = vmatpush.bf16.msra.mxu0 %v7027
    %8522 = vmatpush.bf16.msra.mxu0 %v7011
    %8523 = vmatpush.bf16.msra.mxu0 %v6995
    %8524 = vmatpush.bf16.msra.mxu0 %v6979
    %8525 = vmatpush.bf16.msra.mxu0 %v6963
    %8526 = vmatpush.bf16.msra.mxu0 %v6947
    %8527 = vmatmul.bf16.gmra.mxu0 %v4350
    %v8528 = vpop.f32.mrf.mxu0
    %v8529 = vadd.f32 %v8516, %v8528
    %v8530 = vpop.f32.mrf.mxu0
    %8531 = vdwg.mxu0
    %8532 = vmatpush.bf16.msra.mxu0 %v7187
    %8533 = vmatpush.bf16.msra.mxu0 %v7171
    %8534 = vmatpush.bf16.msra.mxu0 %v7155
    %8535 = vmatpush.bf16.msra.mxu0 %v7139
    %8536 = vmatpush.bf16.msra.mxu0 %v7123
    %8537 = vmatpush.bf16.msra.mxu0 %v7107
    %8538 = vmatpush.bf16.msra.mxu0 %v7091
    %8539 = vmatpush.bf16.msra.mxu0 %v7075
    %8540 = vmatmul.bf16.gmra.mxu0 %v4351
    %v8541 = vpop.f32.mrf.mxu0
    %v8542 = vadd.f32 %v8529, %v8541
    %v8543 = vpop.f32.mrf.mxu0
    %8544 = vdwg.mxu0
    %8545 = vmatpush.bf16.msra.mxu0 %v7315
    %8546 = vmatpush.bf16.msra.mxu0 %v7299
    %8547 = vmatpush.bf16.msra.mxu0 %v7283
    %8548 = vmatpush.bf16.msra.mxu0 %v7267
    %8549 = vmatpush.bf16.msra.mxu0 %v7251
    %8550 = vmatpush.bf16.msra.mxu0 %v7235
    %8551 = vmatpush.bf16.msra.mxu0 %v7219
    %8552 = vmatpush.bf16.msra.mxu0 %v7203
    %8553 = vmatmul.bf16.gmra.mxu0 %v4352
    %v8554 = vpop.f32.mrf.mxu0
    %v8555 = vadd.f32 %v8542, %v8554
    %v8556 = vpop.f32.mrf.mxu0
    %8557 = vdwg.mxu0
    %8558 = vmatpush.bf16.msra.mxu0 %v6932
    %8559 = vmatpush.bf16.msra.mxu0 %v6916
    %8560 = vmatpush.bf16.msra.mxu0 %v6900
    %8561 = vmatpush.bf16.msra.mxu0 %v6884
    %8562 = vmatpush.bf16.msra.mxu0 %v6868
    %8563 = vmatpush.bf16.msra.mxu0 %v6852
    %8564 = vmatpush.bf16.msra.mxu0 %v6836
    %8565 = vmatpush.bf16.msra.mxu0 %v6820
    %8566 = vmatmul.bf16.gmra.mxu0 %v4349
    %v8567 = vpop.f32.mrf.mxu0
    %v8568 = vadd.f32 %v5254, %v8567
    %v8569 = vpop.f32.mrf.mxu0
    %8570 = vdwg.mxu0
    %8571 = vmatpush.bf16.msra.mxu0 %v7060
    %8572 = vmatpush.bf16.msra.mxu0 %v7044
    %8573 = vmatpush.bf16.msra.mxu0 %v7028
    %8574 = vmatpush.bf16.msra.mxu0 %v7012
    %8575 = vmatpush.bf16.msra.mxu0 %v6996
    %8576 = vmatpush.bf16.msra.mxu0 %v6980
    %8577 = vmatpush.bf16.msra.mxu0 %v6964
    %8578 = vmatpush.bf16.msra.mxu0 %v6948
    %8579 = vmatmul.bf16.gmra.mxu0 %v4350
    %v8580 = vpop.f32.mrf.mxu0
    %v8581 = vadd.f32 %v8568, %v8580
    %v8582 = vpop.f32.mrf.mxu0
    %8583 = vdwg.mxu0
    %8584 = vmatpush.bf16.msra.mxu0 %v7188
    %8585 = vmatpush.bf16.msra.mxu0 %v7172
    %8586 = vmatpush.bf16.msra.mxu0 %v7156
    %8587 = vmatpush.bf16.msra.mxu0 %v7140
    %8588 = vmatpush.bf16.msra.mxu0 %v7124
    %8589 = vmatpush.bf16.msra.mxu0 %v7108
    %8590 = vmatpush.bf16.msra.mxu0 %v7092
    %8591 = vmatpush.bf16.msra.mxu0 %v7076
    %8592 = vmatmul.bf16.gmra.mxu0 %v4351
    %v8593 = vpop.f32.mrf.mxu0
    %v8594 = vadd.f32 %v8581, %v8593
    %v8595 = vpop.f32.mrf.mxu0
    %8596 = vdwg.mxu0
    %8597 = vmatpush.bf16.msra.mxu0 %v7316
    %8598 = vmatpush.bf16.msra.mxu0 %v7300
    %8599 = vmatpush.bf16.msra.mxu0 %v7284
    %8600 = vmatpush.bf16.msra.mxu0 %v7268
    %8601 = vmatpush.bf16.msra.mxu0 %v7252
    %8602 = vmatpush.bf16.msra.mxu0 %v7236
    %8603 = vmatpush.bf16.msra.mxu0 %v7220
    %8604 = vmatpush.bf16.msra.mxu0 %v7204
    %8605 = vmatmul.bf16.gmra.mxu0 %v4352
    %v8606 = vpop.f32.mrf.mxu0
    %v8607 = vadd.f32 %v8594, %v8606
    %v8608 = vpop.f32.mrf.mxu0
    %8609 = vdwg.mxu0
    %8610 = vmatpush.bf16.msra.mxu0 %v6933
    %8611 = vmatpush.bf16.msra.mxu0 %v6917
    %8612 = vmatpush.bf16.msra.mxu0 %v6901
    %8613 = vmatpush.bf16.msra.mxu0 %v6885
    %8614 = vmatpush.bf16.msra.mxu0 %v6869
    %8615 = vmatpush.bf16.msra.mxu0 %v6853
    %8616 = vmatpush.bf16.msra.mxu0 %v6837
    %8617 = vmatpush.bf16.msra.mxu0 %v6821
    %8618 = vmatmul.bf16.gmra.mxu0 %v4349
    %v8619 = vpop.f32.mrf.mxu0
    %v8620 = vadd.f32 %v5267, %v8619
    %v8621 = vpop.f32.mrf.mxu0
    %8622 = vdwg.mxu0
    %8623 = vmatpush.bf16.msra.mxu0 %v7061
    %8624 = vmatpush.bf16.msra.mxu0 %v7045
    %8625 = vmatpush.bf16.msra.mxu0 %v7029
    %8626 = vmatpush.bf16.msra.mxu0 %v7013
    %8627 = vmatpush.bf16.msra.mxu0 %v6997
    %8628 = vmatpush.bf16.msra.mxu0 %v6981
    %8629 = vmatpush.bf16.msra.mxu0 %v6965
    %8630 = vmatpush.bf16.msra.mxu0 %v6949
    %8631 = vmatmul.bf16.gmra.mxu0 %v4350
    %v8632 = vpop.f32.mrf.mxu0
    %v8633 = vadd.f32 %v8620, %v8632
    %v8634 = vpop.f32.mrf.mxu0
    %8635 = vdwg.mxu0
    %8636 = vmatpush.bf16.msra.mxu0 %v7189
    %8637 = vmatpush.bf16.msra.mxu0 %v7173
    %8638 = vmatpush.bf16.msra.mxu0 %v7157
    %8639 = vmatpush.bf16.msra.mxu0 %v7141
    %8640 = vmatpush.bf16.msra.mxu0 %v7125
    %8641 = vmatpush.bf16.msra.mxu0 %v7109
    %8642 = vmatpush.bf16.msra.mxu0 %v7093
    %8643 = vmatpush.bf16.msra.mxu0 %v7077
    %8644 = vmatmul.bf16.gmra.mxu0 %v4351
    %v8645 = vpop.f32.mrf.mxu0
    %v8646 = vadd.f32 %v8633, %v8645
    %v8647 = vpop.f32.mrf.mxu0
    %8648 = vdwg.mxu0
    %8649 = vmatpush.bf16.msra.mxu0 %v7317
    %8650 = vmatpush.bf16.msra.mxu0 %v7301
    %8651 = vmatpush.bf16.msra.mxu0 %v7285
    %8652 = vmatpush.bf16.msra.mxu0 %v7269
    %8653 = vmatpush.bf16.msra.mxu0 %v7253
    %8654 = vmatpush.bf16.msra.mxu0 %v7237
    %8655 = vmatpush.bf16.msra.mxu0 %v7221
    %8656 = vmatpush.bf16.msra.mxu0 %v7205
    %8657 = vmatmul.bf16.gmra.mxu0 %v4352
    %v8658 = vpop.f32.mrf.mxu0
    %v8659 = vadd.f32 %v8646, %v8658
    %v8660 = vpop.f32.mrf.mxu0
    %8661 = vdwg.mxu0
    %v8662 = vld [vmem:[#allocation19] sm:$0xff]
    %v8663 = vld [vmem:[#allocation19 + $0x8] sm:$0xff]
    %v8666 = vperm.slane %v8662, 0
    %v8667 = vperm.slane %v8662, 1
    %v8668 = vperm.slane %v8662, 2
    %v8669 = vperm.slane %v8662, 3
    %v8670 = vperm.slane %v8662, 4
    %v8671 = vperm.slane %v8662, 5
    %v8672 = vperm.slane %v8662, 6
    %v8673 = vperm.slane %v8662, 7
    %v8674 = vperm.slane %v8663, 0
    %v8675 = vperm.slane %v8663, 1
    %v8676 = vperm.slane %v8663, 2
    %v8677 = vperm.slane %v8663, 3
    %v8678 = vperm.slane %v8663, 4
    %v8679 = vperm.slane %v8663, 5
    %v8680 = vperm.slane %v8663, 6
    %v8681 = vperm.slane %v8663, 7
    %v8698 = vadd.f32 %v7879, %v8666
    %v8699 = vadd.f32 %v7931, %v8667
    %v8700 = vadd.f32 %v7983, %v8668
    %v8701 = vadd.f32 %v8035, %v8669
    %v8702 = vadd.f32 %v8087, %v8670
    %v8703 = vadd.f32 %v8139, %v8671
    %v8704 = vadd.f32 %v8191, %v8672
    %v8705 = vadd.f32 %v8243, %v8673
    %v8706 = vadd.f32 %v8295, %v8674
    %v8707 = vadd.f32 %v8347, %v8675
    %v8708 = vadd.f32 %v8399, %v8676
    %v8709 = vadd.f32 %v8451, %v8677
    %v8710 = vadd.f32 %v8503, %v8678
    %v8711 = vadd.f32 %v8555, %v8679
    %v8712 = vadd.f32 %v8607, %v8680
    %v8713 = vadd.f32 %v8659, %v8681
    %v8714 = vxor.u32 %v8698, 2147483648
    %v8715 = vxor.u32 %v8699, 2147483648
    %v8716 = vxor.u32 %v8700, 2147483648
    %v8717 = vxor.u32 %v8701, 2147483648
    %v8718 = vmul.f32 %v8714, 1.442695
    %v8719 = vpow.pop %v8718
    %v8720 = vmul.f32 %v8715, 1.442695
    %v8721 = vpow.pop %v8720
    %v8722 = vmul.f32 %v8716, 1.442695
    %v8723 = vpow.pop %v8722
    %v8724 = vmul.f32 %v8717, 1.442695
    %v8725 = vpow.pop %v8724
    %v8726 = vadd.f32 %v8719, 1.0
    %v8727 = vadd.f32 %v8721, 1.0
    %v8728 = vadd.f32 %v8723, 1.0
    %v8729 = vadd.f32 %v8725, 1.0
    %v8730 = vrcp.pop %v8726
    %v8731 = vmul.f32 %v8726, %v8730
    %v8732 = vsub.f32 1.0, %v8731
    %v8733 = vmul.f32 %v8730, %v8732
    %v8734 = vadd.f32 %v8730, %v8733
    %vm8735 = vweird.f32 %v8726
    %vm8736 = vweird.f32 %v8730
    %vm8737 = vmor %vm8735, %vm8736
    %v8738 = vsel %vm8737, %v8730, %v8734
    %v8739 = vand.u32 2147483647, %v8726
    %vm8740 = vcmp.eq.f32.partialorder %v8739, 8.507059e+37
    %v8741 = vand.u32 %v8726, 2147483648
    %v8742 = vor.u32 1.1754944e-38, %v8741
    %v8743 = vsel %vm8740, %v8742, %v8738
    %v8744 = vmul.f32 1.0, %v8743
    %v8745 = vrcp.pop %v8727
    %v8746 = vmul.f32 %v8727, %v8745
    %v8747 = vsub.f32 1.0, %v8746
    %v8748 = vmul.f32 %v8745, %v8747
    %v8749 = vadd.f32 %v8745, %v8748
    %vm8750 = vweird.f32 %v8727
    %vm8751 = vweird.f32 %v8745
    %vm8752 = vmor %vm8750, %vm8751
    %v8753 = vsel %vm8752, %v8745, %v8749
    %v8754 = vand.u32 2147483647, %v8727
    %vm8755 = vcmp.eq.f32.partialorder %v8754, 8.507059e+37
    %v8756 = vand.u32 %v8727, 2147483648
    %v8757 = vor.u32 1.1754944e-38, %v8756
    %v8758 = vsel %vm8755, %v8757, %v8753
    %v8759 = vmul.f32 1.0, %v8758
    %v8760 = vrcp.pop %v8728
    %v8761 = vmul.f32 %v8728, %v8760
    %v8762 = vsub.f32 1.0, %v8761
    %v8763 = vmul.f32 %v8760, %v8762
    %v8764 = vadd.f32 %v8760, %v8763
    %vm8765 = vweird.f32 %v8728
    %vm8766 = vweird.f32 %v8760
    %vm8767 = vmor %vm8765, %vm8766
    %v8768 = vsel %vm8767, %v8760, %v8764
    %v8769 = vand.u32 2147483647, %v8728
    %vm8770 = vcmp.eq.f32.partialorder %v8769, 8.507059e+37
    %v8771 = vand.u32 %v8728, 2147483648
    %v8772 = vor.u32 1.1754944e-38, %v8771
    %v8773 = vsel %vm8770, %v8772, %v8768
    %v8774 = vmul.f32 1.0, %v8773
    %v8775 = vrcp.pop %v8729
    %v8776 = vmul.f32 %v8729, %v8775
    %v8777 = vsub.f32 1.0, %v8776
    %v8778 = vmul.f32 %v8775, %v8777
    %v8779 = vadd.f32 %v8775, %v8778
    %vm8780 = vweird.f32 %v8729
    %vm8781 = vweird.f32 %v8775
    %vm8782 = vmor %vm8780, %vm8781
    %v8783 = vsel %vm8782, %v8775, %v8779
    %v8784 = vand.u32 2147483647, %v8729
    %vm8785 = vcmp.eq.f32.partialorder %v8784, 8.507059e+37
    %v8786 = vand.u32 %v8729, 2147483648
    %v8787 = vor.u32 1.1754944e-38, %v8786
    %v8788 = vsel %vm8785, %v8787, %v8783
    %v8789 = vmul.f32 1.0, %v8788
    %v8790 = vxor.u32 %v8702, 2147483648
    %v8791 = vxor.u32 %v8703, 2147483648
    %v8792 = vxor.u32 %v8704, 2147483648
    %v8793 = vxor.u32 %v8705, 2147483648
    %v8794 = vmul.f32 %v8790, 1.442695
    %v8795 = vpow.pop %v8794
    %v8796 = vmul.f32 %v8791, 1.442695
    %v8797 = vpow.pop %v8796
    %v8798 = vmul.f32 %v8792, 1.442695
    %v8799 = vpow.pop %v8798
    %v8800 = vmul.f32 %v8793, 1.442695
    %v8801 = vpow.pop %v8800
    %v8802 = vadd.f32 %v8795, 1.0
    %v8803 = vadd.f32 %v8797, 1.0
    %v8804 = vadd.f32 %v8799, 1.0
    %v8805 = vadd.f32 %v8801, 1.0
    %v8806 = vrcp.pop %v8802
    %v8807 = vmul.f32 %v8802, %v8806
    %v8808 = vsub.f32 1.0, %v8807
    %v8809 = vmul.f32 %v8806, %v8808
    %v8810 = vadd.f32 %v8806, %v8809
    %vm8811 = vweird.f32 %v8802
    %vm8812 = vweird.f32 %v8806
    %vm8813 = vmor %vm8811, %vm8812
    %v8814 = vsel %vm8813, %v8806, %v8810
    %v8815 = vand.u32 2147483647, %v8802
    %vm8816 = vcmp.eq.f32.partialorder %v8815, 8.507059e+37
    %v8817 = vand.u32 %v8802, 2147483648
    %v8818 = vor.u32 1.1754944e-38, %v8817
    %v8819 = vsel %vm8816, %v8818, %v8814
    %v8820 = vmul.f32 1.0, %v8819
    %v8821 = vrcp.pop %v8803
    %v8822 = vmul.f32 %v8803, %v8821
    %v8823 = vsub.f32 1.0, %v8822
    %v8824 = vmul.f32 %v8821, %v8823
    %v8825 = vadd.f32 %v8821, %v8824
    %vm8826 = vweird.f32 %v8803
    %vm8827 = vweird.f32 %v8821
    %vm8828 = vmor %vm8826, %vm8827
    %v8829 = vsel %vm8828, %v8821, %v8825
    %v8830 = vand.u32 2147483647, %v8803
    %vm8831 = vcmp.eq.f32.partialorder %v8830, 8.507059e+37
    %v8832 = vand.u32 %v8803, 2147483648
    %v8833 = vor.u32 1.1754944e-38, %v8832
    %v8834 = vsel %vm8831, %v8833, %v8829
    %v8835 = vmul.f32 1.0, %v8834
    %v8836 = vrcp.pop %v8804
    %v8837 = vmul.f32 %v8804, %v8836
    %v8838 = vsub.f32 1.0, %v8837
    %v8839 = vmul.f32 %v8836, %v8838
    %v8840 = vadd.f32 %v8836, %v8839
    %vm8841 = vweird.f32 %v8804
    %vm8842 = vweird.f32 %v8836
    %vm8843 = vmor %vm8841, %vm8842
    %v8844 = vsel %vm8843, %v8836, %v8840
    %v8845 = vand.u32 2147483647, %v8804
    %vm8846 = vcmp.eq.f32.partialorder %v8845, 8.507059e+37
    %v8847 = vand.u32 %v8804, 2147483648
    %v8848 = vor.u32 1.1754944e-38, %v8847
    %v8849 = vsel %vm8846, %v8848, %v8844
    %v8850 = vmul.f32 1.0, %v8849
    %v8851 = vrcp.pop %v8805
    %v8852 = vmul.f32 %v8805, %v8851
    %v8853 = vsub.f32 1.0, %v8852
    %v8854 = vmul.f32 %v8851, %v8853
    %v8855 = vadd.f32 %v8851, %v8854
    %vm8856 = vweird.f32 %v8805
    %vm8857 = vweird.f32 %v8851
    %vm8858 = vmor %vm8856, %vm8857
    %v8859 = vsel %vm8858, %v8851, %v8855
    %v8860 = vand.u32 2147483647, %v8805
    %vm8861 = vcmp.eq.f32.partialorder %v8860, 8.507059e+37
    %v8862 = vand.u32 %v8805, 2147483648
    %v8863 = vor.u32 1.1754944e-38, %v8862
    %v8864 = vsel %vm8861, %v8863, %v8859
    %v8865 = vmul.f32 1.0, %v8864
    %v8866 = vtanh.pop %v8706
    %v8867 = vtanh.pop %v8707
    %v8868 = vtanh.pop %v8708
    %v8869 = vtanh.pop %v8709
    %v8870 = vxor.u32 %v8710, 2147483648
    %v8871 = vxor.u32 %v8711, 2147483648
    %v8872 = vxor.u32 %v8712, 2147483648
    %v8873 = vxor.u32 %v8713, 2147483648
    %v8874 = vmul.f32 %v8870, 1.442695
    %v8875 = vpow.pop %v8874
    %v8876 = vmul.f32 %v8871, 1.442695
    %v8877 = vpow.pop %v8876
    %v8878 = vmul.f32 %v8872, 1.442695
    %v8879 = vpow.pop %v8878
    %v8880 = vmul.f32 %v8873, 1.442695
    %v8881 = vpow.pop %v8880
    %v8882 = vadd.f32 %v8875, 1.0
    %v8883 = vadd.f32 %v8877, 1.0
    %v8884 = vadd.f32 %v8879, 1.0
    %v8885 = vadd.f32 %v8881, 1.0
    %v8886 = vrcp.pop %v8882
    %v8887 = vmul.f32 %v8882, %v8886
    %v8888 = vsub.f32 1.0, %v8887
    %v8889 = vmul.f32 %v8886, %v8888
    %v8890 = vadd.f32 %v8886, %v8889
    %vm8891 = vweird.f32 %v8882
    %vm8892 = vweird.f32 %v8886
    %vm8893 = vmor %vm8891, %vm8892
    %v8894 = vsel %vm8893, %v8886, %v8890
    %v8895 = vand.u32 2147483647, %v8882
    %vm8896 = vcmp.eq.f32.partialorder %v8895, 8.507059e+37
    %v8897 = vand.u32 %v8882, 2147483648
    %v8898 = vor.u32 1.1754944e-38, %v8897
    %v8899 = vsel %vm8896, %v8898, %v8894
    %v8900 = vmul.f32 1.0, %v8899
    %v8901 = vrcp.pop %v8883
    %v8902 = vmul.f32 %v8883, %v8901
    %v8903 = vsub.f32 1.0, %v8902
    %v8904 = vmul.f32 %v8901, %v8903
    %v8905 = vadd.f32 %v8901, %v8904
    %vm8906 = vweird.f32 %v8883
    %vm8907 = vweird.f32 %v8901
    %vm8908 = vmor %vm8906, %vm8907
    %v8909 = vsel %vm8908, %v8901, %v8905
    %v8910 = vand.u32 2147483647, %v8883
    %vm8911 = vcmp.eq.f32.partialorder %v8910, 8.507059e+37
    %v8912 = vand.u32 %v8883, 2147483648
    %v8913 = vor.u32 1.1754944e-38, %v8912
    %v8914 = vsel %vm8911, %v8913, %v8909
    %v8915 = vmul.f32 1.0, %v8914
    %v8916 = vrcp.pop %v8884
    %v8917 = vmul.f32 %v8884, %v8916
    %v8918 = vsub.f32 1.0, %v8917
    %v8919 = vmul.f32 %v8916, %v8918
    %v8920 = vadd.f32 %v8916, %v8919
    %vm8921 = vweird.f32 %v8884
    %vm8922 = vweird.f32 %v8916
    %vm8923 = vmor %vm8921, %vm8922
    %v8924 = vsel %vm8923, %v8916, %v8920
    %v8925 = vand.u32 2147483647, %v8884
    %vm8926 = vcmp.eq.f32.partialorder %v8925, 8.507059e+37
    %v8927 = vand.u32 %v8884, 2147483648
    %v8928 = vor.u32 1.1754944e-38, %v8927
    %v8929 = vsel %vm8926, %v8928, %v8924
    %v8930 = vmul.f32 1.0, %v8929
    %v8931 = vrcp.pop %v8885
    %v8932 = vmul.f32 %v8885, %v8931
    %v8933 = vsub.f32 1.0, %v8932
    %v8934 = vmul.f32 %v8931, %v8933
    %v8935 = vadd.f32 %v8931, %v8934
    %vm8936 = vweird.f32 %v8885
    %vm8937 = vweird.f32 %v8931
    %vm8938 = vmor %vm8936, %vm8937
    %v8939 = vsel %vm8938, %v8931, %v8935
    %v8940 = vand.u32 2147483647, %v8885
    %vm8941 = vcmp.eq.f32.partialorder %v8940, 8.507059e+37
    %v8942 = vand.u32 %v8885, 2147483648
    %v8943 = vor.u32 1.1754944e-38, %v8942
    %v8944 = vsel %vm8941, %v8943, %v8939
    %v8945 = vmul.f32 1.0, %v8944
    %v8946 = vld [vmem:[%s10] sm:$0xff]
    %v8947 = vld [vmem:[%s10 + $0x8] sm:$0xff]
    %v8948 = vld [vmem:[%s10 + $0x10] sm:$0xff]
    %v8949 = vld [vmem:[%s10 + $0x18] sm:$0xff]
    %v8950 = vmul.f32 %v8820, %v8946
    %v8951 = vmul.f32 %v8835, %v8947
    %v8952 = vmul.f32 %v8850, %v8948
    %v8953 = vmul.f32 %v8865, %v8949
    %v8954 = vmul.f32 %v8744, %v8866
    %v8955 = vmul.f32 %v8759, %v8867
    %v8956 = vmul.f32 %v8774, %v8868
    %v8957 = vmul.f32 %v8789, %v8869
    %v8958 = vadd.f32 %v8950, %v8954
    %v8959 = vadd.f32 %v8951, %v8955
    %v8960 = vadd.f32 %v8952, %v8956
    %v8961 = vadd.f32 %v8953, %v8957
    %v8962 = vtanh.pop %v8958
    %v8963 = vtanh.pop %v8959
    %v8964 = vtanh.pop %v8960
    %v8965 = vtanh.pop %v8961
    %v8966 = vmul.f32 %v8900, %v8962
    %v8967 = vmul.f32 %v8915, %v8963
    %v8968 = vmul.f32 %v8930, %v8964
    %v8969 = vmul.f32 %v8945, %v8965
    %8970 = vst [vmem:[%s17] sm:$0xff] %v8966
    %8971 = vst [vmem:[%s17 + $0x8] sm:$0xff] %v8967
    %8972 = vst [vmem:[%s17 + $0x10] sm:$0xff] %v8968
    %8973 = vst [vmem:[%s17 + $0x18] sm:$0xff] %v8969
    %8974 = vst [vmem:[%s18] sm:$0xff] %v8958
    %8975 = vst [vmem:[%s18 + $0x8] sm:$0xff] %v8959
    %8976 = vst [vmem:[%s18 + $0x10] sm:$0xff] %v8960
    %8977 = vst [vmem:[%s18 + $0x18] sm:$0xff] %v8961
    %v8978 = vpack.c.bf16 %v8966, %v8966
    %v8979 = vpack.c.bf16 %v8967, %v8967
    %v8980 = vpack.c.bf16 %v8968, %v8968
    %v8981 = vpack.c.bf16 %v8969, %v8969
    %v8982 = vld [vmem:[#allocation20] sm:$0xf]
    %v8983 = vld [vmem:[#allocation20 + $0x4] sm:$0xf]
    %v8984 = vld [vmem:[#allocation20 + $0x8] sm:$0xf]
    %v8985 = vld [vmem:[#allocation20 + $0xc] sm:$0xf]
    %v8986 = vld [vmem:[#allocation20 + $0x10] sm:$0xf]
    %v8987 = vld [vmem:[#allocation20 + $0x14] sm:$0xf]
    %v8988 = vld [vmem:[#allocation20 + $0x18] sm:$0xf]
    %v8989 = vld [vmem:[#allocation20 + $0x1c] sm:$0xf]
    %v8990 = vld [vmem:[#allocation20 + $0x20] sm:$0xf]
    %v8991 = vld [vmem:[#allocation20 + $0x24] sm:$0xf]
    %v8992 = vld [vmem:[#allocation20 + $0x28] sm:$0xf]
    %v8993 = vld [vmem:[#allocation20 + $0x2c] sm:$0xf]
    %v8994 = vld [vmem:[#allocation20 + $0x30] sm:$0xf]
    %v8995 = vld [vmem:[#allocation20 + $0x34] sm:$0xf]
    %v8996 = vld [vmem:[#allocation20 + $0x38] sm:$0xf]
    %v8997 = vld [vmem:[#allocation20 + $0x3c] sm:$0xf]
    %v8998 = vld [vmem:[#allocation20 + $0x40] sm:$0xf]
    %v8999 = vld [vmem:[#allocation20 + $0x44] sm:$0xf]
    %v9000 = vld [vmem:[#allocation20 + $0x48] sm:$0xf]
    %v9001 = vld [vmem:[#allocation20 + $0x4c] sm:$0xf]
    %v9002 = vld [vmem:[#allocation20 + $0x50] sm:$0xf]
    %v9003 = vld [vmem:[#allocation20 + $0x54] sm:$0xf]
    %v9004 = vld [vmem:[#allocation20 + $0x58] sm:$0xf]
    %v9005 = vld [vmem:[#allocation20 + $0x5c] sm:$0xf]
    %v9006 = vld [vmem:[#allocation20 + $0x60] sm:$0xf]
    %v9007 = vld [vmem:[#allocation20 + $0x64] sm:$0xf]
    %v9008 = vld [vmem:[#allocation20 + $0x68] sm:$0xf]
    %v9009 = vld [vmem:[#allocation20 + $0x6c] sm:$0xf]
    %v9010 = vld [vmem:[#allocation20 + $0x70] sm:$0xf]
    %v9011 = vld [vmem:[#allocation20 + $0x74] sm:$0xf]
    %v9012 = vld [vmem:[#allocation20 + $0x78] sm:$0xf]
    %v9013 = vld [vmem:[#allocation20 + $0x7c] sm:$0xf]
    %v9014 = vld [vmem:[#allocation20 + $0x80] sm:$0xf]
    %v9015 = vld [vmem:[#allocation20 + $0x84] sm:$0xf]
    %v9016 = vld [vmem:[#allocation20 + $0x88] sm:$0xf]
    %v9017 = vld [vmem:[#allocation20 + $0x8c] sm:$0xf]
    %v9018 = vld [vmem:[#allocation20 + $0x90] sm:$0xf]
    %v9019 = vld [vmem:[#allocation20 + $0x94] sm:$0xf]
    %v9020 = vld [vmem:[#allocation20 + $0x98] sm:$0xf]
    %v9021 = vld [vmem:[#allocation20 + $0x9c] sm:$0xf]
    %v9022 = vld [vmem:[#allocation20 + $0xa0] sm:$0xf]
    %v9023 = vld [vmem:[#allocation20 + $0xa4] sm:$0xf]
    %v9024 = vld [vmem:[#allocation20 + $0xa8] sm:$0xf]
    %v9025 = vld [vmem:[#allocation20 + $0xac] sm:$0xf]
    %v9026 = vld [vmem:[#allocation20 + $0xb0] sm:$0xf]
    %v9027 = vld [vmem:[#allocation20 + $0xb4] sm:$0xf]
    %v9028 = vld [vmem:[#allocation20 + $0xb8] sm:$0xf]
    %v9029 = vld [vmem:[#allocation20 + $0xbc] sm:$0xf]
    %v9030 = vld [vmem:[#allocation20 + $0xc0] sm:$0xf]
    %v9031 = vld [vmem:[#allocation20 + $0xc4] sm:$0xf]
    %v9032 = vld [vmem:[#allocation20 + $0xc8] sm:$0xf]
    %v9033 = vld [vmem:[#allocation20 + $0xcc] sm:$0xf]
    %v9034 = vld [vmem:[#allocation20 + $0xd0] sm:$0xf]
    %v9035 = vld [vmem:[#allocation20 + $0xd4] sm:$0xf]
    %v9036 = vld [vmem:[#allocation20 + $0xd8] sm:$0xf]
    %v9037 = vld [vmem:[#allocation20 + $0xdc] sm:$0xf]
    %v9038 = vld [vmem:[#allocation20 + $0xe0] sm:$0xf]
    %v9039 = vld [vmem:[#allocation20 + $0xe4] sm:$0xf]
    %v9040 = vld [vmem:[#allocation20 + $0xe8] sm:$0xf]
    %v9041 = vld [vmem:[#allocation20 + $0xec] sm:$0xf]
    %v9042 = vld [vmem:[#allocation20 + $0xf0] sm:$0xf]
    %v9043 = vld [vmem:[#allocation20 + $0xf4] sm:$0xf]
    %v9044 = vld [vmem:[#allocation20 + $0xf8] sm:$0xf]
    %v9045 = vld [vmem:[#allocation20 + $0xfc] sm:$0xf]
    %v9046 = vld [vmem:[#allocation22] sm:$0x1]
    %v9048 = vperm.slane %v9046, 0
    %v9114 = vunpack.c.l.b16 %v8982
    %v9115 = vunpack.c.l.b16 %v8983
    %v9116 = vunpack.c.l.b16 %v8984
    %v9117 = vunpack.c.l.b16 %v8985
    %v9118 = vunpack.c.l.b16 %v8986
    %v9119 = vunpack.c.l.b16 %v8987
    %v9120 = vunpack.c.l.b16 %v8988
    %v9121 = vunpack.c.l.b16 %v8989
    %v9122 = vunpack.c.l.b16 %v8990
    %v9123 = vunpack.c.l.b16 %v8991
    %v9124 = vunpack.c.l.b16 %v8992
    %v9125 = vunpack.c.l.b16 %v8993
    %v9126 = vunpack.c.l.b16 %v8994
    %v9127 = vunpack.c.l.b16 %v8995
    %v9128 = vunpack.c.l.b16 %v8996
    %v9129 = vunpack.c.l.b16 %v8997
    %v9130 = vunpack.c.l.b16 %v8998
    %v9131 = vunpack.c.l.b16 %v8999
    %v9132 = vunpack.c.l.b16 %v9000
    %v9133 = vunpack.c.l.b16 %v9001
    %v9134 = vunpack.c.l.b16 %v9002
    %v9135 = vunpack.c.l.b16 %v9003
    %v9136 = vunpack.c.l.b16 %v9004
    %v9137 = vunpack.c.l.b16 %v9005
    %v9138 = vunpack.c.l.b16 %v9006
    %v9139 = vunpack.c.l.b16 %v9007
    %v9140 = vunpack.c.l.b16 %v9008
    %v9141 = vunpack.c.l.b16 %v9009
    %v9142 = vunpack.c.l.b16 %v9010
    %v9143 = vunpack.c.l.b16 %v9011
    %v9144 = vunpack.c.l.b16 %v9012
    %v9145 = vunpack.c.l.b16 %v9013
    %v9146 = vunpack.c.l.b16 %v9014
    %v9147 = vunpack.c.l.b16 %v9015
    %v9148 = vunpack.c.l.b16 %v9016
    %v9149 = vunpack.c.l.b16 %v9017
    %v9150 = vunpack.c.l.b16 %v9018
    %v9151 = vunpack.c.l.b16 %v9019
    %v9152 = vunpack.c.l.b16 %v9020
    %v9153 = vunpack.c.l.b16 %v9021
    %v9154 = vunpack.c.l.b16 %v9022
    %v9155 = vunpack.c.l.b16 %v9023
    %v9156 = vunpack.c.l.b16 %v9024
    %v9157 = vunpack.c.l.b16 %v9025
    %v9158 = vunpack.c.l.b16 %v9026
    %v9159 = vunpack.c.l.b16 %v9027
    %v9160 = vunpack.c.l.b16 %v9028
    %v9161 = vunpack.c.l.b16 %v9029
    %v9162 = vunpack.c.l.b16 %v9030
    %v9163 = vunpack.c.l.b16 %v9031
    %v9164 = vunpack.c.l.b16 %v9032
    %v9165 = vunpack.c.l.b16 %v9033
    %v9166 = vunpack.c.l.b16 %v9034
    %v9167 = vunpack.c.l.b16 %v9035
    %v9168 = vunpack.c.l.b16 %v9036
    %v9169 = vunpack.c.l.b16 %v9037
    %v9170 = vunpack.c.l.b16 %v9038
    %v9171 = vunpack.c.l.b16 %v9039
    %v9172 = vunpack.c.l.b16 %v9040
    %v9173 = vunpack.c.l.b16 %v9041
    %v9174 = vunpack.c.l.b16 %v9042
    %v9175 = vunpack.c.l.b16 %v9043
    %v9176 = vunpack.c.l.b16 %v9044
    %v9177 = vunpack.c.l.b16 %v9045
    %v9178 = vpack.c.b16 %v9115, %v9114
    %v9179 = vpack.c.b16 %v9117, %v9116
    %v9180 = vpack.c.b16 %v9119, %v9118
    %v9181 = vpack.c.b16 %v9121, %v9120
    %v9182 = vpack.c.b16 %v9123, %v9122
    %v9183 = vpack.c.b16 %v9125, %v9124
    %v9184 = vpack.c.b16 %v9127, %v9126
    %v9185 = vpack.c.b16 %v9129, %v9128
    %v9186 = vpack.c.b16 %v9131, %v9130
    %v9187 = vpack.c.b16 %v9133, %v9132
    %v9188 = vpack.c.b16 %v9135, %v9134
    %v9189 = vpack.c.b16 %v9137, %v9136
    %v9190 = vpack.c.b16 %v9139, %v9138
    %v9191 = vpack.c.b16 %v9141, %v9140
    %v9192 = vpack.c.b16 %v9143, %v9142
    %v9193 = vpack.c.b16 %v9145, %v9144
    %v9194 = vpack.c.b16 %v9147, %v9146
    %v9195 = vpack.c.b16 %v9149, %v9148
    %v9196 = vpack.c.b16 %v9151, %v9150
    %v9197 = vpack.c.b16 %v9153, %v9152
    %v9198 = vpack.c.b16 %v9155, %v9154
    %v9199 = vpack.c.b16 %v9157, %v9156
    %v9200 = vpack.c.b16 %v9159, %v9158
    %v9201 = vpack.c.b16 %v9161, %v9160
    %v9202 = vpack.c.b16 %v9163, %v9162
    %v9203 = vpack.c.b16 %v9165, %v9164
    %v9204 = vpack.c.b16 %v9167, %v9166
    %v9205 = vpack.c.b16 %v9169, %v9168
    %v9206 = vpack.c.b16 %v9171, %v9170
    %v9207 = vpack.c.b16 %v9173, %v9172
    %v9208 = vpack.c.b16 %v9175, %v9174
    %v9209 = vpack.c.b16 %v9177, %v9176
    %9242 = vmatpush.bf16.msra.mxu0 %v9185
    %9243 = vmatpush.bf16.msra.mxu0 %v9184
    %9244 = vmatpush.bf16.msra.mxu0 %v9183
    %9245 = vmatpush.bf16.msra.mxu0 %v9182
    %9246 = vmatpush.bf16.msra.mxu0 %v9181
    %9247 = vmatpush.bf16.msra.mxu0 %v9180
    %9248 = vmatpush.bf16.msra.mxu0 %v9179
    %9249 = vmatpush.bf16.msra.mxu0 %v9178
    %9250 = vmatmul.bf16.gmra.mxu0 %v8978
    %v9251 = vpop.f32.mrf.mxu0
    %v9252 = vadd.f32 %v9048, %v9251
    %v9253 = vpop.f32.mrf.mxu0
    %9254 = vdwg.mxu0
    %9255 = vmatpush.bf16.msra.mxu0 %v9193
    %9256 = vmatpush.bf16.msra.mxu0 %v9192
    %9257 = vmatpush.bf16.msra.mxu0 %v9191
    %9258 = vmatpush.bf16.msra.mxu0 %v9190
    %9259 = vmatpush.bf16.msra.mxu0 %v9189
    %9260 = vmatpush.bf16.msra.mxu0 %v9188
    %9261 = vmatpush.bf16.msra.mxu0 %v9187
    %9262 = vmatpush.bf16.msra.mxu0 %v9186
    %9263 = vmatmul.bf16.gmra.mxu0 %v8979
    %v9264 = vpop.f32.mrf.mxu0
    %v9265 = vadd.f32 %v9252, %v9264
    %v9266 = vpop.f32.mrf.mxu0
    %9267 = vdwg.mxu0
    %9268 = vmatpush.bf16.msra.mxu0 %v9201
    %9269 = vmatpush.bf16.msra.mxu0 %v9200
    %9270 = vmatpush.bf16.msra.mxu0 %v9199
    %9271 = vmatpush.bf16.msra.mxu0 %v9198
    %9272 = vmatpush.bf16.msra.mxu0 %v9197
    %9273 = vmatpush.bf16.msra.mxu0 %v9196
    %9274 = vmatpush.bf16.msra.mxu0 %v9195
    %9275 = vmatpush.bf16.msra.mxu0 %v9194
    %9276 = vmatmul.bf16.gmra.mxu0 %v8980
    %v9277 = vpop.f32.mrf.mxu0
    %v9278 = vadd.f32 %v9265, %v9277
    %v9279 = vpop.f32.mrf.mxu0
    %9280 = vdwg.mxu0
    %9281 = vmatpush.bf16.msra.mxu0 %v9209
    %9282 = vmatpush.bf16.msra.mxu0 %v9208
    %9283 = vmatpush.bf16.msra.mxu0 %v9207
    %9284 = vmatpush.bf16.msra.mxu0 %v9206
    %9285 = vmatpush.bf16.msra.mxu0 %v9205
    %9286 = vmatpush.bf16.msra.mxu0 %v9204
    %9287 = vmatpush.bf16.msra.mxu0 %v9203
    %9288 = vmatpush.bf16.msra.mxu0 %v9202
    %9289 = vmatmul.bf16.gmra.mxu0 %v8981
    %v9290 = vpop.f32.mrf.mxu0
    %v9291 = vadd.f32 %v9278, %v9290
    %v9292 = vpop.f32.mrf.mxu0
    %9293 = vdwg.mxu0
    %9294 = vst [vmem:[%s16] sm:$0xff] %v9291
    // Predicated region
    $region110: #{actor_critic_forward.1} parent=1 // pred_check
      _
    $region111: #{actor_critic_forward.1} parent=1 // pred_check_branch
      %9296 = sbr.rel (0) target = $region113
    $region112: #{actor_critic_forward.1} parent=1 // pred_region
      _
    $region113: #{actor_critic_forward.1} parent=1 // pred_fallthru
      _
    // Predicated region
    $region114: #{actor_critic_forward.1} parent=1 // pred_check
      _
    $region115: #{actor_critic_forward.1} parent=1 // pred_check_branch
      %9298 = sbr.rel (0) target = $region117
    $region116: #{actor_critic_forward.1} parent=1 // pred_region
      _
    $region117: #{actor_critic_forward.1} parent=1 // pred_fallthru
      _
    // Predicated region
    $region118: #{actor_critic_forward.1} parent=1 // pred_check
      _
    $region119: #{actor_critic_forward.1} parent=1 // pred_check_branch
      %9300 = sbr.rel (0) target = $region121
    $region120: #{actor_critic_forward.1} parent=1 // pred_region
      _
    $region121: #{actor_critic_forward.1} parent=1 // pred_fallthru
      _
    // Predicated region
    $region122: #{actor_critic_forward.1} parent=1 // pred_check
      _
    $region123: #{actor_critic_forward.1} parent=1 // pred_check_branch
      %9302 = sbr.rel (0) target = $region125
    $region124: #{actor_critic_forward.1} parent=1 // pred_region
      _
    $region125: #{actor_critic_forward.1} parent=1 // pred_fallthru
      _
    // Predicated region
    $region126: #{actor_critic_forward.1} parent=1 // pred_check
      _
    $region127: #{actor_critic_forward.1} parent=1 // pred_check_branch
      %9304 = sbr.rel (0) target = $region129
    $region128: #{actor_critic_forward.1} parent=1 // pred_region
      _
    $region129: #{actor_critic_forward.1} parent=1 // pred_fallthru
      _
    // Predicated region
    $region130: #{actor_critic_forward.1} parent=1 // pred_check
      _
    $region131: #{actor_critic_forward.1} parent=1 // pred_check_branch
      %9306 = sbr.rel (0) target = $region133
    $region132: #{actor_critic_forward.1} parent=1 // pred_region
      _
    $region133: #{actor_critic_forward.1} parent=1 // pred_fallthru
      _
    %9307 = vsyncpa [#allocation7], 1
    %9308 = vsyncpa [#allocation9], 1
    %9309 = vsyncpa [#allocation12], 1
    %9310 = vsyncpa [#allocation15], 1
    %9311 = vsyncpa [#allocation18], 1
    %9312 = vsyncpa [#allocation21], 1
  %9313 = vsyncmov [#allocation5]
  %s9314 = vpop.sfrf %9313
  %p9315 = scmp.eq.s32.totalorder %s9314, 0
  %p9316 = pneg %p9315
  %9318 = shalt.err (%p9316)

</llo_original>
